<compile_context>
chip_gen: v5e
topology: v5e:2x2
jax: 0.10.0
libtpu: 0.0.40
codegen_flags: <defaults>
</compile_context>

<pallas_src>
import jax
import jax.numpy as jnp
from jax import lax
from jax.experimental import pallas as pl
from jax.experimental.pallas import tpu as pltpu


def _round_up(x, m):
    return (x + m - 1) // m * m


# ------------------------------ Pallas kernel --------------------------------

def _make_downsample_kernel(H, W, Wp, R_out):
    """Fused DoubleConvolution + MaxPool2d(2) for one image.

    Layouts (all 'flat padded-width': row index = pad_y*Wp + pad_x):
      x_ref   : (R_in,  Cin_p) f32   spatially padded input image
      w*_ref  : (9, Ci_p, Co_p) bf16 tap-major weights (k = dy*3 + dx)
      s/b_ref : (1, Co_p) f32        folded conv-bias + BN scale / bias
      m_ref   : (R_out, 1) f32       1.0 on real columns, 0.0 on junk columns
      down_ref: (R_out, C_p) f32     conv2 result (row = y*Wp + x)
      pool_ref: (Ho*Wo, C_p) f32     2x2/stride-2 max-pool of down
      h1_ref  : (R_in, C_p) f32      VMEM scratch: conv1 result, re-padded
      acc_ref : (R_out, C_p) f32     VMEM scratch: MXU accumulator
    """
    Ho, Wo = H // 2, W // 2

    def accumulate_conv3x3(in_ref, w_ref, acc_ref):
        for k in range(9):                       # static unroll: 9 taps
            dy, dx = divmod(k, 3)
            tap = in_ref[pl.ds(dy * Wp + dx, R_out), :].astype(jnp.bfloat16)
            contrib = jnp.dot(tap, w_ref[k], preferred_element_type=jnp.float32)
            if k == 0:
                acc_ref[...] = contrib           # skip explicit zero-init
            else:
                acc_ref[...] += contrib

    def kernel(x_ref, w1_ref, s1_ref, b1_ref, m_ref, w2_ref, s2_ref, b2_ref,
               down_ref, pool_ref, h1_ref, acc_ref):
        # ----- conv1 + BN + ReLU, emitted zero-re-padded into VMEM scratch -----
        accumulate_conv3x3(x_ref, w1_ref, acc_ref)
        y1 = jnp.maximum(acc_ref[...] * s1_ref[...] + b1_ref[...], 0.0)
        y1 = y1 * m_ref[...]                     # zero the 2 junk columns / row
        h1_ref[...] = jnp.zeros_like(h1_ref)     # zero halo rows / pad columns
        h1_ref[pl.ds(Wp + 1, R_out), :] = y1     # interior shifted by (+1, +1)

        # ----------------------- conv2 + BN + ReLU -----------------------------
        accumulate_conv3x3(h1_ref, w2_ref, acc_ref)
        down_ref[...] = jnp.maximum(acc_ref[...] * s2_ref[...] + b2_ref[...], 0.0)

        # ---- fused 2x2/stride-2 max-pool (reads conv2 result back from VMEM) --
        for yo in range(Ho):                     # static unroll over pooled rows
            r0 = (2 * yo) * Wp
            r1 = r0 + Wp
            t00 = down_ref[pl.ds(r0,     Wo, stride=2), :]
            t01 = down_ref[pl.ds(r0 + 1, Wo, stride=2), :]
            t10 = down_ref[pl.ds(r1,     Wo, stride=2), :]
            t11 = down_ref[pl.ds(r1 + 1, Wo, stride=2), :]
            pool_ref[pl.ds(yo * Wo, Wo), :] = jnp.maximum(
                jnp.maximum(t00, t01), jnp.maximum(t10, t11))

    return kernel


# --------------------------------- wrapper ------------------------------------

def downsample_forward(x_nchw, params, *, eps=1e-5):
    """DownSample.forward: returns (down_sampling, pooling), both NCHW f32."""
    N, Cin, H, W = x_nchw.shape
    assert H % 2 == 0 and W % 2 == 0  # TODO(synk): odd H/W (MaxPool floor) unhandled
    Cout = params["w1"].shape[0]

    Wp = W + 2                         # padded row width (junk-column stride)
    R_in = (H + 3) * Wp                # 1 top + 2 bottom pad rows (tap slack)
    R_out = H * Wp                     # conv result rows in padded-width layout
    Ho, Wo = H // 2, W // 2

    Cin_p = _round_up(Cin, 8)          # contraction dim: sublane-aligned
    C_p = _round_up(Cout, 128)         # lane dim of every store: full 128 lanes

    f32, bf16 = jnp.float32, jnp.bfloat16

    # ----------------- one-time packing (layout only, no im2col) ---------------
    x = jnp.transpose(x_nchw, (0, 2, 3, 1)).astype(f32)              # NHWC
    x = jnp.pad(x, ((0, 0), (1, 2), (1, 1), (0, Cin_p - Cin)))
    x_flat = x.reshape(N, R_in, Cin_p)

    def pack_w(w, ci_p, co_p):         # (O, I, 3, 3) -> (9, Ci_p, Co_p) bf16
        co, ci = w.shape[0], w.shape[1]
        kio = jnp.transpose(w, (2, 3, 1, 0)).reshape(9, ci, co)
        return jnp.pad(kio, ((0, 0), (0, ci_p - ci), (0, co_p - co))).astype(bf16)

    def pack_affine(conv_b, g, beta, m, v, co_p):       # fold conv bias + BN
        scale = g / jnp.sqrt(v + eps)
        bias = (conv_b - m) * scale + beta
        pad = (0, co_p - scale.shape[0])
        return (jnp.pad(scale, pad).reshape(1, co_p).astype(f32),
                jnp.pad(bias, pad).reshape(1, co_p).astype(f32))

    w1 = pack_w(params["w1"], Cin_p, C_p)
    w2 = pack_w(params["w2"], C_p, C_p)
    s1, b1 = pack_affine(params["b1"], params["g1"], params["beta1"],
                         params["m1"], params["v1"], C_p)
    s2, b2 = pack_affine(params["b2"], params["g2"], params["beta2"],
                         params["m2"], params["v2"], C_p)

    # 1.0 on real columns (x < W), 0.0 on the 2 junk columns of each padded row.
    col_mask = ((jnp.arange(R_out, dtype=jnp.int32) % Wp) < W
                ).astype(f32).reshape(R_out, 1)

    cparams = pltpu.CompilerParams(
        dimension_semantics=("parallel",),        # batch splits across v7x cores
        vmem_limit_bytes=32 * 1024 * 1024,        # per-step working set is ~2 MB
    )

    # ------------- single fused call: conv1 -> conv2 -> max-pool ---------------
    down_flat, pool_flat = pl.pallas_call(
        _make_downsample_kernel(H, W, Wp, R_out),
        out_shape=(jax.ShapeDtypeStruct((N, R_out, C_p), f32),
                   jax.ShapeDtypeStruct((N, Ho * Wo, C_p), f32)),
        grid_spec=pltpu.PrefetchScalarGridSpec(
            num_scalar_prefetch=0,
            grid=(N,),
            in_specs=[
                pl.BlockSpec((None, R_in, Cin_p), lambda n: (n, 0, 0)),
                pl.BlockSpec((9, Cin_p, C_p), lambda n: (0, 0, 0)),
                pl.BlockSpec((1, C_p), lambda n: (0, 0)),
                pl.BlockSpec((1, C_p), lambda n: (0, 0)),
                pl.BlockSpec((R_out, 1), lambda n: (0, 0)),
                pl.BlockSpec((9, C_p, C_p), lambda n: (0, 0, 0)),
                pl.BlockSpec((1, C_p), lambda n: (0, 0)),
                pl.BlockSpec((1, C_p), lambda n: (0, 0)),
            ],
            out_specs=(pl.BlockSpec((None, R_out, C_p), lambda n: (n, 0, 0)),
                       pl.BlockSpec((None, Ho * Wo, C_p), lambda n: (n, 0, 0))),
            scratch_shapes=[pltpu.VMEM((R_in, C_p), f32),
                            pltpu.VMEM((R_out, C_p), f32)],
        ),
        compiler_params=cparams,
    )(x_flat, w1, s1, b1, col_mask, w2, s2, b2)

    # ------------------- unpack to the PyTorch NCHW interface ------------------
    down = down_flat.reshape(N, H, Wp, C_p)[:, :, :W, :Cout]
    down = jnp.transpose(down, (0, 3, 1, 2))
    pool = pool_flat.reshape(N, Ho, Wo, C_p)[:, :, :, :Cout]
    pool = jnp.transpose(pool, (0, 3, 1, 2))
    return down, pool


# -------------------------- deterministic params -----------------------------

def init_params(key, in_ch, out_ch):
    ks = jax.random.split(key, 12)
    p = {}
    p["w1"] = 0.2 * jax.random.normal(ks[0], (out_ch, in_ch, 3, 3), jnp.float32)
    p["b1"] = 0.05 * jax.random.normal(ks[1], (out_ch,), jnp.float32)
    p["g1"] = 1.0 + 0.1 * jax.random.normal(ks[2], (out_ch,), jnp.float32)
    p["beta1"] = 0.1 * jax.random.normal(ks[3], (out_ch,), jnp.float32)
    p["m1"] = 0.05 * jax.random.normal(ks[4], (out_ch,), jnp.float32)
    p["v1"] = 1.0 + 0.1 * jnp.abs(jax.random.normal(ks[5], (out_ch,), jnp.float32))
    p["w2"] = 0.2 * jax.random.normal(ks[6], (out_ch, out_ch, 3, 3), jnp.float32)
    p["b2"] = 0.05 * jax.random.normal(ks[7], (out_ch,), jnp.float32)
    p["g2"] = 1.0 + 0.1 * jax.random.normal(ks[8], (out_ch,), jnp.float32)
    p["beta2"] = 0.1 * jax.random.normal(ks[9], (out_ch,), jnp.float32)
    p["m2"] = 0.05 * jax.random.normal(ks[10], (out_ch,), jnp.float32)
    p["v2"] = 1.0 + 0.1 * jnp.abs(jax.random.normal(ks[11], (out_ch,), jnp.float32))
    return p


# ------------------------------ pure-JAX reference ---------------------------

def _ref_forward(x_nchw, p, eps=1e-5):
    """Reference with the same compute-dtype policy as the kernel
    (bf16 matmul operands, f32 accumulation / BN / ReLU)."""
    def conv_bn_relu(x, w, b, g, beta, m, v):
        y = lax.conv_general_dilated(
            x.astype(jnp.bfloat16),
            jnp.transpose(w, (2, 3, 1, 0)).astype(jnp.bfloat16),
            window_strides=(1, 1), padding="SAME",
            dimension_numbers=("NHWC", "HWIO", "NHWC"),
            preferred_element_type=jnp.float32)
        y = y + b
        y = (y - m) / jnp.sqrt(v + eps) * g + beta
        return jnp.maximum(y, 0.0)

    x = jnp.transpose(x_nchw, (0, 2, 3, 1)).astype(jnp.float32)
    h1 = conv_bn_relu(x, p["w1"], p["b1"], p["g1"], p["beta1"], p["m1"], p["v1"])
    h2 = conv_bn_relu(h1, p["w2"], p["b2"], p["g2"], p["beta2"], p["m2"], p["v2"])
    Nb, H, W, C = h2.shape
    pooled = jnp.max(h2.reshape(Nb, H // 2, 2, W // 2, 2, C), axis=(2, 4))
    return jnp.transpose(h2, (0, 3, 1, 2)), jnp.transpose(pooled, (0, 3, 1, 2))


# ---------------------------------- main --------------------------------------

if __name__ == "__main__":
    key = jax.random.PRNGKey(0)
    kx, kp = jax.random.split(key)

    in_ch, out_ch = 4, 8
    x = jax.random.normal(kx, (2, in_ch, 16, 16), jnp.float32)   # NCHW, like PyTorch
    params = init_params(kp, in_ch, out_ch)

    fwd = jax.jit(downsample_forward)
    down, pool = fwd(x, params)
    jax.block_until_ready((down, pool))

    assert down.shape == (2, out_ch, 16, 16)
    assert pool.shape == (2, out_ch, 8, 8)

    # correctness vs pure-JAX reference (same bf16-MXU dtype policy); 1e-2
    # covers occasional 1-ulp bf16 re-rounding of the intermediate activation.
    ref_down, ref_pool = _ref_forward(x, params)
    assert jnp.allclose(down, ref_down, atol=1e-2, rtol=1e-2), \
        float(jnp.max(jnp.abs(down - ref_down)))
    assert jnp.allclose(pool, ref_pool, atol=1e-2, rtol=1e-2), \
        float(jnp.max(jnp.abs(pool - ref_pool)))

    print("KERNEL_OK")
</pallas_src>

<mosaic_0001>
module attributes {stable_mosaic.version = 11 : i64} {
  func.func @kernel(%arg0: i32, %arg1: memref<1x342x8xf32, #tpu.memory_space<vmem>>, %arg2: memref<9x8x128xbf16, #tpu.memory_space<vmem>>, %arg3: memref<1x128xf32, #tpu.memory_space<vmem>>, %arg4: memref<1x128xf32, #tpu.memory_space<vmem>>, %arg5: memref<288x1xf32, #tpu.memory_space<vmem>>, %arg6: memref<9x128x128xbf16, #tpu.memory_space<vmem>>, %arg7: memref<1x128xf32, #tpu.memory_space<vmem>>, %arg8: memref<1x128xf32, #tpu.memory_space<vmem>>, %arg9: memref<1x288x128xf32, #tpu.memory_space<vmem>>, %arg10: memref<1x64x128xf32, #tpu.memory_space<vmem>>, %arg11: memref<342x128xf32, #tpu.memory_space<vmem>>, %arg12: memref<288x128xf32, #tpu.memory_space<vmem>>) attributes {dimension_semantics = [#tpu.dimension_semantics<parallel>], iteration_bounds = array<i64: 2>, scalar_prefetch = 0 : i64, scratch_operands = 2 : i64, tpu.core_type = #tpu.core_type<tc>, window_params = [{transform_indices = @transform_0, window_bounds = array<i64: 1, 342, 8>}, {pipeline_mode = #tpu.pipeline_mode<synchronous>, transform_indices = @transform_1, window_bounds = array<i64: 9, 8, 128>}, {pipeline_mode = #tpu.pipeline_mode<synchronous>, transform_indices = @transform_2, window_bounds = array<i64: 1, 128>}, {pipeline_mode = #tpu.pipeline_mode<synchronous>, transform_indices = @transform_3, window_bounds = array<i64: 1, 128>}, {pipeline_mode = #tpu.pipeline_mode<synchronous>, transform_indices = @transform_4, window_bounds = array<i64: 288, 1>}, {pipeline_mode = #tpu.pipeline_mode<synchronous>, transform_indices = @transform_5, window_bounds = array<i64: 9, 128, 128>}, {pipeline_mode = #tpu.pipeline_mode<synchronous>, transform_indices = @transform_6, window_bounds = array<i64: 1, 128>}, {pipeline_mode = #tpu.pipeline_mode<synchronous>, transform_indices = @transform_7, window_bounds = array<i64: 1, 128>}, {transform_indices = @transform_8, window_bounds = array<i64: 1, 288, 128>}, {transform_indices = @transform_9, window_bounds = array<i64: 1, 64, 128>}]} {
    %c0 = arith.constant 0 : index
    %c0_0 = arith.constant 0 : index
    %c0_1 = arith.constant 0 : index
    %0 = vector.load %arg1[%c0, %c0_0, %c0_1] : memref<1x342x8xf32, #tpu.memory_space<vmem>>, vector<1x288x8xf32>
    %1 = vector.shape_cast %0 : vector<1x288x8xf32> to vector<288x8xf32>
    %2 = arith.truncf %1 : vector<288x8xf32> to vector<288x8xbf16>
    %c0_2 = arith.constant 0 : index
    %c0_3 = arith.constant 0 : index
    %c0_4 = arith.constant 0 : index
    %3 = vector.load %arg2[%c0_2, %c0_3, %c0_4] : memref<9x8x128xbf16, #tpu.memory_space<vmem>>, vector<1x8x128xbf16>
    %4 = vector.shape_cast %3 : vector<1x8x128xbf16> to vector<8x128xbf16>
    %cst = arith.constant dense<0.000000e+00> : vector<288x128xf32>
    %5 = tpu.matmul %2, %4, %cst {dimension_numbers = #tpu.dot_dimension_numbers<[1], [0], [0], [1], [0, 0, 1, 1], [], []>} : vector<288x8xbf16>, vector<8x128xbf16>, vector<288x128xf32> -> vector<288x128xf32>
    %c0_5 = arith.constant 0 : index
    %c0_6 = arith.constant 0 : index
    %6 = vector.load %arg12[%c0_5, %c0_6] : memref<288x128xf32, #tpu.memory_space<vmem>>, vector<288x128xf32>
    tpu.vector_store %arg12[%c0_5, %c0_6], %5 {strides = array<i32>} : memref<288x128xf32, #tpu.memory_space<vmem>>, vector<288x128xf32>,
    %c0_7 = arith.constant 0 : index
    %c1 = arith.constant 1 : index
    %c0_8 = arith.constant 0 : index
    %7 = vector.load %arg1[%c0_7, %c1, %c0_8] : memref<1x342x8xf32, #tpu.memory_space<vmem>>, vector<1x288x8xf32>
    %8 = vector.shape_cast %7 : vector<1x288x8xf32> to vector<288x8xf32>
    %9 = arith.truncf %8 : vector<288x8xf32> to vector<288x8xbf16>
    %c1_9 = arith.constant 1 : index
    %c0_10 = arith.constant 0 : index
    %c0_11 = arith.constant 0 : index
    %10 = vector.load %arg2[%c1_9, %c0_10, %c0_11] : memref<9x8x128xbf16, #tpu.memory_space<vmem>>, vector<1x8x128xbf16>
    %11 = vector.shape_cast %10 : vector<1x8x128xbf16> to vector<8x128xbf16>
    %cst_12 = arith.constant dense<0.000000e+00> : vector<288x128xf32>
    %12 = tpu.matmul %9, %11, %cst_12 {dimension_numbers = #tpu.dot_dimension_numbers<[1], [0], [0], [1], [0, 0, 1, 1], [], []>} : vector<288x8xbf16>, vector<8x128xbf16>, vector<288x128xf32> -> vector<288x128xf32>
    %c0_13 = arith.constant 0 : index
    %c0_14 = arith.constant 0 : index
    %13 = vector.load %arg12[%c0_13, %c0_14] : memref<288x128xf32, #tpu.memory_space<vmem>>, vector<288x128xf32>
    %14 = arith.addf %13, %12 : vector<288x128xf32>
    %c0_15 = arith.constant 0 : index
    %c0_16 = arith.constant 0 : index
    %15 = vector.load %arg12[%c0_15, %c0_16] : memref<288x128xf32, #tpu.memory_space<vmem>>, vector<288x128xf32>
    tpu.vector_store %arg12[%c0_15, %c0_16], %14 {strides = array<i32>} : memref<288x128xf32, #tpu.memory_space<vmem>>, vector<288x128xf32>,
    %c0_17 = arith.constant 0 : index
    %c2 = arith.constant 2 : index
    %c0_18 = arith.constant 0 : index
    %16 = vector.load %arg1[%c0_17, %c2, %c0_18] : memref<1x342x8xf32, #tpu.memory_space<vmem>>, vector<1x288x8xf32>
    %17 = vector.shape_cast %16 : vector<1x288x8xf32> to vector<288x8xf32>
    %18 = arith.truncf %17 : vector<288x8xf32> to vector<288x8xbf16>
    %c2_19 = arith.constant 2 : index
    %c0_20 = arith.constant 0 : index
    %c0_21 = arith.constant 0 : index
    %19 = vector.load %arg2[%c2_19, %c0_20, %c0_21] : memref<9x8x128xbf16, #tpu.memory_space<vmem>>, vector<1x8x128xbf16>
    %20 = vector.shape_cast %19 : vector<1x8x128xbf16> to vector<8x128xbf16>
    %cst_22 = arith.constant dense<0.000000e+00> : vector<288x128xf32>
    %21 = tpu.matmul %18, %20, %cst_22 {dimension_numbers = #tpu.dot_dimension_numbers<[1], [0], [0], [1], [0, 0, 1, 1], [], []>} : vector<288x8xbf16>, vector<8x128xbf16>, vector<288x128xf32> -> vector<288x128xf32>
    %c0_23 = arith.constant 0 : index
    %c0_24 = arith.constant 0 : index
    %22 = vector.load %arg12[%c0_23, %c0_24] : memref<288x128xf32, #tpu.memory_space<vmem>>, vector<288x128xf32>
    %23 = arith.addf %22, %21 : vector<288x128xf32>
    %c0_25 = arith.constant 0 : index
    %c0_26 = arith.constant 0 : index
    %24 = vector.load %arg12[%c0_25, %c0_26] : memref<288x128xf32, #tpu.memory_space<vmem>>, vector<288x128xf32>
    tpu.vector_store %arg12[%c0_25, %c0_26], %23 {strides = array<i32>} : memref<288x128xf32, #tpu.memory_space<vmem>>, vector<288x128xf32>,
    %c0_27 = arith.constant 0 : index
    %c18 = arith.constant 18 : index
    %c0_28 = arith.constant 0 : index
    %25 = vector.load %arg1[%c0_27, %c18, %c0_28] : memref<1x342x8xf32, #tpu.memory_space<vmem>>, vector<1x288x8xf32>
    %26 = vector.shape_cast %25 : vector<1x288x8xf32> to vector<288x8xf32>
    %27 = arith.truncf %26 : vector<288x8xf32> to vector<288x8xbf16>
    %c3 = arith.constant 3 : index
    %c0_29 = arith.constant 0 : index
    %c0_30 = arith.constant 0 : index
    %28 = vector.load %arg2[%c3, %c0_29, %c0_30] : memref<9x8x128xbf16, #tpu.memory_space<vmem>>, vector<1x8x128xbf16>
    %29 = vector.shape_cast %28 : vector<1x8x128xbf16> to vector<8x128xbf16>
    %cst_31 = arith.constant dense<0.000000e+00> : vector<288x128xf32>
    %30 = tpu.matmul %27, %29, %cst_31 {dimension_numbers = #tpu.dot_dimension_numbers<[1], [0], [0], [1], [0, 0, 1, 1], [], []>} : vector<288x8xbf16>, vector<8x128xbf16>, vector<288x128xf32> -> vector<288x128xf32>
    %c0_32 = arith.constant 0 : index
    %c0_33 = arith.constant 0 : index
    %31 = vector.load %arg12[%c0_32, %c0_33] : memref<288x128xf32, #tpu.memory_space<vmem>>, vector<288x128xf32>
    %32 = arith.addf %31, %30 : vector<288x128xf32>
    %c0_34 = arith.constant 0 : index
    %c0_35 = arith.constant 0 : index
    %33 = vector.load %arg12[%c0_34, %c0_35] : memref<288x128xf32, #tpu.memory_space<vmem>>, vector<288x128xf32>
    tpu.vector_store %arg12[%c0_34, %c0_35], %32 {strides = array<i32>} : memref<288x128xf32, #tpu.memory_space<vmem>>, vector<288x128xf32>,
    %c0_36 = arith.constant 0 : index
    %c19 = arith.constant 19 : index
    %c0_37 = arith.constant 0 : index
    %34 = vector.load %arg1[%c0_36, %c19, %c0_37] : memref<1x342x8xf32, #tpu.memory_space<vmem>>, vector<1x288x8xf32>
    %35 = vector.shape_cast %34 : vector<1x288x8xf32> to vector<288x8xf32>
    %36 = arith.truncf %35 : vector<288x8xf32> to vector<288x8xbf16>
    %c4 = arith.constant 4 : index
    %c0_38 = arith.constant 0 : index
    %c0_39 = arith.constant 0 : index
    %37 = vector.load %arg2[%c4, %c0_38, %c0_39] : memref<9x8x128xbf16, #tpu.memory_space<vmem>>, vector<1x8x128xbf16>
    %38 = vector.shape_cast %37 : vector<1x8x128xbf16> to vector<8x128xbf16>
    %cst_40 = arith.constant dense<0.000000e+00> : vector<288x128xf32>
    %39 = tpu.matmul %36, %38, %cst_40 {dimension_numbers = #tpu.dot_dimension_numbers<[1], [0], [0], [1], [0, 0, 1, 1], [], []>} : vector<288x8xbf16>, vector<8x128xbf16>, vector<288x128xf32> -> vector<288x128xf32>
    %c0_41 = arith.constant 0 : index
    %c0_42 = arith.constant 0 : index
    %40 = vector.load %arg12[%c0_41, %c0_42] : memref<288x128xf32, #tpu.memory_space<vmem>>, vector<288x128xf32>
    %41 = arith.addf %40, %39 : vector<288x128xf32>
    %c0_43 = arith.constant 0 : index
    %c0_44 = arith.constant 0 : index
    %42 = vector.load %arg12[%c0_43, %c0_44] : memref<288x128xf32, #tpu.memory_space<vmem>>, vector<288x128xf32>
    tpu.vector_store %arg12[%c0_43, %c0_44], %41 {strides = array<i32>} : memref<288x128xf32, #tpu.memory_space<vmem>>, vector<288x128xf32>,
    %c0_45 = arith.constant 0 : index
    %c20 = arith.constant 20 : index
    %c0_46 = arith.constant 0 : index
    %43 = vector.load %arg1[%c0_45, %c20, %c0_46] : memref<1x342x8xf32, #tpu.memory_space<vmem>>, vector<1x288x8xf32>
    %44 = vector.shape_cast %43 : vector<1x288x8xf32> to vector<288x8xf32>
    %45 = arith.truncf %44 : vector<288x8xf32> to vector<288x8xbf16>
    %c5 = arith.constant 5 : index
    %c0_47 = arith.constant 0 : index
    %c0_48 = arith.constant 0 : index
    %46 = vector.load %arg2[%c5, %c0_47, %c0_48] : memref<9x8x128xbf16, #tpu.memory_space<vmem>>, vector<1x8x128xbf16>
    %47 = vector.shape_cast %46 : vector<1x8x128xbf16> to vector<8x128xbf16>
    %cst_49 = arith.constant dense<0.000000e+00> : vector<288x128xf32>
    %48 = tpu.matmul %45, %47, %cst_49 {dimension_numbers = #tpu.dot_dimension_numbers<[1], [0], [0], [1], [0, 0, 1, 1], [], []>} : vector<288x8xbf16>, vector<8x128xbf16>, vector<288x128xf32> -> vector<288x128xf32>
    %c0_50 = arith.constant 0 : index
    %c0_51 = arith.constant 0 : index
    %49 = vector.load %arg12[%c0_50, %c0_51] : memref<288x128xf32, #tpu.memory_space<vmem>>, vector<288x128xf32>
    %50 = arith.addf %49, %48 : vector<288x128xf32>
    %c0_52 = arith.constant 0 : index
    %c0_53 = arith.constant 0 : index
    %51 = vector.load %arg12[%c0_52, %c0_53] : memref<288x128xf32, #tpu.memory_space<vmem>>, vector<288x128xf32>
    tpu.vector_store %arg12[%c0_52, %c0_53], %50 {strides = array<i32>} : memref<288x128xf32, #tpu.memory_space<vmem>>, vector<288x128xf32>,
    %c0_54 = arith.constant 0 : index
    %c36 = arith.constant 36 : index
    %c0_55 = arith.constant 0 : index
    %52 = vector.load %arg1[%c0_54, %c36, %c0_55] : memref<1x342x8xf32, #tpu.memory_space<vmem>>, vector<1x288x8xf32>
    %53 = vector.shape_cast %52 : vector<1x288x8xf32> to vector<288x8xf32>
    %54 = arith.truncf %53 : vector<288x8xf32> to vector<288x8xbf16>
    %c6 = arith.constant 6 : index
    %c0_56 = arith.constant 0 : index
    %c0_57 = arith.constant 0 : index
    %55 = vector.load %arg2[%c6, %c0_56, %c0_57] : memref<9x8x128xbf16, #tpu.memory_space<vmem>>, vector<1x8x128xbf16>
    %56 = vector.shape_cast %55 : vector<1x8x128xbf16> to vector<8x128xbf16>
    %cst_58 = arith.constant dense<0.000000e+00> : vector<288x128xf32>
    %57 = tpu.matmul %54, %56, %cst_58 {dimension_numbers = #tpu.dot_dimension_numbers<[1], [0], [0], [1], [0, 0, 1, 1], [], []>} : vector<288x8xbf16>, vector<8x128xbf16>, vector<288x128xf32> -> vector<288x128xf32>
    %c0_59 = arith.constant 0 : index
    %c0_60 = arith.constant 0 : index
    %58 = vector.load %arg12[%c0_59, %c0_60] : memref<288x128xf32, #tpu.memory_space<vmem>>, vector<288x128xf32>
    %59 = arith.addf %58, %57 : vector<288x128xf32>
    %c0_61 = arith.constant 0 : index
    %c0_62 = arith.constant 0 : index
    %60 = vector.load %arg12[%c0_61, %c0_62] : memref<288x128xf32, #tpu.memory_space<vmem>>, vector<288x128xf32>
    tpu.vector_store %arg12[%c0_61, %c0_62], %59 {strides = array<i32>} : memref<288x128xf32, #tpu.memory_space<vmem>>, vector<288x128xf32>,
    %c0_63 = arith.constant 0 : index
    %c37 = arith.constant 37 : index
    %c0_64 = arith.constant 0 : index
    %61 = vector.load %arg1[%c0_63, %c37, %c0_64] : memref<1x342x8xf32, #tpu.memory_space<vmem>>, vector<1x288x8xf32>
    %62 = vector.shape_cast %61 : vector<1x288x8xf32> to vector<288x8xf32>
    %63 = arith.truncf %62 : vector<288x8xf32> to vector<288x8xbf16>
    %c7 = arith.constant 7 : index
    %c0_65 = arith.constant 0 : index
    %c0_66 = arith.constant 0 : index
    %64 = vector.load %arg2[%c7, %c0_65, %c0_66] : memref<9x8x128xbf16, #tpu.memory_space<vmem>>, vector<1x8x128xbf16>
    %65 = vector.shape_cast %64 : vector<1x8x128xbf16> to vector<8x128xbf16>
    %cst_67 = arith.constant dense<0.000000e+00> : vector<288x128xf32>
    %66 = tpu.matmul %63, %65, %cst_67 {dimension_numbers = #tpu.dot_dimension_numbers<[1], [0], [0], [1], [0, 0, 1, 1], [], []>} : vector<288x8xbf16>, vector<8x128xbf16>, vector<288x128xf32> -> vector<288x128xf32>
    %c0_68 = arith.constant 0 : index
    %c0_69 = arith.constant 0 : index
    %67 = vector.load %arg12[%c0_68, %c0_69] : memref<288x128xf32, #tpu.memory_space<vmem>>, vector<288x128xf32>
    %68 = arith.addf %67, %66 : vector<288x128xf32>
    %c0_70 = arith.constant 0 : index
    %c0_71 = arith.constant 0 : index
    %69 = vector.load %arg12[%c0_70, %c0_71] : memref<288x128xf32, #tpu.memory_space<vmem>>, vector<288x128xf32>
    tpu.vector_store %arg12[%c0_70, %c0_71], %68 {strides = array<i32>} : memref<288x128xf32, #tpu.memory_space<vmem>>, vector<288x128xf32>,
    %c0_72 = arith.constant 0 : index
    %c38 = arith.constant 38 : index
    %c0_73 = arith.constant 0 : index
    %70 = vector.load %arg1[%c0_72, %c38, %c0_73] : memref<1x342x8xf32, #tpu.memory_space<vmem>>, vector<1x288x8xf32>
    %71 = vector.shape_cast %70 : vector<1x288x8xf32> to vector<288x8xf32>
    %72 = arith.truncf %71 : vector<288x8xf32> to vector<288x8xbf16>
    %c8 = arith.constant 8 : index
    %c0_74 = arith.constant 0 : index
    %c0_75 = arith.constant 0 : index
    %73 = vector.load %arg2[%c8, %c0_74, %c0_75] : memref<9x8x128xbf16, #tpu.memory_space<vmem>>, vector<1x8x128xbf16>
    %74 = vector.shape_cast %73 : vector<1x8x128xbf16> to vector<8x128xbf16>
    %cst_76 = arith.constant dense<0.000000e+00> : vector<288x128xf32>
    %75 = tpu.matmul %72, %74, %cst_76 {dimension_numbers = #tpu.dot_dimension_numbers<[1], [0], [0], [1], [0, 0, 1, 1], [], []>} : vector<288x8xbf16>, vector<8x128xbf16>, vector<288x128xf32> -> vector<288x128xf32>
    %c0_77 = arith.constant 0 : index
    %c0_78 = arith.constant 0 : index
    %76 = vector.load %arg12[%c0_77, %c0_78] : memref<288x128xf32, #tpu.memory_space<vmem>>, vector<288x128xf32>
    %77 = arith.addf %76, %75 : vector<288x128xf32>
    %c0_79 = arith.constant 0 : index
    %c0_80 = arith.constant 0 : index
    %78 = vector.load %arg12[%c0_79, %c0_80] : memref<288x128xf32, #tpu.memory_space<vmem>>, vector<288x128xf32>
    tpu.vector_store %arg12[%c0_79, %c0_80], %77 {strides = array<i32>} : memref<288x128xf32, #tpu.memory_space<vmem>>, vector<288x128xf32>,
    %c0_81 = arith.constant 0 : index
    %c0_82 = arith.constant 0 : index
    %79 = vector.load %arg12[%c0_81, %c0_82] : memref<288x128xf32, #tpu.memory_space<vmem>>, vector<288x128xf32>
    %c0_83 = arith.constant 0 : index
    %c0_84 = arith.constant 0 : index
    %80 = vector.load %arg3[%c0_83, %c0_84] : memref<1x128xf32, #tpu.memory_space<vmem>>, vector<1x128xf32>
    %81 = vector.broadcast %80 : vector<1x128xf32> to vector<288x128xf32>
    %82 = arith.mulf %79, %81 : vector<288x128xf32>
    %c0_85 = arith.constant 0 : index
    %c0_86 = arith.constant 0 : index
    %83 = vector.load %arg4[%c0_85, %c0_86] : memref<1x128xf32, #tpu.memory_space<vmem>>, vector<1x128xf32>
    %84 = vector.broadcast %83 : vector<1x128xf32> to vector<288x128xf32>
    %85 = arith.addf %82, %84 : vector<288x128xf32>
    %cst_87 = arith.constant 0.000000e+00 : f32
    %86 = vector.broadcast %cst_87 : f32 to vector<288x128xf32>
    %87 = arith.maximumf %85, %86 : vector<288x128xf32>
    %c0_88 = arith.constant 0 : index
    %c0_89 = arith.constant 0 : index
    %88 = vector.load %arg5[%c0_88, %c0_89] : memref<288x1xf32, #tpu.memory_space<vmem>>, vector<288x1xf32>
    %89 = vector.broadcast %88 : vector<288x1xf32> to vector<288x128xf32>
    %90 = arith.mulf %87, %89 : vector<288x128xf32>
    %cst_90 = arith.constant 0.000000e+00 : f32
    %91 = vector.broadcast %cst_90 : f32 to vector<342x128xf32>
    %c0_91 = arith.constant 0 : index
    %c0_92 = arith.constant 0 : index
    %92 = vector.load %arg11[%c0_91, %c0_92] : memref<342x128xf32, #tpu.memory_space<vmem>>, vector<342x128xf32>
    tpu.vector_store %arg11[%c0_91, %c0_92], %91 {strides = array<i32>} : memref<342x128xf32, #tpu.memory_space<vmem>>, vector<342x128xf32>,
    %c19_93 = arith.constant 19 : index
    %c0_94 = arith.constant 0 : index
    %93 = vector.load %arg11[%c19_93, %c0_94] : memref<342x128xf32, #tpu.memory_space<vmem>>, vector<288x128xf32>
    tpu.vector_store %arg11[%c19_93, %c0_94], %90 {strides = array<i32>} : memref<342x128xf32, #tpu.memory_space<vmem>>, vector<288x128xf32>,
    %c0_95 = arith.constant 0 : index
    %c0_96 = arith.constant 0 : index
    %94 = vector.load %arg11[%c0_95, %c0_96] : memref<342x128xf32, #tpu.memory_space<vmem>>, vector<288x128xf32>
    %95 = arith.truncf %94 : vector<288x128xf32> to vector<288x128xbf16>
    %c0_97 = arith.constant 0 : index
    %c0_98 = arith.constant 0 : index
    %c0_99 = arith.constant 0 : index
    %96 = vector.load %arg6[%c0_97, %c0_98, %c0_99] : memref<9x128x128xbf16, #tpu.memory_space<vmem>>, vector<1x128x128xbf16>
    %97 = vector.shape_cast %96 : vector<1x128x128xbf16> to vector<128x128xbf16>
    %cst_100 = arith.constant dense<0.000000e+00> : vector<288x128xf32>
    %98 = tpu.matmul %95, %97, %cst_100 {dimension_numbers = #tpu.dot_dimension_numbers<[1], [0], [0], [1], [0, 0, 1, 1], [], []>} : vector<288x128xbf16>, vector<128x128xbf16>, vector<288x128xf32> -> vector<288x128xf32>
    %c0_101 = arith.constant 0 : index
    %c0_102 = arith.constant 0 : index
    %99 = vector.load %arg12[%c0_101, %c0_102] : memref<288x128xf32, #tpu.memory_space<vmem>>, vector<288x128xf32>
    tpu.vector_store %arg12[%c0_101, %c0_102], %98 {strides = array<i32>} : memref<288x128xf32, #tpu.memory_space<vmem>>, vector<288x128xf32>,
    %c1_103 = arith.constant 1 : index
    %c0_104 = arith.constant 0 : index
    %100 = vector.load %arg11[%c1_103, %c0_104] : memref<342x128xf32, #tpu.memory_space<vmem>>, vector<288x128xf32>
    %101 = arith.truncf %100 : vector<288x128xf32> to vector<288x128xbf16>
    %c1_105 = arith.constant 1 : index
    %c0_106 = arith.constant 0 : index
    %c0_107 = arith.constant 0 : index
    %102 = vector.load %arg6[%c1_105, %c0_106, %c0_107] : memref<9x128x128xbf16, #tpu.memory_space<vmem>>, vector<1x128x128xbf16>
    %103 = vector.shape_cast %102 : vector<1x128x128xbf16> to vector<128x128xbf16>
    %cst_108 = arith.constant dense<0.000000e+00> : vector<288x128xf32>
    %104 = tpu.matmul %101, %103, %cst_108 {dimension_numbers = #tpu.dot_dimension_numbers<[1], [0], [0], [1], [0, 0, 1, 1], [], []>} : vector<288x128xbf16>, vector<128x128xbf16>, vector<288x128xf32> -> vector<288x128xf32>
    %c0_109 = arith.constant 0 : index
    %c0_110 = arith.constant 0 : index
    %105 = vector.load %arg12[%c0_109, %c0_110] : memref<288x128xf32, #tpu.memory_space<vmem>>, vector<288x128xf32>
    %106 = arith.addf %105, %104 : vector<288x128xf32>
    %c0_111 = arith.constant 0 : index
    %c0_112 = arith.constant 0 : index
    %107 = vector.load %arg12[%c0_111, %c0_112] : memref<288x128xf32, #tpu.memory_space<vmem>>, vector<288x128xf32>
    tpu.vector_store %arg12[%c0_111, %c0_112], %106 {strides = array<i32>} : memref<288x128xf32, #tpu.memory_space<vmem>>, vector<288x128xf32>,
    %c2_113 = arith.constant 2 : index
    %c0_114 = arith.constant 0 : index
    %108 = vector.load %arg11[%c2_113, %c0_114] : memref<342x128xf32, #tpu.memory_space<vmem>>, vector<288x128xf32>
    %109 = arith.truncf %108 : vector<288x128xf32> to vector<288x128xbf16>
    %c2_115 = arith.constant 2 : index
    %c0_116 = arith.constant 0 : index
    %c0_117 = arith.constant 0 : index
    %110 = vector.load %arg6[%c2_115, %c0_116, %c0_117] : memref<9x128x128xbf16, #tpu.memory_space<vmem>>, vector<1x128x128xbf16>
    %111 = vector.shape_cast %110 : vector<1x128x128xbf16> to vector<128x128xbf16>
    %cst_118 = arith.constant dense<0.000000e+00> : vector<288x128xf32>
    %112 = tpu.matmul %109, %111, %cst_118 {dimension_numbers = #tpu.dot_dimension_numbers<[1], [0], [0], [1], [0, 0, 1, 1], [], []>} : vector<288x128xbf16>, vector<128x128xbf16>, vector<288x128xf32> -> vector<288x128xf32>
    %c0_119 = arith.constant 0 : index
    %c0_120 = arith.constant 0 : index
    %113 = vector.load %arg12[%c0_119, %c0_120] : memref<288x128xf32, #tpu.memory_space<vmem>>, vector<288x128xf32>
    %114 = arith.addf %113, %112 : vector<288x128xf32>
    %c0_121 = arith.constant 0 : index
    %c0_122 = arith.constant 0 : index
    %115 = vector.load %arg12[%c0_121, %c0_122] : memref<288x128xf32, #tpu.memory_space<vmem>>, vector<288x128xf32>
    tpu.vector_store %arg12[%c0_121, %c0_122], %114 {strides = array<i32>} : memref<288x128xf32, #tpu.memory_space<vmem>>, vector<288x128xf32>,
    %c18_123 = arith.constant 18 : index
    %c0_124 = arith.constant 0 : index
    %116 = vector.load %arg11[%c18_123, %c0_124] : memref<342x128xf32, #tpu.memory_space<vmem>>, vector<288x128xf32>
    %117 = arith.truncf %116 : vector<288x128xf32> to vector<288x128xbf16>
    %c3_125 = arith.constant 3 : index
    %c0_126 = arith.constant 0 : index
    %c0_127 = arith.constant 0 : index
    %118 = vector.load %arg6[%c3_125, %c0_126, %c0_127] : memref<9x128x128xbf16, #tpu.memory_space<vmem>>, vector<1x128x128xbf16>
    %119 = vector.shape_cast %118 : vector<1x128x128xbf16> to vector<128x128xbf16>
    %cst_128 = arith.constant dense<0.000000e+00> : vector<288x128xf32>
    %120 = tpu.matmul %117, %119, %cst_128 {dimension_numbers = #tpu.dot_dimension_numbers<[1], [0], [0], [1], [0, 0, 1, 1], [], []>} : vector<288x128xbf16>, vector<128x128xbf16>, vector<288x128xf32> -> vector<288x128xf32>
    %c0_129 = arith.constant 0 : index
    %c0_130 = arith.constant 0 : index
    %121 = vector.load %arg12[%c0_129, %c0_130] : memref<288x128xf32, #tpu.memory_space<vmem>>, vector<288x128xf32>
    %122 = arith.addf %121, %120 : vector<288x128xf32>
    %c0_131 = arith.constant 0 : index
    %c0_132 = arith.constant 0 : index
    %123 = vector.load %arg12[%c0_131, %c0_132] : memref<288x128xf32, #tpu.memory_space<vmem>>, vector<288x128xf32>
    tpu.vector_store %arg12[%c0_131, %c0_132], %122 {strides = array<i32>} : memref<288x128xf32, #tpu.memory_space<vmem>>, vector<288x128xf32>,
    %c19_133 = arith.constant 19 : index
    %c0_134 = arith.constant 0 : index
    %124 = vector.load %arg11[%c19_133, %c0_134] : memref<342x128xf32, #tpu.memory_space<vmem>>, vector<288x128xf32>
    %125 = arith.truncf %124 : vector<288x128xf32> to vector<288x128xbf16>
    %c4_135 = arith.constant 4 : index
    %c0_136 = arith.constant 0 : index
    %c0_137 = arith.constant 0 : index
    %126 = vector.load %arg6[%c4_135, %c0_136, %c0_137] : memref<9x128x128xbf16, #tpu.memory_space<vmem>>, vector<1x128x128xbf16>
    %127 = vector.shape_cast %126 : vector<1x128x128xbf16> to vector<128x128xbf16>
    %cst_138 = arith.constant dense<0.000000e+00> : vector<288x128xf32>
    %128 = tpu.matmul %125, %127, %cst_138 {dimension_numbers = #tpu.dot_dimension_numbers<[1], [0], [0], [1], [0, 0, 1, 1], [], []>} : vector<288x128xbf16>, vector<128x128xbf16>, vector<288x128xf32> -> vector<288x128xf32>
    %c0_139 = arith.constant 0 : index
    %c0_140 = arith.constant 0 : index
    %129 = vector.load %arg12[%c0_139, %c0_140] : memref<288x128xf32, #tpu.memory_space<vmem>>, vector<288x128xf32>
    %130 = arith.addf %129, %128 : vector<288x128xf32>
    %c0_141 = arith.constant 0 : index
    %c0_142 = arith.constant 0 : index
    %131 = vector.load %arg12[%c0_141, %c0_142] : memref<288x128xf32, #tpu.memory_space<vmem>>, vector<288x128xf32>
    tpu.vector_store %arg12[%c0_141, %c0_142], %130 {strides = array<i32>} : memref<288x128xf32, #tpu.memory_space<vmem>>, vector<288x128xf32>,
    %c20_143 = arith.constant 20 : index
    %c0_144 = arith.constant 0 : index
    %132 = vector.load %arg11[%c20_143, %c0_144] : memref<342x128xf32, #tpu.memory_space<vmem>>, vector<288x128xf32>
    %133 = arith.truncf %132 : vector<288x128xf32> to vector<288x128xbf16>
    %c5_145 = arith.constant 5 : index
    %c0_146 = arith.constant 0 : index
    %c0_147 = arith.constant 0 : index
    %134 = vector.load %arg6[%c5_145, %c0_146, %c0_147] : memref<9x128x128xbf16, #tpu.memory_space<vmem>>, vector<1x128x128xbf16>
    %135 = vector.shape_cast %134 : vector<1x128x128xbf16> to vector<128x128xbf16>
    %cst_148 = arith.constant dense<0.000000e+00> : vector<288x128xf32>
    %136 = tpu.matmul %133, %135, %cst_148 {dimension_numbers = #tpu.dot_dimension_numbers<[1], [0], [0], [1], [0, 0, 1, 1], [], []>} : vector<288x128xbf16>, vector<128x128xbf16>, vector<288x128xf32> -> vector<288x128xf32>
    %c0_149 = arith.constant 0 : index
    %c0_150 = arith.constant 0 : index
    %137 = vector.load %arg12[%c0_149, %c0_150] : memref<288x128xf32, #tpu.memory_space<vmem>>, vector<288x128xf32>
    %138 = arith.addf %137, %136 : vector<288x128xf32>
    %c0_151 = arith.constant 0 : index
    %c0_152 = arith.constant 0 : index
    %139 = vector.load %arg12[%c0_151, %c0_152] : memref<288x128xf32, #tpu.memory_space<vmem>>, vector<288x128xf32>
    tpu.vector_store %arg12[%c0_151, %c0_152], %138 {strides = array<i32>} : memref<288x128xf32, #tpu.memory_space<vmem>>, vector<288x128xf32>,
    %c36_153 = arith.constant 36 : index
    %c0_154 = arith.constant 0 : index
    %140 = vector.load %arg11[%c36_153, %c0_154] : memref<342x128xf32, #tpu.memory_space<vmem>>, vector<288x128xf32>
    %141 = arith.truncf %140 : vector<288x128xf32> to vector<288x128xbf16>
    %c6_155 = arith.constant 6 : index
    %c0_156 = arith.constant 0 : index
    %c0_157 = arith.constant 0 : index
    %142 = vector.load %arg6[%c6_155, %c0_156, %c0_157] : memref<9x128x128xbf16, #tpu.memory_space<vmem>>, vector<1x128x128xbf16>
    %143 = vector.shape_cast %142 : vector<1x128x128xbf16> to vector<128x128xbf16>
    %cst_158 = arith.constant dense<0.000000e+00> : vector<288x128xf32>
    %144 = tpu.matmul %141, %143, %cst_158 {dimension_numbers = #tpu.dot_dimension_numbers<[1], [0], [0], [1], [0, 0, 1, 1], [], []>} : vector<288x128xbf16>, vector<128x128xbf16>, vector<288x128xf32> -> vector<288x128xf32>
    %c0_159 = arith.constant 0 : index
    %c0_160 = arith.constant 0 : index
    %145 = vector.load %arg12[%c0_159, %c0_160] : memref<288x128xf32, #tpu.memory_space<vmem>>, vector<288x128xf32>
    %146 = arith.addf %145, %144 : vector<288x128xf32>
    %c0_161 = arith.constant 0 : index
    %c0_162 = arith.constant 0 : index
    %147 = vector.load %arg12[%c0_161, %c0_162] : memref<288x128xf32, #tpu.memory_space<vmem>>, vector<288x128xf32>
    tpu.vector_store %arg12[%c0_161, %c0_162], %146 {strides = array<i32>} : memref<288x128xf32, #tpu.memory_space<vmem>>, vector<288x128xf32>,
    %c37_163 = arith.constant 37 : index
    %c0_164 = arith.constant 0 : index
    %148 = vector.load %arg11[%c37_163, %c0_164] : memref<342x128xf32, #tpu.memory_space<vmem>>, vector<288x128xf32>
    %149 = arith.truncf %148 : vector<288x128xf32> to vector<288x128xbf16>
    %c7_165 = arith.constant 7 : index
    %c0_166 = arith.constant 0 : index
    %c0_167 = arith.constant 0 : index
    %150 = vector.load %arg6[%c7_165, %c0_166, %c0_167] : memref<9x128x128xbf16, #tpu.memory_space<vmem>>, vector<1x128x128xbf16>
    %151 = vector.shape_cast %150 : vector<1x128x128xbf16> to vector<128x128xbf16>
    %cst_168 = arith.constant dense<0.000000e+00> : vector<288x128xf32>
    %152 = tpu.matmul %149, %151, %cst_168 {dimension_numbers = #tpu.dot_dimension_numbers<[1], [0], [0], [1], [0, 0, 1, 1], [], []>} : vector<288x128xbf16>, vector<128x128xbf16>, vector<288x128xf32> -> vector<288x128xf32>
    %c0_169 = arith.constant 0 : index
    %c0_170 = arith.constant 0 : index
    %153 = vector.load %arg12[%c0_169, %c0_170] : memref<288x128xf32, #tpu.memory_space<vmem>>, vector<288x128xf32>
    %154 = arith.addf %153, %152 : vector<288x128xf32>
    %c0_171 = arith.constant 0 : index
    %c0_172 = arith.constant 0 : index
    %155 = vector.load %arg12[%c0_171, %c0_172] : memref<288x128xf32, #tpu.memory_space<vmem>>, vector<288x128xf32>
    tpu.vector_store %arg12[%c0_171, %c0_172], %154 {strides = array<i32>} : memref<288x128xf32, #tpu.memory_space<vmem>>, vector<288x128xf32>,
    %c38_173 = arith.constant 38 : index
    %c0_174 = arith.constant 0 : index
    %156 = vector.load %arg11[%c38_173, %c0_174] : memref<342x128xf32, #tpu.memory_space<vmem>>, vector<288x128xf32>
    %157 = arith.truncf %156 : vector<288x128xf32> to vector<288x128xbf16>
    %c8_175 = arith.constant 8 : index
    %c0_176 = arith.constant 0 : index
    %c0_177 = arith.constant 0 : index
    %158 = vector.load %arg6[%c8_175, %c0_176, %c0_177] : memref<9x128x128xbf16, #tpu.memory_space<vmem>>, vector<1x128x128xbf16>
    %159 = vector.shape_cast %158 : vector<1x128x128xbf16> to vector<128x128xbf16>
    %cst_178 = arith.constant dense<0.000000e+00> : vector<288x128xf32>
    %160 = tpu.matmul %157, %159, %cst_178 {dimension_numbers = #tpu.dot_dimension_numbers<[1], [0], [0], [1], [0, 0, 1, 1], [], []>} : vector<288x128xbf16>, vector<128x128xbf16>, vector<288x128xf32> -> vector<288x128xf32>
    %c0_179 = arith.constant 0 : index
    %c0_180 = arith.constant 0 : index
    %161 = vector.load %arg12[%c0_179, %c0_180] : memref<288x128xf32, #tpu.memory_space<vmem>>, vector<288x128xf32>
    %162 = arith.addf %161, %160 : vector<288x128xf32>
    %c0_181 = arith.constant 0 : index
    %c0_182 = arith.constant 0 : index
    %163 = vector.load %arg12[%c0_181, %c0_182] : memref<288x128xf32, #tpu.memory_space<vmem>>, vector<288x128xf32>
    tpu.vector_store %arg12[%c0_181, %c0_182], %162 {strides = array<i32>} : memref<288x128xf32, #tpu.memory_space<vmem>>, vector<288x128xf32>,
    %c0_183 = arith.constant 0 : index
    %c0_184 = arith.constant 0 : index
    %164 = vector.load %arg12[%c0_183, %c0_184] : memref<288x128xf32, #tpu.memory_space<vmem>>, vector<288x128xf32>
    %c0_185 = arith.constant 0 : index
    %c0_186 = arith.constant 0 : index
    %165 = vector.load %arg7[%c0_185, %c0_186] : memref<1x128xf32, #tpu.memory_space<vmem>>, vector<1x128xf32>
    %166 = vector.broadcast %165 : vector<1x128xf32> to vector<288x128xf32>
    %167 = arith.mulf %164, %166 : vector<288x128xf32>
    %c0_187 = arith.constant 0 : index
    %c0_188 = arith.constant 0 : index
    %168 = vector.load %arg8[%c0_187, %c0_188] : memref<1x128xf32, #tpu.memory_space<vmem>>, vector<1x128xf32>
    %169 = vector.broadcast %168 : vector<1x128xf32> to vector<288x128xf32>
    %170 = arith.addf %167, %169 : vector<288x128xf32>
    %cst_189 = arith.constant 0.000000e+00 : f32
    %171 = vector.broadcast %cst_189 : f32 to vector<288x128xf32>
    %172 = arith.maximumf %170, %171 : vector<288x128xf32>
    %c0_190 = arith.constant 0 : index
    %c0_191 = arith.constant 0 : index
    %c0_192 = arith.constant 0 : index
    %173 = vector.load %arg9[%c0_190, %c0_191, %c0_192] : memref<1x288x128xf32, #tpu.memory_space<vmem>>, vector<1x288x128xf32>
    %174 = vector.shape_cast %173 : vector<1x288x128xf32> to vector<288x128xf32>
    %175 = vector.shape_cast %172 : vector<288x128xf32> to vector<1x288x128xf32>
    tpu.vector_store %arg9[%c0_190, %c0_191, %c0_192], %175 {strides = array<i32>} : memref<1x288x128xf32, #tpu.memory_space<vmem>>, vector<1x288x128xf32>,
    %c0_193 = arith.constant 0 : index
    %c0_194 = arith.constant 0 : index
    %c0_195 = arith.constant 0 : index
    %176 = tpu.strided_load %arg9[%c0_193, %c0_194, %c0_195] {strides = array<i32: 1, 2, 1>} : memref<1x288x128xf32, #tpu.memory_space<vmem>>, vector<1x8x128xf32>
    %177 = vector.shape_cast %176 : vector<1x8x128xf32> to vector<8x128xf32>
    %c0_196 = arith.constant 0 : index
    %c1_197 = arith.constant 1 : index
    %c0_198 = arith.constant 0 : index
    %178 = tpu.strided_load %arg9[%c0_196, %c1_197, %c0_198] {strides = array<i32: 1, 2, 1>} : memref<1x288x128xf32, #tpu.memory_space<vmem>>, vector<1x8x128xf32>
    %179 = vector.shape_cast %178 : vector<1x8x128xf32> to vector<8x128xf32>
    %c0_199 = arith.constant 0 : index
    %c18_200 = arith.constant 18 : index
    %c0_201 = arith.constant 0 : index
    %180 = tpu.strided_load %arg9[%c0_199, %c18_200, %c0_201] {strides = array<i32: 1, 2, 1>} : memref<1x288x128xf32, #tpu.memory_space<vmem>>, vector<1x8x128xf32>
    %181 = vector.shape_cast %180 : vector<1x8x128xf32> to vector<8x128xf32>
    %c0_202 = arith.constant 0 : index
    %c19_203 = arith.constant 19 : index
    %c0_204 = arith.constant 0 : index
    %182 = tpu.strided_load %arg9[%c0_202, %c19_203, %c0_204] {strides = array<i32: 1, 2, 1>} : memref<1x288x128xf32, #tpu.memory_space<vmem>>, vector<1x8x128xf32>
    %183 = vector.shape_cast %182 : vector<1x8x128xf32> to vector<8x128xf32>
    %184 = arith.maximumf %177, %179 : vector<8x128xf32>
    %185 = arith.maximumf %181, %183 : vector<8x128xf32>
    %186 = arith.maximumf %184, %185 : vector<8x128xf32>
    %c0_205 = arith.constant 0 : index
    %c0_206 = arith.constant 0 : index
    %c0_207 = arith.constant 0 : index
    %187 = vector.load %arg10[%c0_205, %c0_206, %c0_207] : memref<1x64x128xf32, #tpu.memory_space<vmem>>, vector<1x8x128xf32>
    %188 = vector.shape_cast %187 : vector<1x8x128xf32> to vector<8x128xf32>
    %189 = vector.shape_cast %186 : vector<8x128xf32> to vector<1x8x128xf32>
    tpu.vector_store %arg10[%c0_205, %c0_206, %c0_207], %189 {strides = array<i32>} : memref<1x64x128xf32, #tpu.memory_space<vmem>>, vector<1x8x128xf32>,
    %c0_208 = arith.constant 0 : index
    %c36_209 = arith.constant 36 : index
    %c0_210 = arith.constant 0 : index
    %190 = tpu.strided_load %arg9[%c0_208, %c36_209, %c0_210] {strides = array<i32: 1, 2, 1>} : memref<1x288x128xf32, #tpu.memory_space<vmem>>, vector<1x8x128xf32>
    %191 = vector.shape_cast %190 : vector<1x8x128xf32> to vector<8x128xf32>
    %c0_211 = arith.constant 0 : index
    %c37_212 = arith.constant 37 : index
    %c0_213 = arith.constant 0 : index
    %192 = tpu.strided_load %arg9[%c0_211, %c37_212, %c0_213] {strides = array<i32: 1, 2, 1>} : memref<1x288x128xf32, #tpu.memory_space<vmem>>, vector<1x8x128xf32>
    %193 = vector.shape_cast %192 : vector<1x8x128xf32> to vector<8x128xf32>
    %c0_214 = arith.constant 0 : index
    %c54 = arith.constant 54 : index
    %c0_215 = arith.constant 0 : index
    %194 = tpu.strided_load %arg9[%c0_214, %c54, %c0_215] {strides = array<i32: 1, 2, 1>} : memref<1x288x128xf32, #tpu.memory_space<vmem>>, vector<1x8x128xf32>
    %195 = vector.shape_cast %194 : vector<1x8x128xf32> to vector<8x128xf32>
    %c0_216 = arith.constant 0 : index
    %c55 = arith.constant 55 : index
    %c0_217 = arith.constant 0 : index
    %196 = tpu.strided_load %arg9[%c0_216, %c55, %c0_217] {strides = array<i32: 1, 2, 1>} : memref<1x288x128xf32, #tpu.memory_space<vmem>>, vector<1x8x128xf32>
    %197 = vector.shape_cast %196 : vector<1x8x128xf32> to vector<8x128xf32>
    %198 = arith.maximumf %191, %193 : vector<8x128xf32>
    %199 = arith.maximumf %195, %197 : vector<8x128xf32>
    %200 = arith.maximumf %198, %199 : vector<8x128xf32>
    %c0_218 = arith.constant 0 : index
    %c8_219 = arith.constant 8 : index
    %c0_220 = arith.constant 0 : index
    %201 = vector.load %arg10[%c0_218, %c8_219, %c0_220] : memref<1x64x128xf32, #tpu.memory_space<vmem>>, vector<1x8x128xf32>
    %202 = vector.shape_cast %201 : vector<1x8x128xf32> to vector<8x128xf32>
    %203 = vector.shape_cast %200 : vector<8x128xf32> to vector<1x8x128xf32>
    tpu.vector_store %arg10[%c0_218, %c8_219, %c0_220], %203 {strides = array<i32>} : memref<1x64x128xf32, #tpu.memory_space<vmem>>, vector<1x8x128xf32>,
    %c0_221 = arith.constant 0 : index
    %c72 = arith.constant 72 : index
    %c0_222 = arith.constant 0 : index
    %204 = tpu.strided_load %arg9[%c0_221, %c72, %c0_222] {strides = array<i32: 1, 2, 1>} : memref<1x288x128xf32, #tpu.memory_space<vmem>>, vector<1x8x128xf32>
    %205 = vector.shape_cast %204 : vector<1x8x128xf32> to vector<8x128xf32>
    %c0_223 = arith.constant 0 : index
    %c73 = arith.constant 73 : index
    %c0_224 = arith.constant 0 : index
    %206 = tpu.strided_load %arg9[%c0_223, %c73, %c0_224] {strides = array<i32: 1, 2, 1>} : memref<1x288x128xf32, #tpu.memory_space<vmem>>, vector<1x8x128xf32>
    %207 = vector.shape_cast %206 : vector<1x8x128xf32> to vector<8x128xf32>
    %c0_225 = arith.constant 0 : index
    %c90 = arith.constant 90 : index
    %c0_226 = arith.constant 0 : index
    %208 = tpu.strided_load %arg9[%c0_225, %c90, %c0_226] {strides = array<i32: 1, 2, 1>} : memref<1x288x128xf32, #tpu.memory_space<vmem>>, vector<1x8x128xf32>
    %209 = vector.shape_cast %208 : vector<1x8x128xf32> to vector<8x128xf32>
    %c0_227 = arith.constant 0 : index
    %c91 = arith.constant 91 : index
    %c0_228 = arith.constant 0 : index
    %210 = tpu.strided_load %arg9[%c0_227, %c91, %c0_228] {strides = array<i32: 1, 2, 1>} : memref<1x288x128xf32, #tpu.memory_space<vmem>>, vector<1x8x128xf32>
    %211 = vector.shape_cast %210 : vector<1x8x128xf32> to vector<8x128xf32>
    %212 = arith.maximumf %205, %207 : vector<8x128xf32>
    %213 = arith.maximumf %209, %211 : vector<8x128xf32>
    %214 = arith.maximumf %212, %213 : vector<8x128xf32>
    %c0_229 = arith.constant 0 : index
    %c16 = arith.constant 16 : index
    %c0_230 = arith.constant 0 : index
    %215 = vector.load %arg10[%c0_229, %c16, %c0_230] : memref<1x64x128xf32, #tpu.memory_space<vmem>>, vector<1x8x128xf32>
    %216 = vector.shape_cast %215 : vector<1x8x128xf32> to vector<8x128xf32>
    %217 = vector.shape_cast %214 : vector<8x128xf32> to vector<1x8x128xf32>
    tpu.vector_store %arg10[%c0_229, %c16, %c0_230], %217 {strides = array<i32>} : memref<1x64x128xf32, #tpu.memory_space<vmem>>, vector<1x8x128xf32>,
    %c0_231 = arith.constant 0 : index
    %c108 = arith.constant 108 : index
    %c0_232 = arith.constant 0 : index
    %218 = tpu.strided_load %arg9[%c0_231, %c108, %c0_232] {strides = array<i32: 1, 2, 1>} : memref<1x288x128xf32, #tpu.memory_space<vmem>>, vector<1x8x128xf32>
    %219 = vector.shape_cast %218 : vector<1x8x128xf32> to vector<8x128xf32>
    %c0_233 = arith.constant 0 : index
    %c109 = arith.constant 109 : index
    %c0_234 = arith.constant 0 : index
    %220 = tpu.strided_load %arg9[%c0_233, %c109, %c0_234] {strides = array<i32: 1, 2, 1>} : memref<1x288x128xf32, #tpu.memory_space<vmem>>, vector<1x8x128xf32>
    %221 = vector.shape_cast %220 : vector<1x8x128xf32> to vector<8x128xf32>
    %c0_235 = arith.constant 0 : index
    %c126 = arith.constant 126 : index
    %c0_236 = arith.constant 0 : index
    %222 = tpu.strided_load %arg9[%c0_235, %c126, %c0_236] {strides = array<i32: 1, 2, 1>} : memref<1x288x128xf32, #tpu.memory_space<vmem>>, vector<1x8x128xf32>
    %223 = vector.shape_cast %222 : vector<1x8x128xf32> to vector<8x128xf32>
    %c0_237 = arith.constant 0 : index
    %c127 = arith.constant 127 : index
    %c0_238 = arith.constant 0 : index
    %224 = tpu.strided_load %arg9[%c0_237, %c127, %c0_238] {strides = array<i32: 1, 2, 1>} : memref<1x288x128xf32, #tpu.memory_space<vmem>>, vector<1x8x128xf32>
    %225 = vector.shape_cast %224 : vector<1x8x128xf32> to vector<8x128xf32>
    %226 = arith.maximumf %219, %221 : vector<8x128xf32>
    %227 = arith.maximumf %223, %225 : vector<8x128xf32>
    %228 = arith.maximumf %226, %227 : vector<8x128xf32>
    %c0_239 = arith.constant 0 : index
    %c24 = arith.constant 24 : index
    %c0_240 = arith.constant 0 : index
    %229 = vector.load %arg10[%c0_239, %c24, %c0_240] : memref<1x64x128xf32, #tpu.memory_space<vmem>>, vector<1x8x128xf32>
    %230 = vector.shape_cast %229 : vector<1x8x128xf32> to vector<8x128xf32>
    %231 = vector.shape_cast %228 : vector<8x128xf32> to vector<1x8x128xf32>
    tpu.vector_store %arg10[%c0_239, %c24, %c0_240], %231 {strides = array<i32>} : memref<1x64x128xf32, #tpu.memory_space<vmem>>, vector<1x8x128xf32>,
    %c0_241 = arith.constant 0 : index
    %c144 = arith.constant 144 : index
    %c0_242 = arith.constant 0 : index
    %232 = tpu.strided_load %arg9[%c0_241, %c144, %c0_242] {strides = array<i32: 1, 2, 1>} : memref<1x288x128xf32, #tpu.memory_space<vmem>>, vector<1x8x128xf32>
    %233 = vector.shape_cast %232 : vector<1x8x128xf32> to vector<8x128xf32>
    %c0_243 = arith.constant 0 : index
    %c145 = arith.constant 145 : index
    %c0_244 = arith.constant 0 : index
    %234 = tpu.strided_load %arg9[%c0_243, %c145, %c0_244] {strides = array<i32: 1, 2, 1>} : memref<1x288x128xf32, #tpu.memory_space<vmem>>, vector<1x8x128xf32>
    %235 = vector.shape_cast %234 : vector<1x8x128xf32> to vector<8x128xf32>
    %c0_245 = arith.constant 0 : index
    %c162 = arith.constant 162 : index
    %c0_246 = arith.constant 0 : index
    %236 = tpu.strided_load %arg9[%c0_245, %c162, %c0_246] {strides = array<i32: 1, 2, 1>} : memref<1x288x128xf32, #tpu.memory_space<vmem>>, vector<1x8x128xf32>
    %237 = vector.shape_cast %236 : vector<1x8x128xf32> to vector<8x128xf32>
    %c0_247 = arith.constant 0 : index
    %c163 = arith.constant 163 : index
    %c0_248 = arith.constant 0 : index
    %238 = tpu.strided_load %arg9[%c0_247, %c163, %c0_248] {strides = array<i32: 1, 2, 1>} : memref<1x288x128xf32, #tpu.memory_space<vmem>>, vector<1x8x128xf32>
    %239 = vector.shape_cast %238 : vector<1x8x128xf32> to vector<8x128xf32>
    %240 = arith.maximumf %233, %235 : vector<8x128xf32>
    %241 = arith.maximumf %237, %239 : vector<8x128xf32>
    %242 = arith.maximumf %240, %241 : vector<8x128xf32>
    %c0_249 = arith.constant 0 : index
    %c32 = arith.constant 32 : index
    %c0_250 = arith.constant 0 : index
    %243 = vector.load %arg10[%c0_249, %c32, %c0_250] : memref<1x64x128xf32, #tpu.memory_space<vmem>>, vector<1x8x128xf32>
    %244 = vector.shape_cast %243 : vector<1x8x128xf32> to vector<8x128xf32>
    %245 = vector.shape_cast %242 : vector<8x128xf32> to vector<1x8x128xf32>
    tpu.vector_store %arg10[%c0_249, %c32, %c0_250], %245 {strides = array<i32>} : memref<1x64x128xf32, #tpu.memory_space<vmem>>, vector<1x8x128xf32>,
    %c0_251 = arith.constant 0 : index
    %c180 = arith.constant 180 : index
    %c0_252 = arith.constant 0 : index
    %246 = tpu.strided_load %arg9[%c0_251, %c180, %c0_252] {strides = array<i32: 1, 2, 1>} : memref<1x288x128xf32, #tpu.memory_space<vmem>>, vector<1x8x128xf32>
    %247 = vector.shape_cast %246 : vector<1x8x128xf32> to vector<8x128xf32>
    %c0_253 = arith.constant 0 : index
    %c181 = arith.constant 181 : index
    %c0_254 = arith.constant 0 : index
    %248 = tpu.strided_load %arg9[%c0_253, %c181, %c0_254] {strides = array<i32: 1, 2, 1>} : memref<1x288x128xf32, #tpu.memory_space<vmem>>, vector<1x8x128xf32>
    %249 = vector.shape_cast %248 : vector<1x8x128xf32> to vector<8x128xf32>
    %c0_255 = arith.constant 0 : index
    %c198 = arith.constant 198 : index
    %c0_256 = arith.constant 0 : index
    %250 = tpu.strided_load %arg9[%c0_255, %c198, %c0_256] {strides = array<i32: 1, 2, 1>} : memref<1x288x128xf32, #tpu.memory_space<vmem>>, vector<1x8x128xf32>
    %251 = vector.shape_cast %250 : vector<1x8x128xf32> to vector<8x128xf32>
    %c0_257 = arith.constant 0 : index
    %c199 = arith.constant 199 : index
    %c0_258 = arith.constant 0 : index
    %252 = tpu.strided_load %arg9[%c0_257, %c199, %c0_258] {strides = array<i32: 1, 2, 1>} : memref<1x288x128xf32, #tpu.memory_space<vmem>>, vector<1x8x128xf32>
    %253 = vector.shape_cast %252 : vector<1x8x128xf32> to vector<8x128xf32>
    %254 = arith.maximumf %247, %249 : vector<8x128xf32>
    %255 = arith.maximumf %251, %253 : vector<8x128xf32>
    %256 = arith.maximumf %254, %255 : vector<8x128xf32>
    %c0_259 = arith.constant 0 : index
    %c40 = arith.constant 40 : index
    %c0_260 = arith.constant 0 : index
    %257 = vector.load %arg10[%c0_259, %c40, %c0_260] : memref<1x64x128xf32, #tpu.memory_space<vmem>>, vector<1x8x128xf32>
    %258 = vector.shape_cast %257 : vector<1x8x128xf32> to vector<8x128xf32>
    %259 = vector.shape_cast %256 : vector<8x128xf32> to vector<1x8x128xf32>
    tpu.vector_store %arg10[%c0_259, %c40, %c0_260], %259 {strides = array<i32>} : memref<1x64x128xf32, #tpu.memory_space<vmem>>, vector<1x8x128xf32>,
    %c0_261 = arith.constant 0 : index
    %c216 = arith.constant 216 : index
    %c0_262 = arith.constant 0 : index
    %260 = tpu.strided_load %arg9[%c0_261, %c216, %c0_262] {strides = array<i32: 1, 2, 1>} : memref<1x288x128xf32, #tpu.memory_space<vmem>>, vector<1x8x128xf32>
    %261 = vector.shape_cast %260 : vector<1x8x128xf32> to vector<8x128xf32>
    %c0_263 = arith.constant 0 : index
    %c217 = arith.constant 217 : index
    %c0_264 = arith.constant 0 : index
    %262 = tpu.strided_load %arg9[%c0_263, %c217, %c0_264] {strides = array<i32: 1, 2, 1>} : memref<1x288x128xf32, #tpu.memory_space<vmem>>, vector<1x8x128xf32>
    %263 = vector.shape_cast %262 : vector<1x8x128xf32> to vector<8x128xf32>
    %c0_265 = arith.constant 0 : index
    %c234 = arith.constant 234 : index
    %c0_266 = arith.constant 0 : index
    %264 = tpu.strided_load %arg9[%c0_265, %c234, %c0_266] {strides = array<i32: 1, 2, 1>} : memref<1x288x128xf32, #tpu.memory_space<vmem>>, vector<1x8x128xf32>
    %265 = vector.shape_cast %264 : vector<1x8x128xf32> to vector<8x128xf32>
    %c0_267 = arith.constant 0 : index
    %c235 = arith.constant 235 : index
    %c0_268 = arith.constant 0 : index
    %266 = tpu.strided_load %arg9[%c0_267, %c235, %c0_268] {strides = array<i32: 1, 2, 1>} : memref<1x288x128xf32, #tpu.memory_space<vmem>>, vector<1x8x128xf32>
    %267 = vector.shape_cast %266 : vector<1x8x128xf32> to vector<8x128xf32>
    %268 = arith.maximumf %261, %263 : vector<8x128xf32>
    %269 = arith.maximumf %265, %267 : vector<8x128xf32>
    %270 = arith.maximumf %268, %269 : vector<8x128xf32>
    %c0_269 = arith.constant 0 : index
    %c48 = arith.constant 48 : index
    %c0_270 = arith.constant 0 : index
    %271 = vector.load %arg10[%c0_269, %c48, %c0_270] : memref<1x64x128xf32, #tpu.memory_space<vmem>>, vector<1x8x128xf32>
    %272 = vector.shape_cast %271 : vector<1x8x128xf32> to vector<8x128xf32>
    %273 = vector.shape_cast %270 : vector<8x128xf32> to vector<1x8x128xf32>
    tpu.vector_store %arg10[%c0_269, %c48, %c0_270], %273 {strides = array<i32>} : memref<1x64x128xf32, #tpu.memory_space<vmem>>, vector<1x8x128xf32>,
    %c0_271 = arith.constant 0 : index
    %c252 = arith.constant 252 : index
    %c0_272 = arith.constant 0 : index
    %274 = tpu.strided_load %arg9[%c0_271, %c252, %c0_272] {strides = array<i32: 1, 2, 1>} : memref<1x288x128xf32, #tpu.memory_space<vmem>>, vector<1x8x128xf32>
    %275 = vector.shape_cast %274 : vector<1x8x128xf32> to vector<8x128xf32>
    %c0_273 = arith.constant 0 : index
    %c253 = arith.constant 253 : index
    %c0_274 = arith.constant 0 : index
    %276 = tpu.strided_load %arg9[%c0_273, %c253, %c0_274] {strides = array<i32: 1, 2, 1>} : memref<1x288x128xf32, #tpu.memory_space<vmem>>, vector<1x8x128xf32>
    %277 = vector.shape_cast %276 : vector<1x8x128xf32> to vector<8x128xf32>
    %c0_275 = arith.constant 0 : index
    %c270 = arith.constant 270 : index
    %c0_276 = arith.constant 0 : index
    %278 = tpu.strided_load %arg9[%c0_275, %c270, %c0_276] {strides = array<i32: 1, 2, 1>} : memref<1x288x128xf32, #tpu.memory_space<vmem>>, vector<1x8x128xf32>
    %279 = vector.shape_cast %278 : vector<1x8x128xf32> to vector<8x128xf32>
    %c0_277 = arith.constant 0 : index
    %c271 = arith.constant 271 : index
    %c0_278 = arith.constant 0 : index
    %280 = tpu.strided_load %arg9[%c0_277, %c271, %c0_278] {strides = array<i32: 1, 2, 1>} : memref<1x288x128xf32, #tpu.memory_space<vmem>>, vector<1x8x128xf32>
    %281 = vector.shape_cast %280 : vector<1x8x128xf32> to vector<8x128xf32>
    %282 = arith.maximumf %275, %277 : vector<8x128xf32>
    %283 = arith.maximumf %279, %281 : vector<8x128xf32>
    %284 = arith.maximumf %282, %283 : vector<8x128xf32>
    %c0_279 = arith.constant 0 : index
    %c56 = arith.constant 56 : index
    %c0_280 = arith.constant 0 : index
    %285 = vector.load %arg10[%c0_279, %c56, %c0_280] : memref<1x64x128xf32, #tpu.memory_space<vmem>>, vector<1x8x128xf32>
    %286 = vector.shape_cast %285 : vector<1x8x128xf32> to vector<8x128xf32>
    %287 = vector.shape_cast %284 : vector<8x128xf32> to vector<1x8x128xf32>
    tpu.vector_store %arg10[%c0_279, %c56, %c0_280], %287 {strides = array<i32>} : memref<1x64x128xf32, #tpu.memory_space<vmem>>, vector<1x8x128xf32>,
    return
  }
  func.func @transform_0(%arg0: i32) -> (i32, i32, i32) {
    %c0_i32 = arith.constant 0 : i32
    %c0_i32_0 = arith.constant 0 : i32
    %c0_i32_1 = arith.constant 0 : i32
    return %arg0, %c0_i32, %c0_i32_0 : i32, i32, i32
  }
  func.func @transform_1(%arg0: i32) -> (i32, i32, i32) {
    %c0_i32 = arith.constant 0 : i32
    %c0_i32_0 = arith.constant 0 : i32
    %c0_i32_1 = arith.constant 0 : i32
    %c0_i32_2 = arith.constant 0 : i32
    return %c0_i32, %c0_i32_0, %c0_i32_1 : i32, i32, i32
  }
  func.func @transform_2(%arg0: i32) -> (i32, i32) {
    %c0_i32 = arith.constant 0 : i32
    %c0_i32_0 = arith.constant 0 : i32
    %c0_i32_1 = arith.constant 0 : i32
    return %c0_i32, %c0_i32_0 : i32, i32
  }
  func.func @transform_3(%arg0: i32) -> (i32, i32) {
    %c0_i32 = arith.constant 0 : i32
    %c0_i32_0 = arith.constant 0 : i32
    %c0_i32_1 = arith.constant 0 : i32
    return %c0_i32, %c0_i32_0 : i32, i32
  }
  func.func @transform_4(%arg0: i32) -> (i32, i32) {
    %c0_i32 = arith.constant 0 : i32
    %c0_i32_0 = arith.constant 0 : i32
    %c0_i32_1 = arith.constant 0 : i32
    return %c0_i32, %c0_i32_0 : i32, i32
  }
  func.func @transform_5(%arg0: i32) -> (i32, i32, i32) {
    %c0_i32 = arith.constant 0 : i32
    %c0_i32_0 = arith.constant 0 : i32
    %c0_i32_1 = arith.constant 0 : i32
    %c0_i32_2 = arith.constant 0 : i32
    return %c0_i32, %c0_i32_0, %c0_i32_1 : i32, i32, i32
  }
  func.func @transform_6(%arg0: i32) -> (i32, i32) {
    %c0_i32 = arith.constant 0 : i32
    %c0_i32_0 = arith.constant 0 : i32
    %c0_i32_1 = arith.constant 0 : i32
    return %c0_i32, %c0_i32_0 : i32, i32
  }
  func.func @transform_7(%arg0: i32) -> (i32, i32) {
    %c0_i32 = arith.constant 0 : i32
    %c0_i32_0 = arith.constant 0 : i32
    %c0_i32_1 = arith.constant 0 : i32
    return %c0_i32, %c0_i32_0 : i32, i32
  }
  func.func @transform_8(%arg0: i32) -> (i32, i32, i32) {
    %c0_i32 = arith.constant 0 : i32
    %c0_i32_0 = arith.constant 0 : i32
    %c0_i32_1 = arith.constant 0 : i32
    return %arg0, %c0_i32, %c0_i32_0 : i32, i32, i32
  }
  func.func @transform_9(%arg0: i32) -> (i32, i32, i32) {
    %c0_i32 = arith.constant 0 : i32
    %c0_i32_0 = arith.constant 0 : i32
    %c0_i32_1 = arith.constant 0 : i32
    return %arg0, %c0_i32, %c0_i32_0 : i32, i32, i32
  }
}

</mosaic_0001>

<llo_original>
// kernel: downsample_forward.1
$region0: #{downsample_forward.1}
  #allocation0 [shape = 'u32[]', space=smem, size = 0x4, offset = 0x4, fixed_abs, tag = 'smem constant byte address 0x4 - core index']
  #allocation1 [shape = 'u32[72,128]{1,0:T(1,128)}', space=vmem, size = 0x9000, scoped, tag = 'internal scratch']
  #allocation2 [shape = 'f32[342,128]{1,0:T(8,128)}', space=vmem, size = 0x2b000, scoped, tag = 'scratch operand']
  #allocation3 [shape = 'f32[288,128]{1,0:T(8,128)}', space=vmem, size = 0x24000, scoped, tag = 'scratch operand']
  %s0 = inlined_call_operand.vmem [shape: f32[2,342,8], index: 0, kind: input, shape index: {}]
  %s1 = inlined_call_operand.vmem [shape: bf16[9,8,128], index: 1, kind: input, shape index: {}]
  %s2 = inlined_call_operand.vmem [shape: f32[1,128], index: 2, kind: input, shape index: {}]
  %s3 = inlined_call_operand.vmem [shape: f32[1,128], index: 3, kind: input, shape index: {}]
  %s4 = inlined_call_operand.vmem [shape: f32[288,1], index: 4, kind: input, shape index: {}]
  %s5 = inlined_call_operand.vmem [shape: bf16[9,128,128], index: 5, kind: input, shape index: {}]
  %s6 = inlined_call_operand.vmem [shape: f32[1,128], index: 6, kind: input, shape index: {}]
  %s7 = inlined_call_operand.vmem [shape: f32[1,128], index: 7, kind: input, shape index: {}]
  %s8 = inlined_call_operand.vmem [shape: f32[2,288,128], index: 8, kind: output, shape index: {0}]
  %s9 = inlined_call_operand.vmem [shape: f32[2,64,128], index: 9, kind: output, shape index: {1}]
  %10 = xla_tuple %s8, %s9
  %s11 = sld [smem:[#allocation0]]
  $region73: #{downsample_forward.1} parent=0
    _
  %s13 = ssub.s32 1, %s11
  %s14 = scalar_select 0, %s13, %s11
  loop: start=0, step=1, limit=4
  $region2: #{downsample_forward.1} parent=0 // loop_pre_header
    _
  $region3: #{downsample_forward.1} parent=0 // loop_header
    %s16 = sphi 0, %s20
    %p17 = scmp.ge.s32.totalorder %s16, 4
    %s26 = sphi 0, %s28
    %s29 = sphi 0, %s26
    %s30 = sphi 0, %s29
    %s46 = sphi 0, %s30
    %s50 = sphi 0, %s50
    %s52 = sphi 0, %s50
    %s53 = sphi 0, %s52
    %s67 = sphi 0, %s53
    %s71 = sphi 0, %s71
    %s73 = sphi 0, %s71
    %s74 = sphi 0, %s73
    %s88 = sphi 0, %s74
    %s92 = sphi 0, %s92
    %s94 = sphi 0, %s92
    %s95 = sphi 0, %s94
    %s109 = sphi 0, %s95
    %s113 = sphi 0, %s113
    %s115 = sphi 0, %s113
    %s116 = sphi 0, %s115
    %s130 = sphi 0, %s116
    %s134 = sphi 0, %s134
    %s136 = sphi 0, %s134
    %s137 = sphi 0, %s136
    %s151 = sphi 0, %s137
    %s155 = sphi 0, %s155
    %s157 = sphi 0, %s155
    %s158 = sphi 0, %s157
    %s172 = sphi 0, %s158
    %s176 = sphi 0, %s176
    %s178 = sphi 0, %s176
    %s179 = sphi 0, %s178
    %s193 = sphi 0, %s179
    %s199 = sphi 0, %s201
    %s202 = sphi 0, %s199
    %s203 = sphi 0, %s202
    %s219 = sphi 0, %s203
    %s225 = sphi 0, %s227
    %s228 = sphi 0, %s225
    %s229 = sphi 0, %s228
    %s245 = sphi 0, %s229
  $region4: #{downsample_forward.1} parent=0 // loop_header_branch
    %19 = sbr.rel (%p17) target = $region8
  $region5: #{downsample_forward.1} parent=0 // loop_body
    %s21 = ssub.s32 %s16, 1
    %s22 = ssub.s32 %s16, 2
    %s23 = sadd.s32 %s16, 1
    %s24 = ssub.s32 %s16, %s23
    %p25 = scmp.eq.s32.totalorder %s24, 0
    %s27 = sadd.s32 %s26, 1
    %s28 = scalar_select %p25, %s26, %s27
    %p31 = pneg %p25
    %p32 = scmp.eq.s32.totalorder %s16, 1
    %p33 = por %p31, %p32
    %p34 = scmp.ne.s32.totalorder %s26, %s29
    %p35 = scmp.eq.s32.totalorder %s16, 0
    %p36 = por %p34, %p35
    %p37 = scmp.ne.s32.totalorder %s26, %s29
    %p38 = scmp.eq.s32.totalorder %s21, 1
    %p39 = por %p37, %p38
    %p40 = scmp.ne.s32.totalorder %s29, %s30
    %p41 = scmp.eq.s32.totalorder %s21, 0
    %p42 = por %p40, %p41
    %p43 = scmp.ne.s32.totalorder %s29, %s30
    %p44 = scmp.eq.s32.totalorder %s22, 1
    %p45 = por %p43, %p44
    %p47 = scmp.ne.s32.totalorder %s30, %s46
    %p48 = scmp.eq.s32.totalorder %s22, 0
    %p49 = por %p47, %p48
    %s51 = sadd.s32 %s50, 1
    %p54 = scmp.eq.s32.totalorder %s16, 1
    %p55 = scmp.ne.s32.totalorder %s50, %s52
    %p56 = scmp.eq.s32.totalorder %s16, 0
    %p57 = por %p55, %p56
    %p58 = scmp.ne.s32.totalorder %s50, %s52
    %p59 = scmp.eq.s32.totalorder %s21, 1
    %p60 = por %p58, %p59
    %p61 = scmp.ne.s32.totalorder %s52, %s53
    %p62 = scmp.eq.s32.totalorder %s21, 0
    %p63 = por %p61, %p62
    %p64 = scmp.ne.s32.totalorder %s52, %s53
    %p65 = scmp.eq.s32.totalorder %s22, 1
    %p66 = por %p64, %p65
    %p68 = scmp.ne.s32.totalorder %s53, %s67
    %p69 = scmp.eq.s32.totalorder %s22, 0
    %p70 = por %p68, %p69
    %s72 = sadd.s32 %s71, 1
    %p75 = scmp.eq.s32.totalorder %s16, 1
    %p76 = scmp.ne.s32.totalorder %s71, %s73
    %p77 = scmp.eq.s32.totalorder %s16, 0
    %p78 = por %p76, %p77
    %p79 = scmp.ne.s32.totalorder %s71, %s73
    %p80 = scmp.eq.s32.totalorder %s21, 1
    %p81 = por %p79, %p80
    %p82 = scmp.ne.s32.totalorder %s73, %s74
    %p83 = scmp.eq.s32.totalorder %s21, 0
    %p84 = por %p82, %p83
    %p85 = scmp.ne.s32.totalorder %s73, %s74
    %p86 = scmp.eq.s32.totalorder %s22, 1
    %p87 = por %p85, %p86
    %p89 = scmp.ne.s32.totalorder %s74, %s88
    %p90 = scmp.eq.s32.totalorder %s22, 0
    %p91 = por %p89, %p90
    %s93 = sadd.s32 %s92, 1
    %p96 = scmp.eq.s32.totalorder %s16, 1
    %p97 = scmp.ne.s32.totalorder %s92, %s94
    %p98 = scmp.eq.s32.totalorder %s16, 0
    %p99 = por %p97, %p98
    %p100 = scmp.ne.s32.totalorder %s92, %s94
    %p101 = scmp.eq.s32.totalorder %s21, 1
    %p102 = por %p100, %p101
    %p103 = scmp.ne.s32.totalorder %s94, %s95
    %p104 = scmp.eq.s32.totalorder %s21, 0
    %p105 = por %p103, %p104
    %p106 = scmp.ne.s32.totalorder %s94, %s95
    %p107 = scmp.eq.s32.totalorder %s22, 1
    %p108 = por %p106, %p107
    %p110 = scmp.ne.s32.totalorder %s95, %s109
    %p111 = scmp.eq.s32.totalorder %s22, 0
    %p112 = por %p110, %p111
    %s114 = sadd.s32 %s113, 1
    %p117 = scmp.eq.s32.totalorder %s16, 1
    %p118 = scmp.ne.s32.totalorder %s113, %s115
    %p119 = scmp.eq.s32.totalorder %s16, 0
    %p120 = por %p118, %p119
    %p121 = scmp.ne.s32.totalorder %s113, %s115
    %p122 = scmp.eq.s32.totalorder %s21, 1
    %p123 = por %p121, %p122
    %p124 = scmp.ne.s32.totalorder %s115, %s116
    %p125 = scmp.eq.s32.totalorder %s21, 0
    %p126 = por %p124, %p125
    %p127 = scmp.ne.s32.totalorder %s115, %s116
    %p128 = scmp.eq.s32.totalorder %s22, 1
    %p129 = por %p127, %p128
    %p131 = scmp.ne.s32.totalorder %s116, %s130
    %p132 = scmp.eq.s32.totalorder %s22, 0
    %p133 = por %p131, %p132
    %s135 = sadd.s32 %s134, 1
    %p138 = scmp.eq.s32.totalorder %s16, 1
    %p139 = scmp.ne.s32.totalorder %s134, %s136
    %p140 = scmp.eq.s32.totalorder %s16, 0
    %p141 = por %p139, %p140
    %p142 = scmp.ne.s32.totalorder %s134, %s136
    %p143 = scmp.eq.s32.totalorder %s21, 1
    %p144 = por %p142, %p143
    %p145 = scmp.ne.s32.totalorder %s136, %s137
    %p146 = scmp.eq.s32.totalorder %s21, 0
    %p147 = por %p145, %p146
    %p148 = scmp.ne.s32.totalorder %s136, %s137
    %p149 = scmp.eq.s32.totalorder %s22, 1
    %p150 = por %p148, %p149
    %p152 = scmp.ne.s32.totalorder %s137, %s151
    %p153 = scmp.eq.s32.totalorder %s22, 0
    %p154 = por %p152, %p153
    %s156 = sadd.s32 %s155, 1
    %p159 = scmp.eq.s32.totalorder %s16, 1
    %p160 = scmp.ne.s32.totalorder %s155, %s157
    %p161 = scmp.eq.s32.totalorder %s16, 0
    %p162 = por %p160, %p161
    %p163 = scmp.ne.s32.totalorder %s155, %s157
    %p164 = scmp.eq.s32.totalorder %s21, 1
    %p165 = por %p163, %p164
    %p166 = scmp.ne.s32.totalorder %s157, %s158
    %p167 = scmp.eq.s32.totalorder %s21, 0
    %p168 = por %p166, %p167
    %p169 = scmp.ne.s32.totalorder %s157, %s158
    %p170 = scmp.eq.s32.totalorder %s22, 1
    %p171 = por %p169, %p170
    %p173 = scmp.ne.s32.totalorder %s158, %s172
    %p174 = scmp.eq.s32.totalorder %s22, 0
    %p175 = por %p173, %p174
    %s177 = sadd.s32 %s176, 1
    %p180 = scmp.eq.s32.totalorder %s16, 1
    %p181 = scmp.ne.s32.totalorder %s176, %s178
    %p182 = scmp.eq.s32.totalorder %s16, 0
    %p183 = por %p181, %p182
    %p184 = scmp.ne.s32.totalorder %s176, %s178
    %p185 = scmp.eq.s32.totalorder %s21, 1
    %p186 = por %p184, %p185
    %p187 = scmp.ne.s32.totalorder %s178, %s179
    %p188 = scmp.eq.s32.totalorder %s21, 0
    %p189 = por %p187, %p188
    %p190 = scmp.ne.s32.totalorder %s178, %s179
    %p191 = scmp.eq.s32.totalorder %s22, 1
    %p192 = por %p190, %p191
    %p194 = scmp.ne.s32.totalorder %s179, %s193
    %p195 = scmp.eq.s32.totalorder %s22, 0
    %p196 = por %p194, %p195
    %s197 = ssub.s32 %s16, %s23
    %p198 = scmp.eq.s32.totalorder %s197, 0
    %s200 = sadd.s32 %s199, 1
    %s201 = scalar_select %p198, %s199, %s200
    %p204 = pneg %p198
    %p205 = scmp.eq.s32.totalorder %s16, 1
    %p206 = por %p204, %p205
    %p207 = scmp.ne.s32.totalorder %s199, %s202
    %p208 = scmp.eq.s32.totalorder %s16, 0
    %p209 = por %p207, %p208
    %p210 = scmp.ne.s32.totalorder %s199, %s202
    %p211 = scmp.eq.s32.totalorder %s21, 1
    %p212 = por %p210, %p211
    %p213 = scmp.ne.s32.totalorder %s202, %s203
    %p214 = scmp.eq.s32.totalorder %s21, 0
    %p215 = por %p213, %p214
    %p216 = scmp.ne.s32.totalorder %s202, %s203
    %p217 = scmp.eq.s32.totalorder %s22, 1
    %p218 = por %p216, %p217
    %p220 = scmp.ne.s32.totalorder %s203, %s219
    %p221 = scmp.eq.s32.totalorder %s22, 0
    %p222 = por %p220, %p221
    %s223 = ssub.s32 %s16, %s23
    %p224 = scmp.eq.s32.totalorder %s223, 0
    %s226 = sadd.s32 %s225, 1
    %s227 = scalar_select %p224, %s225, %s226
    %p230 = pneg %p224
    %p231 = scmp.eq.s32.totalorder %s16, 1
    %p232 = por %p230, %p231
    %p233 = scmp.ne.s32.totalorder %s225, %s228
    %p234 = scmp.eq.s32.totalorder %s16, 0
    %p235 = por %p233, %p234
    %p236 = scmp.ne.s32.totalorder %s225, %s228
    %p237 = scmp.eq.s32.totalorder %s21, 1
    %p238 = por %p236, %p237
    %p239 = scmp.ne.s32.totalorder %s228, %s229
    %p240 = scmp.eq.s32.totalorder %s21, 0
    %p241 = por %p239, %p240
    %p242 = scmp.ne.s32.totalorder %s228, %s229
    %p243 = scmp.eq.s32.totalorder %s22, 1
    %p244 = por %p242, %p243
    %p246 = scmp.ne.s32.totalorder %s229, %s245
    %p247 = scmp.eq.s32.totalorder %s22, 0
    %p248 = por %p246, %p247
    %p249 = scmp.le.s32.totalorder 1, %s16
    %p250 = scmp.lt.s32.totalorder %s16, 3
    %p251 = pnand %p249, %p250
    %p252 = pneg %p251
    // Predicated region
    $region9: #{downsample_forward.1} parent=5 // pred_check
      _
    $region10: #{downsample_forward.1} parent=5 // pred_check_branch
      %254 = sbr.rel (%p251) target = $region12
    $region11: #{downsample_forward.1} parent=5 // pred_region
      %s255 = ssub.s32 %s16, 1
      // Predicated region
      $region13: #{downsample_forward.1} parent=11 // pred_check
        %p256 = pneg %p63
      $region14: #{downsample_forward.1} parent=11 // pred_check_branch
        %258 = sbr.rel (%p256) target = $region16
      $region15: #{downsample_forward.1} parent=11 // pred_region
        _
      $region16: #{downsample_forward.1} parent=11 // pred_fallthru
        _
      // Predicated region
      $region17: #{downsample_forward.1} parent=11 // pred_check
        %p259 = pneg %p84
      $region18: #{downsample_forward.1} parent=11 // pred_check_branch
        %261 = sbr.rel (%p259) target = $region20
      $region19: #{downsample_forward.1} parent=11 // pred_region
        _
      $region20: #{downsample_forward.1} parent=11 // pred_fallthru
        _
      // Predicated region
      $region21: #{downsample_forward.1} parent=11 // pred_check
        %p262 = pneg %p105
      $region22: #{downsample_forward.1} parent=11 // pred_check_branch
        %264 = sbr.rel (%p262) target = $region24
      $region23: #{downsample_forward.1} parent=11 // pred_region
        _
      $region24: #{downsample_forward.1} parent=11 // pred_fallthru
        _
      // Predicated region
      $region25: #{downsample_forward.1} parent=11 // pred_check
        %p265 = pneg %p126
      $region26: #{downsample_forward.1} parent=11 // pred_check_branch
        %267 = sbr.rel (%p265) target = $region28
      $region27: #{downsample_forward.1} parent=11 // pred_region
        _
      $region28: #{downsample_forward.1} parent=11 // pred_fallthru
        _
      // Predicated region
      $region29: #{downsample_forward.1} parent=11 // pred_check
        %p268 = pneg %p147
      $region30: #{downsample_forward.1} parent=11 // pred_check_branch
        %270 = sbr.rel (%p268) target = $region32
      $region31: #{downsample_forward.1} parent=11 // pred_region
        _
      $region32: #{downsample_forward.1} parent=11 // pred_fallthru
        _
      // Predicated region
      $region33: #{downsample_forward.1} parent=11 // pred_check
        %p271 = pneg %p168
      $region34: #{downsample_forward.1} parent=11 // pred_check_branch
        %273 = sbr.rel (%p271) target = $region36
      $region35: #{downsample_forward.1} parent=11 // pred_region
        _
      $region36: #{downsample_forward.1} parent=11 // pred_fallthru
        _
      // Predicated region
      $region37: #{downsample_forward.1} parent=11 // pred_check
        %p274 = pneg %p189
      $region38: #{downsample_forward.1} parent=11 // pred_check_branch
        %276 = sbr.rel (%p274) target = $region40
      $region39: #{downsample_forward.1} parent=11 // pred_region
        _
      $region40: #{downsample_forward.1} parent=11 // pred_fallthru
        _
    $region12: #{downsample_forward.1} parent=5 // pred_fallthru
      _
    %p277 = scmp.lt.s32.totalorder %s16, 2
    // Predicated region
    $region41: #{downsample_forward.1} parent=5 // pred_check
      %p278 = pneg %p277
    $region42: #{downsample_forward.1} parent=5 // pred_check_branch
      %280 = sbr.rel (%p278) target = $region44
    $region43: #{downsample_forward.1} parent=5 // pred_region
      // Predicated region
      $region45: #{downsample_forward.1} parent=43 // pred_check
        %p281 = pneg %p36
      $region46: #{downsample_forward.1} parent=43 // pred_check_branch
        %283 = sbr.rel (%p281) target = $region48
      $region47: #{downsample_forward.1} parent=43 // pred_region
        %p284 = scmp.lt.s32.totalorder %s16, 1
        %s285 = scalar_select %p284, %s16, 1
        %s286 = smul.addr %s285, 43
        %s287 = smul.addr %s286, 8
        %s288 = scalar_lea.vmem %s0, %s287
      $region48: #{downsample_forward.1} parent=43 // pred_fallthru
        _
    $region44: #{downsample_forward.1} parent=5 // pred_fallthru
      _
    %p289 = scmp.le.s32.totalorder 1, %s16
    %p290 = scmp.lt.s32.totalorder %s16, 3
    %p291 = pnand %p289, %p290
    %p292 = pneg %p291
    // Predicated region
    $region49: #{downsample_forward.1} parent=5 // pred_check
      _
    $region50: #{downsample_forward.1} parent=5 // pred_check_branch
      %294 = sbr.rel (%p291) target = $region52
    $region51: #{downsample_forward.1} parent=5 // pred_region
      %s295 = ssub.s32 %s16, 1
      %p296 = scmp.lt.s32.totalorder %s21, 1
      %s297 = scalar_select %p296, %s21, 1
      %s298 = smul.addr %s297, 43
      %s299 = smul.addr %s298, 8
      %s300 = scalar_lea.vmem %s0, %s299
      %p301 = pneg %p42
      %p302 = pneg %p39
      %p303 = pneg %p63
      %p304 = pneg %p60
      %p305 = pneg %p84
      %p306 = pneg %p81
      %p307 = pneg %p105
      %p308 = pneg %p102
      %p309 = pneg %p126
      %p310 = pneg %p123
      %p311 = pneg %p147
      %p312 = pneg %p144
      %p313 = pneg %p168
      %p314 = pneg %p165
      %p315 = pneg %p189
      %p316 = pneg %p186
      %p317 = pneg %p215
      %p318 = pneg %p212
      %p319 = scmp.lt.s32.totalorder %s21, 1
      %s320 = scalar_select %p319, %s21, 1
      %s321 = smul.addr %s320, 36
      %s322 = smul.addr %s321, 8
      %s323 = scalar_lea.vmem %s8, %s322
      %p324 = pneg %p241
      %p325 = pneg %p238
      %p326 = scmp.lt.s32.totalorder %s21, 1
      %s327 = scalar_select %p326, %s21, 1
      %s328 = smul.addr %s327, 8
      %s329 = smul.addr %s328, 8
      %s330 = scalar_lea.vmem %s9, %s329
      %p331 = scmp.lt.s32.totalorder %s21, 1
      %s332 = scalar_select %p331, %s21, 1
      %s333 = smul.addr %s332, 43
      %s334 = smul.addr %s333, 8
      %s335 = scalar_lea.vmem %s0, %s334
      %p336 = scmp.lt.s32.totalorder %s21, 1
      %s337 = scalar_select %p336, %s21, 1
      %s338 = smul.addr %s337, 36
      %s339 = smul.addr %s338, 8
      %s340 = scalar_lea.vmem %s8, %s339
      %p341 = scmp.lt.s32.totalorder %s21, 1
      %s342 = scalar_select %p341, %s21, 1
      %s343 = smul.addr %s342, 8
      %s344 = smul.addr %s343, 8
      %s345 = scalar_lea.vmem %s9, %s344
      %v347 = vld [vmem:[%s335] sm:$0xff]
      %v348 = vld [vmem:[%s335 + $0x8] sm:$0xff]
      %v349 = vld [vmem:[%s335 + $0x10] sm:$0xff]
      %v350 = vld [vmem:[%s335 + $0x18] sm:$0xff]
      %v351 = vld [vmem:[%s335 + $0x20] sm:$0xff]
      %v352 = vld [vmem:[%s335 + $0x28] sm:$0xff]
      %v353 = vld [vmem:[%s335 + $0x30] sm:$0xff]
      %v354 = vld [vmem:[%s335 + $0x38] sm:$0xff]
      %v355 = vld [vmem:[%s335 + $0x40] sm:$0xff]
      %v356 = vld [vmem:[%s335 + $0x48] sm:$0xff]
      %v357 = vld [vmem:[%s335 + $0x50] sm:$0xff]
      %v358 = vld [vmem:[%s335 + $0x58] sm:$0xff]
      %v359 = vld [vmem:[%s335 + $0x60] sm:$0xff]
      %v360 = vld [vmem:[%s335 + $0x68] sm:$0xff]
      %v361 = vld [vmem:[%s335 + $0x70] sm:$0xff]
      %v362 = vld [vmem:[%s335 + $0x78] sm:$0xff]
      %v363 = vld [vmem:[%s335 + $0x80] sm:$0xff]
      %v364 = vld [vmem:[%s335 + $0x88] sm:$0xff]
      %v365 = vld [vmem:[%s335 + $0x90] sm:$0xff]
      %v366 = vld [vmem:[%s335 + $0x98] sm:$0xff]
      %v367 = vld [vmem:[%s335 + $0xa0] sm:$0xff]
      %v368 = vld [vmem:[%s335 + $0xa8] sm:$0xff]
      %v369 = vld [vmem:[%s335 + $0xb0] sm:$0xff]
      %v370 = vld [vmem:[%s335 + $0xb8] sm:$0xff]
      %v371 = vld [vmem:[%s335 + $0xc0] sm:$0xff]
      %v372 = vld [vmem:[%s335 + $0xc8] sm:$0xff]
      %v373 = vld [vmem:[%s335 + $0xd0] sm:$0xff]
      %v374 = vld [vmem:[%s335 + $0xd8] sm:$0xff]
      %v375 = vld [vmem:[%s335 + $0xe0] sm:$0xff]
      %v376 = vld [vmem:[%s335 + $0xe8] sm:$0xff]
      %v377 = vld [vmem:[%s335 + $0xf0] sm:$0xff]
      %v378 = vld [vmem:[%s335 + $0xf8] sm:$0xff]
      %v379 = vld [vmem:[%s335 + $0x100] sm:$0xff]
      %v380 = vld [vmem:[%s335 + $0x108] sm:$0xff]
      %v381 = vld [vmem:[%s335 + $0x110] sm:$0xff]
      %v382 = vld [vmem:[%s335 + $0x118] sm:$0xff]
      %v383 = vpack.c.bf16 %v348, %v347
      %v384 = vpack.c.bf16 %v350, %v349
      %v385 = vpack.c.bf16 %v352, %v351
      %v386 = vpack.c.bf16 %v354, %v353
      %v387 = vpack.c.bf16 %v356, %v355
      %v388 = vpack.c.bf16 %v358, %v357
      %v389 = vpack.c.bf16 %v360, %v359
      %v390 = vpack.c.bf16 %v362, %v361
      %v391 = vpack.c.bf16 %v364, %v363
      %v392 = vpack.c.bf16 %v366, %v365
      %v393 = vpack.c.bf16 %v368, %v367
      %v394 = vpack.c.bf16 %v370, %v369
      %v395 = vpack.c.bf16 %v372, %v371
      %v396 = vpack.c.bf16 %v374, %v373
      %v397 = vpack.c.bf16 %v376, %v375
      %v398 = vpack.c.bf16 %v378, %v377
      %v399 = vpack.c.bf16 %v380, %v379
      %v400 = vpack.c.bf16 %v382, %v381
      %v401 = vld [vmem:[%s1] sm:$0xf]
      %vm402 = vcmask 64512
      %v404 = vsel %vm402, %v383, 0
      %v407 = vsel %vm402, %v384, 0
      %v410 = vsel %vm402, %v385, 0
      %v413 = vsel %vm402, %v386, 0
      %v416 = vsel %vm402, %v387, 0
      %v419 = vsel %vm402, %v388, 0
      %v422 = vsel %vm402, %v389, 0
      %v425 = vsel %vm402, %v390, 0
      %v428 = vsel %vm402, %v391, 0
      %v431 = vsel %vm402, %v392, 0
      %v434 = vsel %vm402, %v393, 0
      %v437 = vsel %vm402, %v394, 0
      %v440 = vsel %vm402, %v395, 0
      %v443 = vsel %vm402, %v396, 0
      %v446 = vsel %vm402, %v397, 0
      %v449 = vsel %vm402, %v398, 0
      %v452 = vsel %vm402, %v399, 0
      %v455 = vsel %vm402, %v400, 0
      %vm457 = vcmask 1043456
      %v459 = vsel %vm457, %v401, 0
      %461 = vmatpush.bf16.msra.mxu0 0
      %462 = vmatpush.bf16.msra.mxu0 0
      %463 = vmatpush.bf16.msra.mxu0 0
      %464 = vmatpush.bf16.msra.mxu0 0
      %465 = vmatpush.bf16.msra.mxu0 0
      %466 = vmatpush.bf16.msra.mxu0 0
      %467 = vmatpush.bf16.msra.mxu0 0
      %468 = vmatpush.bf16.msra.mxu0 %v459
      %469 = vmatmul.bf16.gmra.mxu0 %v404
      %v470 = vpop.f32.mrf.mxu0
      %v471 = vadd.f32 0.0, %v470
      %v472 = vpop.f32.mrf.mxu0
      %v473 = vadd.f32 0.0, %v472
      %474 = vmatmul.bf16.gmra.mxu0 %v407
      %v475 = vpop.f32.mrf.mxu0
      %v476 = vadd.f32 0.0, %v475
      %v477 = vpop.f32.mrf.mxu0
      %v478 = vadd.f32 0.0, %v477
      %479 = vmatmul.bf16.gmra.mxu0 %v410
      %v480 = vpop.f32.mrf.mxu0
      %v481 = vadd.f32 0.0, %v480
      %v482 = vpop.f32.mrf.mxu0
      %v483 = vadd.f32 0.0, %v482
      %484 = vmatmul.bf16.gmra.mxu0 %v413
      %v485 = vpop.f32.mrf.mxu0
      %v486 = vadd.f32 0.0, %v485
      %v487 = vpop.f32.mrf.mxu0
      %v488 = vadd.f32 0.0, %v487
      %489 = vmatmul.bf16.gmra.mxu0 %v416
      %v490 = vpop.f32.mrf.mxu0
      %v491 = vadd.f32 0.0, %v490
      %v492 = vpop.f32.mrf.mxu0
      %v493 = vadd.f32 0.0, %v492
      %494 = vmatmul.bf16.gmra.mxu0 %v419
      %v495 = vpop.f32.mrf.mxu0
      %v496 = vadd.f32 0.0, %v495
      %v497 = vpop.f32.mrf.mxu0
      %v498 = vadd.f32 0.0, %v497
      %499 = vmatmul.bf16.gmra.mxu0 %v422
      %v500 = vpop.f32.mrf.mxu0
      %v501 = vadd.f32 0.0, %v500
      %v502 = vpop.f32.mrf.mxu0
      %v503 = vadd.f32 0.0, %v502
      %504 = vmatmul.bf16.gmra.mxu0 %v425
      %v505 = vpop.f32.mrf.mxu0
      %v506 = vadd.f32 0.0, %v505
      %v507 = vpop.f32.mrf.mxu0
      %v508 = vadd.f32 0.0, %v507
      %509 = vmatmul.bf16.gmra.mxu0 %v428
      %v510 = vpop.f32.mrf.mxu0
      %v511 = vadd.f32 0.0, %v510
      %v512 = vpop.f32.mrf.mxu0
      %v513 = vadd.f32 0.0, %v512
      %514 = vmatmul.bf16.gmra.mxu0 %v431
      %v515 = vpop.f32.mrf.mxu0
      %v516 = vadd.f32 0.0, %v515
      %v517 = vpop.f32.mrf.mxu0
      %v518 = vadd.f32 0.0, %v517
      %519 = vmatmul.bf16.gmra.mxu0 %v434
      %v520 = vpop.f32.mrf.mxu0
      %v521 = vadd.f32 0.0, %v520
      %v522 = vpop.f32.mrf.mxu0
      %v523 = vadd.f32 0.0, %v522
      %524 = vmatmul.bf16.gmra.mxu0 %v437
      %v525 = vpop.f32.mrf.mxu0
      %v526 = vadd.f32 0.0, %v525
      %v527 = vpop.f32.mrf.mxu0
      %v528 = vadd.f32 0.0, %v527
      %529 = vmatmul.bf16.gmra.mxu0 %v440
      %v530 = vpop.f32.mrf.mxu0
      %v531 = vadd.f32 0.0, %v530
      %v532 = vpop.f32.mrf.mxu0
      %v533 = vadd.f32 0.0, %v532
      %534 = vmatmul.bf16.gmra.mxu0 %v443
      %v535 = vpop.f32.mrf.mxu0
      %v536 = vadd.f32 0.0, %v535
      %v537 = vpop.f32.mrf.mxu0
      %v538 = vadd.f32 0.0, %v537
      %539 = vmatmul.bf16.gmra.mxu0 %v446
      %v540 = vpop.f32.mrf.mxu0
      %v541 = vadd.f32 0.0, %v540
      %v542 = vpop.f32.mrf.mxu0
      %v543 = vadd.f32 0.0, %v542
      %544 = vmatmul.bf16.gmra.mxu0 %v449
      %v545 = vpop.f32.mrf.mxu0
      %v546 = vadd.f32 0.0, %v545
      %v547 = vpop.f32.mrf.mxu0
      %v548 = vadd.f32 0.0, %v547
      %549 = vmatmul.bf16.gmra.mxu0 %v452
      %v550 = vpop.f32.mrf.mxu0
      %v551 = vadd.f32 0.0, %v550
      %v552 = vpop.f32.mrf.mxu0
      %v553 = vadd.f32 0.0, %v552
      %554 = vmatmul.bf16.gmra.mxu0 %v455
      %v555 = vpop.f32.mrf.mxu0
      %v556 = vadd.f32 0.0, %v555
      %v557 = vpop.f32.mrf.mxu0
      %v558 = vadd.f32 0.0, %v557
      %559 = vdwg.mxu0
      %560 = vst [vmem:[#allocation3] sm:$0xff] %v471
      %561 = vst [vmem:[#allocation3 + $0x8] sm:$0xff] %v473
      %562 = vst [vmem:[#allocation3 + $0x10] sm:$0xff] %v476
      %563 = vst [vmem:[#allocation3 + $0x18] sm:$0xff] %v478
      %564 = vst [vmem:[#allocation3 + $0x20] sm:$0xff] %v481
      %565 = vst [vmem:[#allocation3 + $0x28] sm:$0xff] %v483
      %566 = vst [vmem:[#allocation3 + $0x30] sm:$0xff] %v486
      %567 = vst [vmem:[#allocation3 + $0x38] sm:$0xff] %v488
      %568 = vst [vmem:[#allocation3 + $0x40] sm:$0xff] %v491
      %569 = vst [vmem:[#allocation3 + $0x48] sm:$0xff] %v493
      %570 = vst [vmem:[#allocation3 + $0x50] sm:$0xff] %v496
      %571 = vst [vmem:[#allocation3 + $0x58] sm:$0xff] %v498
      %572 = vst [vmem:[#allocation3 + $0x60] sm:$0xff] %v501
      %573 = vst [vmem:[#allocation3 + $0x68] sm:$0xff] %v503
      %574 = vst [vmem:[#allocation3 + $0x70] sm:$0xff] %v506
      %575 = vst [vmem:[#allocation3 + $0x78] sm:$0xff] %v508
      %576 = vst [vmem:[#allocation3 + $0x80] sm:$0xff] %v511
      %577 = vst [vmem:[#allocation3 + $0x88] sm:$0xff] %v513
      %578 = vst [vmem:[#allocation3 + $0x90] sm:$0xff] %v516
      %579 = vst [vmem:[#allocation3 + $0x98] sm:$0xff] %v518
      %580 = vst [vmem:[#allocation3 + $0xa0] sm:$0xff] %v521
      %581 = vst [vmem:[#allocation3 + $0xa8] sm:$0xff] %v523
      %582 = vst [vmem:[#allocation3 + $0xb0] sm:$0xff] %v526
      %583 = vst [vmem:[#allocation3 + $0xb8] sm:$0xff] %v528
      %584 = vst [vmem:[#allocation3 + $0xc0] sm:$0xff] %v531
      %585 = vst [vmem:[#allocation3 + $0xc8] sm:$0xff] %v533
      %586 = vst [vmem:[#allocation3 + $0xd0] sm:$0xff] %v536
      %587 = vst [vmem:[#allocation3 + $0xd8] sm:$0xff] %v538
      %588 = vst [vmem:[#allocation3 + $0xe0] sm:$0xff] %v541
      %589 = vst [vmem:[#allocation3 + $0xe8] sm:$0xff] %v543
      %590 = vst [vmem:[#allocation3 + $0xf0] sm:$0xff] %v546
      %591 = vst [vmem:[#allocation3 + $0xf8] sm:$0xff] %v548
      %592 = vst [vmem:[#allocation3 + $0x100] sm:$0xff] %v551
      %593 = vst [vmem:[#allocation3 + $0x108] sm:$0xff] %v553
      %594 = vst [vmem:[#allocation3 + $0x110] sm:$0xff] %v556
      %595 = vst [vmem:[#allocation3 + $0x118] sm:$0xff] %v558
      %v596 = vld [vmem:[%s335 + $0x1] sm:$0xff]
      %v597 = vld [vmem:[%s335 + $0x9] sm:$0xff]
      %v598 = vld [vmem:[%s335 + $0x11] sm:$0xff]
      %v599 = vld [vmem:[%s335 + $0x19] sm:$0xff]
      %v600 = vld [vmem:[%s335 + $0x21] sm:$0xff]
      %v601 = vld [vmem:[%s335 + $0x29] sm:$0xff]
      %v602 = vld [vmem:[%s335 + $0x31] sm:$0xff]
      %v603 = vld [vmem:[%s335 + $0x39] sm:$0xff]
      %v604 = vld [vmem:[%s335 + $0x41] sm:$0xff]
      %v605 = vld [vmem:[%s335 + $0x49] sm:$0xff]
      %v606 = vld [vmem:[%s335 + $0x51] sm:$0xff]
      %v607 = vld [vmem:[%s335 + $0x59] sm:$0xff]
      %v608 = vld [vmem:[%s335 + $0x61] sm:$0xff]
      %v609 = vld [vmem:[%s335 + $0x69] sm:$0xff]
      %v610 = vld [vmem:[%s335 + $0x71] sm:$0xff]
      %v611 = vld [vmem:[%s335 + $0x79] sm:$0xff]
      %v612 = vld [vmem:[%s335 + $0x81] sm:$0xff]
      %v613 = vld [vmem:[%s335 + $0x89] sm:$0xff]
      %v614 = vld [vmem:[%s335 + $0x91] sm:$0xff]
      %v615 = vld [vmem:[%s335 + $0x99] sm:$0xff]
      %v616 = vld [vmem:[%s335 + $0xa1] sm:$0xff]
      %v617 = vld [vmem:[%s335 + $0xa9] sm:$0xff]
      %v618 = vld [vmem:[%s335 + $0xb1] sm:$0xff]
      %v619 = vld [vmem:[%s335 + $0xb9] sm:$0xff]
      %v620 = vld [vmem:[%s335 + $0xc1] sm:$0xff]
      %v621 = vld [vmem:[%s335 + $0xc9] sm:$0xff]
      %v622 = vld [vmem:[%s335 + $0xd1] sm:$0xff]
      %v623 = vld [vmem:[%s335 + $0xd9] sm:$0xff]
      %v624 = vld [vmem:[%s335 + $0xe1] sm:$0xff]
      %v625 = vld [vmem:[%s335 + $0xe9] sm:$0xff]
      %v626 = vld [vmem:[%s335 + $0xf1] sm:$0xff]
      %v627 = vld [vmem:[%s335 + $0xf9] sm:$0xff]
      %v628 = vld [vmem:[%s335 + $0x101] sm:$0xff]
      %v629 = vld [vmem:[%s335 + $0x109] sm:$0xff]
      %v630 = vld [vmem:[%s335 + $0x111] sm:$0xff]
      %v631 = vld [vmem:[%s335 + $0x119] sm:$0xff]
      %v632 = vpack.c.bf16 %v597, %v596
      %v633 = vpack.c.bf16 %v599, %v598
      %v634 = vpack.c.bf16 %v601, %v600
      %v635 = vpack.c.bf16 %v603, %v602
      %v636 = vpack.c.bf16 %v605, %v604
      %v637 = vpack.c.bf16 %v607, %v606
      %v638 = vpack.c.bf16 %v609, %v608
      %v639 = vpack.c.bf16 %v611, %v610
      %v640 = vpack.c.bf16 %v613, %v612
      %v641 = vpack.c.bf16 %v615, %v614
      %v642 = vpack.c.bf16 %v617, %v616
      %v643 = vpack.c.bf16 %v619, %v618
      %v644 = vpack.c.bf16 %v621, %v620
      %v645 = vpack.c.bf16 %v623, %v622
      %v646 = vpack.c.bf16 %v625, %v624
      %v647 = vpack.c.bf16 %v627, %v626
      %v648 = vpack.c.bf16 %v629, %v628
      %v649 = vpack.c.bf16 %v631, %v630
      %s650 = scalar_lea.vmem %s1, 4
      %v651 = vld [vmem:[%s650] sm:$0xf]
      %v653 = vsel %vm402, %v632, 0
      %v656 = vsel %vm402, %v633, 0
      %v659 = vsel %vm402, %v634, 0
      %v662 = vsel %vm402, %v635, 0
      %v665 = vsel %vm402, %v636, 0
      %v668 = vsel %vm402, %v637, 0
      %v671 = vsel %vm402, %v638, 0
      %v674 = vsel %vm402, %v639, 0
      %v677 = vsel %vm402, %v640, 0
      %v680 = vsel %vm402, %v641, 0
      %v683 = vsel %vm402, %v642, 0
      %v686 = vsel %vm402, %v643, 0
      %v689 = vsel %vm402, %v644, 0
      %v692 = vsel %vm402, %v645, 0
      %v695 = vsel %vm402, %v646, 0
      %v698 = vsel %vm402, %v647, 0
      %v701 = vsel %vm402, %v648, 0
      %v704 = vsel %vm402, %v649, 0
      %v707 = vsel %vm457, %v651, 0
      %709 = vmatpush.bf16.msra.mxu0 0
      %710 = vmatpush.bf16.msra.mxu0 0
      %711 = vmatpush.bf16.msra.mxu0 0
      %712 = vmatpush.bf16.msra.mxu0 0
      %713 = vmatpush.bf16.msra.mxu0 0
      %714 = vmatpush.bf16.msra.mxu0 0
      %715 = vmatpush.bf16.msra.mxu0 0
      %716 = vmatpush.bf16.msra.mxu0 %v707
      %717 = vmatmul.bf16.gmra.mxu0 %v653
      %v718 = vpop.f32.mrf.mxu0
      %v719 = vadd.f32 0.0, %v718
      %v720 = vpop.f32.mrf.mxu0
      %v721 = vadd.f32 0.0, %v720
      %722 = vmatmul.bf16.gmra.mxu0 %v656
      %v723 = vpop.f32.mrf.mxu0
      %v724 = vadd.f32 0.0, %v723
      %v725 = vpop.f32.mrf.mxu0
      %v726 = vadd.f32 0.0, %v725
      %727 = vmatmul.bf16.gmra.mxu0 %v659
      %v728 = vpop.f32.mrf.mxu0
      %v729 = vadd.f32 0.0, %v728
      %v730 = vpop.f32.mrf.mxu0
      %v731 = vadd.f32 0.0, %v730
      %732 = vmatmul.bf16.gmra.mxu0 %v662
      %v733 = vpop.f32.mrf.mxu0
      %v734 = vadd.f32 0.0, %v733
      %v735 = vpop.f32.mrf.mxu0
      %v736 = vadd.f32 0.0, %v735
      %737 = vmatmul.bf16.gmra.mxu0 %v665
      %v738 = vpop.f32.mrf.mxu0
      %v739 = vadd.f32 0.0, %v738
      %v740 = vpop.f32.mrf.mxu0
      %v741 = vadd.f32 0.0, %v740
      %742 = vmatmul.bf16.gmra.mxu0 %v668
      %v743 = vpop.f32.mrf.mxu0
      %v744 = vadd.f32 0.0, %v743
      %v745 = vpop.f32.mrf.mxu0
      %v746 = vadd.f32 0.0, %v745
      %747 = vmatmul.bf16.gmra.mxu0 %v671
      %v748 = vpop.f32.mrf.mxu0
      %v749 = vadd.f32 0.0, %v748
      %v750 = vpop.f32.mrf.mxu0
      %v751 = vadd.f32 0.0, %v750
      %752 = vmatmul.bf16.gmra.mxu0 %v674
      %v753 = vpop.f32.mrf.mxu0
      %v754 = vadd.f32 0.0, %v753
      %v755 = vpop.f32.mrf.mxu0
      %v756 = vadd.f32 0.0, %v755
      %757 = vmatmul.bf16.gmra.mxu0 %v677
      %v758 = vpop.f32.mrf.mxu0
      %v759 = vadd.f32 0.0, %v758
      %v760 = vpop.f32.mrf.mxu0
      %v761 = vadd.f32 0.0, %v760
      %762 = vmatmul.bf16.gmra.mxu0 %v680
      %v763 = vpop.f32.mrf.mxu0
      %v764 = vadd.f32 0.0, %v763
      %v765 = vpop.f32.mrf.mxu0
      %v766 = vadd.f32 0.0, %v765
      %767 = vmatmul.bf16.gmra.mxu0 %v683
      %v768 = vpop.f32.mrf.mxu0
      %v769 = vadd.f32 0.0, %v768
      %v770 = vpop.f32.mrf.mxu0
      %v771 = vadd.f32 0.0, %v770
      %772 = vmatmul.bf16.gmra.mxu0 %v686
      %v773 = vpop.f32.mrf.mxu0
      %v774 = vadd.f32 0.0, %v773
      %v775 = vpop.f32.mrf.mxu0
      %v776 = vadd.f32 0.0, %v775
      %777 = vmatmul.bf16.gmra.mxu0 %v689
      %v778 = vpop.f32.mrf.mxu0
      %v779 = vadd.f32 0.0, %v778
      %v780 = vpop.f32.mrf.mxu0
      %v781 = vadd.f32 0.0, %v780
      %782 = vmatmul.bf16.gmra.mxu0 %v692
      %v783 = vpop.f32.mrf.mxu0
      %v784 = vadd.f32 0.0, %v783
      %v785 = vpop.f32.mrf.mxu0
      %v786 = vadd.f32 0.0, %v785
      %787 = vmatmul.bf16.gmra.mxu0 %v695
      %v788 = vpop.f32.mrf.mxu0
      %v789 = vadd.f32 0.0, %v788
      %v790 = vpop.f32.mrf.mxu0
      %v791 = vadd.f32 0.0, %v790
      %792 = vmatmul.bf16.gmra.mxu0 %v698
      %v793 = vpop.f32.mrf.mxu0
      %v794 = vadd.f32 0.0, %v793
      %v795 = vpop.f32.mrf.mxu0
      %v796 = vadd.f32 0.0, %v795
      %797 = vmatmul.bf16.gmra.mxu0 %v701
      %v798 = vpop.f32.mrf.mxu0
      %v799 = vadd.f32 0.0, %v798
      %v800 = vpop.f32.mrf.mxu0
      %v801 = vadd.f32 0.0, %v800
      %802 = vmatmul.bf16.gmra.mxu0 %v704
      %v803 = vpop.f32.mrf.mxu0
      %v804 = vadd.f32 0.0, %v803
      %v805 = vpop.f32.mrf.mxu0
      %v806 = vadd.f32 0.0, %v805
      %807 = vdwg.mxu0
      %v808 = vld [vmem:[#allocation3] sm:$0xff]
      %v809 = vld [vmem:[#allocation3 + $0x8] sm:$0xff]
      %v810 = vld [vmem:[#allocation3 + $0x10] sm:$0xff]
      %v811 = vld [vmem:[#allocation3 + $0x18] sm:$0xff]
      %v812 = vld [vmem:[#allocation3 + $0x20] sm:$0xff]
      %v813 = vld [vmem:[#allocation3 + $0x28] sm:$0xff]
      %v814 = vld [vmem:[#allocation3 + $0x30] sm:$0xff]
      %v815 = vld [vmem:[#allocation3 + $0x38] sm:$0xff]
      %v816 = vld [vmem:[#allocation3 + $0x40] sm:$0xff]
      %v817 = vld [vmem:[#allocation3 + $0x48] sm:$0xff]
      %v818 = vld [vmem:[#allocation3 + $0x50] sm:$0xff]
      %v819 = vld [vmem:[#allocation3 + $0x58] sm:$0xff]
      %v820 = vld [vmem:[#allocation3 + $0x60] sm:$0xff]
      %v821 = vld [vmem:[#allocation3 + $0x68] sm:$0xff]
      %v822 = vld [vmem:[#allocation3 + $0x70] sm:$0xff]
      %v823 = vld [vmem:[#allocation3 + $0x78] sm:$0xff]
      %v824 = vld [vmem:[#allocation3 + $0x80] sm:$0xff]
      %v825 = vld [vmem:[#allocation3 + $0x88] sm:$0xff]
      %v826 = vld [vmem:[#allocation3 + $0x90] sm:$0xff]
      %v827 = vld [vmem:[#allocation3 + $0x98] sm:$0xff]
      %v828 = vld [vmem:[#allocation3 + $0xa0] sm:$0xff]
      %v829 = vld [vmem:[#allocation3 + $0xa8] sm:$0xff]
      %v830 = vld [vmem:[#allocation3 + $0xb0] sm:$0xff]
      %v831 = vld [vmem:[#allocation3 + $0xb8] sm:$0xff]
      %v832 = vld [vmem:[#allocation3 + $0xc0] sm:$0xff]
      %v833 = vld [vmem:[#allocation3 + $0xc8] sm:$0xff]
      %v834 = vld [vmem:[#allocation3 + $0xd0] sm:$0xff]
      %v835 = vld [vmem:[#allocation3 + $0xd8] sm:$0xff]
      %v836 = vld [vmem:[#allocation3 + $0xe0] sm:$0xff]
      %v837 = vld [vmem:[#allocation3 + $0xe8] sm:$0xff]
      %v838 = vld [vmem:[#allocation3 + $0xf0] sm:$0xff]
      %v839 = vld [vmem:[#allocation3 + $0xf8] sm:$0xff]
      %v840 = vld [vmem:[#allocation3 + $0x100] sm:$0xff]
      %v841 = vld [vmem:[#allocation3 + $0x108] sm:$0xff]
      %v842 = vld [vmem:[#allocation3 + $0x110] sm:$0xff]
      %v843 = vld [vmem:[#allocation3 + $0x118] sm:$0xff]
      %v844 = vadd.f32 %v808, %v719
      %v845 = vadd.f32 %v809, %v721
      %v846 = vadd.f32 %v810, %v724
      %v847 = vadd.f32 %v811, %v726
      %v848 = vadd.f32 %v812, %v729
      %v849 = vadd.f32 %v813, %v731
      %v850 = vadd.f32 %v814, %v734
      %v851 = vadd.f32 %v815, %v736
      %v852 = vadd.f32 %v816, %v739
      %v853 = vadd.f32 %v817, %v741
      %v854 = vadd.f32 %v818, %v744
      %v855 = vadd.f32 %v819, %v746
      %v856 = vadd.f32 %v820, %v749
      %v857 = vadd.f32 %v821, %v751
      %v858 = vadd.f32 %v822, %v754
      %v859 = vadd.f32 %v823, %v756
      %v860 = vadd.f32 %v824, %v759
      %v861 = vadd.f32 %v825, %v761
      %v862 = vadd.f32 %v826, %v764
      %v863 = vadd.f32 %v827, %v766
      %v864 = vadd.f32 %v828, %v769
      %v865 = vadd.f32 %v829, %v771
      %v866 = vadd.f32 %v830, %v774
      %v867 = vadd.f32 %v831, %v776
      %v868 = vadd.f32 %v832, %v779
      %v869 = vadd.f32 %v833, %v781
      %v870 = vadd.f32 %v834, %v784
      %v871 = vadd.f32 %v835, %v786
      %v872 = vadd.f32 %v836, %v789
      %v873 = vadd.f32 %v837, %v791
      %v874 = vadd.f32 %v838, %v794
      %v875 = vadd.f32 %v839, %v796
      %v876 = vadd.f32 %v840, %v799
      %v877 = vadd.f32 %v841, %v801
      %v878 = vadd.f32 %v842, %v804
      %v879 = vadd.f32 %v843, %v806
      %880 = vst [vmem:[#allocation3] sm:$0xff] %v844
      %881 = vst [vmem:[#allocation3 + $0x8] sm:$0xff] %v845
      %882 = vst [vmem:[#allocation3 + $0x10] sm:$0xff] %v846
      %883 = vst [vmem:[#allocation3 + $0x18] sm:$0xff] %v847
      %884 = vst [vmem:[#allocation3 + $0x20] sm:$0xff] %v848
      %885 = vst [vmem:[#allocation3 + $0x28] sm:$0xff] %v849
      %886 = vst [vmem:[#allocation3 + $0x30] sm:$0xff] %v850
      %887 = vst [vmem:[#allocation3 + $0x38] sm:$0xff] %v851
      %888 = vst [vmem:[#allocation3 + $0x40] sm:$0xff] %v852
      %889 = vst [vmem:[#allocation3 + $0x48] sm:$0xff] %v853
      %890 = vst [vmem:[#allocation3 + $0x50] sm:$0xff] %v854
      %891 = vst [vmem:[#allocation3 + $0x58] sm:$0xff] %v855
      %892 = vst [vmem:[#allocation3 + $0x60] sm:$0xff] %v856
      %893 = vst [vmem:[#allocation3 + $0x68] sm:$0xff] %v857
      %894 = vst [vmem:[#allocation3 + $0x70] sm:$0xff] %v858
      %895 = vst [vmem:[#allocation3 + $0x78] sm:$0xff] %v859
      %896 = vst [vmem:[#allocation3 + $0x80] sm:$0xff] %v860
      %897 = vst [vmem:[#allocation3 + $0x88] sm:$0xff] %v861
      %898 = vst [vmem:[#allocation3 + $0x90] sm:$0xff] %v862
      %899 = vst [vmem:[#allocation3 + $0x98] sm:$0xff] %v863
      %900 = vst [vmem:[#allocation3 + $0xa0] sm:$0xff] %v864
      %901 = vst [vmem:[#allocation3 + $0xa8] sm:$0xff] %v865
      %902 = vst [vmem:[#allocation3 + $0xb0] sm:$0xff] %v866
      %903 = vst [vmem:[#allocation3 + $0xb8] sm:$0xff] %v867
      %904 = vst [vmem:[#allocation3 + $0xc0] sm:$0xff] %v868
      %905 = vst [vmem:[#allocation3 + $0xc8] sm:$0xff] %v869
      %906 = vst [vmem:[#allocation3 + $0xd0] sm:$0xff] %v870
      %907 = vst [vmem:[#allocation3 + $0xd8] sm:$0xff] %v871
      %908 = vst [vmem:[#allocation3 + $0xe0] sm:$0xff] %v872
      %909 = vst [vmem:[#allocation3 + $0xe8] sm:$0xff] %v873
      %910 = vst [vmem:[#allocation3 + $0xf0] sm:$0xff] %v874
      %911 = vst [vmem:[#allocation3 + $0xf8] sm:$0xff] %v875
      %912 = vst [vmem:[#allocation3 + $0x100] sm:$0xff] %v876
      %913 = vst [vmem:[#allocation3 + $0x108] sm:$0xff] %v877
      %914 = vst [vmem:[#allocation3 + $0x110] sm:$0xff] %v878
      %915 = vst [vmem:[#allocation3 + $0x118] sm:$0xff] %v879
      %v916 = vld [vmem:[%s335 + $0x2] sm:$0xff]
      %v917 = vld [vmem:[%s335 + $0xa] sm:$0xff]
      %v918 = vld [vmem:[%s335 + $0x12] sm:$0xff]
      %v919 = vld [vmem:[%s335 + $0x1a] sm:$0xff]
      %v920 = vld [vmem:[%s335 + $0x22] sm:$0xff]
      %v921 = vld [vmem:[%s335 + $0x2a] sm:$0xff]
      %v922 = vld [vmem:[%s335 + $0x32] sm:$0xff]
      %v923 = vld [vmem:[%s335 + $0x3a] sm:$0xff]
      %v924 = vld [vmem:[%s335 + $0x42] sm:$0xff]
      %v925 = vld [vmem:[%s335 + $0x4a] sm:$0xff]
      %v926 = vld [vmem:[%s335 + $0x52] sm:$0xff]
      %v927 = vld [vmem:[%s335 + $0x5a] sm:$0xff]
      %v928 = vld [vmem:[%s335 + $0x62] sm:$0xff]
      %v929 = vld [vmem:[%s335 + $0x6a] sm:$0xff]
      %v930 = vld [vmem:[%s335 + $0x72] sm:$0xff]
      %v931 = vld [vmem:[%s335 + $0x7a] sm:$0xff]
      %v932 = vld [vmem:[%s335 + $0x82] sm:$0xff]
      %v933 = vld [vmem:[%s335 + $0x8a] sm:$0xff]
      %v934 = vld [vmem:[%s335 + $0x92] sm:$0xff]
      %v935 = vld [vmem:[%s335 + $0x9a] sm:$0xff]
      %v936 = vld [vmem:[%s335 + $0xa2] sm:$0xff]
      %v937 = vld [vmem:[%s335 + $0xaa] sm:$0xff]
      %v938 = vld [vmem:[%s335 + $0xb2] sm:$0xff]
      %v939 = vld [vmem:[%s335 + $0xba] sm:$0xff]
      %v940 = vld [vmem:[%s335 + $0xc2] sm:$0xff]
      %v941 = vld [vmem:[%s335 + $0xca] sm:$0xff]
      %v942 = vld [vmem:[%s335 + $0xd2] sm:$0xff]
      %v943 = vld [vmem:[%s335 + $0xda] sm:$0xff]
      %v944 = vld [vmem:[%s335 + $0xe2] sm:$0xff]
      %v945 = vld [vmem:[%s335 + $0xea] sm:$0xff]
      %v946 = vld [vmem:[%s335 + $0xf2] sm:$0xff]
      %v947 = vld [vmem:[%s335 + $0xfa] sm:$0xff]
      %v948 = vld [vmem:[%s335 + $0x102] sm:$0xff]
      %v949 = vld [vmem:[%s335 + $0x10a] sm:$0xff]
      %v950 = vld [vmem:[%s335 + $0x112] sm:$0xff]
      %v951 = vld [vmem:[%s335 + $0x11a] sm:$0xff]
      %v952 = vpack.c.bf16 %v917, %v916
      %v953 = vpack.c.bf16 %v919, %v918
      %v954 = vpack.c.bf16 %v921, %v920
      %v955 = vpack.c.bf16 %v923, %v922
      %v956 = vpack.c.bf16 %v925, %v924
      %v957 = vpack.c.bf16 %v927, %v926
      %v958 = vpack.c.bf16 %v929, %v928
      %v959 = vpack.c.bf16 %v931, %v930
      %v960 = vpack.c.bf16 %v933, %v932
      %v961 = vpack.c.bf16 %v935, %v934
      %v962 = vpack.c.bf16 %v937, %v936
      %v963 = vpack.c.bf16 %v939, %v938
      %v964 = vpack.c.bf16 %v941, %v940
      %v965 = vpack.c.bf16 %v943, %v942
      %v966 = vpack.c.bf16 %v945, %v944
      %v967 = vpack.c.bf16 %v947, %v946
      %v968 = vpack.c.bf16 %v949, %v948
      %v969 = vpack.c.bf16 %v951, %v950
      %s970 = scalar_lea.vmem %s1, 8
      %v971 = vld [vmem:[%s970] sm:$0xf]
      %v973 = vsel %vm402, %v952, 0
      %v976 = vsel %vm402, %v953, 0
      %v979 = vsel %vm402, %v954, 0
      %v982 = vsel %vm402, %v955, 0
      %v985 = vsel %vm402, %v956, 0
      %v988 = vsel %vm402, %v957, 0
      %v991 = vsel %vm402, %v958, 0
      %v994 = vsel %vm402, %v959, 0
      %v997 = vsel %vm402, %v960, 0
      %v1000 = vsel %vm402, %v961, 0
      %v1003 = vsel %vm402, %v962, 0
      %v1006 = vsel %vm402, %v963, 0
      %v1009 = vsel %vm402, %v964, 0
      %v1012 = vsel %vm402, %v965, 0
      %v1015 = vsel %vm402, %v966, 0
      %v1018 = vsel %vm402, %v967, 0
      %v1021 = vsel %vm402, %v968, 0
      %v1024 = vsel %vm402, %v969, 0
      %v1027 = vsel %vm457, %v971, 0
      %1029 = vmatpush.bf16.msra.mxu0 0
      %1030 = vmatpush.bf16.msra.mxu0 0
      %1031 = vmatpush.bf16.msra.mxu0 0
      %1032 = vmatpush.bf16.msra.mxu0 0
      %1033 = vmatpush.bf16.msra.mxu0 0
      %1034 = vmatpush.bf16.msra.mxu0 0
      %1035 = vmatpush.bf16.msra.mxu0 0
      %1036 = vmatpush.bf16.msra.mxu0 %v1027
      %1037 = vmatmul.bf16.gmra.mxu0 %v973
      %v1038 = vpop.f32.mrf.mxu0
      %v1039 = vadd.f32 0.0, %v1038
      %v1040 = vpop.f32.mrf.mxu0
      %v1041 = vadd.f32 0.0, %v1040
      %1042 = vmatmul.bf16.gmra.mxu0 %v976
      %v1043 = vpop.f32.mrf.mxu0
      %v1044 = vadd.f32 0.0, %v1043
      %v1045 = vpop.f32.mrf.mxu0
      %v1046 = vadd.f32 0.0, %v1045
      %1047 = vmatmul.bf16.gmra.mxu0 %v979
      %v1048 = vpop.f32.mrf.mxu0
      %v1049 = vadd.f32 0.0, %v1048
      %v1050 = vpop.f32.mrf.mxu0
      %v1051 = vadd.f32 0.0, %v1050
      %1052 = vmatmul.bf16.gmra.mxu0 %v982
      %v1053 = vpop.f32.mrf.mxu0
      %v1054 = vadd.f32 0.0, %v1053
      %v1055 = vpop.f32.mrf.mxu0
      %v1056 = vadd.f32 0.0, %v1055
      %1057 = vmatmul.bf16.gmra.mxu0 %v985
      %v1058 = vpop.f32.mrf.mxu0
      %v1059 = vadd.f32 0.0, %v1058
      %v1060 = vpop.f32.mrf.mxu0
      %v1061 = vadd.f32 0.0, %v1060
      %1062 = vmatmul.bf16.gmra.mxu0 %v988
      %v1063 = vpop.f32.mrf.mxu0
      %v1064 = vadd.f32 0.0, %v1063
      %v1065 = vpop.f32.mrf.mxu0
      %v1066 = vadd.f32 0.0, %v1065
      %1067 = vmatmul.bf16.gmra.mxu0 %v991
      %v1068 = vpop.f32.mrf.mxu0
      %v1069 = vadd.f32 0.0, %v1068
      %v1070 = vpop.f32.mrf.mxu0
      %v1071 = vadd.f32 0.0, %v1070
      %1072 = vmatmul.bf16.gmra.mxu0 %v994
      %v1073 = vpop.f32.mrf.mxu0
      %v1074 = vadd.f32 0.0, %v1073
      %v1075 = vpop.f32.mrf.mxu0
      %v1076 = vadd.f32 0.0, %v1075
      %1077 = vmatmul.bf16.gmra.mxu0 %v997
      %v1078 = vpop.f32.mrf.mxu0
      %v1079 = vadd.f32 0.0, %v1078
      %v1080 = vpop.f32.mrf.mxu0
      %v1081 = vadd.f32 0.0, %v1080
      %1082 = vmatmul.bf16.gmra.mxu0 %v1000
      %v1083 = vpop.f32.mrf.mxu0
      %v1084 = vadd.f32 0.0, %v1083
      %v1085 = vpop.f32.mrf.mxu0
      %v1086 = vadd.f32 0.0, %v1085
      %1087 = vmatmul.bf16.gmra.mxu0 %v1003
      %v1088 = vpop.f32.mrf.mxu0
      %v1089 = vadd.f32 0.0, %v1088
      %v1090 = vpop.f32.mrf.mxu0
      %v1091 = vadd.f32 0.0, %v1090
      %1092 = vmatmul.bf16.gmra.mxu0 %v1006
      %v1093 = vpop.f32.mrf.mxu0
      %v1094 = vadd.f32 0.0, %v1093
      %v1095 = vpop.f32.mrf.mxu0
      %v1096 = vadd.f32 0.0, %v1095
      %1097 = vmatmul.bf16.gmra.mxu0 %v1009
      %v1098 = vpop.f32.mrf.mxu0
      %v1099 = vadd.f32 0.0, %v1098
      %v1100 = vpop.f32.mrf.mxu0
      %v1101 = vadd.f32 0.0, %v1100
      %1102 = vmatmul.bf16.gmra.mxu0 %v1012
      %v1103 = vpop.f32.mrf.mxu0
      %v1104 = vadd.f32 0.0, %v1103
      %v1105 = vpop.f32.mrf.mxu0
      %v1106 = vadd.f32 0.0, %v1105
      %1107 = vmatmul.bf16.gmra.mxu0 %v1015
      %v1108 = vpop.f32.mrf.mxu0
      %v1109 = vadd.f32 0.0, %v1108
      %v1110 = vpop.f32.mrf.mxu0
      %v1111 = vadd.f32 0.0, %v1110
      %1112 = vmatmul.bf16.gmra.mxu0 %v1018
      %v1113 = vpop.f32.mrf.mxu0
      %v1114 = vadd.f32 0.0, %v1113
      %v1115 = vpop.f32.mrf.mxu0
      %v1116 = vadd.f32 0.0, %v1115
      %1117 = vmatmul.bf16.gmra.mxu0 %v1021
      %v1118 = vpop.f32.mrf.mxu0
      %v1119 = vadd.f32 0.0, %v1118
      %v1120 = vpop.f32.mrf.mxu0
      %v1121 = vadd.f32 0.0, %v1120
      %1122 = vmatmul.bf16.gmra.mxu0 %v1024
      %v1123 = vpop.f32.mrf.mxu0
      %v1124 = vadd.f32 0.0, %v1123
      %v1125 = vpop.f32.mrf.mxu0
      %v1126 = vadd.f32 0.0, %v1125
      %1127 = vdwg.mxu0
      %v1128 = vld [vmem:[#allocation3] sm:$0xff]
      %v1129 = vld [vmem:[#allocation3 + $0x8] sm:$0xff]
      %v1130 = vld [vmem:[#allocation3 + $0x10] sm:$0xff]
      %v1131 = vld [vmem:[#allocation3 + $0x18] sm:$0xff]
      %v1132 = vld [vmem:[#allocation3 + $0x20] sm:$0xff]
      %v1133 = vld [vmem:[#allocation3 + $0x28] sm:$0xff]
      %v1134 = vld [vmem:[#allocation3 + $0x30] sm:$0xff]
      %v1135 = vld [vmem:[#allocation3 + $0x38] sm:$0xff]
      %v1136 = vld [vmem:[#allocation3 + $0x40] sm:$0xff]
      %v1137 = vld [vmem:[#allocation3 + $0x48] sm:$0xff]
      %v1138 = vld [vmem:[#allocation3 + $0x50] sm:$0xff]
      %v1139 = vld [vmem:[#allocation3 + $0x58] sm:$0xff]
      %v1140 = vld [vmem:[#allocation3 + $0x60] sm:$0xff]
      %v1141 = vld [vmem:[#allocation3 + $0x68] sm:$0xff]
      %v1142 = vld [vmem:[#allocation3 + $0x70] sm:$0xff]
      %v1143 = vld [vmem:[#allocation3 + $0x78] sm:$0xff]
      %v1144 = vld [vmem:[#allocation3 + $0x80] sm:$0xff]
      %v1145 = vld [vmem:[#allocation3 + $0x88] sm:$0xff]
      %v1146 = vld [vmem:[#allocation3 + $0x90] sm:$0xff]
      %v1147 = vld [vmem:[#allocation3 + $0x98] sm:$0xff]
      %v1148 = vld [vmem:[#allocation3 + $0xa0] sm:$0xff]
      %v1149 = vld [vmem:[#allocation3 + $0xa8] sm:$0xff]
      %v1150 = vld [vmem:[#allocation3 + $0xb0] sm:$0xff]
      %v1151 = vld [vmem:[#allocation3 + $0xb8] sm:$0xff]
      %v1152 = vld [vmem:[#allocation3 + $0xc0] sm:$0xff]
      %v1153 = vld [vmem:[#allocation3 + $0xc8] sm:$0xff]
      %v1154 = vld [vmem:[#allocation3 + $0xd0] sm:$0xff]
      %v1155 = vld [vmem:[#allocation3 + $0xd8] sm:$0xff]
      %v1156 = vld [vmem:[#allocation3 + $0xe0] sm:$0xff]
      %v1157 = vld [vmem:[#allocation3 + $0xe8] sm:$0xff]
      %v1158 = vld [vmem:[#allocation3 + $0xf0] sm:$0xff]
      %v1159 = vld [vmem:[#allocation3 + $0xf8] sm:$0xff]
      %v1160 = vld [vmem:[#allocation3 + $0x100] sm:$0xff]
      %v1161 = vld [vmem:[#allocation3 + $0x108] sm:$0xff]
      %v1162 = vld [vmem:[#allocation3 + $0x110] sm:$0xff]
      %v1163 = vld [vmem:[#allocation3 + $0x118] sm:$0xff]
      %v1164 = vadd.f32 %v1128, %v1039
      %v1165 = vadd.f32 %v1129, %v1041
      %v1166 = vadd.f32 %v1130, %v1044
      %v1167 = vadd.f32 %v1131, %v1046
      %v1168 = vadd.f32 %v1132, %v1049
      %v1169 = vadd.f32 %v1133, %v1051
      %v1170 = vadd.f32 %v1134, %v1054
      %v1171 = vadd.f32 %v1135, %v1056
      %v1172 = vadd.f32 %v1136, %v1059
      %v1173 = vadd.f32 %v1137, %v1061
      %v1174 = vadd.f32 %v1138, %v1064
      %v1175 = vadd.f32 %v1139, %v1066
      %v1176 = vadd.f32 %v1140, %v1069
      %v1177 = vadd.f32 %v1141, %v1071
      %v1178 = vadd.f32 %v1142, %v1074
      %v1179 = vadd.f32 %v1143, %v1076
      %v1180 = vadd.f32 %v1144, %v1079
      %v1181 = vadd.f32 %v1145, %v1081
      %v1182 = vadd.f32 %v1146, %v1084
      %v1183 = vadd.f32 %v1147, %v1086
      %v1184 = vadd.f32 %v1148, %v1089
      %v1185 = vadd.f32 %v1149, %v1091
      %v1186 = vadd.f32 %v1150, %v1094
      %v1187 = vadd.f32 %v1151, %v1096
      %v1188 = vadd.f32 %v1152, %v1099
      %v1189 = vadd.f32 %v1153, %v1101
      %v1190 = vadd.f32 %v1154, %v1104
      %v1191 = vadd.f32 %v1155, %v1106
      %v1192 = vadd.f32 %v1156, %v1109
      %v1193 = vadd.f32 %v1157, %v1111
      %v1194 = vadd.f32 %v1158, %v1114
      %v1195 = vadd.f32 %v1159, %v1116
      %v1196 = vadd.f32 %v1160, %v1119
      %v1197 = vadd.f32 %v1161, %v1121
      %v1198 = vadd.f32 %v1162, %v1124
      %v1199 = vadd.f32 %v1163, %v1126
      %1200 = vst [vmem:[#allocation3] sm:$0xff] %v1164
      %1201 = vst [vmem:[#allocation3 + $0x8] sm:$0xff] %v1165
      %1202 = vst [vmem:[#allocation3 + $0x10] sm:$0xff] %v1166
      %1203 = vst [vmem:[#allocation3 + $0x18] sm:$0xff] %v1167
      %1204 = vst [vmem:[#allocation3 + $0x20] sm:$0xff] %v1168
      %1205 = vst [vmem:[#allocation3 + $0x28] sm:$0xff] %v1169
      %1206 = vst [vmem:[#allocation3 + $0x30] sm:$0xff] %v1170
      %1207 = vst [vmem:[#allocation3 + $0x38] sm:$0xff] %v1171
      %1208 = vst [vmem:[#allocation3 + $0x40] sm:$0xff] %v1172
      %1209 = vst [vmem:[#allocation3 + $0x48] sm:$0xff] %v1173
      %1210 = vst [vmem:[#allocation3 + $0x50] sm:$0xff] %v1174
      %1211 = vst [vmem:[#allocation3 + $0x58] sm:$0xff] %v1175
      %1212 = vst [vmem:[#allocation3 + $0x60] sm:$0xff] %v1176
      %1213 = vst [vmem:[#allocation3 + $0x68] sm:$0xff] %v1177
      %1214 = vst [vmem:[#allocation3 + $0x70] sm:$0xff] %v1178
      %1215 = vst [vmem:[#allocation3 + $0x78] sm:$0xff] %v1179
      %1216 = vst [vmem:[#allocation3 + $0x80] sm:$0xff] %v1180
      %1217 = vst [vmem:[#allocation3 + $0x88] sm:$0xff] %v1181
      %1218 = vst [vmem:[#allocation3 + $0x90] sm:$0xff] %v1182
      %1219 = vst [vmem:[#allocation3 + $0x98] sm:$0xff] %v1183
      %1220 = vst [vmem:[#allocation3 + $0xa0] sm:$0xff] %v1184
      %1221 = vst [vmem:[#allocation3 + $0xa8] sm:$0xff] %v1185
      %1222 = vst [vmem:[#allocation3 + $0xb0] sm:$0xff] %v1186
      %1223 = vst [vmem:[#allocation3 + $0xb8] sm:$0xff] %v1187
      %1224 = vst [vmem:[#allocation3 + $0xc0] sm:$0xff] %v1188
      %1225 = vst [vmem:[#allocation3 + $0xc8] sm:$0xff] %v1189
      %1226 = vst [vmem:[#allocation3 + $0xd0] sm:$0xff] %v1190
      %1227 = vst [vmem:[#allocation3 + $0xd8] sm:$0xff] %v1191
      %1228 = vst [vmem:[#allocation3 + $0xe0] sm:$0xff] %v1192
      %1229 = vst [vmem:[#allocation3 + $0xe8] sm:$0xff] %v1193
      %1230 = vst [vmem:[#allocation3 + $0xf0] sm:$0xff] %v1194
      %1231 = vst [vmem:[#allocation3 + $0xf8] sm:$0xff] %v1195
      %1232 = vst [vmem:[#allocation3 + $0x100] sm:$0xff] %v1196
      %1233 = vst [vmem:[#allocation3 + $0x108] sm:$0xff] %v1197
      %1234 = vst [vmem:[#allocation3 + $0x110] sm:$0xff] %v1198
      %1235 = vst [vmem:[#allocation3 + $0x118] sm:$0xff] %v1199
      %v1236 = vld [vmem:[%s335 + $0x12] sm:$0xff]
      %v1237 = vld [vmem:[%s335 + $0x1a] sm:$0xff]
      %v1238 = vld [vmem:[%s335 + $0x22] sm:$0xff]
      %v1239 = vld [vmem:[%s335 + $0x2a] sm:$0xff]
      %v1240 = vld [vmem:[%s335 + $0x32] sm:$0xff]
      %v1241 = vld [vmem:[%s335 + $0x3a] sm:$0xff]
      %v1242 = vld [vmem:[%s335 + $0x42] sm:$0xff]
      %v1243 = vld [vmem:[%s335 + $0x4a] sm:$0xff]
      %v1244 = vld [vmem:[%s335 + $0x52] sm:$0xff]
      %v1245 = vld [vmem:[%s335 + $0x5a] sm:$0xff]
      %v1246 = vld [vmem:[%s335 + $0x62] sm:$0xff]
      %v1247 = vld [vmem:[%s335 + $0x6a] sm:$0xff]
      %v1248 = vld [vmem:[%s335 + $0x72] sm:$0xff]
      %v1249 = vld [vmem:[%s335 + $0x7a] sm:$0xff]
      %v1250 = vld [vmem:[%s335 + $0x82] sm:$0xff]
      %v1251 = vld [vmem:[%s335 + $0x8a] sm:$0xff]
      %v1252 = vld [vmem:[%s335 + $0x92] sm:$0xff]
      %v1253 = vld [vmem:[%s335 + $0x9a] sm:$0xff]
      %v1254 = vld [vmem:[%s335 + $0xa2] sm:$0xff]
      %v1255 = vld [vmem:[%s335 + $0xaa] sm:$0xff]
      %v1256 = vld [vmem:[%s335 + $0xb2] sm:$0xff]
      %v1257 = vld [vmem:[%s335 + $0xba] sm:$0xff]
      %v1258 = vld [vmem:[%s335 + $0xc2] sm:$0xff]
      %v1259 = vld [vmem:[%s335 + $0xca] sm:$0xff]
      %v1260 = vld [vmem:[%s335 + $0xd2] sm:$0xff]
      %v1261 = vld [vmem:[%s335 + $0xda] sm:$0xff]
      %v1262 = vld [vmem:[%s335 + $0xe2] sm:$0xff]
      %v1263 = vld [vmem:[%s335 + $0xea] sm:$0xff]
      %v1264 = vld [vmem:[%s335 + $0xf2] sm:$0xff]
      %v1265 = vld [vmem:[%s335 + $0xfa] sm:$0xff]
      %v1266 = vld [vmem:[%s335 + $0x102] sm:$0xff]
      %v1267 = vld [vmem:[%s335 + $0x10a] sm:$0xff]
      %v1268 = vld [vmem:[%s335 + $0x112] sm:$0xff]
      %v1269 = vld [vmem:[%s335 + $0x11a] sm:$0xff]
      %v1270 = vld [vmem:[%s335 + $0x122] sm:$0xff]
      %v1271 = vld [vmem:[%s335 + $0x12a] sm:$0xff]
      %v1272 = vpack.c.bf16 %v1237, %v1236
      %v1273 = vpack.c.bf16 %v1239, %v1238
      %v1274 = vpack.c.bf16 %v1241, %v1240
      %v1275 = vpack.c.bf16 %v1243, %v1242
      %v1276 = vpack.c.bf16 %v1245, %v1244
      %v1277 = vpack.c.bf16 %v1247, %v1246
      %v1278 = vpack.c.bf16 %v1249, %v1248
      %v1279 = vpack.c.bf16 %v1251, %v1250
      %v1280 = vpack.c.bf16 %v1253, %v1252
      %v1281 = vpack.c.bf16 %v1255, %v1254
      %v1282 = vpack.c.bf16 %v1257, %v1256
      %v1283 = vpack.c.bf16 %v1259, %v1258
      %v1284 = vpack.c.bf16 %v1261, %v1260
      %v1285 = vpack.c.bf16 %v1263, %v1262
      %v1286 = vpack.c.bf16 %v1265, %v1264
      %v1287 = vpack.c.bf16 %v1267, %v1266
      %v1288 = vpack.c.bf16 %v1269, %v1268
      %v1289 = vpack.c.bf16 %v1271, %v1270
      %s1290 = scalar_lea.vmem %s1, 12
      %v1291 = vld [vmem:[%s1290] sm:$0xf]
      %v1293 = vsel %vm402, %v1272, 0
      %v1296 = vsel %vm402, %v1273, 0
      %v1299 = vsel %vm402, %v1274, 0
      %v1302 = vsel %vm402, %v1275, 0
      %v1305 = vsel %vm402, %v1276, 0
      %v1308 = vsel %vm402, %v1277, 0
      %v1311 = vsel %vm402, %v1278, 0
      %v1314 = vsel %vm402, %v1279, 0
      %v1317 = vsel %vm402, %v1280, 0
      %v1320 = vsel %vm402, %v1281, 0
      %v1323 = vsel %vm402, %v1282, 0
      %v1326 = vsel %vm402, %v1283, 0
      %v1329 = vsel %vm402, %v1284, 0
      %v1332 = vsel %vm402, %v1285, 0
      %v1335 = vsel %vm402, %v1286, 0
      %v1338 = vsel %vm402, %v1287, 0
      %v1341 = vsel %vm402, %v1288, 0
      %v1344 = vsel %vm402, %v1289, 0
      %v1347 = vsel %vm457, %v1291, 0
      %1349 = vmatpush.bf16.msra.mxu0 0
      %1350 = vmatpush.bf16.msra.mxu0 0
      %1351 = vmatpush.bf16.msra.mxu0 0
      %1352 = vmatpush.bf16.msra.mxu0 0
      %1353 = vmatpush.bf16.msra.mxu0 0
      %1354 = vmatpush.bf16.msra.mxu0 0
      %1355 = vmatpush.bf16.msra.mxu0 0
      %1356 = vmatpush.bf16.msra.mxu0 %v1347
      %1357 = vmatmul.bf16.gmra.mxu0 %v1293
      %v1358 = vpop.f32.mrf.mxu0
      %v1359 = vadd.f32 0.0, %v1358
      %v1360 = vpop.f32.mrf.mxu0
      %v1361 = vadd.f32 0.0, %v1360
      %1362 = vmatmul.bf16.gmra.mxu0 %v1296
      %v1363 = vpop.f32.mrf.mxu0
      %v1364 = vadd.f32 0.0, %v1363
      %v1365 = vpop.f32.mrf.mxu0
      %v1366 = vadd.f32 0.0, %v1365
      %1367 = vmatmul.bf16.gmra.mxu0 %v1299
      %v1368 = vpop.f32.mrf.mxu0
      %v1369 = vadd.f32 0.0, %v1368
      %v1370 = vpop.f32.mrf.mxu0
      %v1371 = vadd.f32 0.0, %v1370
      %1372 = vmatmul.bf16.gmra.mxu0 %v1302
      %v1373 = vpop.f32.mrf.mxu0
      %v1374 = vadd.f32 0.0, %v1373
      %v1375 = vpop.f32.mrf.mxu0
      %v1376 = vadd.f32 0.0, %v1375
      %1377 = vmatmul.bf16.gmra.mxu0 %v1305
      %v1378 = vpop.f32.mrf.mxu0
      %v1379 = vadd.f32 0.0, %v1378
      %v1380 = vpop.f32.mrf.mxu0
      %v1381 = vadd.f32 0.0, %v1380
      %1382 = vmatmul.bf16.gmra.mxu0 %v1308
      %v1383 = vpop.f32.mrf.mxu0
      %v1384 = vadd.f32 0.0, %v1383
      %v1385 = vpop.f32.mrf.mxu0
      %v1386 = vadd.f32 0.0, %v1385
      %1387 = vmatmul.bf16.gmra.mxu0 %v1311
      %v1388 = vpop.f32.mrf.mxu0
      %v1389 = vadd.f32 0.0, %v1388
      %v1390 = vpop.f32.mrf.mxu0
      %v1391 = vadd.f32 0.0, %v1390
      %1392 = vmatmul.bf16.gmra.mxu0 %v1314
      %v1393 = vpop.f32.mrf.mxu0
      %v1394 = vadd.f32 0.0, %v1393
      %v1395 = vpop.f32.mrf.mxu0
      %v1396 = vadd.f32 0.0, %v1395
      %1397 = vmatmul.bf16.gmra.mxu0 %v1317
      %v1398 = vpop.f32.mrf.mxu0
      %v1399 = vadd.f32 0.0, %v1398
      %v1400 = vpop.f32.mrf.mxu0
      %v1401 = vadd.f32 0.0, %v1400
      %1402 = vmatmul.bf16.gmra.mxu0 %v1320
      %v1403 = vpop.f32.mrf.mxu0
      %v1404 = vadd.f32 0.0, %v1403
      %v1405 = vpop.f32.mrf.mxu0
      %v1406 = vadd.f32 0.0, %v1405
      %1407 = vmatmul.bf16.gmra.mxu0 %v1323
      %v1408 = vpop.f32.mrf.mxu0
      %v1409 = vadd.f32 0.0, %v1408
      %v1410 = vpop.f32.mrf.mxu0
      %v1411 = vadd.f32 0.0, %v1410
      %1412 = vmatmul.bf16.gmra.mxu0 %v1326
      %v1413 = vpop.f32.mrf.mxu0
      %v1414 = vadd.f32 0.0, %v1413
      %v1415 = vpop.f32.mrf.mxu0
      %v1416 = vadd.f32 0.0, %v1415
      %1417 = vmatmul.bf16.gmra.mxu0 %v1329
      %v1418 = vpop.f32.mrf.mxu0
      %v1419 = vadd.f32 0.0, %v1418
      %v1420 = vpop.f32.mrf.mxu0
      %v1421 = vadd.f32 0.0, %v1420
      %1422 = vmatmul.bf16.gmra.mxu0 %v1332
      %v1423 = vpop.f32.mrf.mxu0
      %v1424 = vadd.f32 0.0, %v1423
      %v1425 = vpop.f32.mrf.mxu0
      %v1426 = vadd.f32 0.0, %v1425
      %1427 = vmatmul.bf16.gmra.mxu0 %v1335
      %v1428 = vpop.f32.mrf.mxu0
      %v1429 = vadd.f32 0.0, %v1428
      %v1430 = vpop.f32.mrf.mxu0
      %v1431 = vadd.f32 0.0, %v1430
      %1432 = vmatmul.bf16.gmra.mxu0 %v1338
      %v1433 = vpop.f32.mrf.mxu0
      %v1434 = vadd.f32 0.0, %v1433
      %v1435 = vpop.f32.mrf.mxu0
      %v1436 = vadd.f32 0.0, %v1435
      %1437 = vmatmul.bf16.gmra.mxu0 %v1341
      %v1438 = vpop.f32.mrf.mxu0
      %v1439 = vadd.f32 0.0, %v1438
      %v1440 = vpop.f32.mrf.mxu0
      %v1441 = vadd.f32 0.0, %v1440
      %1442 = vmatmul.bf16.gmra.mxu0 %v1344
      %v1443 = vpop.f32.mrf.mxu0
      %v1444 = vadd.f32 0.0, %v1443
      %v1445 = vpop.f32.mrf.mxu0
      %v1446 = vadd.f32 0.0, %v1445
      %1447 = vdwg.mxu0
      %v1448 = vld [vmem:[#allocation3] sm:$0xff]
      %v1449 = vld [vmem:[#allocation3 + $0x8] sm:$0xff]
      %v1450 = vld [vmem:[#allocation3 + $0x10] sm:$0xff]
      %v1451 = vld [vmem:[#allocation3 + $0x18] sm:$0xff]
      %v1452 = vld [vmem:[#allocation3 + $0x20] sm:$0xff]
      %v1453 = vld [vmem:[#allocation3 + $0x28] sm:$0xff]
      %v1454 = vld [vmem:[#allocation3 + $0x30] sm:$0xff]
      %v1455 = vld [vmem:[#allocation3 + $0x38] sm:$0xff]
      %v1456 = vld [vmem:[#allocation3 + $0x40] sm:$0xff]
      %v1457 = vld [vmem:[#allocation3 + $0x48] sm:$0xff]
      %v1458 = vld [vmem:[#allocation3 + $0x50] sm:$0xff]
      %v1459 = vld [vmem:[#allocation3 + $0x58] sm:$0xff]
      %v1460 = vld [vmem:[#allocation3 + $0x60] sm:$0xff]
      %v1461 = vld [vmem:[#allocation3 + $0x68] sm:$0xff]
      %v1462 = vld [vmem:[#allocation3 + $0x70] sm:$0xff]
      %v1463 = vld [vmem:[#allocation3 + $0x78] sm:$0xff]
      %v1464 = vld [vmem:[#allocation3 + $0x80] sm:$0xff]
      %v1465 = vld [vmem:[#allocation3 + $0x88] sm:$0xff]
      %v1466 = vld [vmem:[#allocation3 + $0x90] sm:$0xff]
      %v1467 = vld [vmem:[#allocation3 + $0x98] sm:$0xff]
      %v1468 = vld [vmem:[#allocation3 + $0xa0] sm:$0xff]
      %v1469 = vld [vmem:[#allocation3 + $0xa8] sm:$0xff]
      %v1470 = vld [vmem:[#allocation3 + $0xb0] sm:$0xff]
      %v1471 = vld [vmem:[#allocation3 + $0xb8] sm:$0xff]
      %v1472 = vld [vmem:[#allocation3 + $0xc0] sm:$0xff]
      %v1473 = vld [vmem:[#allocation3 + $0xc8] sm:$0xff]
      %v1474 = vld [vmem:[#allocation3 + $0xd0] sm:$0xff]
      %v1475 = vld [vmem:[#allocation3 + $0xd8] sm:$0xff]
      %v1476 = vld [vmem:[#allocation3 + $0xe0] sm:$0xff]
      %v1477 = vld [vmem:[#allocation3 + $0xe8] sm:$0xff]
      %v1478 = vld [vmem:[#allocation3 + $0xf0] sm:$0xff]
      %v1479 = vld [vmem:[#allocation3 + $0xf8] sm:$0xff]
      %v1480 = vld [vmem:[#allocation3 + $0x100] sm:$0xff]
      %v1481 = vld [vmem:[#allocation3 + $0x108] sm:$0xff]
      %v1482 = vld [vmem:[#allocation3 + $0x110] sm:$0xff]
      %v1483 = vld [vmem:[#allocation3 + $0x118] sm:$0xff]
      %v1484 = vadd.f32 %v1448, %v1359
      %v1485 = vadd.f32 %v1449, %v1361
      %v1486 = vadd.f32 %v1450, %v1364
      %v1487 = vadd.f32 %v1451, %v1366
      %v1488 = vadd.f32 %v1452, %v1369
      %v1489 = vadd.f32 %v1453, %v1371
      %v1490 = vadd.f32 %v1454, %v1374
      %v1491 = vadd.f32 %v1455, %v1376
      %v1492 = vadd.f32 %v1456, %v1379
      %v1493 = vadd.f32 %v1457, %v1381
      %v1494 = vadd.f32 %v1458, %v1384
      %v1495 = vadd.f32 %v1459, %v1386
      %v1496 = vadd.f32 %v1460, %v1389
      %v1497 = vadd.f32 %v1461, %v1391
      %v1498 = vadd.f32 %v1462, %v1394
      %v1499 = vadd.f32 %v1463, %v1396
      %v1500 = vadd.f32 %v1464, %v1399
      %v1501 = vadd.f32 %v1465, %v1401
      %v1502 = vadd.f32 %v1466, %v1404
      %v1503 = vadd.f32 %v1467, %v1406
      %v1504 = vadd.f32 %v1468, %v1409
      %v1505 = vadd.f32 %v1469, %v1411
      %v1506 = vadd.f32 %v1470, %v1414
      %v1507 = vadd.f32 %v1471, %v1416
      %v1508 = vadd.f32 %v1472, %v1419
      %v1509 = vadd.f32 %v1473, %v1421
      %v1510 = vadd.f32 %v1474, %v1424
      %v1511 = vadd.f32 %v1475, %v1426
      %v1512 = vadd.f32 %v1476, %v1429
      %v1513 = vadd.f32 %v1477, %v1431
      %v1514 = vadd.f32 %v1478, %v1434
      %v1515 = vadd.f32 %v1479, %v1436
      %v1516 = vadd.f32 %v1480, %v1439
      %v1517 = vadd.f32 %v1481, %v1441
      %v1518 = vadd.f32 %v1482, %v1444
      %v1519 = vadd.f32 %v1483, %v1446
      %1520 = vst [vmem:[#allocation3] sm:$0xff] %v1484
      %1521 = vst [vmem:[#allocation3 + $0x8] sm:$0xff] %v1485
      %1522 = vst [vmem:[#allocation3 + $0x10] sm:$0xff] %v1486
      %1523 = vst [vmem:[#allocation3 + $0x18] sm:$0xff] %v1487
      %1524 = vst [vmem:[#allocation3 + $0x20] sm:$0xff] %v1488
      %1525 = vst [vmem:[#allocation3 + $0x28] sm:$0xff] %v1489
      %1526 = vst [vmem:[#allocation3 + $0x30] sm:$0xff] %v1490
      %1527 = vst [vmem:[#allocation3 + $0x38] sm:$0xff] %v1491
      %1528 = vst [vmem:[#allocation3 + $0x40] sm:$0xff] %v1492
      %1529 = vst [vmem:[#allocation3 + $0x48] sm:$0xff] %v1493
      %1530 = vst [vmem:[#allocation3 + $0x50] sm:$0xff] %v1494
      %1531 = vst [vmem:[#allocation3 + $0x58] sm:$0xff] %v1495
      %1532 = vst [vmem:[#allocation3 + $0x60] sm:$0xff] %v1496
      %1533 = vst [vmem:[#allocation3 + $0x68] sm:$0xff] %v1497
      %1534 = vst [vmem:[#allocation3 + $0x70] sm:$0xff] %v1498
      %1535 = vst [vmem:[#allocation3 + $0x78] sm:$0xff] %v1499
      %1536 = vst [vmem:[#allocation3 + $0x80] sm:$0xff] %v1500
      %1537 = vst [vmem:[#allocation3 + $0x88] sm:$0xff] %v1501
      %1538 = vst [vmem:[#allocation3 + $0x90] sm:$0xff] %v1502
      %1539 = vst [vmem:[#allocation3 + $0x98] sm:$0xff] %v1503
      %1540 = vst [vmem:[#allocation3 + $0xa0] sm:$0xff] %v1504
      %1541 = vst [vmem:[#allocation3 + $0xa8] sm:$0xff] %v1505
      %1542 = vst [vmem:[#allocation3 + $0xb0] sm:$0xff] %v1506
      %1543 = vst [vmem:[#allocation3 + $0xb8] sm:$0xff] %v1507
      %1544 = vst [vmem:[#allocation3 + $0xc0] sm:$0xff] %v1508
      %1545 = vst [vmem:[#allocation3 + $0xc8] sm:$0xff] %v1509
      %1546 = vst [vmem:[#allocation3 + $0xd0] sm:$0xff] %v1510
      %1547 = vst [vmem:[#allocation3 + $0xd8] sm:$0xff] %v1511
      %1548 = vst [vmem:[#allocation3 + $0xe0] sm:$0xff] %v1512
      %1549 = vst [vmem:[#allocation3 + $0xe8] sm:$0xff] %v1513
      %1550 = vst [vmem:[#allocation3 + $0xf0] sm:$0xff] %v1514
      %1551 = vst [vmem:[#allocation3 + $0xf8] sm:$0xff] %v1515
      %1552 = vst [vmem:[#allocation3 + $0x100] sm:$0xff] %v1516
      %1553 = vst [vmem:[#allocation3 + $0x108] sm:$0xff] %v1517
      %1554 = vst [vmem:[#allocation3 + $0x110] sm:$0xff] %v1518
      %1555 = vst [vmem:[#allocation3 + $0x118] sm:$0xff] %v1519
      %v1556 = vld [vmem:[%s335 + $0x13] sm:$0xff]
      %v1557 = vld [vmem:[%s335 + $0x1b] sm:$0xff]
      %v1558 = vld [vmem:[%s335 + $0x23] sm:$0xff]
      %v1559 = vld [vmem:[%s335 + $0x2b] sm:$0xff]
      %v1560 = vld [vmem:[%s335 + $0x33] sm:$0xff]
      %v1561 = vld [vmem:[%s335 + $0x3b] sm:$0xff]
      %v1562 = vld [vmem:[%s335 + $0x43] sm:$0xff]
      %v1563 = vld [vmem:[%s335 + $0x4b] sm:$0xff]
      %v1564 = vld [vmem:[%s335 + $0x53] sm:$0xff]
      %v1565 = vld [vmem:[%s335 + $0x5b] sm:$0xff]
      %v1566 = vld [vmem:[%s335 + $0x63] sm:$0xff]
      %v1567 = vld [vmem:[%s335 + $0x6b] sm:$0xff]
      %v1568 = vld [vmem:[%s335 + $0x73] sm:$0xff]
      %v1569 = vld [vmem:[%s335 + $0x7b] sm:$0xff]
      %v1570 = vld [vmem:[%s335 + $0x83] sm:$0xff]
      %v1571 = vld [vmem:[%s335 + $0x8b] sm:$0xff]
      %v1572 = vld [vmem:[%s335 + $0x93] sm:$0xff]
      %v1573 = vld [vmem:[%s335 + $0x9b] sm:$0xff]
      %v1574 = vld [vmem:[%s335 + $0xa3] sm:$0xff]
      %v1575 = vld [vmem:[%s335 + $0xab] sm:$0xff]
      %v1576 = vld [vmem:[%s335 + $0xb3] sm:$0xff]
      %v1577 = vld [vmem:[%s335 + $0xbb] sm:$0xff]
      %v1578 = vld [vmem:[%s335 + $0xc3] sm:$0xff]
      %v1579 = vld [vmem:[%s335 + $0xcb] sm:$0xff]
      %v1580 = vld [vmem:[%s335 + $0xd3] sm:$0xff]
      %v1581 = vld [vmem:[%s335 + $0xdb] sm:$0xff]
      %v1582 = vld [vmem:[%s335 + $0xe3] sm:$0xff]
      %v1583 = vld [vmem:[%s335 + $0xeb] sm:$0xff]
      %v1584 = vld [vmem:[%s335 + $0xf3] sm:$0xff]
      %v1585 = vld [vmem:[%s335 + $0xfb] sm:$0xff]
      %v1586 = vld [vmem:[%s335 + $0x103] sm:$0xff]
      %v1587 = vld [vmem:[%s335 + $0x10b] sm:$0xff]
      %v1588 = vld [vmem:[%s335 + $0x113] sm:$0xff]
      %v1589 = vld [vmem:[%s335 + $0x11b] sm:$0xff]
      %v1590 = vld [vmem:[%s335 + $0x123] sm:$0xff]
      %v1591 = vld [vmem:[%s335 + $0x12b] sm:$0xff]
      %v1592 = vpack.c.bf16 %v1557, %v1556
      %v1593 = vpack.c.bf16 %v1559, %v1558
      %v1594 = vpack.c.bf16 %v1561, %v1560
      %v1595 = vpack.c.bf16 %v1563, %v1562
      %v1596 = vpack.c.bf16 %v1565, %v1564
      %v1597 = vpack.c.bf16 %v1567, %v1566
      %v1598 = vpack.c.bf16 %v1569, %v1568
      %v1599 = vpack.c.bf16 %v1571, %v1570
      %v1600 = vpack.c.bf16 %v1573, %v1572
      %v1601 = vpack.c.bf16 %v1575, %v1574
      %v1602 = vpack.c.bf16 %v1577, %v1576
      %v1603 = vpack.c.bf16 %v1579, %v1578
      %v1604 = vpack.c.bf16 %v1581, %v1580
      %v1605 = vpack.c.bf16 %v1583, %v1582
      %v1606 = vpack.c.bf16 %v1585, %v1584
      %v1607 = vpack.c.bf16 %v1587, %v1586
      %v1608 = vpack.c.bf16 %v1589, %v1588
      %v1609 = vpack.c.bf16 %v1591, %v1590
      %s1610 = scalar_lea.vmem %s1, 16
      %v1611 = vld [vmem:[%s1610] sm:$0xf]
      %v1613 = vsel %vm402, %v1592, 0
      %v1616 = vsel %vm402, %v1593, 0
      %v1619 = vsel %vm402, %v1594, 0
      %v1622 = vsel %vm402, %v1595, 0
      %v1625 = vsel %vm402, %v1596, 0
      %v1628 = vsel %vm402, %v1597, 0
      %v1631 = vsel %vm402, %v1598, 0
      %v1634 = vsel %vm402, %v1599, 0
      %v1637 = vsel %vm402, %v1600, 0
      %v1640 = vsel %vm402, %v1601, 0
      %v1643 = vsel %vm402, %v1602, 0
      %v1646 = vsel %vm402, %v1603, 0
      %v1649 = vsel %vm402, %v1604, 0
      %v1652 = vsel %vm402, %v1605, 0
      %v1655 = vsel %vm402, %v1606, 0
      %v1658 = vsel %vm402, %v1607, 0
      %v1661 = vsel %vm402, %v1608, 0
      %v1664 = vsel %vm402, %v1609, 0
      %v1667 = vsel %vm457, %v1611, 0
      %1669 = vmatpush.bf16.msra.mxu0 0
      %1670 = vmatpush.bf16.msra.mxu0 0
      %1671 = vmatpush.bf16.msra.mxu0 0
      %1672 = vmatpush.bf16.msra.mxu0 0
      %1673 = vmatpush.bf16.msra.mxu0 0
      %1674 = vmatpush.bf16.msra.mxu0 0
      %1675 = vmatpush.bf16.msra.mxu0 0
      %1676 = vmatpush.bf16.msra.mxu0 %v1667
      %1677 = vmatmul.bf16.gmra.mxu0 %v1613
      %v1678 = vpop.f32.mrf.mxu0
      %v1679 = vadd.f32 0.0, %v1678
      %v1680 = vpop.f32.mrf.mxu0
      %v1681 = vadd.f32 0.0, %v1680
      %1682 = vmatmul.bf16.gmra.mxu0 %v1616
      %v1683 = vpop.f32.mrf.mxu0
      %v1684 = vadd.f32 0.0, %v1683
      %v1685 = vpop.f32.mrf.mxu0
      %v1686 = vadd.f32 0.0, %v1685
      %1687 = vmatmul.bf16.gmra.mxu0 %v1619
      %v1688 = vpop.f32.mrf.mxu0
      %v1689 = vadd.f32 0.0, %v1688
      %v1690 = vpop.f32.mrf.mxu0
      %v1691 = vadd.f32 0.0, %v1690
      %1692 = vmatmul.bf16.gmra.mxu0 %v1622
      %v1693 = vpop.f32.mrf.mxu0
      %v1694 = vadd.f32 0.0, %v1693
      %v1695 = vpop.f32.mrf.mxu0
      %v1696 = vadd.f32 0.0, %v1695
      %1697 = vmatmul.bf16.gmra.mxu0 %v1625
      %v1698 = vpop.f32.mrf.mxu0
      %v1699 = vadd.f32 0.0, %v1698
      %v1700 = vpop.f32.mrf.mxu0
      %v1701 = vadd.f32 0.0, %v1700
      %1702 = vmatmul.bf16.gmra.mxu0 %v1628
      %v1703 = vpop.f32.mrf.mxu0
      %v1704 = vadd.f32 0.0, %v1703
      %v1705 = vpop.f32.mrf.mxu0
      %v1706 = vadd.f32 0.0, %v1705
      %1707 = vmatmul.bf16.gmra.mxu0 %v1631
      %v1708 = vpop.f32.mrf.mxu0
      %v1709 = vadd.f32 0.0, %v1708
      %v1710 = vpop.f32.mrf.mxu0
      %v1711 = vadd.f32 0.0, %v1710
      %1712 = vmatmul.bf16.gmra.mxu0 %v1634
      %v1713 = vpop.f32.mrf.mxu0
      %v1714 = vadd.f32 0.0, %v1713
      %v1715 = vpop.f32.mrf.mxu0
      %v1716 = vadd.f32 0.0, %v1715
      %1717 = vmatmul.bf16.gmra.mxu0 %v1637
      %v1718 = vpop.f32.mrf.mxu0
      %v1719 = vadd.f32 0.0, %v1718
      %v1720 = vpop.f32.mrf.mxu0
      %v1721 = vadd.f32 0.0, %v1720
      %1722 = vmatmul.bf16.gmra.mxu0 %v1640
      %v1723 = vpop.f32.mrf.mxu0
      %v1724 = vadd.f32 0.0, %v1723
      %v1725 = vpop.f32.mrf.mxu0
      %v1726 = vadd.f32 0.0, %v1725
      %1727 = vmatmul.bf16.gmra.mxu0 %v1643
      %v1728 = vpop.f32.mrf.mxu0
      %v1729 = vadd.f32 0.0, %v1728
      %v1730 = vpop.f32.mrf.mxu0
      %v1731 = vadd.f32 0.0, %v1730
      %1732 = vmatmul.bf16.gmra.mxu0 %v1646
      %v1733 = vpop.f32.mrf.mxu0
      %v1734 = vadd.f32 0.0, %v1733
      %v1735 = vpop.f32.mrf.mxu0
      %v1736 = vadd.f32 0.0, %v1735
      %1737 = vmatmul.bf16.gmra.mxu0 %v1649
      %v1738 = vpop.f32.mrf.mxu0
      %v1739 = vadd.f32 0.0, %v1738
      %v1740 = vpop.f32.mrf.mxu0
      %v1741 = vadd.f32 0.0, %v1740
      %1742 = vmatmul.bf16.gmra.mxu0 %v1652
      %v1743 = vpop.f32.mrf.mxu0
      %v1744 = vadd.f32 0.0, %v1743
      %v1745 = vpop.f32.mrf.mxu0
      %v1746 = vadd.f32 0.0, %v1745
      %1747 = vmatmul.bf16.gmra.mxu0 %v1655
      %v1748 = vpop.f32.mrf.mxu0
      %v1749 = vadd.f32 0.0, %v1748
      %v1750 = vpop.f32.mrf.mxu0
      %v1751 = vadd.f32 0.0, %v1750
      %1752 = vmatmul.bf16.gmra.mxu0 %v1658
      %v1753 = vpop.f32.mrf.mxu0
      %v1754 = vadd.f32 0.0, %v1753
      %v1755 = vpop.f32.mrf.mxu0
      %v1756 = vadd.f32 0.0, %v1755
      %1757 = vmatmul.bf16.gmra.mxu0 %v1661
      %v1758 = vpop.f32.mrf.mxu0
      %v1759 = vadd.f32 0.0, %v1758
      %v1760 = vpop.f32.mrf.mxu0
      %v1761 = vadd.f32 0.0, %v1760
      %1762 = vmatmul.bf16.gmra.mxu0 %v1664
      %v1763 = vpop.f32.mrf.mxu0
      %v1764 = vadd.f32 0.0, %v1763
      %v1765 = vpop.f32.mrf.mxu0
      %v1766 = vadd.f32 0.0, %v1765
      %1767 = vdwg.mxu0
      %v1768 = vld [vmem:[#allocation3] sm:$0xff]
      %v1769 = vld [vmem:[#allocation3 + $0x8] sm:$0xff]
      %v1770 = vld [vmem:[#allocation3 + $0x10] sm:$0xff]
      %v1771 = vld [vmem:[#allocation3 + $0x18] sm:$0xff]
      %v1772 = vld [vmem:[#allocation3 + $0x20] sm:$0xff]
      %v1773 = vld [vmem:[#allocation3 + $0x28] sm:$0xff]
      %v1774 = vld [vmem:[#allocation3 + $0x30] sm:$0xff]
      %v1775 = vld [vmem:[#allocation3 + $0x38] sm:$0xff]
      %v1776 = vld [vmem:[#allocation3 + $0x40] sm:$0xff]
      %v1777 = vld [vmem:[#allocation3 + $0x48] sm:$0xff]
      %v1778 = vld [vmem:[#allocation3 + $0x50] sm:$0xff]
      %v1779 = vld [vmem:[#allocation3 + $0x58] sm:$0xff]
      %v1780 = vld [vmem:[#allocation3 + $0x60] sm:$0xff]
      %v1781 = vld [vmem:[#allocation3 + $0x68] sm:$0xff]
      %v1782 = vld [vmem:[#allocation3 + $0x70] sm:$0xff]
      %v1783 = vld [vmem:[#allocation3 + $0x78] sm:$0xff]
      %v1784 = vld [vmem:[#allocation3 + $0x80] sm:$0xff]
      %v1785 = vld [vmem:[#allocation3 + $0x88] sm:$0xff]
      %v1786 = vld [vmem:[#allocation3 + $0x90] sm:$0xff]
      %v1787 = vld [vmem:[#allocation3 + $0x98] sm:$0xff]
      %v1788 = vld [vmem:[#allocation3 + $0xa0] sm:$0xff]
      %v1789 = vld [vmem:[#allocation3 + $0xa8] sm:$0xff]
      %v1790 = vld [vmem:[#allocation3 + $0xb0] sm:$0xff]
      %v1791 = vld [vmem:[#allocation3 + $0xb8] sm:$0xff]
      %v1792 = vld [vmem:[#allocation3 + $0xc0] sm:$0xff]
      %v1793 = vld [vmem:[#allocation3 + $0xc8] sm:$0xff]
      %v1794 = vld [vmem:[#allocation3 + $0xd0] sm:$0xff]
      %v1795 = vld [vmem:[#allocation3 + $0xd8] sm:$0xff]
      %v1796 = vld [vmem:[#allocation3 + $0xe0] sm:$0xff]
      %v1797 = vld [vmem:[#allocation3 + $0xe8] sm:$0xff]
      %v1798 = vld [vmem:[#allocation3 + $0xf0] sm:$0xff]
      %v1799 = vld [vmem:[#allocation3 + $0xf8] sm:$0xff]
      %v1800 = vld [vmem:[#allocation3 + $0x100] sm:$0xff]
      %v1801 = vld [vmem:[#allocation3 + $0x108] sm:$0xff]
      %v1802 = vld [vmem:[#allocation3 + $0x110] sm:$0xff]
      %v1803 = vld [vmem:[#allocation3 + $0x118] sm:$0xff]
      %v1804 = vadd.f32 %v1768, %v1679
      %v1805 = vadd.f32 %v1769, %v1681
      %v1806 = vadd.f32 %v1770, %v1684
      %v1807 = vadd.f32 %v1771, %v1686
      %v1808 = vadd.f32 %v1772, %v1689
      %v1809 = vadd.f32 %v1773, %v1691
      %v1810 = vadd.f32 %v1774, %v1694
      %v1811 = vadd.f32 %v1775, %v1696
      %v1812 = vadd.f32 %v1776, %v1699
      %v1813 = vadd.f32 %v1777, %v1701
      %v1814 = vadd.f32 %v1778, %v1704
      %v1815 = vadd.f32 %v1779, %v1706
      %v1816 = vadd.f32 %v1780, %v1709
      %v1817 = vadd.f32 %v1781, %v1711
      %v1818 = vadd.f32 %v1782, %v1714
      %v1819 = vadd.f32 %v1783, %v1716
      %v1820 = vadd.f32 %v1784, %v1719
      %v1821 = vadd.f32 %v1785, %v1721
      %v1822 = vadd.f32 %v1786, %v1724
      %v1823 = vadd.f32 %v1787, %v1726
      %v1824 = vadd.f32 %v1788, %v1729
      %v1825 = vadd.f32 %v1789, %v1731
      %v1826 = vadd.f32 %v1790, %v1734
      %v1827 = vadd.f32 %v1791, %v1736
      %v1828 = vadd.f32 %v1792, %v1739
      %v1829 = vadd.f32 %v1793, %v1741
      %v1830 = vadd.f32 %v1794, %v1744
      %v1831 = vadd.f32 %v1795, %v1746
      %v1832 = vadd.f32 %v1796, %v1749
      %v1833 = vadd.f32 %v1797, %v1751
      %v1834 = vadd.f32 %v1798, %v1754
      %v1835 = vadd.f32 %v1799, %v1756
      %v1836 = vadd.f32 %v1800, %v1759
      %v1837 = vadd.f32 %v1801, %v1761
      %v1838 = vadd.f32 %v1802, %v1764
      %v1839 = vadd.f32 %v1803, %v1766
      %1840 = vst [vmem:[#allocation3] sm:$0xff] %v1804
      %1841 = vst [vmem:[#allocation3 + $0x8] sm:$0xff] %v1805
      %1842 = vst [vmem:[#allocation3 + $0x10] sm:$0xff] %v1806
      %1843 = vst [vmem:[#allocation3 + $0x18] sm:$0xff] %v1807
      %1844 = vst [vmem:[#allocation3 + $0x20] sm:$0xff] %v1808
      %1845 = vst [vmem:[#allocation3 + $0x28] sm:$0xff] %v1809
      %1846 = vst [vmem:[#allocation3 + $0x30] sm:$0xff] %v1810
      %1847 = vst [vmem:[#allocation3 + $0x38] sm:$0xff] %v1811
      %1848 = vst [vmem:[#allocation3 + $0x40] sm:$0xff] %v1812
      %1849 = vst [vmem:[#allocation3 + $0x48] sm:$0xff] %v1813
      %1850 = vst [vmem:[#allocation3 + $0x50] sm:$0xff] %v1814
      %1851 = vst [vmem:[#allocation3 + $0x58] sm:$0xff] %v1815
      %1852 = vst [vmem:[#allocation3 + $0x60] sm:$0xff] %v1816
      %1853 = vst [vmem:[#allocation3 + $0x68] sm:$0xff] %v1817
      %1854 = vst [vmem:[#allocation3 + $0x70] sm:$0xff] %v1818
      %1855 = vst [vmem:[#allocation3 + $0x78] sm:$0xff] %v1819
      %1856 = vst [vmem:[#allocation3 + $0x80] sm:$0xff] %v1820
      %1857 = vst [vmem:[#allocation3 + $0x88] sm:$0xff] %v1821
      %1858 = vst [vmem:[#allocation3 + $0x90] sm:$0xff] %v1822
      %1859 = vst [vmem:[#allocation3 + $0x98] sm:$0xff] %v1823
      %1860 = vst [vmem:[#allocation3 + $0xa0] sm:$0xff] %v1824
      %1861 = vst [vmem:[#allocation3 + $0xa8] sm:$0xff] %v1825
      %1862 = vst [vmem:[#allocation3 + $0xb0] sm:$0xff] %v1826
      %1863 = vst [vmem:[#allocation3 + $0xb8] sm:$0xff] %v1827
      %1864 = vst [vmem:[#allocation3 + $0xc0] sm:$0xff] %v1828
      %1865 = vst [vmem:[#allocation3 + $0xc8] sm:$0xff] %v1829
      %1866 = vst [vmem:[#allocation3 + $0xd0] sm:$0xff] %v1830
      %1867 = vst [vmem:[#allocation3 + $0xd8] sm:$0xff] %v1831
      %1868 = vst [vmem:[#allocation3 + $0xe0] sm:$0xff] %v1832
      %1869 = vst [vmem:[#allocation3 + $0xe8] sm:$0xff] %v1833
      %1870 = vst [vmem:[#allocation3 + $0xf0] sm:$0xff] %v1834
      %1871 = vst [vmem:[#allocation3 + $0xf8] sm:$0xff] %v1835
      %1872 = vst [vmem:[#allocation3 + $0x100] sm:$0xff] %v1836
      %1873 = vst [vmem:[#allocation3 + $0x108] sm:$0xff] %v1837
      %1874 = vst [vmem:[#allocation3 + $0x110] sm:$0xff] %v1838
      %1875 = vst [vmem:[#allocation3 + $0x118] sm:$0xff] %v1839
      %v1876 = vld [vmem:[%s335 + $0x14] sm:$0xff]
      %v1877 = vld [vmem:[%s335 + $0x1c] sm:$0xff]
      %v1878 = vld [vmem:[%s335 + $0x24] sm:$0xff]
      %v1879 = vld [vmem:[%s335 + $0x2c] sm:$0xff]
      %v1880 = vld [vmem:[%s335 + $0x34] sm:$0xff]
      %v1881 = vld [vmem:[%s335 + $0x3c] sm:$0xff]
      %v1882 = vld [vmem:[%s335 + $0x44] sm:$0xff]
      %v1883 = vld [vmem:[%s335 + $0x4c] sm:$0xff]
      %v1884 = vld [vmem:[%s335 + $0x54] sm:$0xff]
      %v1885 = vld [vmem:[%s335 + $0x5c] sm:$0xff]
      %v1886 = vld [vmem:[%s335 + $0x64] sm:$0xff]
      %v1887 = vld [vmem:[%s335 + $0x6c] sm:$0xff]
      %v1888 = vld [vmem:[%s335 + $0x74] sm:$0xff]
      %v1889 = vld [vmem:[%s335 + $0x7c] sm:$0xff]
      %v1890 = vld [vmem:[%s335 + $0x84] sm:$0xff]
      %v1891 = vld [vmem:[%s335 + $0x8c] sm:$0xff]
      %v1892 = vld [vmem:[%s335 + $0x94] sm:$0xff]
      %v1893 = vld [vmem:[%s335 + $0x9c] sm:$0xff]
      %v1894 = vld [vmem:[%s335 + $0xa4] sm:$0xff]
      %v1895 = vld [vmem:[%s335 + $0xac] sm:$0xff]
      %v1896 = vld [vmem:[%s335 + $0xb4] sm:$0xff]
      %v1897 = vld [vmem:[%s335 + $0xbc] sm:$0xff]
      %v1898 = vld [vmem:[%s335 + $0xc4] sm:$0xff]
      %v1899 = vld [vmem:[%s335 + $0xcc] sm:$0xff]
      %v1900 = vld [vmem:[%s335 + $0xd4] sm:$0xff]
      %v1901 = vld [vmem:[%s335 + $0xdc] sm:$0xff]
      %v1902 = vld [vmem:[%s335 + $0xe4] sm:$0xff]
      %v1903 = vld [vmem:[%s335 + $0xec] sm:$0xff]
      %v1904 = vld [vmem:[%s335 + $0xf4] sm:$0xff]
      %v1905 = vld [vmem:[%s335 + $0xfc] sm:$0xff]
      %v1906 = vld [vmem:[%s335 + $0x104] sm:$0xff]
      %v1907 = vld [vmem:[%s335 + $0x10c] sm:$0xff]
      %v1908 = vld [vmem:[%s335 + $0x114] sm:$0xff]
      %v1909 = vld [vmem:[%s335 + $0x11c] sm:$0xff]
      %v1910 = vld [vmem:[%s335 + $0x124] sm:$0xff]
      %v1911 = vld [vmem:[%s335 + $0x12c] sm:$0xff]
      %v1912 = vpack.c.bf16 %v1877, %v1876
      %v1913 = vpack.c.bf16 %v1879, %v1878
      %v1914 = vpack.c.bf16 %v1881, %v1880
      %v1915 = vpack.c.bf16 %v1883, %v1882
      %v1916 = vpack.c.bf16 %v1885, %v1884
      %v1917 = vpack.c.bf16 %v1887, %v1886
      %v1918 = vpack.c.bf16 %v1889, %v1888
      %v1919 = vpack.c.bf16 %v1891, %v1890
      %v1920 = vpack.c.bf16 %v1893, %v1892
      %v1921 = vpack.c.bf16 %v1895, %v1894
      %v1922 = vpack.c.bf16 %v1897, %v1896
      %v1923 = vpack.c.bf16 %v1899, %v1898
      %v1924 = vpack.c.bf16 %v1901, %v1900
      %v1925 = vpack.c.bf16 %v1903, %v1902
      %v1926 = vpack.c.bf16 %v1905, %v1904
      %v1927 = vpack.c.bf16 %v1907, %v1906
      %v1928 = vpack.c.bf16 %v1909, %v1908
      %v1929 = vpack.c.bf16 %v1911, %v1910
      %s1930 = scalar_lea.vmem %s1, 20
      %v1931 = vld [vmem:[%s1930] sm:$0xf]
      %v1933 = vsel %vm402, %v1912, 0
      %v1936 = vsel %vm402, %v1913, 0
      %v1939 = vsel %vm402, %v1914, 0
      %v1942 = vsel %vm402, %v1915, 0
      %v1945 = vsel %vm402, %v1916, 0
      %v1948 = vsel %vm402, %v1917, 0
      %v1951 = vsel %vm402, %v1918, 0
      %v1954 = vsel %vm402, %v1919, 0
      %v1957 = vsel %vm402, %v1920, 0
      %v1960 = vsel %vm402, %v1921, 0
      %v1963 = vsel %vm402, %v1922, 0
      %v1966 = vsel %vm402, %v1923, 0
      %v1969 = vsel %vm402, %v1924, 0
      %v1972 = vsel %vm402, %v1925, 0
      %v1975 = vsel %vm402, %v1926, 0
      %v1978 = vsel %vm402, %v1927, 0
      %v1981 = vsel %vm402, %v1928, 0
      %v1984 = vsel %vm402, %v1929, 0
      %v1987 = vsel %vm457, %v1931, 0
      %1989 = vmatpush.bf16.msra.mxu0 0
      %1990 = vmatpush.bf16.msra.mxu0 0
      %1991 = vmatpush.bf16.msra.mxu0 0
      %1992 = vmatpush.bf16.msra.mxu0 0
      %1993 = vmatpush.bf16.msra.mxu0 0
      %1994 = vmatpush.bf16.msra.mxu0 0
      %1995 = vmatpush.bf16.msra.mxu0 0
      %1996 = vmatpush.bf16.msra.mxu0 %v1987
      %1997 = vmatmul.bf16.gmra.mxu0 %v1933
      %v1998 = vpop.f32.mrf.mxu0
      %v1999 = vadd.f32 0.0, %v1998
      %v2000 = vpop.f32.mrf.mxu0
      %v2001 = vadd.f32 0.0, %v2000
      %2002 = vmatmul.bf16.gmra.mxu0 %v1936
      %v2003 = vpop.f32.mrf.mxu0
      %v2004 = vadd.f32 0.0, %v2003
      %v2005 = vpop.f32.mrf.mxu0
      %v2006 = vadd.f32 0.0, %v2005
      %2007 = vmatmul.bf16.gmra.mxu0 %v1939
      %v2008 = vpop.f32.mrf.mxu0
      %v2009 = vadd.f32 0.0, %v2008
      %v2010 = vpop.f32.mrf.mxu0
      %v2011 = vadd.f32 0.0, %v2010
      %2012 = vmatmul.bf16.gmra.mxu0 %v1942
      %v2013 = vpop.f32.mrf.mxu0
      %v2014 = vadd.f32 0.0, %v2013
      %v2015 = vpop.f32.mrf.mxu0
      %v2016 = vadd.f32 0.0, %v2015
      %2017 = vmatmul.bf16.gmra.mxu0 %v1945
      %v2018 = vpop.f32.mrf.mxu0
      %v2019 = vadd.f32 0.0, %v2018
      %v2020 = vpop.f32.mrf.mxu0
      %v2021 = vadd.f32 0.0, %v2020
      %2022 = vmatmul.bf16.gmra.mxu0 %v1948
      %v2023 = vpop.f32.mrf.mxu0
      %v2024 = vadd.f32 0.0, %v2023
      %v2025 = vpop.f32.mrf.mxu0
      %v2026 = vadd.f32 0.0, %v2025
      %2027 = vmatmul.bf16.gmra.mxu0 %v1951
      %v2028 = vpop.f32.mrf.mxu0
      %v2029 = vadd.f32 0.0, %v2028
      %v2030 = vpop.f32.mrf.mxu0
      %v2031 = vadd.f32 0.0, %v2030
      %2032 = vmatmul.bf16.gmra.mxu0 %v1954
      %v2033 = vpop.f32.mrf.mxu0
      %v2034 = vadd.f32 0.0, %v2033
      %v2035 = vpop.f32.mrf.mxu0
      %v2036 = vadd.f32 0.0, %v2035
      %2037 = vmatmul.bf16.gmra.mxu0 %v1957
      %v2038 = vpop.f32.mrf.mxu0
      %v2039 = vadd.f32 0.0, %v2038
      %v2040 = vpop.f32.mrf.mxu0
      %v2041 = vadd.f32 0.0, %v2040
      %2042 = vmatmul.bf16.gmra.mxu0 %v1960
      %v2043 = vpop.f32.mrf.mxu0
      %v2044 = vadd.f32 0.0, %v2043
      %v2045 = vpop.f32.mrf.mxu0
      %v2046 = vadd.f32 0.0, %v2045
      %2047 = vmatmul.bf16.gmra.mxu0 %v1963
      %v2048 = vpop.f32.mrf.mxu0
      %v2049 = vadd.f32 0.0, %v2048
      %v2050 = vpop.f32.mrf.mxu0
      %v2051 = vadd.f32 0.0, %v2050
      %2052 = vmatmul.bf16.gmra.mxu0 %v1966
      %v2053 = vpop.f32.mrf.mxu0
      %v2054 = vadd.f32 0.0, %v2053
      %v2055 = vpop.f32.mrf.mxu0
      %v2056 = vadd.f32 0.0, %v2055
      %2057 = vmatmul.bf16.gmra.mxu0 %v1969
      %v2058 = vpop.f32.mrf.mxu0
      %v2059 = vadd.f32 0.0, %v2058
      %v2060 = vpop.f32.mrf.mxu0
      %v2061 = vadd.f32 0.0, %v2060
      %2062 = vmatmul.bf16.gmra.mxu0 %v1972
      %v2063 = vpop.f32.mrf.mxu0
      %v2064 = vadd.f32 0.0, %v2063
      %v2065 = vpop.f32.mrf.mxu0
      %v2066 = vadd.f32 0.0, %v2065
      %2067 = vmatmul.bf16.gmra.mxu0 %v1975
      %v2068 = vpop.f32.mrf.mxu0
      %v2069 = vadd.f32 0.0, %v2068
      %v2070 = vpop.f32.mrf.mxu0
      %v2071 = vadd.f32 0.0, %v2070
      %2072 = vmatmul.bf16.gmra.mxu0 %v1978
      %v2073 = vpop.f32.mrf.mxu0
      %v2074 = vadd.f32 0.0, %v2073
      %v2075 = vpop.f32.mrf.mxu0
      %v2076 = vadd.f32 0.0, %v2075
      %2077 = vmatmul.bf16.gmra.mxu0 %v1981
      %v2078 = vpop.f32.mrf.mxu0
      %v2079 = vadd.f32 0.0, %v2078
      %v2080 = vpop.f32.mrf.mxu0
      %v2081 = vadd.f32 0.0, %v2080
      %2082 = vmatmul.bf16.gmra.mxu0 %v1984
      %v2083 = vpop.f32.mrf.mxu0
      %v2084 = vadd.f32 0.0, %v2083
      %v2085 = vpop.f32.mrf.mxu0
      %v2086 = vadd.f32 0.0, %v2085
      %2087 = vdwg.mxu0
      %v2088 = vld [vmem:[#allocation3] sm:$0xff]
      %v2089 = vld [vmem:[#allocation3 + $0x8] sm:$0xff]
      %v2090 = vld [vmem:[#allocation3 + $0x10] sm:$0xff]
      %v2091 = vld [vmem:[#allocation3 + $0x18] sm:$0xff]
      %v2092 = vld [vmem:[#allocation3 + $0x20] sm:$0xff]
      %v2093 = vld [vmem:[#allocation3 + $0x28] sm:$0xff]
      %v2094 = vld [vmem:[#allocation3 + $0x30] sm:$0xff]
      %v2095 = vld [vmem:[#allocation3 + $0x38] sm:$0xff]
      %v2096 = vld [vmem:[#allocation3 + $0x40] sm:$0xff]
      %v2097 = vld [vmem:[#allocation3 + $0x48] sm:$0xff]
      %v2098 = vld [vmem:[#allocation3 + $0x50] sm:$0xff]
      %v2099 = vld [vmem:[#allocation3 + $0x58] sm:$0xff]
      %v2100 = vld [vmem:[#allocation3 + $0x60] sm:$0xff]
      %v2101 = vld [vmem:[#allocation3 + $0x68] sm:$0xff]
      %v2102 = vld [vmem:[#allocation3 + $0x70] sm:$0xff]
      %v2103 = vld [vmem:[#allocation3 + $0x78] sm:$0xff]
      %v2104 = vld [vmem:[#allocation3 + $0x80] sm:$0xff]
      %v2105 = vld [vmem:[#allocation3 + $0x88] sm:$0xff]
      %v2106 = vld [vmem:[#allocation3 + $0x90] sm:$0xff]
      %v2107 = vld [vmem:[#allocation3 + $0x98] sm:$0xff]
      %v2108 = vld [vmem:[#allocation3 + $0xa0] sm:$0xff]
      %v2109 = vld [vmem:[#allocation3 + $0xa8] sm:$0xff]
      %v2110 = vld [vmem:[#allocation3 + $0xb0] sm:$0xff]
      %v2111 = vld [vmem:[#allocation3 + $0xb8] sm:$0xff]
      %v2112 = vld [vmem:[#allocation3 + $0xc0] sm:$0xff]
      %v2113 = vld [vmem:[#allocation3 + $0xc8] sm:$0xff]
      %v2114 = vld [vmem:[#allocation3 + $0xd0] sm:$0xff]
      %v2115 = vld [vmem:[#allocation3 + $0xd8] sm:$0xff]
      %v2116 = vld [vmem:[#allocation3 + $0xe0] sm:$0xff]
      %v2117 = vld [vmem:[#allocation3 + $0xe8] sm:$0xff]
      %v2118 = vld [vmem:[#allocation3 + $0xf0] sm:$0xff]
      %v2119 = vld [vmem:[#allocation3 + $0xf8] sm:$0xff]
      %v2120 = vld [vmem:[#allocation3 + $0x100] sm:$0xff]
      %v2121 = vld [vmem:[#allocation3 + $0x108] sm:$0xff]
      %v2122 = vld [vmem:[#allocation3 + $0x110] sm:$0xff]
      %v2123 = vld [vmem:[#allocation3 + $0x118] sm:$0xff]
      %v2124 = vadd.f32 %v2088, %v1999
      %v2125 = vadd.f32 %v2089, %v2001
      %v2126 = vadd.f32 %v2090, %v2004
      %v2127 = vadd.f32 %v2091, %v2006
      %v2128 = vadd.f32 %v2092, %v2009
      %v2129 = vadd.f32 %v2093, %v2011
      %v2130 = vadd.f32 %v2094, %v2014
      %v2131 = vadd.f32 %v2095, %v2016
      %v2132 = vadd.f32 %v2096, %v2019
      %v2133 = vadd.f32 %v2097, %v2021
      %v2134 = vadd.f32 %v2098, %v2024
      %v2135 = vadd.f32 %v2099, %v2026
      %v2136 = vadd.f32 %v2100, %v2029
      %v2137 = vadd.f32 %v2101, %v2031
      %v2138 = vadd.f32 %v2102, %v2034
      %v2139 = vadd.f32 %v2103, %v2036
      %v2140 = vadd.f32 %v2104, %v2039
      %v2141 = vadd.f32 %v2105, %v2041
      %v2142 = vadd.f32 %v2106, %v2044
      %v2143 = vadd.f32 %v2107, %v2046
      %v2144 = vadd.f32 %v2108, %v2049
      %v2145 = vadd.f32 %v2109, %v2051
      %v2146 = vadd.f32 %v2110, %v2054
      %v2147 = vadd.f32 %v2111, %v2056
      %v2148 = vadd.f32 %v2112, %v2059
      %v2149 = vadd.f32 %v2113, %v2061
      %v2150 = vadd.f32 %v2114, %v2064
      %v2151 = vadd.f32 %v2115, %v2066
      %v2152 = vadd.f32 %v2116, %v2069
      %v2153 = vadd.f32 %v2117, %v2071
      %v2154 = vadd.f32 %v2118, %v2074
      %v2155 = vadd.f32 %v2119, %v2076
      %v2156 = vadd.f32 %v2120, %v2079
      %v2157 = vadd.f32 %v2121, %v2081
      %v2158 = vadd.f32 %v2122, %v2084
      %v2159 = vadd.f32 %v2123, %v2086
      %2160 = vst [vmem:[#allocation3] sm:$0xff] %v2124
      %2161 = vst [vmem:[#allocation3 + $0x8] sm:$0xff] %v2125
      %2162 = vst [vmem:[#allocation3 + $0x10] sm:$0xff] %v2126
      %2163 = vst [vmem:[#allocation3 + $0x18] sm:$0xff] %v2127
      %2164 = vst [vmem:[#allocation3 + $0x20] sm:$0xff] %v2128
      %2165 = vst [vmem:[#allocation3 + $0x28] sm:$0xff] %v2129
      %2166 = vst [vmem:[#allocation3 + $0x30] sm:$0xff] %v2130
      %2167 = vst [vmem:[#allocation3 + $0x38] sm:$0xff] %v2131
      %2168 = vst [vmem:[#allocation3 + $0x40] sm:$0xff] %v2132
      %2169 = vst [vmem:[#allocation3 + $0x48] sm:$0xff] %v2133
      %2170 = vst [vmem:[#allocation3 + $0x50] sm:$0xff] %v2134
      %2171 = vst [vmem:[#allocation3 + $0x58] sm:$0xff] %v2135
      %2172 = vst [vmem:[#allocation3 + $0x60] sm:$0xff] %v2136
      %2173 = vst [vmem:[#allocation3 + $0x68] sm:$0xff] %v2137
      %2174 = vst [vmem:[#allocation3 + $0x70] sm:$0xff] %v2138
      %2175 = vst [vmem:[#allocation3 + $0x78] sm:$0xff] %v2139
      %2176 = vst [vmem:[#allocation3 + $0x80] sm:$0xff] %v2140
      %2177 = vst [vmem:[#allocation3 + $0x88] sm:$0xff] %v2141
      %2178 = vst [vmem:[#allocation3 + $0x90] sm:$0xff] %v2142
      %2179 = vst [vmem:[#allocation3 + $0x98] sm:$0xff] %v2143
      %2180 = vst [vmem:[#allocation3 + $0xa0] sm:$0xff] %v2144
      %2181 = vst [vmem:[#allocation3 + $0xa8] sm:$0xff] %v2145
      %2182 = vst [vmem:[#allocation3 + $0xb0] sm:$0xff] %v2146
      %2183 = vst [vmem:[#allocation3 + $0xb8] sm:$0xff] %v2147
      %2184 = vst [vmem:[#allocation3 + $0xc0] sm:$0xff] %v2148
      %2185 = vst [vmem:[#allocation3 + $0xc8] sm:$0xff] %v2149
      %2186 = vst [vmem:[#allocation3 + $0xd0] sm:$0xff] %v2150
      %2187 = vst [vmem:[#allocation3 + $0xd8] sm:$0xff] %v2151
      %2188 = vst [vmem:[#allocation3 + $0xe0] sm:$0xff] %v2152
      %2189 = vst [vmem:[#allocation3 + $0xe8] sm:$0xff] %v2153
      %2190 = vst [vmem:[#allocation3 + $0xf0] sm:$0xff] %v2154
      %2191 = vst [vmem:[#allocation3 + $0xf8] sm:$0xff] %v2155
      %2192 = vst [vmem:[#allocation3 + $0x100] sm:$0xff] %v2156
      %2193 = vst [vmem:[#allocation3 + $0x108] sm:$0xff] %v2157
      %2194 = vst [vmem:[#allocation3 + $0x110] sm:$0xff] %v2158
      %2195 = vst [vmem:[#allocation3 + $0x118] sm:$0xff] %v2159
      %v2196 = vld [vmem:[%s335 + $0x24] sm:$0xff]
      %v2197 = vld [vmem:[%s335 + $0x2c] sm:$0xff]
      %v2198 = vld [vmem:[%s335 + $0x34] sm:$0xff]
      %v2199 = vld [vmem:[%s335 + $0x3c] sm:$0xff]
      %v2200 = vld [vmem:[%s335 + $0x44] sm:$0xff]
      %v2201 = vld [vmem:[%s335 + $0x4c] sm:$0xff]
      %v2202 = vld [vmem:[%s335 + $0x54] sm:$0xff]
      %v2203 = vld [vmem:[%s335 + $0x5c] sm:$0xff]
      %v2204 = vld [vmem:[%s335 + $0x64] sm:$0xff]
      %v2205 = vld [vmem:[%s335 + $0x6c] sm:$0xff]
      %v2206 = vld [vmem:[%s335 + $0x74] sm:$0xff]
      %v2207 = vld [vmem:[%s335 + $0x7c] sm:$0xff]
      %v2208 = vld [vmem:[%s335 + $0x84] sm:$0xff]
      %v2209 = vld [vmem:[%s335 + $0x8c] sm:$0xff]
      %v2210 = vld [vmem:[%s335 + $0x94] sm:$0xff]
      %v2211 = vld [vmem:[%s335 + $0x9c] sm:$0xff]
      %v2212 = vld [vmem:[%s335 + $0xa4] sm:$0xff]
      %v2213 = vld [vmem:[%s335 + $0xac] sm:$0xff]
      %v2214 = vld [vmem:[%s335 + $0xb4] sm:$0xff]
      %v2215 = vld [vmem:[%s335 + $0xbc] sm:$0xff]
      %v2216 = vld [vmem:[%s335 + $0xc4] sm:$0xff]
      %v2217 = vld [vmem:[%s335 + $0xcc] sm:$0xff]
      %v2218 = vld [vmem:[%s335 + $0xd4] sm:$0xff]
      %v2219 = vld [vmem:[%s335 + $0xdc] sm:$0xff]
      %v2220 = vld [vmem:[%s335 + $0xe4] sm:$0xff]
      %v2221 = vld [vmem:[%s335 + $0xec] sm:$0xff]
      %v2222 = vld [vmem:[%s335 + $0xf4] sm:$0xff]
      %v2223 = vld [vmem:[%s335 + $0xfc] sm:$0xff]
      %v2224 = vld [vmem:[%s335 + $0x104] sm:$0xff]
      %v2225 = vld [vmem:[%s335 + $0x10c] sm:$0xff]
      %v2226 = vld [vmem:[%s335 + $0x114] sm:$0xff]
      %v2227 = vld [vmem:[%s335 + $0x11c] sm:$0xff]
      %v2228 = vld [vmem:[%s335 + $0x124] sm:$0xff]
      %v2229 = vld [vmem:[%s335 + $0x12c] sm:$0xff]
      %v2230 = vld [vmem:[%s335 + $0x134] sm:$0xff]
      %v2231 = vld [vmem:[%s335 + $0x13c] sm:$0xff]
      %v2232 = vpack.c.bf16 %v2197, %v2196
      %v2233 = vpack.c.bf16 %v2199, %v2198
      %v2234 = vpack.c.bf16 %v2201, %v2200
      %v2235 = vpack.c.bf16 %v2203, %v2202
      %v2236 = vpack.c.bf16 %v2205, %v2204
      %v2237 = vpack.c.bf16 %v2207, %v2206
      %v2238 = vpack.c.bf16 %v2209, %v2208
      %v2239 = vpack.c.bf16 %v2211, %v2210
      %v2240 = vpack.c.bf16 %v2213, %v2212
      %v2241 = vpack.c.bf16 %v2215, %v2214
      %v2242 = vpack.c.bf16 %v2217, %v2216
      %v2243 = vpack.c.bf16 %v2219, %v2218
      %v2244 = vpack.c.bf16 %v2221, %v2220
      %v2245 = vpack.c.bf16 %v2223, %v2222
      %v2246 = vpack.c.bf16 %v2225, %v2224
      %v2247 = vpack.c.bf16 %v2227, %v2226
      %v2248 = vpack.c.bf16 %v2229, %v2228
      %v2249 = vpack.c.bf16 %v2231, %v2230
      %s2250 = scalar_lea.vmem %s1, 24
      %v2251 = vld [vmem:[%s2250] sm:$0xf]
      %v2253 = vsel %vm402, %v2232, 0
      %v2256 = vsel %vm402, %v2233, 0
      %v2259 = vsel %vm402, %v2234, 0
      %v2262 = vsel %vm402, %v2235, 0
      %v2265 = vsel %vm402, %v2236, 0
      %v2268 = vsel %vm402, %v2237, 0
      %v2271 = vsel %vm402, %v2238, 0
      %v2274 = vsel %vm402, %v2239, 0
      %v2277 = vsel %vm402, %v2240, 0
      %v2280 = vsel %vm402, %v2241, 0
      %v2283 = vsel %vm402, %v2242, 0
      %v2286 = vsel %vm402, %v2243, 0
      %v2289 = vsel %vm402, %v2244, 0
      %v2292 = vsel %vm402, %v2245, 0
      %v2295 = vsel %vm402, %v2246, 0
      %v2298 = vsel %vm402, %v2247, 0
      %v2301 = vsel %vm402, %v2248, 0
      %v2304 = vsel %vm402, %v2249, 0
      %v2307 = vsel %vm457, %v2251, 0
      %2309 = vmatpush.bf16.msra.mxu0 0
      %2310 = vmatpush.bf16.msra.mxu0 0
      %2311 = vmatpush.bf16.msra.mxu0 0
      %2312 = vmatpush.bf16.msra.mxu0 0
      %2313 = vmatpush.bf16.msra.mxu0 0
      %2314 = vmatpush.bf16.msra.mxu0 0
      %2315 = vmatpush.bf16.msra.mxu0 0
      %2316 = vmatpush.bf16.msra.mxu0 %v2307
      %2317 = vmatmul.bf16.gmra.mxu0 %v2253
      %v2318 = vpop.f32.mrf.mxu0
      %v2319 = vadd.f32 0.0, %v2318
      %v2320 = vpop.f32.mrf.mxu0
      %v2321 = vadd.f32 0.0, %v2320
      %2322 = vmatmul.bf16.gmra.mxu0 %v2256
      %v2323 = vpop.f32.mrf.mxu0
      %v2324 = vadd.f32 0.0, %v2323
      %v2325 = vpop.f32.mrf.mxu0
      %v2326 = vadd.f32 0.0, %v2325
      %2327 = vmatmul.bf16.gmra.mxu0 %v2259
      %v2328 = vpop.f32.mrf.mxu0
      %v2329 = vadd.f32 0.0, %v2328
      %v2330 = vpop.f32.mrf.mxu0
      %v2331 = vadd.f32 0.0, %v2330
      %2332 = vmatmul.bf16.gmra.mxu0 %v2262
      %v2333 = vpop.f32.mrf.mxu0
      %v2334 = vadd.f32 0.0, %v2333
      %v2335 = vpop.f32.mrf.mxu0
      %v2336 = vadd.f32 0.0, %v2335
      %2337 = vmatmul.bf16.gmra.mxu0 %v2265
      %v2338 = vpop.f32.mrf.mxu0
      %v2339 = vadd.f32 0.0, %v2338
      %v2340 = vpop.f32.mrf.mxu0
      %v2341 = vadd.f32 0.0, %v2340
      %2342 = vmatmul.bf16.gmra.mxu0 %v2268
      %v2343 = vpop.f32.mrf.mxu0
      %v2344 = vadd.f32 0.0, %v2343
      %v2345 = vpop.f32.mrf.mxu0
      %v2346 = vadd.f32 0.0, %v2345
      %2347 = vmatmul.bf16.gmra.mxu0 %v2271
      %v2348 = vpop.f32.mrf.mxu0
      %v2349 = vadd.f32 0.0, %v2348
      %v2350 = vpop.f32.mrf.mxu0
      %v2351 = vadd.f32 0.0, %v2350
      %2352 = vmatmul.bf16.gmra.mxu0 %v2274
      %v2353 = vpop.f32.mrf.mxu0
      %v2354 = vadd.f32 0.0, %v2353
      %v2355 = vpop.f32.mrf.mxu0
      %v2356 = vadd.f32 0.0, %v2355
      %2357 = vmatmul.bf16.gmra.mxu0 %v2277
      %v2358 = vpop.f32.mrf.mxu0
      %v2359 = vadd.f32 0.0, %v2358
      %v2360 = vpop.f32.mrf.mxu0
      %v2361 = vadd.f32 0.0, %v2360
      %2362 = vmatmul.bf16.gmra.mxu0 %v2280
      %v2363 = vpop.f32.mrf.mxu0
      %v2364 = vadd.f32 0.0, %v2363
      %v2365 = vpop.f32.mrf.mxu0
      %v2366 = vadd.f32 0.0, %v2365
      %2367 = vmatmul.bf16.gmra.mxu0 %v2283
      %v2368 = vpop.f32.mrf.mxu0
      %v2369 = vadd.f32 0.0, %v2368
      %v2370 = vpop.f32.mrf.mxu0
      %v2371 = vadd.f32 0.0, %v2370
      %2372 = vmatmul.bf16.gmra.mxu0 %v2286
      %v2373 = vpop.f32.mrf.mxu0
      %v2374 = vadd.f32 0.0, %v2373
      %v2375 = vpop.f32.mrf.mxu0
      %v2376 = vadd.f32 0.0, %v2375
      %2377 = vmatmul.bf16.gmra.mxu0 %v2289
      %v2378 = vpop.f32.mrf.mxu0
      %v2379 = vadd.f32 0.0, %v2378
      %v2380 = vpop.f32.mrf.mxu0
      %v2381 = vadd.f32 0.0, %v2380
      %2382 = vmatmul.bf16.gmra.mxu0 %v2292
      %v2383 = vpop.f32.mrf.mxu0
      %v2384 = vadd.f32 0.0, %v2383
      %v2385 = vpop.f32.mrf.mxu0
      %v2386 = vadd.f32 0.0, %v2385
      %2387 = vmatmul.bf16.gmra.mxu0 %v2295
      %v2388 = vpop.f32.mrf.mxu0
      %v2389 = vadd.f32 0.0, %v2388
      %v2390 = vpop.f32.mrf.mxu0
      %v2391 = vadd.f32 0.0, %v2390
      %2392 = vmatmul.bf16.gmra.mxu0 %v2298
      %v2393 = vpop.f32.mrf.mxu0
      %v2394 = vadd.f32 0.0, %v2393
      %v2395 = vpop.f32.mrf.mxu0
      %v2396 = vadd.f32 0.0, %v2395
      %2397 = vmatmul.bf16.gmra.mxu0 %v2301
      %v2398 = vpop.f32.mrf.mxu0
      %v2399 = vadd.f32 0.0, %v2398
      %v2400 = vpop.f32.mrf.mxu0
      %v2401 = vadd.f32 0.0, %v2400
      %2402 = vmatmul.bf16.gmra.mxu0 %v2304
      %v2403 = vpop.f32.mrf.mxu0
      %v2404 = vadd.f32 0.0, %v2403
      %v2405 = vpop.f32.mrf.mxu0
      %v2406 = vadd.f32 0.0, %v2405
      %2407 = vdwg.mxu0
      %v2408 = vld [vmem:[#allocation3] sm:$0xff]
      %v2409 = vld [vmem:[#allocation3 + $0x8] sm:$0xff]
      %v2410 = vld [vmem:[#allocation3 + $0x10] sm:$0xff]
      %v2411 = vld [vmem:[#allocation3 + $0x18] sm:$0xff]
      %v2412 = vld [vmem:[#allocation3 + $0x20] sm:$0xff]
      %v2413 = vld [vmem:[#allocation3 + $0x28] sm:$0xff]
      %v2414 = vld [vmem:[#allocation3 + $0x30] sm:$0xff]
      %v2415 = vld [vmem:[#allocation3 + $0x38] sm:$0xff]
      %v2416 = vld [vmem:[#allocation3 + $0x40] sm:$0xff]
      %v2417 = vld [vmem:[#allocation3 + $0x48] sm:$0xff]
      %v2418 = vld [vmem:[#allocation3 + $0x50] sm:$0xff]
      %v2419 = vld [vmem:[#allocation3 + $0x58] sm:$0xff]
      %v2420 = vld [vmem:[#allocation3 + $0x60] sm:$0xff]
      %v2421 = vld [vmem:[#allocation3 + $0x68] sm:$0xff]
      %v2422 = vld [vmem:[#allocation3 + $0x70] sm:$0xff]
      %v2423 = vld [vmem:[#allocation3 + $0x78] sm:$0xff]
      %v2424 = vld [vmem:[#allocation3 + $0x80] sm:$0xff]
      %v2425 = vld [vmem:[#allocation3 + $0x88] sm:$0xff]
      %v2426 = vld [vmem:[#allocation3 + $0x90] sm:$0xff]
      %v2427 = vld [vmem:[#allocation3 + $0x98] sm:$0xff]
      %v2428 = vld [vmem:[#allocation3 + $0xa0] sm:$0xff]
      %v2429 = vld [vmem:[#allocation3 + $0xa8] sm:$0xff]
      %v2430 = vld [vmem:[#allocation3 + $0xb0] sm:$0xff]
      %v2431 = vld [vmem:[#allocation3 + $0xb8] sm:$0xff]
      %v2432 = vld [vmem:[#allocation3 + $0xc0] sm:$0xff]
      %v2433 = vld [vmem:[#allocation3 + $0xc8] sm:$0xff]
      %v2434 = vld [vmem:[#allocation3 + $0xd0] sm:$0xff]
      %v2435 = vld [vmem:[#allocation3 + $0xd8] sm:$0xff]
      %v2436 = vld [vmem:[#allocation3 + $0xe0] sm:$0xff]
      %v2437 = vld [vmem:[#allocation3 + $0xe8] sm:$0xff]
      %v2438 = vld [vmem:[#allocation3 + $0xf0] sm:$0xff]
      %v2439 = vld [vmem:[#allocation3 + $0xf8] sm:$0xff]
      %v2440 = vld [vmem:[#allocation3 + $0x100] sm:$0xff]
      %v2441 = vld [vmem:[#allocation3 + $0x108] sm:$0xff]
      %v2442 = vld [vmem:[#allocation3 + $0x110] sm:$0xff]
      %v2443 = vld [vmem:[#allocation3 + $0x118] sm:$0xff]
      %v2444 = vadd.f32 %v2408, %v2319
      %v2445 = vadd.f32 %v2409, %v2321
      %v2446 = vadd.f32 %v2410, %v2324
      %v2447 = vadd.f32 %v2411, %v2326
      %v2448 = vadd.f32 %v2412, %v2329
      %v2449 = vadd.f32 %v2413, %v2331
      %v2450 = vadd.f32 %v2414, %v2334
      %v2451 = vadd.f32 %v2415, %v2336
      %v2452 = vadd.f32 %v2416, %v2339
      %v2453 = vadd.f32 %v2417, %v2341
      %v2454 = vadd.f32 %v2418, %v2344
      %v2455 = vadd.f32 %v2419, %v2346
      %v2456 = vadd.f32 %v2420, %v2349
      %v2457 = vadd.f32 %v2421, %v2351
      %v2458 = vadd.f32 %v2422, %v2354
      %v2459 = vadd.f32 %v2423, %v2356
      %v2460 = vadd.f32 %v2424, %v2359
      %v2461 = vadd.f32 %v2425, %v2361
      %v2462 = vadd.f32 %v2426, %v2364
      %v2463 = vadd.f32 %v2427, %v2366
      %v2464 = vadd.f32 %v2428, %v2369
      %v2465 = vadd.f32 %v2429, %v2371
      %v2466 = vadd.f32 %v2430, %v2374
      %v2467 = vadd.f32 %v2431, %v2376
      %v2468 = vadd.f32 %v2432, %v2379
      %v2469 = vadd.f32 %v2433, %v2381
      %v2470 = vadd.f32 %v2434, %v2384
      %v2471 = vadd.f32 %v2435, %v2386
      %v2472 = vadd.f32 %v2436, %v2389
      %v2473 = vadd.f32 %v2437, %v2391
      %v2474 = vadd.f32 %v2438, %v2394
      %v2475 = vadd.f32 %v2439, %v2396
      %v2476 = vadd.f32 %v2440, %v2399
      %v2477 = vadd.f32 %v2441, %v2401
      %v2478 = vadd.f32 %v2442, %v2404
      %v2479 = vadd.f32 %v2443, %v2406
      %2480 = vst [vmem:[#allocation3] sm:$0xff] %v2444
      %2481 = vst [vmem:[#allocation3 + $0x8] sm:$0xff] %v2445
      %2482 = vst [vmem:[#allocation3 + $0x10] sm:$0xff] %v2446
      %2483 = vst [vmem:[#allocation3 + $0x18] sm:$0xff] %v2447
      %2484 = vst [vmem:[#allocation3 + $0x20] sm:$0xff] %v2448
      %2485 = vst [vmem:[#allocation3 + $0x28] sm:$0xff] %v2449
      %2486 = vst [vmem:[#allocation3 + $0x30] sm:$0xff] %v2450
      %2487 = vst [vmem:[#allocation3 + $0x38] sm:$0xff] %v2451
      %2488 = vst [vmem:[#allocation3 + $0x40] sm:$0xff] %v2452
      %2489 = vst [vmem:[#allocation3 + $0x48] sm:$0xff] %v2453
      %2490 = vst [vmem:[#allocation3 + $0x50] sm:$0xff] %v2454
      %2491 = vst [vmem:[#allocation3 + $0x58] sm:$0xff] %v2455
      %2492 = vst [vmem:[#allocation3 + $0x60] sm:$0xff] %v2456
      %2493 = vst [vmem:[#allocation3 + $0x68] sm:$0xff] %v2457
      %2494 = vst [vmem:[#allocation3 + $0x70] sm:$0xff] %v2458
      %2495 = vst [vmem:[#allocation3 + $0x78] sm:$0xff] %v2459
      %2496 = vst [vmem:[#allocation3 + $0x80] sm:$0xff] %v2460
      %2497 = vst [vmem:[#allocation3 + $0x88] sm:$0xff] %v2461
      %2498 = vst [vmem:[#allocation3 + $0x90] sm:$0xff] %v2462
      %2499 = vst [vmem:[#allocation3 + $0x98] sm:$0xff] %v2463
      %2500 = vst [vmem:[#allocation3 + $0xa0] sm:$0xff] %v2464
      %2501 = vst [vmem:[#allocation3 + $0xa8] sm:$0xff] %v2465
      %2502 = vst [vmem:[#allocation3 + $0xb0] sm:$0xff] %v2466
      %2503 = vst [vmem:[#allocation3 + $0xb8] sm:$0xff] %v2467
      %2504 = vst [vmem:[#allocation3 + $0xc0] sm:$0xff] %v2468
      %2505 = vst [vmem:[#allocation3 + $0xc8] sm:$0xff] %v2469
      %2506 = vst [vmem:[#allocation3 + $0xd0] sm:$0xff] %v2470
      %2507 = vst [vmem:[#allocation3 + $0xd8] sm:$0xff] %v2471
      %2508 = vst [vmem:[#allocation3 + $0xe0] sm:$0xff] %v2472
      %2509 = vst [vmem:[#allocation3 + $0xe8] sm:$0xff] %v2473
      %2510 = vst [vmem:[#allocation3 + $0xf0] sm:$0xff] %v2474
      %2511 = vst [vmem:[#allocation3 + $0xf8] sm:$0xff] %v2475
      %2512 = vst [vmem:[#allocation3 + $0x100] sm:$0xff] %v2476
      %2513 = vst [vmem:[#allocation3 + $0x108] sm:$0xff] %v2477
      %2514 = vst [vmem:[#allocation3 + $0x110] sm:$0xff] %v2478
      %2515 = vst [vmem:[#allocation3 + $0x118] sm:$0xff] %v2479
      %v2516 = vld [vmem:[%s335 + $0x25] sm:$0xff]
      %v2517 = vld [vmem:[%s335 + $0x2d] sm:$0xff]
      %v2518 = vld [vmem:[%s335 + $0x35] sm:$0xff]
      %v2519 = vld [vmem:[%s335 + $0x3d] sm:$0xff]
      %v2520 = vld [vmem:[%s335 + $0x45] sm:$0xff]
      %v2521 = vld [vmem:[%s335 + $0x4d] sm:$0xff]
      %v2522 = vld [vmem:[%s335 + $0x55] sm:$0xff]
      %v2523 = vld [vmem:[%s335 + $0x5d] sm:$0xff]
      %v2524 = vld [vmem:[%s335 + $0x65] sm:$0xff]
      %v2525 = vld [vmem:[%s335 + $0x6d] sm:$0xff]
      %v2526 = vld [vmem:[%s335 + $0x75] sm:$0xff]
      %v2527 = vld [vmem:[%s335 + $0x7d] sm:$0xff]
      %v2528 = vld [vmem:[%s335 + $0x85] sm:$0xff]
      %v2529 = vld [vmem:[%s335 + $0x8d] sm:$0xff]
      %v2530 = vld [vmem:[%s335 + $0x95] sm:$0xff]
      %v2531 = vld [vmem:[%s335 + $0x9d] sm:$0xff]
      %v2532 = vld [vmem:[%s335 + $0xa5] sm:$0xff]
      %v2533 = vld [vmem:[%s335 + $0xad] sm:$0xff]
      %v2534 = vld [vmem:[%s335 + $0xb5] sm:$0xff]
      %v2535 = vld [vmem:[%s335 + $0xbd] sm:$0xff]
      %v2536 = vld [vmem:[%s335 + $0xc5] sm:$0xff]
      %v2537 = vld [vmem:[%s335 + $0xcd] sm:$0xff]
      %v2538 = vld [vmem:[%s335 + $0xd5] sm:$0xff]
      %v2539 = vld [vmem:[%s335 + $0xdd] sm:$0xff]
      %v2540 = vld [vmem:[%s335 + $0xe5] sm:$0xff]
      %v2541 = vld [vmem:[%s335 + $0xed] sm:$0xff]
      %v2542 = vld [vmem:[%s335 + $0xf5] sm:$0xff]
      %v2543 = vld [vmem:[%s335 + $0xfd] sm:$0xff]
      %v2544 = vld [vmem:[%s335 + $0x105] sm:$0xff]
      %v2545 = vld [vmem:[%s335 + $0x10d] sm:$0xff]
      %v2546 = vld [vmem:[%s335 + $0x115] sm:$0xff]
      %v2547 = vld [vmem:[%s335 + $0x11d] sm:$0xff]
      %v2548 = vld [vmem:[%s335 + $0x125] sm:$0xff]
      %v2549 = vld [vmem:[%s335 + $0x12d] sm:$0xff]
      %v2550 = vld [vmem:[%s335 + $0x135] sm:$0xff]
      %v2551 = vld [vmem:[%s335 + $0x13d] sm:$0xff]
      %v2552 = vpack.c.bf16 %v2517, %v2516
      %v2553 = vpack.c.bf16 %v2519, %v2518
      %v2554 = vpack.c.bf16 %v2521, %v2520
      %v2555 = vpack.c.bf16 %v2523, %v2522
      %v2556 = vpack.c.bf16 %v2525, %v2524
      %v2557 = vpack.c.bf16 %v2527, %v2526
      %v2558 = vpack.c.bf16 %v2529, %v2528
      %v2559 = vpack.c.bf16 %v2531, %v2530
      %v2560 = vpack.c.bf16 %v2533, %v2532
      %v2561 = vpack.c.bf16 %v2535, %v2534
      %v2562 = vpack.c.bf16 %v2537, %v2536
      %v2563 = vpack.c.bf16 %v2539, %v2538
      %v2564 = vpack.c.bf16 %v2541, %v2540
      %v2565 = vpack.c.bf16 %v2543, %v2542
      %v2566 = vpack.c.bf16 %v2545, %v2544
      %v2567 = vpack.c.bf16 %v2547, %v2546
      %v2568 = vpack.c.bf16 %v2549, %v2548
      %v2569 = vpack.c.bf16 %v2551, %v2550
      %s2570 = scalar_lea.vmem %s1, 28
      %v2571 = vld [vmem:[%s2570] sm:$0xf]
      %v2573 = vsel %vm402, %v2552, 0
      %v2576 = vsel %vm402, %v2553, 0
      %v2579 = vsel %vm402, %v2554, 0
      %v2582 = vsel %vm402, %v2555, 0
      %v2585 = vsel %vm402, %v2556, 0
      %v2588 = vsel %vm402, %v2557, 0
      %v2591 = vsel %vm402, %v2558, 0
      %v2594 = vsel %vm402, %v2559, 0
      %v2597 = vsel %vm402, %v2560, 0
      %v2600 = vsel %vm402, %v2561, 0
      %v2603 = vsel %vm402, %v2562, 0
      %v2606 = vsel %vm402, %v2563, 0
      %v2609 = vsel %vm402, %v2564, 0
      %v2612 = vsel %vm402, %v2565, 0
      %v2615 = vsel %vm402, %v2566, 0
      %v2618 = vsel %vm402, %v2567, 0
      %v2621 = vsel %vm402, %v2568, 0
      %v2624 = vsel %vm402, %v2569, 0
      %v2627 = vsel %vm457, %v2571, 0
      %2629 = vmatpush.bf16.msra.mxu0 0
      %2630 = vmatpush.bf16.msra.mxu0 0
      %2631 = vmatpush.bf16.msra.mxu0 0
      %2632 = vmatpush.bf16.msra.mxu0 0
      %2633 = vmatpush.bf16.msra.mxu0 0
      %2634 = vmatpush.bf16.msra.mxu0 0
      %2635 = vmatpush.bf16.msra.mxu0 0
      %2636 = vmatpush.bf16.msra.mxu0 %v2627
      %2637 = vmatmul.bf16.gmra.mxu0 %v2573
      %v2638 = vpop.f32.mrf.mxu0
      %v2639 = vadd.f32 0.0, %v2638
      %v2640 = vpop.f32.mrf.mxu0
      %v2641 = vadd.f32 0.0, %v2640
      %2642 = vmatmul.bf16.gmra.mxu0 %v2576
      %v2643 = vpop.f32.mrf.mxu0
      %v2644 = vadd.f32 0.0, %v2643
      %v2645 = vpop.f32.mrf.mxu0
      %v2646 = vadd.f32 0.0, %v2645
      %2647 = vmatmul.bf16.gmra.mxu0 %v2579
      %v2648 = vpop.f32.mrf.mxu0
      %v2649 = vadd.f32 0.0, %v2648
      %v2650 = vpop.f32.mrf.mxu0
      %v2651 = vadd.f32 0.0, %v2650
      %2652 = vmatmul.bf16.gmra.mxu0 %v2582
      %v2653 = vpop.f32.mrf.mxu0
      %v2654 = vadd.f32 0.0, %v2653
      %v2655 = vpop.f32.mrf.mxu0
      %v2656 = vadd.f32 0.0, %v2655
      %2657 = vmatmul.bf16.gmra.mxu0 %v2585
      %v2658 = vpop.f32.mrf.mxu0
      %v2659 = vadd.f32 0.0, %v2658
      %v2660 = vpop.f32.mrf.mxu0
      %v2661 = vadd.f32 0.0, %v2660
      %2662 = vmatmul.bf16.gmra.mxu0 %v2588
      %v2663 = vpop.f32.mrf.mxu0
      %v2664 = vadd.f32 0.0, %v2663
      %v2665 = vpop.f32.mrf.mxu0
      %v2666 = vadd.f32 0.0, %v2665
      %2667 = vmatmul.bf16.gmra.mxu0 %v2591
      %v2668 = vpop.f32.mrf.mxu0
      %v2669 = vadd.f32 0.0, %v2668
      %v2670 = vpop.f32.mrf.mxu0
      %v2671 = vadd.f32 0.0, %v2670
      %2672 = vmatmul.bf16.gmra.mxu0 %v2594
      %v2673 = vpop.f32.mrf.mxu0
      %v2674 = vadd.f32 0.0, %v2673
      %v2675 = vpop.f32.mrf.mxu0
      %v2676 = vadd.f32 0.0, %v2675
      %2677 = vmatmul.bf16.gmra.mxu0 %v2597
      %v2678 = vpop.f32.mrf.mxu0
      %v2679 = vadd.f32 0.0, %v2678
      %v2680 = vpop.f32.mrf.mxu0
      %v2681 = vadd.f32 0.0, %v2680
      %2682 = vmatmul.bf16.gmra.mxu0 %v2600
      %v2683 = vpop.f32.mrf.mxu0
      %v2684 = vadd.f32 0.0, %v2683
      %v2685 = vpop.f32.mrf.mxu0
      %v2686 = vadd.f32 0.0, %v2685
      %2687 = vmatmul.bf16.gmra.mxu0 %v2603
      %v2688 = vpop.f32.mrf.mxu0
      %v2689 = vadd.f32 0.0, %v2688
      %v2690 = vpop.f32.mrf.mxu0
      %v2691 = vadd.f32 0.0, %v2690
      %2692 = vmatmul.bf16.gmra.mxu0 %v2606
      %v2693 = vpop.f32.mrf.mxu0
      %v2694 = vadd.f32 0.0, %v2693
      %v2695 = vpop.f32.mrf.mxu0
      %v2696 = vadd.f32 0.0, %v2695
      %2697 = vmatmul.bf16.gmra.mxu0 %v2609
      %v2698 = vpop.f32.mrf.mxu0
      %v2699 = vadd.f32 0.0, %v2698
      %v2700 = vpop.f32.mrf.mxu0
      %v2701 = vadd.f32 0.0, %v2700
      %2702 = vmatmul.bf16.gmra.mxu0 %v2612
      %v2703 = vpop.f32.mrf.mxu0
      %v2704 = vadd.f32 0.0, %v2703
      %v2705 = vpop.f32.mrf.mxu0
      %v2706 = vadd.f32 0.0, %v2705
      %2707 = vmatmul.bf16.gmra.mxu0 %v2615
      %v2708 = vpop.f32.mrf.mxu0
      %v2709 = vadd.f32 0.0, %v2708
      %v2710 = vpop.f32.mrf.mxu0
      %v2711 = vadd.f32 0.0, %v2710
      %2712 = vmatmul.bf16.gmra.mxu0 %v2618
      %v2713 = vpop.f32.mrf.mxu0
      %v2714 = vadd.f32 0.0, %v2713
      %v2715 = vpop.f32.mrf.mxu0
      %v2716 = vadd.f32 0.0, %v2715
      %2717 = vmatmul.bf16.gmra.mxu0 %v2621
      %v2718 = vpop.f32.mrf.mxu0
      %v2719 = vadd.f32 0.0, %v2718
      %v2720 = vpop.f32.mrf.mxu0
      %v2721 = vadd.f32 0.0, %v2720
      %2722 = vmatmul.bf16.gmra.mxu0 %v2624
      %v2723 = vpop.f32.mrf.mxu0
      %v2724 = vadd.f32 0.0, %v2723
      %v2725 = vpop.f32.mrf.mxu0
      %v2726 = vadd.f32 0.0, %v2725
      %2727 = vdwg.mxu0
      %v2728 = vld [vmem:[#allocation3] sm:$0xff]
      %v2729 = vld [vmem:[#allocation3 + $0x8] sm:$0xff]
      %v2730 = vld [vmem:[#allocation3 + $0x10] sm:$0xff]
      %v2731 = vld [vmem:[#allocation3 + $0x18] sm:$0xff]
      %v2732 = vld [vmem:[#allocation3 + $0x20] sm:$0xff]
      %v2733 = vld [vmem:[#allocation3 + $0x28] sm:$0xff]
      %v2734 = vld [vmem:[#allocation3 + $0x30] sm:$0xff]
      %v2735 = vld [vmem:[#allocation3 + $0x38] sm:$0xff]
      %v2736 = vld [vmem:[#allocation3 + $0x40] sm:$0xff]
      %v2737 = vld [vmem:[#allocation3 + $0x48] sm:$0xff]
      %v2738 = vld [vmem:[#allocation3 + $0x50] sm:$0xff]
      %v2739 = vld [vmem:[#allocation3 + $0x58] sm:$0xff]
      %v2740 = vld [vmem:[#allocation3 + $0x60] sm:$0xff]
      %v2741 = vld [vmem:[#allocation3 + $0x68] sm:$0xff]
      %v2742 = vld [vmem:[#allocation3 + $0x70] sm:$0xff]
      %v2743 = vld [vmem:[#allocation3 + $0x78] sm:$0xff]
      %v2744 = vld [vmem:[#allocation3 + $0x80] sm:$0xff]
      %v2745 = vld [vmem:[#allocation3 + $0x88] sm:$0xff]
      %v2746 = vld [vmem:[#allocation3 + $0x90] sm:$0xff]
      %v2747 = vld [vmem:[#allocation3 + $0x98] sm:$0xff]
      %v2748 = vld [vmem:[#allocation3 + $0xa0] sm:$0xff]
      %v2749 = vld [vmem:[#allocation3 + $0xa8] sm:$0xff]
      %v2750 = vld [vmem:[#allocation3 + $0xb0] sm:$0xff]
      %v2751 = vld [vmem:[#allocation3 + $0xb8] sm:$0xff]
      %v2752 = vld [vmem:[#allocation3 + $0xc0] sm:$0xff]
      %v2753 = vld [vmem:[#allocation3 + $0xc8] sm:$0xff]
      %v2754 = vld [vmem:[#allocation3 + $0xd0] sm:$0xff]
      %v2755 = vld [vmem:[#allocation3 + $0xd8] sm:$0xff]
      %v2756 = vld [vmem:[#allocation3 + $0xe0] sm:$0xff]
      %v2757 = vld [vmem:[#allocation3 + $0xe8] sm:$0xff]
      %v2758 = vld [vmem:[#allocation3 + $0xf0] sm:$0xff]
      %v2759 = vld [vmem:[#allocation3 + $0xf8] sm:$0xff]
      %v2760 = vld [vmem:[#allocation3 + $0x100] sm:$0xff]
      %v2761 = vld [vmem:[#allocation3 + $0x108] sm:$0xff]
      %v2762 = vld [vmem:[#allocation3 + $0x110] sm:$0xff]
      %v2763 = vld [vmem:[#allocation3 + $0x118] sm:$0xff]
      %v2764 = vadd.f32 %v2728, %v2639
      %v2765 = vadd.f32 %v2729, %v2641
      %v2766 = vadd.f32 %v2730, %v2644
      %v2767 = vadd.f32 %v2731, %v2646
      %v2768 = vadd.f32 %v2732, %v2649
      %v2769 = vadd.f32 %v2733, %v2651
      %v2770 = vadd.f32 %v2734, %v2654
      %v2771 = vadd.f32 %v2735, %v2656
      %v2772 = vadd.f32 %v2736, %v2659
      %v2773 = vadd.f32 %v2737, %v2661
      %v2774 = vadd.f32 %v2738, %v2664
      %v2775 = vadd.f32 %v2739, %v2666
      %v2776 = vadd.f32 %v2740, %v2669
      %v2777 = vadd.f32 %v2741, %v2671
      %v2778 = vadd.f32 %v2742, %v2674
      %v2779 = vadd.f32 %v2743, %v2676
      %v2780 = vadd.f32 %v2744, %v2679
      %v2781 = vadd.f32 %v2745, %v2681
      %v2782 = vadd.f32 %v2746, %v2684
      %v2783 = vadd.f32 %v2747, %v2686
      %v2784 = vadd.f32 %v2748, %v2689
      %v2785 = vadd.f32 %v2749, %v2691
      %v2786 = vadd.f32 %v2750, %v2694
      %v2787 = vadd.f32 %v2751, %v2696
      %v2788 = vadd.f32 %v2752, %v2699
      %v2789 = vadd.f32 %v2753, %v2701
      %v2790 = vadd.f32 %v2754, %v2704
      %v2791 = vadd.f32 %v2755, %v2706
      %v2792 = vadd.f32 %v2756, %v2709
      %v2793 = vadd.f32 %v2757, %v2711
      %v2794 = vadd.f32 %v2758, %v2714
      %v2795 = vadd.f32 %v2759, %v2716
      %v2796 = vadd.f32 %v2760, %v2719
      %v2797 = vadd.f32 %v2761, %v2721
      %v2798 = vadd.f32 %v2762, %v2724
      %v2799 = vadd.f32 %v2763, %v2726
      %2800 = vst [vmem:[#allocation3] sm:$0xff] %v2764
      %2801 = vst [vmem:[#allocation3 + $0x8] sm:$0xff] %v2765
      %2802 = vst [vmem:[#allocation3 + $0x10] sm:$0xff] %v2766
      %2803 = vst [vmem:[#allocation3 + $0x18] sm:$0xff] %v2767
      %2804 = vst [vmem:[#allocation3 + $0x20] sm:$0xff] %v2768
      %2805 = vst [vmem:[#allocation3 + $0x28] sm:$0xff] %v2769
      %2806 = vst [vmem:[#allocation3 + $0x30] sm:$0xff] %v2770
      %2807 = vst [vmem:[#allocation3 + $0x38] sm:$0xff] %v2771
      %2808 = vst [vmem:[#allocation3 + $0x40] sm:$0xff] %v2772
      %2809 = vst [vmem:[#allocation3 + $0x48] sm:$0xff] %v2773
      %2810 = vst [vmem:[#allocation3 + $0x50] sm:$0xff] %v2774
      %2811 = vst [vmem:[#allocation3 + $0x58] sm:$0xff] %v2775
      %2812 = vst [vmem:[#allocation3 + $0x60] sm:$0xff] %v2776
      %2813 = vst [vmem:[#allocation3 + $0x68] sm:$0xff] %v2777
      %2814 = vst [vmem:[#allocation3 + $0x70] sm:$0xff] %v2778
      %2815 = vst [vmem:[#allocation3 + $0x78] sm:$0xff] %v2779
      %2816 = vst [vmem:[#allocation3 + $0x80] sm:$0xff] %v2780
      %2817 = vst [vmem:[#allocation3 + $0x88] sm:$0xff] %v2781
      %2818 = vst [vmem:[#allocation3 + $0x90] sm:$0xff] %v2782
      %2819 = vst [vmem:[#allocation3 + $0x98] sm:$0xff] %v2783
      %2820 = vst [vmem:[#allocation3 + $0xa0] sm:$0xff] %v2784
      %2821 = vst [vmem:[#allocation3 + $0xa8] sm:$0xff] %v2785
      %2822 = vst [vmem:[#allocation3 + $0xb0] sm:$0xff] %v2786
      %2823 = vst [vmem:[#allocation3 + $0xb8] sm:$0xff] %v2787
      %2824 = vst [vmem:[#allocation3 + $0xc0] sm:$0xff] %v2788
      %2825 = vst [vmem:[#allocation3 + $0xc8] sm:$0xff] %v2789
      %2826 = vst [vmem:[#allocation3 + $0xd0] sm:$0xff] %v2790
      %2827 = vst [vmem:[#allocation3 + $0xd8] sm:$0xff] %v2791
      %2828 = vst [vmem:[#allocation3 + $0xe0] sm:$0xff] %v2792
      %2829 = vst [vmem:[#allocation3 + $0xe8] sm:$0xff] %v2793
      %2830 = vst [vmem:[#allocation3 + $0xf0] sm:$0xff] %v2794
      %2831 = vst [vmem:[#allocation3 + $0xf8] sm:$0xff] %v2795
      %2832 = vst [vmem:[#allocation3 + $0x100] sm:$0xff] %v2796
      %2833 = vst [vmem:[#allocation3 + $0x108] sm:$0xff] %v2797
      %2834 = vst [vmem:[#allocation3 + $0x110] sm:$0xff] %v2798
      %2835 = vst [vmem:[#allocation3 + $0x118] sm:$0xff] %v2799
      %v2836 = vld [vmem:[%s335 + $0x26] sm:$0xff]
      %v2837 = vld [vmem:[%s335 + $0x2e] sm:$0xff]
      %v2838 = vld [vmem:[%s335 + $0x36] sm:$0xff]
      %v2839 = vld [vmem:[%s335 + $0x3e] sm:$0xff]
      %v2840 = vld [vmem:[%s335 + $0x46] sm:$0xff]
      %v2841 = vld [vmem:[%s335 + $0x4e] sm:$0xff]
      %v2842 = vld [vmem:[%s335 + $0x56] sm:$0xff]
      %v2843 = vld [vmem:[%s335 + $0x5e] sm:$0xff]
      %v2844 = vld [vmem:[%s335 + $0x66] sm:$0xff]
      %v2845 = vld [vmem:[%s335 + $0x6e] sm:$0xff]
      %v2846 = vld [vmem:[%s335 + $0x76] sm:$0xff]
      %v2847 = vld [vmem:[%s335 + $0x7e] sm:$0xff]
      %v2848 = vld [vmem:[%s335 + $0x86] sm:$0xff]
      %v2849 = vld [vmem:[%s335 + $0x8e] sm:$0xff]
      %v2850 = vld [vmem:[%s335 + $0x96] sm:$0xff]
      %v2851 = vld [vmem:[%s335 + $0x9e] sm:$0xff]
      %v2852 = vld [vmem:[%s335 + $0xa6] sm:$0xff]
      %v2853 = vld [vmem:[%s335 + $0xae] sm:$0xff]
      %v2854 = vld [vmem:[%s335 + $0xb6] sm:$0xff]
      %v2855 = vld [vmem:[%s335 + $0xbe] sm:$0xff]
      %v2856 = vld [vmem:[%s335 + $0xc6] sm:$0xff]
      %v2857 = vld [vmem:[%s335 + $0xce] sm:$0xff]
      %v2858 = vld [vmem:[%s335 + $0xd6] sm:$0xff]
      %v2859 = vld [vmem:[%s335 + $0xde] sm:$0xff]
      %v2860 = vld [vmem:[%s335 + $0xe6] sm:$0xff]
      %v2861 = vld [vmem:[%s335 + $0xee] sm:$0xff]
      %v2862 = vld [vmem:[%s335 + $0xf6] sm:$0xff]
      %v2863 = vld [vmem:[%s335 + $0xfe] sm:$0xff]
      %v2864 = vld [vmem:[%s335 + $0x106] sm:$0xff]
      %v2865 = vld [vmem:[%s335 + $0x10e] sm:$0xff]
      %v2866 = vld [vmem:[%s335 + $0x116] sm:$0xff]
      %v2867 = vld [vmem:[%s335 + $0x11e] sm:$0xff]
      %v2868 = vld [vmem:[%s335 + $0x126] sm:$0xff]
      %v2869 = vld [vmem:[%s335 + $0x12e] sm:$0xff]
      %v2870 = vld [vmem:[%s335 + $0x136] sm:$0xff]
      %v2871 = vld [vmem:[%s335 + $0x13e] sm:$0xff]
      %v2872 = vpack.c.bf16 %v2837, %v2836
      %v2873 = vpack.c.bf16 %v2839, %v2838
      %v2874 = vpack.c.bf16 %v2841, %v2840
      %v2875 = vpack.c.bf16 %v2843, %v2842
      %v2876 = vpack.c.bf16 %v2845, %v2844
      %v2877 = vpack.c.bf16 %v2847, %v2846
      %v2878 = vpack.c.bf16 %v2849, %v2848
      %v2879 = vpack.c.bf16 %v2851, %v2850
      %v2880 = vpack.c.bf16 %v2853, %v2852
      %v2881 = vpack.c.bf16 %v2855, %v2854
      %v2882 = vpack.c.bf16 %v2857, %v2856
      %v2883 = vpack.c.bf16 %v2859, %v2858
      %v2884 = vpack.c.bf16 %v2861, %v2860
      %v2885 = vpack.c.bf16 %v2863, %v2862
      %v2886 = vpack.c.bf16 %v2865, %v2864
      %v2887 = vpack.c.bf16 %v2867, %v2866
      %v2888 = vpack.c.bf16 %v2869, %v2868
      %v2889 = vpack.c.bf16 %v2871, %v2870
      %s2890 = scalar_lea.vmem %s1, 32
      %v2891 = vld [vmem:[%s2890] sm:$0xf]
      %v2893 = vsel %vm402, %v2872, 0
      %v2896 = vsel %vm402, %v2873, 0
      %v2899 = vsel %vm402, %v2874, 0
      %v2902 = vsel %vm402, %v2875, 0
      %v2905 = vsel %vm402, %v2876, 0
      %v2908 = vsel %vm402, %v2877, 0
      %v2911 = vsel %vm402, %v2878, 0
      %v2914 = vsel %vm402, %v2879, 0
      %v2917 = vsel %vm402, %v2880, 0
      %v2920 = vsel %vm402, %v2881, 0
      %v2923 = vsel %vm402, %v2882, 0
      %v2926 = vsel %vm402, %v2883, 0
      %v2929 = vsel %vm402, %v2884, 0
      %v2932 = vsel %vm402, %v2885, 0
      %v2935 = vsel %vm402, %v2886, 0
      %v2938 = vsel %vm402, %v2887, 0
      %v2941 = vsel %vm402, %v2888, 0
      %v2944 = vsel %vm402, %v2889, 0
      %v2947 = vsel %vm457, %v2891, 0
      %2949 = vmatpush.bf16.msra.mxu0 0
      %2950 = vmatpush.bf16.msra.mxu0 0
      %2951 = vmatpush.bf16.msra.mxu0 0
      %2952 = vmatpush.bf16.msra.mxu0 0
      %2953 = vmatpush.bf16.msra.mxu0 0
      %2954 = vmatpush.bf16.msra.mxu0 0
      %2955 = vmatpush.bf16.msra.mxu0 0
      %2956 = vmatpush.bf16.msra.mxu0 %v2947
      %2957 = vmatmul.bf16.gmra.mxu0 %v2893
      %v2958 = vpop.f32.mrf.mxu0
      %v2959 = vadd.f32 0.0, %v2958
      %v2960 = vpop.f32.mrf.mxu0
      %v2961 = vadd.f32 0.0, %v2960
      %2962 = vmatmul.bf16.gmra.mxu0 %v2896
      %v2963 = vpop.f32.mrf.mxu0
      %v2964 = vadd.f32 0.0, %v2963
      %v2965 = vpop.f32.mrf.mxu0
      %v2966 = vadd.f32 0.0, %v2965
      %2967 = vmatmul.bf16.gmra.mxu0 %v2899
      %v2968 = vpop.f32.mrf.mxu0
      %v2969 = vadd.f32 0.0, %v2968
      %v2970 = vpop.f32.mrf.mxu0
      %v2971 = vadd.f32 0.0, %v2970
      %2972 = vmatmul.bf16.gmra.mxu0 %v2902
      %v2973 = vpop.f32.mrf.mxu0
      %v2974 = vadd.f32 0.0, %v2973
      %v2975 = vpop.f32.mrf.mxu0
      %v2976 = vadd.f32 0.0, %v2975
      %2977 = vmatmul.bf16.gmra.mxu0 %v2905
      %v2978 = vpop.f32.mrf.mxu0
      %v2979 = vadd.f32 0.0, %v2978
      %v2980 = vpop.f32.mrf.mxu0
      %v2981 = vadd.f32 0.0, %v2980
      %2982 = vmatmul.bf16.gmra.mxu0 %v2908
      %v2983 = vpop.f32.mrf.mxu0
      %v2984 = vadd.f32 0.0, %v2983
      %v2985 = vpop.f32.mrf.mxu0
      %v2986 = vadd.f32 0.0, %v2985
      %2987 = vmatmul.bf16.gmra.mxu0 %v2911
      %v2988 = vpop.f32.mrf.mxu0
      %v2989 = vadd.f32 0.0, %v2988
      %v2990 = vpop.f32.mrf.mxu0
      %v2991 = vadd.f32 0.0, %v2990
      %2992 = vmatmul.bf16.gmra.mxu0 %v2914
      %v2993 = vpop.f32.mrf.mxu0
      %v2994 = vadd.f32 0.0, %v2993
      %v2995 = vpop.f32.mrf.mxu0
      %v2996 = vadd.f32 0.0, %v2995
      %2997 = vmatmul.bf16.gmra.mxu0 %v2917
      %v2998 = vpop.f32.mrf.mxu0
      %v2999 = vadd.f32 0.0, %v2998
      %v3000 = vpop.f32.mrf.mxu0
      %v3001 = vadd.f32 0.0, %v3000
      %3002 = vmatmul.bf16.gmra.mxu0 %v2920
      %v3003 = vpop.f32.mrf.mxu0
      %v3004 = vadd.f32 0.0, %v3003
      %v3005 = vpop.f32.mrf.mxu0
      %v3006 = vadd.f32 0.0, %v3005
      %3007 = vmatmul.bf16.gmra.mxu0 %v2923
      %v3008 = vpop.f32.mrf.mxu0
      %v3009 = vadd.f32 0.0, %v3008
      %v3010 = vpop.f32.mrf.mxu0
      %v3011 = vadd.f32 0.0, %v3010
      %3012 = vmatmul.bf16.gmra.mxu0 %v2926
      %v3013 = vpop.f32.mrf.mxu0
      %v3014 = vadd.f32 0.0, %v3013
      %v3015 = vpop.f32.mrf.mxu0
      %v3016 = vadd.f32 0.0, %v3015
      %3017 = vmatmul.bf16.gmra.mxu0 %v2929
      %v3018 = vpop.f32.mrf.mxu0
      %v3019 = vadd.f32 0.0, %v3018
      %v3020 = vpop.f32.mrf.mxu0
      %v3021 = vadd.f32 0.0, %v3020
      %3022 = vmatmul.bf16.gmra.mxu0 %v2932
      %v3023 = vpop.f32.mrf.mxu0
      %v3024 = vadd.f32 0.0, %v3023
      %v3025 = vpop.f32.mrf.mxu0
      %v3026 = vadd.f32 0.0, %v3025
      %3027 = vmatmul.bf16.gmra.mxu0 %v2935
      %v3028 = vpop.f32.mrf.mxu0
      %v3029 = vadd.f32 0.0, %v3028
      %v3030 = vpop.f32.mrf.mxu0
      %v3031 = vadd.f32 0.0, %v3030
      %3032 = vmatmul.bf16.gmra.mxu0 %v2938
      %v3033 = vpop.f32.mrf.mxu0
      %v3034 = vadd.f32 0.0, %v3033
      %v3035 = vpop.f32.mrf.mxu0
      %v3036 = vadd.f32 0.0, %v3035
      %3037 = vmatmul.bf16.gmra.mxu0 %v2941
      %v3038 = vpop.f32.mrf.mxu0
      %v3039 = vadd.f32 0.0, %v3038
      %v3040 = vpop.f32.mrf.mxu0
      %v3041 = vadd.f32 0.0, %v3040
      %3042 = vmatmul.bf16.gmra.mxu0 %v2944
      %v3043 = vpop.f32.mrf.mxu0
      %v3044 = vadd.f32 0.0, %v3043
      %v3045 = vpop.f32.mrf.mxu0
      %v3046 = vadd.f32 0.0, %v3045
      %3047 = vdwg.mxu0
      %v3048 = vld [vmem:[#allocation3] sm:$0xff]
      %v3049 = vld [vmem:[#allocation3 + $0x8] sm:$0xff]
      %v3050 = vld [vmem:[#allocation3 + $0x10] sm:$0xff]
      %v3051 = vld [vmem:[#allocation3 + $0x18] sm:$0xff]
      %v3052 = vld [vmem:[#allocation3 + $0x20] sm:$0xff]
      %v3053 = vld [vmem:[#allocation3 + $0x28] sm:$0xff]
      %v3054 = vld [vmem:[#allocation3 + $0x30] sm:$0xff]
      %v3055 = vld [vmem:[#allocation3 + $0x38] sm:$0xff]
      %v3056 = vld [vmem:[#allocation3 + $0x40] sm:$0xff]
      %v3057 = vld [vmem:[#allocation3 + $0x48] sm:$0xff]
      %v3058 = vld [vmem:[#allocation3 + $0x50] sm:$0xff]
      %v3059 = vld [vmem:[#allocation3 + $0x58] sm:$0xff]
      %v3060 = vld [vmem:[#allocation3 + $0x60] sm:$0xff]
      %v3061 = vld [vmem:[#allocation3 + $0x68] sm:$0xff]
      %v3062 = vld [vmem:[#allocation3 + $0x70] sm:$0xff]
      %v3063 = vld [vmem:[#allocation3 + $0x78] sm:$0xff]
      %v3064 = vld [vmem:[#allocation3 + $0x80] sm:$0xff]
      %v3065 = vld [vmem:[#allocation3 + $0x88] sm:$0xff]
      %v3066 = vld [vmem:[#allocation3 + $0x90] sm:$0xff]
      %v3067 = vld [vmem:[#allocation3 + $0x98] sm:$0xff]
      %v3068 = vld [vmem:[#allocation3 + $0xa0] sm:$0xff]
      %v3069 = vld [vmem:[#allocation3 + $0xa8] sm:$0xff]
      %v3070 = vld [vmem:[#allocation3 + $0xb0] sm:$0xff]
      %v3071 = vld [vmem:[#allocation3 + $0xb8] sm:$0xff]
      %v3072 = vld [vmem:[#allocation3 + $0xc0] sm:$0xff]
      %v3073 = vld [vmem:[#allocation3 + $0xc8] sm:$0xff]
      %v3074 = vld [vmem:[#allocation3 + $0xd0] sm:$0xff]
      %v3075 = vld [vmem:[#allocation3 + $0xd8] sm:$0xff]
      %v3076 = vld [vmem:[#allocation3 + $0xe0] sm:$0xff]
      %v3077 = vld [vmem:[#allocation3 + $0xe8] sm:$0xff]
      %v3078 = vld [vmem:[#allocation3 + $0xf0] sm:$0xff]
      %v3079 = vld [vmem:[#allocation3 + $0xf8] sm:$0xff]
      %v3080 = vld [vmem:[#allocation3 + $0x100] sm:$0xff]
      %v3081 = vld [vmem:[#allocation3 + $0x108] sm:$0xff]
      %v3082 = vld [vmem:[#allocation3 + $0x110] sm:$0xff]
      %v3083 = vld [vmem:[#allocation3 + $0x118] sm:$0xff]
      %v3084 = vadd.f32 %v3048, %v2959
      %v3085 = vadd.f32 %v3049, %v2961
      %v3086 = vadd.f32 %v3050, %v2964
      %v3087 = vadd.f32 %v3051, %v2966
      %v3088 = vadd.f32 %v3052, %v2969
      %v3089 = vadd.f32 %v3053, %v2971
      %v3090 = vadd.f32 %v3054, %v2974
      %v3091 = vadd.f32 %v3055, %v2976
      %v3092 = vadd.f32 %v3056, %v2979
      %v3093 = vadd.f32 %v3057, %v2981
      %v3094 = vadd.f32 %v3058, %v2984
      %v3095 = vadd.f32 %v3059, %v2986
      %v3096 = vadd.f32 %v3060, %v2989
      %v3097 = vadd.f32 %v3061, %v2991
      %v3098 = vadd.f32 %v3062, %v2994
      %v3099 = vadd.f32 %v3063, %v2996
      %v3100 = vadd.f32 %v3064, %v2999
      %v3101 = vadd.f32 %v3065, %v3001
      %v3102 = vadd.f32 %v3066, %v3004
      %v3103 = vadd.f32 %v3067, %v3006
      %v3104 = vadd.f32 %v3068, %v3009
      %v3105 = vadd.f32 %v3069, %v3011
      %v3106 = vadd.f32 %v3070, %v3014
      %v3107 = vadd.f32 %v3071, %v3016
      %v3108 = vadd.f32 %v3072, %v3019
      %v3109 = vadd.f32 %v3073, %v3021
      %v3110 = vadd.f32 %v3074, %v3024
      %v3111 = vadd.f32 %v3075, %v3026
      %v3112 = vadd.f32 %v3076, %v3029
      %v3113 = vadd.f32 %v3077, %v3031
      %v3114 = vadd.f32 %v3078, %v3034
      %v3115 = vadd.f32 %v3079, %v3036
      %v3116 = vadd.f32 %v3080, %v3039
      %v3117 = vadd.f32 %v3081, %v3041
      %v3118 = vadd.f32 %v3082, %v3044
      %v3119 = vadd.f32 %v3083, %v3046
      %3120 = vst [vmem:[#allocation3] sm:$0xff] %v3084
      %3121 = vst [vmem:[#allocation3 + $0x8] sm:$0xff] %v3085
      %3122 = vst [vmem:[#allocation3 + $0x10] sm:$0xff] %v3086
      %3123 = vst [vmem:[#allocation3 + $0x18] sm:$0xff] %v3087
      %3124 = vst [vmem:[#allocation3 + $0x20] sm:$0xff] %v3088
      %3125 = vst [vmem:[#allocation3 + $0x28] sm:$0xff] %v3089
      %3126 = vst [vmem:[#allocation3 + $0x30] sm:$0xff] %v3090
      %3127 = vst [vmem:[#allocation3 + $0x38] sm:$0xff] %v3091
      %3128 = vst [vmem:[#allocation3 + $0x40] sm:$0xff] %v3092
      %3129 = vst [vmem:[#allocation3 + $0x48] sm:$0xff] %v3093
      %3130 = vst [vmem:[#allocation3 + $0x50] sm:$0xff] %v3094
      %3131 = vst [vmem:[#allocation3 + $0x58] sm:$0xff] %v3095
      %3132 = vst [vmem:[#allocation3 + $0x60] sm:$0xff] %v3096
      %3133 = vst [vmem:[#allocation3 + $0x68] sm:$0xff] %v3097
      %3134 = vst [vmem:[#allocation3 + $0x70] sm:$0xff] %v3098
      %3135 = vst [vmem:[#allocation3 + $0x78] sm:$0xff] %v3099
      %3136 = vst [vmem:[#allocation3 + $0x80] sm:$0xff] %v3100
      %3137 = vst [vmem:[#allocation3 + $0x88] sm:$0xff] %v3101
      %3138 = vst [vmem:[#allocation3 + $0x90] sm:$0xff] %v3102
      %3139 = vst [vmem:[#allocation3 + $0x98] sm:$0xff] %v3103
      %3140 = vst [vmem:[#allocation3 + $0xa0] sm:$0xff] %v3104
      %3141 = vst [vmem:[#allocation3 + $0xa8] sm:$0xff] %v3105
      %3142 = vst [vmem:[#allocation3 + $0xb0] sm:$0xff] %v3106
      %3143 = vst [vmem:[#allocation3 + $0xb8] sm:$0xff] %v3107
      %3144 = vst [vmem:[#allocation3 + $0xc0] sm:$0xff] %v3108
      %3145 = vst [vmem:[#allocation3 + $0xc8] sm:$0xff] %v3109
      %3146 = vst [vmem:[#allocation3 + $0xd0] sm:$0xff] %v3110
      %3147 = vst [vmem:[#allocation3 + $0xd8] sm:$0xff] %v3111
      %3148 = vst [vmem:[#allocation3 + $0xe0] sm:$0xff] %v3112
      %3149 = vst [vmem:[#allocation3 + $0xe8] sm:$0xff] %v3113
      %3150 = vst [vmem:[#allocation3 + $0xf0] sm:$0xff] %v3114
      %3151 = vst [vmem:[#allocation3 + $0xf8] sm:$0xff] %v3115
      %3152 = vst [vmem:[#allocation3 + $0x100] sm:$0xff] %v3116
      %3153 = vst [vmem:[#allocation3 + $0x108] sm:$0xff] %v3117
      %3154 = vst [vmem:[#allocation3 + $0x110] sm:$0xff] %v3118
      %3155 = vst [vmem:[#allocation3 + $0x118] sm:$0xff] %v3119
      %v3156 = vld [vmem:[#allocation3] sm:$0xff]
      %v3157 = vld [vmem:[#allocation3 + $0x8] sm:$0xff]
      %v3158 = vld [vmem:[#allocation3 + $0x10] sm:$0xff]
      %v3159 = vld [vmem:[#allocation3 + $0x18] sm:$0xff]
      %v3160 = vld [vmem:[#allocation3 + $0x20] sm:$0xff]
      %v3161 = vld [vmem:[#allocation3 + $0x28] sm:$0xff]
      %v3162 = vld [vmem:[#allocation3 + $0x30] sm:$0xff]
      %v3163 = vld [vmem:[#allocation3 + $0x38] sm:$0xff]
      %v3164 = vld [vmem:[#allocation3 + $0x40] sm:$0xff]
      %v3165 = vld [vmem:[#allocation3 + $0x48] sm:$0xff]
      %v3166 = vld [vmem:[#allocation3 + $0x50] sm:$0xff]
      %v3167 = vld [vmem:[#allocation3 + $0x58] sm:$0xff]
      %v3168 = vld [vmem:[#allocation3 + $0x60] sm:$0xff]
      %v3169 = vld [vmem:[#allocation3 + $0x68] sm:$0xff]
      %v3170 = vld [vmem:[#allocation3 + $0x70] sm:$0xff]
      %v3171 = vld [vmem:[#allocation3 + $0x78] sm:$0xff]
      %v3172 = vld [vmem:[#allocation3 + $0x80] sm:$0xff]
      %v3173 = vld [vmem:[#allocation3 + $0x88] sm:$0xff]
      %v3174 = vld [vmem:[#allocation3 + $0x90] sm:$0xff]
      %v3175 = vld [vmem:[#allocation3 + $0x98] sm:$0xff]
      %v3176 = vld [vmem:[#allocation3 + $0xa0] sm:$0xff]
      %v3177 = vld [vmem:[#allocation3 + $0xa8] sm:$0xff]
      %v3178 = vld [vmem:[#allocation3 + $0xb0] sm:$0xff]
      %v3179 = vld [vmem:[#allocation3 + $0xb8] sm:$0xff]
      %v3180 = vld [vmem:[#allocation3 + $0xc0] sm:$0xff]
      %v3181 = vld [vmem:[#allocation3 + $0xc8] sm:$0xff]
      %v3182 = vld [vmem:[#allocation3 + $0xd0] sm:$0xff]
      %v3183 = vld [vmem:[#allocation3 + $0xd8] sm:$0xff]
      %v3184 = vld [vmem:[#allocation3 + $0xe0] sm:$0xff]
      %v3185 = vld [vmem:[#allocation3 + $0xe8] sm:$0xff]
      %v3186 = vld [vmem:[#allocation3 + $0xf0] sm:$0xff]
      %v3187 = vld [vmem:[#allocation3 + $0xf8] sm:$0xff]
      %v3188 = vld [vmem:[#allocation3 + $0x100] sm:$0xff]
      %v3189 = vld [vmem:[#allocation3 + $0x108] sm:$0xff]
      %v3190 = vld [vmem:[#allocation3 + $0x110] sm:$0xff]
      %v3191 = vld [vmem:[#allocation3 + $0x118] sm:$0xff]
      %v3192 = vld [vmem:[%s2] sm:$0x1]
      %v3194 = vperm.slane %v3192, 0
      %v3196 = vmul.f32 %v3156, %v3194
      %v3197 = vmul.f32 %v3157, %v3194
      %v3198 = vmul.f32 %v3158, %v3194
      %v3199 = vmul.f32 %v3159, %v3194
      %v3200 = vmul.f32 %v3160, %v3194
      %v3201 = vmul.f32 %v3161, %v3194
      %v3202 = vmul.f32 %v3162, %v3194
      %v3203 = vmul.f32 %v3163, %v3194
      %v3204 = vmul.f32 %v3164, %v3194
      %v3205 = vmul.f32 %v3165, %v3194
      %v3206 = vmul.f32 %v3166, %v3194
      %v3207 = vmul.f32 %v3167, %v3194
      %v3208 = vmul.f32 %v3168, %v3194
      %v3209 = vmul.f32 %v3169, %v3194
      %v3210 = vmul.f32 %v3170, %v3194
      %v3211 = vmul.f32 %v3171, %v3194
      %v3212 = vmul.f32 %v3172, %v3194
      %v3213 = vmul.f32 %v3173, %v3194
      %v3214 = vmul.f32 %v3174, %v3194
      %v3215 = vmul.f32 %v3175, %v3194
      %v3216 = vmul.f32 %v3176, %v3194
      %v3217 = vmul.f32 %v3177, %v3194
      %v3218 = vmul.f32 %v3178, %v3194
      %v3219 = vmul.f32 %v3179, %v3194
      %v3220 = vmul.f32 %v3180, %v3194
      %v3221 = vmul.f32 %v3181, %v3194
      %v3222 = vmul.f32 %v3182, %v3194
      %v3223 = vmul.f32 %v3183, %v3194
      %v3224 = vmul.f32 %v3184, %v3194
      %v3225 = vmul.f32 %v3185, %v3194
      %v3226 = vmul.f32 %v3186, %v3194
      %v3227 = vmul.f32 %v3187, %v3194
      %v3228 = vmul.f32 %v3188, %v3194
      %v3229 = vmul.f32 %v3189, %v3194
      %v3230 = vmul.f32 %v3190, %v3194
      %v3231 = vmul.f32 %v3191, %v3194
      %v3232 = vld [vmem:[%s3] sm:$0x1]
      %v3234 = vperm.slane %v3232, 0
      %v3236 = vadd.f32 %v3196, %v3234
      %v3237 = vadd.f32 %v3197, %v3234
      %v3238 = vadd.f32 %v3198, %v3234
      %v3239 = vadd.f32 %v3199, %v3234
      %v3240 = vadd.f32 %v3200, %v3234
      %v3241 = vadd.f32 %v3201, %v3234
      %v3242 = vadd.f32 %v3202, %v3234
      %v3243 = vadd.f32 %v3203, %v3234
      %v3244 = vadd.f32 %v3204, %v3234
      %v3245 = vadd.f32 %v3205, %v3234
      %v3246 = vadd.f32 %v3206, %v3234
      %v3247 = vadd.f32 %v3207, %v3234
      %v3248 = vadd.f32 %v3208, %v3234
      %v3249 = vadd.f32 %v3209, %v3234
      %v3250 = vadd.f32 %v3210, %v3234
      %v3251 = vadd.f32 %v3211, %v3234
      %v3252 = vadd.f32 %v3212, %v3234
      %v3253 = vadd.f32 %v3213, %v3234
      %v3254 = vadd.f32 %v3214, %v3234
      %v3255 = vadd.f32 %v3215, %v3234
      %v3256 = vadd.f32 %v3216, %v3234
      %v3257 = vadd.f32 %v3217, %v3234
      %v3258 = vadd.f32 %v3218, %v3234
      %v3259 = vadd.f32 %v3219, %v3234
      %v3260 = vadd.f32 %v3220, %v3234
      %v3261 = vadd.f32 %v3221, %v3234
      %v3262 = vadd.f32 %v3222, %v3234
      %v3263 = vadd.f32 %v3223, %v3234
      %v3264 = vadd.f32 %v3224, %v3234
      %v3265 = vadd.f32 %v3225, %v3234
      %v3266 = vadd.f32 %v3226, %v3234
      %v3267 = vadd.f32 %v3227, %v3234
      %v3268 = vadd.f32 %v3228, %v3234
      %v3269 = vadd.f32 %v3229, %v3234
      %v3270 = vadd.f32 %v3230, %v3234
      %v3271 = vadd.f32 %v3231, %v3234
      %v3272 = vmax.f32 %v3236, 0.0
      %v3273 = vmax.f32 %v3237, 0.0
      %v3274 = vmax.f32 %v3238, 0.0
      %v3275 = vmax.f32 %v3239, 0.0
      %v3276 = vmax.f32 %v3240, 0.0
      %v3277 = vmax.f32 %v3241, 0.0
      %v3278 = vmax.f32 %v3242, 0.0
      %v3279 = vmax.f32 %v3243, 0.0
      %v3280 = vmax.f32 %v3244, 0.0
      %v3281 = vmax.f32 %v3245, 0.0
      %v3282 = vmax.f32 %v3246, 0.0
      %v3283 = vmax.f32 %v3247, 0.0
      %v3284 = vmax.f32 %v3248, 0.0
      %v3285 = vmax.f32 %v3249, 0.0
      %v3286 = vmax.f32 %v3250, 0.0
      %v3287 = vmax.f32 %v3251, 0.0
      %v3288 = vmax.f32 %v3252, 0.0
      %v3289 = vmax.f32 %v3253, 0.0
      %v3290 = vmax.f32 %v3254, 0.0
      %v3291 = vmax.f32 %v3255, 0.0
      %v3292 = vmax.f32 %v3256, 0.0
      %v3293 = vmax.f32 %v3257, 0.0
      %v3294 = vmax.f32 %v3258, 0.0
      %v3295 = vmax.f32 %v3259, 0.0
      %v3296 = vmax.f32 %v3260, 0.0
      %v3297 = vmax.f32 %v3261, 0.0
      %v3298 = vmax.f32 %v3262, 0.0
      %v3299 = vmax.f32 %v3263, 0.0
      %v3300 = vmax.f32 %v3264, 0.0
      %v3301 = vmax.f32 %v3265, 0.0
      %v3302 = vmax.f32 %v3266, 0.0
      %v3303 = vmax.f32 %v3267, 0.0
      %v3304 = vmax.f32 %v3268, 0.0
      %v3305 = vmax.f32 %v3269, 0.0
      %v3306 = vmax.f32 %v3270, 0.0
      %v3307 = vmax.f32 %v3271, 0.0
      %v3308 = vld [vmem:[%s4] sm:$0xff]
      %v3309 = vld [vmem:[%s4 + $0x8] sm:$0xff]
      %v3310 = vld [vmem:[%s4 + $0x10] sm:$0xff]
      %v3311 = vld [vmem:[%s4 + $0x18] sm:$0xff]
      %v3312 = vld [vmem:[%s4 + $0x20] sm:$0xff]
      %v3313 = vld [vmem:[%s4 + $0x28] sm:$0xff]
      %v3314 = vld [vmem:[%s4 + $0x30] sm:$0xff]
      %v3315 = vld [vmem:[%s4 + $0x38] sm:$0xff]
      %v3316 = vld [vmem:[%s4 + $0x40] sm:$0xff]
      %v3317 = vld [vmem:[%s4 + $0x48] sm:$0xff]
      %v3318 = vld [vmem:[%s4 + $0x50] sm:$0xff]
      %v3319 = vld [vmem:[%s4 + $0x58] sm:$0xff]
      %v3320 = vld [vmem:[%s4 + $0x60] sm:$0xff]
      %v3321 = vld [vmem:[%s4 + $0x68] sm:$0xff]
      %v3322 = vld [vmem:[%s4 + $0x70] sm:$0xff]
      %v3323 = vld [vmem:[%s4 + $0x78] sm:$0xff]
      %v3324 = vld [vmem:[%s4 + $0x80] sm:$0xff]
      %v3325 = vld [vmem:[%s4 + $0x88] sm:$0xff]
      %v3326 = vld [vmem:[%s4 + $0x90] sm:$0xff]
      %v3327 = vld [vmem:[%s4 + $0x98] sm:$0xff]
      %v3328 = vld [vmem:[%s4 + $0xa0] sm:$0xff]
      %v3329 = vld [vmem:[%s4 + $0xa8] sm:$0xff]
      %v3330 = vld [vmem:[%s4 + $0xb0] sm:$0xff]
      %v3331 = vld [vmem:[%s4 + $0xb8] sm:$0xff]
      %v3332 = vld [vmem:[%s4 + $0xc0] sm:$0xff]
      %v3333 = vld [vmem:[%s4 + $0xc8] sm:$0xff]
      %v3334 = vld [vmem:[%s4 + $0xd0] sm:$0xff]
      %v3335 = vld [vmem:[%s4 + $0xd8] sm:$0xff]
      %v3336 = vld [vmem:[%s4 + $0xe0] sm:$0xff]
      %v3337 = vld [vmem:[%s4 + $0xe8] sm:$0xff]
      %v3338 = vld [vmem:[%s4 + $0xf0] sm:$0xff]
      %v3339 = vld [vmem:[%s4 + $0xf8] sm:$0xff]
      %v3340 = vld [vmem:[%s4 + $0x100] sm:$0xff]
      %v3341 = vld [vmem:[%s4 + $0x108] sm:$0xff]
      %v3342 = vld [vmem:[%s4 + $0x110] sm:$0xff]
      %v3343 = vld [vmem:[%s4 + $0x118] sm:$0xff]
      %3345 = vset.pattern.permute.xlu0 0
      %3346 = vperm.xlu0 %3345, %v3308
      %v3347 = vpop.permute.xlu0 %3346
      %3350 = vset.pattern.permute.xlu0 0
      %3351 = vperm.xlu0 %3350, %v3309
      %v3352 = vpop.permute.xlu0 %3351
      %3355 = vset.pattern.permute.xlu0 0
      %3356 = vperm.xlu0 %3355, %v3310
      %v3357 = vpop.permute.xlu0 %3356
      %3360 = vset.pattern.permute.xlu0 0
      %3361 = vperm.xlu0 %3360, %v3311
      %v3362 = vpop.permute.xlu0 %3361
      %3365 = vset.pattern.permute.xlu0 0
      %3366 = vperm.xlu0 %3365, %v3312
      %v3367 = vpop.permute.xlu0 %3366
      %3370 = vset.pattern.permute.xlu0 0
      %3371 = vperm.xlu0 %3370, %v3313
      %v3372 = vpop.permute.xlu0 %3371
      %3375 = vset.pattern.permute.xlu0 0
      %3376 = vperm.xlu0 %3375, %v3314
      %v3377 = vpop.permute.xlu0 %3376
      %3380 = vset.pattern.permute.xlu0 0
      %3381 = vperm.xlu0 %3380, %v3315
      %v3382 = vpop.permute.xlu0 %3381
      %3385 = vset.pattern.permute.xlu0 0
      %3386 = vperm.xlu0 %3385, %v3316
      %v3387 = vpop.permute.xlu0 %3386
      %3390 = vset.pattern.permute.xlu0 0
      %3391 = vperm.xlu0 %3390, %v3317
      %v3392 = vpop.permute.xlu0 %3391
      %3395 = vset.pattern.permute.xlu0 0
      %3396 = vperm.xlu0 %3395, %v3318
      %v3397 = vpop.permute.xlu0 %3396
      %3400 = vset.pattern.permute.xlu0 0
      %3401 = vperm.xlu0 %3400, %v3319
      %v3402 = vpop.permute.xlu0 %3401
      %3405 = vset.pattern.permute.xlu0 0
      %3406 = vperm.xlu0 %3405, %v3320
      %v3407 = vpop.permute.xlu0 %3406
      %3410 = vset.pattern.permute.xlu0 0
      %3411 = vperm.xlu0 %3410, %v3321
      %v3412 = vpop.permute.xlu0 %3411
      %3415 = vset.pattern.permute.xlu0 0
      %3416 = vperm.xlu0 %3415, %v3322
      %v3417 = vpop.permute.xlu0 %3416
      %3420 = vset.pattern.permute.xlu0 0
      %3421 = vperm.xlu0 %3420, %v3323
      %v3422 = vpop.permute.xlu0 %3421
      %3425 = vset.pattern.permute.xlu0 0
      %3426 = vperm.xlu0 %3425, %v3324
      %v3427 = vpop.permute.xlu0 %3426
      %3430 = vset.pattern.permute.xlu0 0
      %3431 = vperm.xlu0 %3430, %v3325
      %v3432 = vpop.permute.xlu0 %3431
      %3435 = vset.pattern.permute.xlu0 0
      %3436 = vperm.xlu0 %3435, %v3326
      %v3437 = vpop.permute.xlu0 %3436
      %3440 = vset.pattern.permute.xlu0 0
      %3441 = vperm.xlu0 %3440, %v3327
      %v3442 = vpop.permute.xlu0 %3441
      %3445 = vset.pattern.permute.xlu0 0
      %3446 = vperm.xlu0 %3445, %v3328
      %v3447 = vpop.permute.xlu0 %3446
      %3450 = vset.pattern.permute.xlu0 0
      %3451 = vperm.xlu0 %3450, %v3329
      %v3452 = vpop.permute.xlu0 %3451
      %3455 = vset.pattern.permute.xlu0 0
      %3456 = vperm.xlu0 %3455, %v3330
      %v3457 = vpop.permute.xlu0 %3456
      %3460 = vset.pattern.permute.xlu0 0
      %3461 = vperm.xlu0 %3460, %v3331
      %v3462 = vpop.permute.xlu0 %3461
      %3465 = vset.pattern.permute.xlu0 0
      %3466 = vperm.xlu0 %3465, %v3332
      %v3467 = vpop.permute.xlu0 %3466
      %3470 = vset.pattern.permute.xlu0 0
      %3471 = vperm.xlu0 %3470, %v3333
      %v3472 = vpop.permute.xlu0 %3471
      %3475 = vset.pattern.permute.xlu0 0
      %3476 = vperm.xlu0 %3475, %v3334
      %v3477 = vpop.permute.xlu0 %3476
      %3480 = vset.pattern.permute.xlu0 0
      %3481 = vperm.xlu0 %3480, %v3335
      %v3482 = vpop.permute.xlu0 %3481
      %3485 = vset.pattern.permute.xlu0 0
      %3486 = vperm.xlu0 %3485, %v3336
      %v3487 = vpop.permute.xlu0 %3486
      %3490 = vset.pattern.permute.xlu0 0
      %3491 = vperm.xlu0 %3490, %v3337
      %v3492 = vpop.permute.xlu0 %3491
      %3495 = vset.pattern.permute.xlu0 0
      %3496 = vperm.xlu0 %3495, %v3338
      %v3497 = vpop.permute.xlu0 %3496
      %3500 = vset.pattern.permute.xlu0 0
      %3501 = vperm.xlu0 %3500, %v3339
      %v3502 = vpop.permute.xlu0 %3501
      %3505 = vset.pattern.permute.xlu0 0
      %3506 = vperm.xlu0 %3505, %v3340
      %v3507 = vpop.permute.xlu0 %3506
      %3510 = vset.pattern.permute.xlu0 0
      %3511 = vperm.xlu0 %3510, %v3341
      %v3512 = vpop.permute.xlu0 %3511
      %3515 = vset.pattern.permute.xlu0 0
      %3516 = vperm.xlu0 %3515, %v3342
      %v3517 = vpop.permute.xlu0 %3516
      %3520 = vset.pattern.permute.xlu0 0
      %3521 = vperm.xlu0 %3520, %v3343
      %v3522 = vpop.permute.xlu0 %3521
      %v3524 = vmul.f32 %v3272, %v3347
      %v3525 = vmul.f32 %v3273, %v3352
      %v3526 = vmul.f32 %v3274, %v3357
      %v3527 = vmul.f32 %v3275, %v3362
      %v3528 = vmul.f32 %v3276, %v3367
      %v3529 = vmul.f32 %v3277, %v3372
      %v3530 = vmul.f32 %v3278, %v3377
      %v3531 = vmul.f32 %v3279, %v3382
      %v3532 = vmul.f32 %v3280, %v3387
      %v3533 = vmul.f32 %v3281, %v3392
      %v3534 = vmul.f32 %v3282, %v3397
      %v3535 = vmul.f32 %v3283, %v3402
      %v3536 = vmul.f32 %v3284, %v3407
      %v3537 = vmul.f32 %v3285, %v3412
      %v3538 = vmul.f32 %v3286, %v3417
      %v3539 = vmul.f32 %v3287, %v3422
      %v3540 = vmul.f32 %v3288, %v3427
      %v3541 = vmul.f32 %v3289, %v3432
      %v3542 = vmul.f32 %v3290, %v3437
      %v3543 = vmul.f32 %v3291, %v3442
      %v3544 = vmul.f32 %v3292, %v3447
      %v3545 = vmul.f32 %v3293, %v3452
      %v3546 = vmul.f32 %v3294, %v3457
      %v3547 = vmul.f32 %v3295, %v3462
      %v3548 = vmul.f32 %v3296, %v3467
      %v3549 = vmul.f32 %v3297, %v3472
      %v3550 = vmul.f32 %v3298, %v3477
      %v3551 = vmul.f32 %v3299, %v3482
      %v3552 = vmul.f32 %v3300, %v3487
      %v3553 = vmul.f32 %v3301, %v3492
      %v3554 = vmul.f32 %v3302, %v3497
      %v3555 = vmul.f32 %v3303, %v3502
      %v3556 = vmul.f32 %v3304, %v3507
      %v3557 = vmul.f32 %v3305, %v3512
      %v3558 = vmul.f32 %v3306, %v3517
      %v3559 = vmul.f32 %v3307, %v3522
      %3560 = vst [vmem:[#allocation2] sm:$0xff] 0.0
      %3561 = vst [vmem:[#allocation2 + $0x8] sm:$0xff] 0.0
      %3562 = vst [vmem:[#allocation2 + $0x10] sm:$0xff] 0.0
      %3563 = vst [vmem:[#allocation2 + $0x18] sm:$0xff] 0.0
      %3564 = vst [vmem:[#allocation2 + $0x20] sm:$0xff] 0.0
      %3565 = vst [vmem:[#allocation2 + $0x28] sm:$0xff] 0.0
      %3566 = vst [vmem:[#allocation2 + $0x30] sm:$0xff] 0.0
      %3567 = vst [vmem:[#allocation2 + $0x38] sm:$0xff] 0.0
      %3568 = vst [vmem:[#allocation2 + $0x40] sm:$0xff] 0.0
      %3569 = vst [vmem:[#allocation2 + $0x48] sm:$0xff] 0.0
      %3570 = vst [vmem:[#allocation2 + $0x50] sm:$0xff] 0.0
      %3571 = vst [vmem:[#allocation2 + $0x58] sm:$0xff] 0.0
      %3572 = vst [vmem:[#allocation2 + $0x60] sm:$0xff] 0.0
      %3573 = vst [vmem:[#allocation2 + $0x68] sm:$0xff] 0.0
      %3574 = vst [vmem:[#allocation2 + $0x70] sm:$0xff] 0.0
      %3575 = vst [vmem:[#allocation2 + $0x78] sm:$0xff] 0.0
      %3576 = vst [vmem:[#allocation2 + $0x80] sm:$0xff] 0.0
      %3577 = vst [vmem:[#allocation2 + $0x88] sm:$0xff] 0.0
      %3578 = vst [vmem:[#allocation2 + $0x90] sm:$0xff] 0.0
      %3579 = vst [vmem:[#allocation2 + $0x98] sm:$0xff] 0.0
      %3580 = vst [vmem:[#allocation2 + $0xa0] sm:$0xff] 0.0
      %3581 = vst [vmem:[#allocation2 + $0xa8] sm:$0xff] 0.0
      %3582 = vst [vmem:[#allocation2 + $0xb0] sm:$0xff] 0.0
      %3583 = vst [vmem:[#allocation2 + $0xb8] sm:$0xff] 0.0
      %3584 = vst [vmem:[#allocation2 + $0xc0] sm:$0xff] 0.0
      %3585 = vst [vmem:[#allocation2 + $0xc8] sm:$0xff] 0.0
      %3586 = vst [vmem:[#allocation2 + $0xd0] sm:$0xff] 0.0
      %3587 = vst [vmem:[#allocation2 + $0xd8] sm:$0xff] 0.0
      %3588 = vst [vmem:[#allocation2 + $0xe0] sm:$0xff] 0.0
      %3589 = vst [vmem:[#allocation2 + $0xe8] sm:$0xff] 0.0
      %3590 = vst [vmem:[#allocation2 + $0xf0] sm:$0xff] 0.0
      %3591 = vst [vmem:[#allocation2 + $0xf8] sm:$0xff] 0.0
      %3592 = vst [vmem:[#allocation2 + $0x100] sm:$0xff] 0.0
      %3593 = vst [vmem:[#allocation2 + $0x108] sm:$0xff] 0.0
      %3594 = vst [vmem:[#allocation2 + $0x110] sm:$0xff] 0.0
      %3595 = vst [vmem:[#allocation2 + $0x118] sm:$0xff] 0.0
      %3596 = vst [vmem:[#allocation2 + $0x120] sm:$0xff] 0.0
      %3597 = vst [vmem:[#allocation2 + $0x128] sm:$0xff] 0.0
      %3598 = vst [vmem:[#allocation2 + $0x130] sm:$0xff] 0.0
      %3599 = vst [vmem:[#allocation2 + $0x138] sm:$0xff] 0.0
      %3600 = vst [vmem:[#allocation2 + $0x140] sm:$0xff] 0.0
      %3601 = vst [vmem:[#allocation2 + $0x148] sm:$0xff] 0.0
      %3602 = vst [vmem:[#allocation2 + $0x150] sm:$0x3f] 0.0
      %3603 = vst [vmem:[#allocation2 + $0x13] sm:$0xff] %v3524
      %3604 = vst [vmem:[#allocation2 + $0x1b] sm:$0xff] %v3525
      %3605 = vst [vmem:[#allocation2 + $0x23] sm:$0xff] %v3526
      %3606 = vst [vmem:[#allocation2 + $0x2b] sm:$0xff] %v3527
      %3607 = vst [vmem:[#allocation2 + $0x33] sm:$0xff] %v3528
      %3608 = vst [vmem:[#allocation2 + $0x3b] sm:$0xff] %v3529
      %3609 = vst [vmem:[#allocation2 + $0x43] sm:$0xff] %v3530
      %3610 = vst [vmem:[#allocation2 + $0x4b] sm:$0xff] %v3531
      %3611 = vst [vmem:[#allocation2 + $0x53] sm:$0xff] %v3532
      %3612 = vst [vmem:[#allocation2 + $0x5b] sm:$0xff] %v3533
      %3613 = vst [vmem:[#allocation2 + $0x63] sm:$0xff] %v3534
      %3614 = vst [vmem:[#allocation2 + $0x6b] sm:$0xff] %v3535
      %3615 = vst [vmem:[#allocation2 + $0x73] sm:$0xff] %v3536
      %3616 = vst [vmem:[#allocation2 + $0x7b] sm:$0xff] %v3537
      %3617 = vst [vmem:[#allocation2 + $0x83] sm:$0xff] %v3538
      %3618 = vst [vmem:[#allocation2 + $0x8b] sm:$0xff] %v3539
      %3619 = vst [vmem:[#allocation2 + $0x93] sm:$0xff] %v3540
      %3620 = vst [vmem:[#allocation2 + $0x9b] sm:$0xff] %v3541
      %3621 = vst [vmem:[#allocation2 + $0xa3] sm:$0xff] %v3542
      %3622 = vst [vmem:[#allocation2 + $0xab] sm:$0xff] %v3543
      %3623 = vst [vmem:[#allocation2 + $0xb3] sm:$0xff] %v3544
      %3624 = vst [vmem:[#allocation2 + $0xbb] sm:$0xff] %v3545
      %3625 = vst [vmem:[#allocation2 + $0xc3] sm:$0xff] %v3546
      %3626 = vst [vmem:[#allocation2 + $0xcb] sm:$0xff] %v3547
      %3627 = vst [vmem:[#allocation2 + $0xd3] sm:$0xff] %v3548
      %3628 = vst [vmem:[#allocation2 + $0xdb] sm:$0xff] %v3549
      %3629 = vst [vmem:[#allocation2 + $0xe3] sm:$0xff] %v3550
      %3630 = vst [vmem:[#allocation2 + $0xeb] sm:$0xff] %v3551
      %3631 = vst [vmem:[#allocation2 + $0xf3] sm:$0xff] %v3552
      %3632 = vst [vmem:[#allocation2 + $0xfb] sm:$0xff] %v3553
      %3633 = vst [vmem:[#allocation2 + $0x103] sm:$0xff] %v3554
      %3634 = vst [vmem:[#allocation2 + $0x10b] sm:$0xff] %v3555
      %3635 = vst [vmem:[#allocation2 + $0x113] sm:$0xff] %v3556
      %3636 = vst [vmem:[#allocation2 + $0x11b] sm:$0xff] %v3557
      %3637 = vst [vmem:[#allocation2 + $0x123] sm:$0xff] %v3558
      %3638 = vst [vmem:[#allocation2 + $0x12b] sm:$0xff] %v3559
      %v3639 = vld [vmem:[#allocation2] sm:$0xff]
      %v3640 = vld [vmem:[#allocation2 + $0x8] sm:$0xff]
      %v3641 = vld [vmem:[#allocation2 + $0x10] sm:$0xff]
      %v3642 = vld [vmem:[#allocation2 + $0x18] sm:$0xff]
      %v3643 = vld [vmem:[#allocation2 + $0x20] sm:$0xff]
      %v3644 = vld [vmem:[#allocation2 + $0x28] sm:$0xff]
      %v3645 = vld [vmem:[#allocation2 + $0x30] sm:$0xff]
      %v3646 = vld [vmem:[#allocation2 + $0x38] sm:$0xff]
      %v3647 = vld [vmem:[#allocation2 + $0x40] sm:$0xff]
      %v3648 = vld [vmem:[#allocation2 + $0x48] sm:$0xff]
      %v3649 = vld [vmem:[#allocation2 + $0x50] sm:$0xff]
      %v3650 = vld [vmem:[#allocation2 + $0x58] sm:$0xff]
      %v3651 = vld [vmem:[#allocation2 + $0x60] sm:$0xff]
      %v3652 = vld [vmem:[#allocation2 + $0x68] sm:$0xff]
      %v3653 = vld [vmem:[#allocation2 + $0x70] sm:$0xff]
      %v3654 = vld [vmem:[#allocation2 + $0x78] sm:$0xff]
      %v3655 = vld [vmem:[#allocation2 + $0x80] sm:$0xff]
      %v3656 = vld [vmem:[#allocation2 + $0x88] sm:$0xff]
      %v3657 = vld [vmem:[#allocation2 + $0x90] sm:$0xff]
      %v3658 = vld [vmem:[#allocation2 + $0x98] sm:$0xff]
      %v3659 = vld [vmem:[#allocation2 + $0xa0] sm:$0xff]
      %v3660 = vld [vmem:[#allocation2 + $0xa8] sm:$0xff]
      %v3661 = vld [vmem:[#allocation2 + $0xb0] sm:$0xff]
      %v3662 = vld [vmem:[#allocation2 + $0xb8] sm:$0xff]
      %v3663 = vld [vmem:[#allocation2 + $0xc0] sm:$0xff]
      %v3664 = vld [vmem:[#allocation2 + $0xc8] sm:$0xff]
      %v3665 = vld [vmem:[#allocation2 + $0xd0] sm:$0xff]
      %v3666 = vld [vmem:[#allocation2 + $0xd8] sm:$0xff]
      %v3667 = vld [vmem:[#allocation2 + $0xe0] sm:$0xff]
      %v3668 = vld [vmem:[#allocation2 + $0xe8] sm:$0xff]
      %v3669 = vld [vmem:[#allocation2 + $0xf0] sm:$0xff]
      %v3670 = vld [vmem:[#allocation2 + $0xf8] sm:$0xff]
      %v3671 = vld [vmem:[#allocation2 + $0x100] sm:$0xff]
      %v3672 = vld [vmem:[#allocation2 + $0x108] sm:$0xff]
      %v3673 = vld [vmem:[#allocation2 + $0x110] sm:$0xff]
      %v3674 = vld [vmem:[#allocation2 + $0x118] sm:$0xff]
      %v3675 = vpack.c.bf16 %v3640, %v3639
      %v3676 = vpack.c.bf16 %v3642, %v3641
      %v3677 = vpack.c.bf16 %v3644, %v3643
      %v3678 = vpack.c.bf16 %v3646, %v3645
      %v3679 = vpack.c.bf16 %v3648, %v3647
      %v3680 = vpack.c.bf16 %v3650, %v3649
      %v3681 = vpack.c.bf16 %v3652, %v3651
      %v3682 = vpack.c.bf16 %v3654, %v3653
      %v3683 = vpack.c.bf16 %v3656, %v3655
      %v3684 = vpack.c.bf16 %v3658, %v3657
      %v3685 = vpack.c.bf16 %v3660, %v3659
      %v3686 = vpack.c.bf16 %v3662, %v3661
      %v3687 = vpack.c.bf16 %v3664, %v3663
      %v3688 = vpack.c.bf16 %v3666, %v3665
      %v3689 = vpack.c.bf16 %v3668, %v3667
      %v3690 = vpack.c.bf16 %v3670, %v3669
      %v3691 = vpack.c.bf16 %v3672, %v3671
      %v3692 = vpack.c.bf16 %v3674, %v3673
      %v3693 = vld [vmem:[%s5] sm:$0xf]
      %v3694 = vld [vmem:[%s5 + $0x4] sm:$0xf]
      %v3695 = vld [vmem:[%s5 + $0x8] sm:$0xf]
      %v3696 = vld [vmem:[%s5 + $0xc] sm:$0xf]
      %v3697 = vld [vmem:[%s5 + $0x10] sm:$0xf]
      %v3698 = vld [vmem:[%s5 + $0x14] sm:$0xf]
      %v3699 = vld [vmem:[%s5 + $0x18] sm:$0xf]
      %v3700 = vld [vmem:[%s5 + $0x1c] sm:$0xf]
      %v3701 = vld [vmem:[%s5 + $0x20] sm:$0xf]
      %v3702 = vld [vmem:[%s5 + $0x24] sm:$0xf]
      %v3703 = vld [vmem:[%s5 + $0x28] sm:$0xf]
      %v3704 = vld [vmem:[%s5 + $0x2c] sm:$0xf]
      %v3705 = vld [vmem:[%s5 + $0x30] sm:$0xf]
      %v3706 = vld [vmem:[%s5 + $0x34] sm:$0xf]
      %v3707 = vld [vmem:[%s5 + $0x38] sm:$0xf]
      %v3708 = vld [vmem:[%s5 + $0x3c] sm:$0xf]
      %v3725 = vunpack.c.l.b16 %v3693
      %v3726 = vunpack.c.l.b16 %v3694
      %v3727 = vunpack.c.l.b16 %v3695
      %v3728 = vunpack.c.l.b16 %v3696
      %v3729 = vunpack.c.l.b16 %v3697
      %v3730 = vunpack.c.l.b16 %v3698
      %v3731 = vunpack.c.l.b16 %v3699
      %v3732 = vunpack.c.l.b16 %v3700
      %v3733 = vunpack.c.l.b16 %v3701
      %v3734 = vunpack.c.l.b16 %v3702
      %v3735 = vunpack.c.l.b16 %v3703
      %v3736 = vunpack.c.l.b16 %v3704
      %v3737 = vunpack.c.l.b16 %v3705
      %v3738 = vunpack.c.l.b16 %v3706
      %v3739 = vunpack.c.l.b16 %v3707
      %v3740 = vunpack.c.l.b16 %v3708
      %v3741 = vpack.c.b16 %v3726, %v3725
      %v3742 = vpack.c.b16 %v3728, %v3727
      %v3743 = vpack.c.b16 %v3730, %v3729
      %v3744 = vpack.c.b16 %v3732, %v3731
      %v3745 = vpack.c.b16 %v3734, %v3733
      %v3746 = vpack.c.b16 %v3736, %v3735
      %v3747 = vpack.c.b16 %v3738, %v3737
      %v3748 = vpack.c.b16 %v3740, %v3739
      %3757 = vmatpush.bf16.msra.mxu0 %v3748
      %3758 = vmatpush.bf16.msra.mxu0 %v3747
      %3759 = vmatpush.bf16.msra.mxu0 %v3746
      %3760 = vmatpush.bf16.msra.mxu0 %v3745
      %3761 = vmatpush.bf16.msra.mxu0 %v3744
      %3762 = vmatpush.bf16.msra.mxu0 %v3743
      %3763 = vmatpush.bf16.msra.mxu0 %v3742
      %3764 = vmatpush.bf16.msra.mxu0 %v3741
      %3765 = vmatmul.bf16.gmra.mxu0 %v3675
      %v3766 = vpop.f32.mrf.mxu0
      %v3767 = vadd.f32 0.0, %v3766
      %v3768 = vpop.f32.mrf.mxu0
      %v3769 = vadd.f32 0.0, %v3768
      %3770 = vmatmul.bf16.gmra.mxu0 %v3676
      %v3771 = vpop.f32.mrf.mxu0
      %v3772 = vadd.f32 0.0, %v3771
      %v3773 = vpop.f32.mrf.mxu0
      %v3774 = vadd.f32 0.0, %v3773
      %3775 = vmatmul.bf16.gmra.mxu0 %v3677
      %v3776 = vpop.f32.mrf.mxu0
      %v3777 = vadd.f32 0.0, %v3776
      %v3778 = vpop.f32.mrf.mxu0
      %v3779 = vadd.f32 0.0, %v3778
      %3780 = vmatmul.bf16.gmra.mxu0 %v3678
      %v3781 = vpop.f32.mrf.mxu0
      %v3782 = vadd.f32 0.0, %v3781
      %v3783 = vpop.f32.mrf.mxu0
      %v3784 = vadd.f32 0.0, %v3783
      %3785 = vmatmul.bf16.gmra.mxu0 %v3679
      %v3786 = vpop.f32.mrf.mxu0
      %v3787 = vadd.f32 0.0, %v3786
      %v3788 = vpop.f32.mrf.mxu0
      %v3789 = vadd.f32 0.0, %v3788
      %3790 = vmatmul.bf16.gmra.mxu0 %v3680
      %v3791 = vpop.f32.mrf.mxu0
      %v3792 = vadd.f32 0.0, %v3791
      %v3793 = vpop.f32.mrf.mxu0
      %v3794 = vadd.f32 0.0, %v3793
      %3795 = vmatmul.bf16.gmra.mxu0 %v3681
      %v3796 = vpop.f32.mrf.mxu0
      %v3797 = vadd.f32 0.0, %v3796
      %v3798 = vpop.f32.mrf.mxu0
      %v3799 = vadd.f32 0.0, %v3798
      %3800 = vmatmul.bf16.gmra.mxu0 %v3682
      %v3801 = vpop.f32.mrf.mxu0
      %v3802 = vadd.f32 0.0, %v3801
      %v3803 = vpop.f32.mrf.mxu0
      %v3804 = vadd.f32 0.0, %v3803
      %3805 = vmatmul.bf16.gmra.mxu0 %v3683
      %v3806 = vpop.f32.mrf.mxu0
      %v3807 = vadd.f32 0.0, %v3806
      %v3808 = vpop.f32.mrf.mxu0
      %v3809 = vadd.f32 0.0, %v3808
      %3810 = vmatmul.bf16.gmra.mxu0 %v3684
      %v3811 = vpop.f32.mrf.mxu0
      %v3812 = vadd.f32 0.0, %v3811
      %v3813 = vpop.f32.mrf.mxu0
      %v3814 = vadd.f32 0.0, %v3813
      %3815 = vmatmul.bf16.gmra.mxu0 %v3685
      %v3816 = vpop.f32.mrf.mxu0
      %v3817 = vadd.f32 0.0, %v3816
      %v3818 = vpop.f32.mrf.mxu0
      %v3819 = vadd.f32 0.0, %v3818
      %3820 = vmatmul.bf16.gmra.mxu0 %v3686
      %v3821 = vpop.f32.mrf.mxu0
      %v3822 = vadd.f32 0.0, %v3821
      %v3823 = vpop.f32.mrf.mxu0
      %v3824 = vadd.f32 0.0, %v3823
      %3825 = vmatmul.bf16.gmra.mxu0 %v3687
      %v3826 = vpop.f32.mrf.mxu0
      %v3827 = vadd.f32 0.0, %v3826
      %v3828 = vpop.f32.mrf.mxu0
      %v3829 = vadd.f32 0.0, %v3828
      %3830 = vmatmul.bf16.gmra.mxu0 %v3688
      %v3831 = vpop.f32.mrf.mxu0
      %v3832 = vadd.f32 0.0, %v3831
      %v3833 = vpop.f32.mrf.mxu0
      %v3834 = vadd.f32 0.0, %v3833
      %3835 = vmatmul.bf16.gmra.mxu0 %v3689
      %v3836 = vpop.f32.mrf.mxu0
      %v3837 = vadd.f32 0.0, %v3836
      %v3838 = vpop.f32.mrf.mxu0
      %v3839 = vadd.f32 0.0, %v3838
      %3840 = vmatmul.bf16.gmra.mxu0 %v3690
      %v3841 = vpop.f32.mrf.mxu0
      %v3842 = vadd.f32 0.0, %v3841
      %v3843 = vpop.f32.mrf.mxu0
      %v3844 = vadd.f32 0.0, %v3843
      %3845 = vmatmul.bf16.gmra.mxu0 %v3691
      %v3846 = vpop.f32.mrf.mxu0
      %v3847 = vadd.f32 0.0, %v3846
      %v3848 = vpop.f32.mrf.mxu0
      %v3849 = vadd.f32 0.0, %v3848
      %3850 = vmatmul.bf16.gmra.mxu0 %v3692
      %v3851 = vpop.f32.mrf.mxu0
      %v3852 = vadd.f32 0.0, %v3851
      %v3853 = vpop.f32.mrf.mxu0
      %v3854 = vadd.f32 0.0, %v3853
      %3855 = vdwg.mxu0
      %3856 = vst [vmem:[#allocation3] sm:$0xff] %v3767
      %3857 = vst [vmem:[#allocation3 + $0x8] sm:$0xff] %v3769
      %3858 = vst [vmem:[#allocation3 + $0x10] sm:$0xff] %v3772
      %3859 = vst [vmem:[#allocation3 + $0x18] sm:$0xff] %v3774
      %3860 = vst [vmem:[#allocation3 + $0x20] sm:$0xff] %v3777
      %3861 = vst [vmem:[#allocation3 + $0x28] sm:$0xff] %v3779
      %3862 = vst [vmem:[#allocation3 + $0x30] sm:$0xff] %v3782
      %3863 = vst [vmem:[#allocation3 + $0x38] sm:$0xff] %v3784
      %3864 = vst [vmem:[#allocation3 + $0x40] sm:$0xff] %v3787
      %3865 = vst [vmem:[#allocation3 + $0x48] sm:$0xff] %v3789
      %3866 = vst [vmem:[#allocation3 + $0x50] sm:$0xff] %v3792
      %3867 = vst [vmem:[#allocation3 + $0x58] sm:$0xff] %v3794
      %3868 = vst [vmem:[#allocation3 + $0x60] sm:$0xff] %v3797
      %3869 = vst [vmem:[#allocation3 + $0x68] sm:$0xff] %v3799
      %3870 = vst [vmem:[#allocation3 + $0x70] sm:$0xff] %v3802
      %3871 = vst [vmem:[#allocation3 + $0x78] sm:$0xff] %v3804
      %3872 = vst [vmem:[#allocation3 + $0x80] sm:$0xff] %v3807
      %3873 = vst [vmem:[#allocation3 + $0x88] sm:$0xff] %v3809
      %3874 = vst [vmem:[#allocation3 + $0x90] sm:$0xff] %v3812
      %3875 = vst [vmem:[#allocation3 + $0x98] sm:$0xff] %v3814
      %3876 = vst [vmem:[#allocation3 + $0xa0] sm:$0xff] %v3817
      %3877 = vst [vmem:[#allocation3 + $0xa8] sm:$0xff] %v3819
      %3878 = vst [vmem:[#allocation3 + $0xb0] sm:$0xff] %v3822
      %3879 = vst [vmem:[#allocation3 + $0xb8] sm:$0xff] %v3824
      %3880 = vst [vmem:[#allocation3 + $0xc0] sm:$0xff] %v3827
      %3881 = vst [vmem:[#allocation3 + $0xc8] sm:$0xff] %v3829
      %3882 = vst [vmem:[#allocation3 + $0xd0] sm:$0xff] %v3832
      %3883 = vst [vmem:[#allocation3 + $0xd8] sm:$0xff] %v3834
      %3884 = vst [vmem:[#allocation3 + $0xe0] sm:$0xff] %v3837
      %3885 = vst [vmem:[#allocation3 + $0xe8] sm:$0xff] %v3839
      %3886 = vst [vmem:[#allocation3 + $0xf0] sm:$0xff] %v3842
      %3887 = vst [vmem:[#allocation3 + $0xf8] sm:$0xff] %v3844
      %3888 = vst [vmem:[#allocation3 + $0x100] sm:$0xff] %v3847
      %3889 = vst [vmem:[#allocation3 + $0x108] sm:$0xff] %v3849
      %3890 = vst [vmem:[#allocation3 + $0x110] sm:$0xff] %v3852
      %3891 = vst [vmem:[#allocation3 + $0x118] sm:$0xff] %v3854
      %v3892 = vld [vmem:[#allocation2 + $0x1] sm:$0xff]
      %v3893 = vld [vmem:[#allocation2 + $0x9] sm:$0xff]
      %v3894 = vld [vmem:[#allocation2 + $0x11] sm:$0xff]
      %v3895 = vld [vmem:[#allocation2 + $0x19] sm:$0xff]
      %v3896 = vld [vmem:[#allocation2 + $0x21] sm:$0xff]
      %v3897 = vld [vmem:[#allocation2 + $0x29] sm:$0xff]
      %v3898 = vld [vmem:[#allocation2 + $0x31] sm:$0xff]
      %v3899 = vld [vmem:[#allocation2 + $0x39] sm:$0xff]
      %v3900 = vld [vmem:[#allocation2 + $0x41] sm:$0xff]
      %v3901 = vld [vmem:[#allocation2 + $0x49] sm:$0xff]
      %v3902 = vld [vmem:[#allocation2 + $0x51] sm:$0xff]
      %v3903 = vld [vmem:[#allocation2 + $0x59] sm:$0xff]
      %v3904 = vld [vmem:[#allocation2 + $0x61] sm:$0xff]
      %v3905 = vld [vmem:[#allocation2 + $0x69] sm:$0xff]
      %v3906 = vld [vmem:[#allocation2 + $0x71] sm:$0xff]
      %v3907 = vld [vmem:[#allocation2 + $0x79] sm:$0xff]
      %v3908 = vld [vmem:[#allocation2 + $0x81] sm:$0xff]
      %v3909 = vld [vmem:[#allocation2 + $0x89] sm:$0xff]
      %v3910 = vld [vmem:[#allocation2 + $0x91] sm:$0xff]
      %v3911 = vld [vmem:[#allocation2 + $0x99] sm:$0xff]
      %v3912 = vld [vmem:[#allocation2 + $0xa1] sm:$0xff]
      %v3913 = vld [vmem:[#allocation2 + $0xa9] sm:$0xff]
      %v3914 = vld [vmem:[#allocation2 + $0xb1] sm:$0xff]
      %v3915 = vld [vmem:[#allocation2 + $0xb9] sm:$0xff]
      %v3916 = vld [vmem:[#allocation2 + $0xc1] sm:$0xff]
      %v3917 = vld [vmem:[#allocation2 + $0xc9] sm:$0xff]
      %v3918 = vld [vmem:[#allocation2 + $0xd1] sm:$0xff]
      %v3919 = vld [vmem:[#allocation2 + $0xd9] sm:$0xff]
      %v3920 = vld [vmem:[#allocation2 + $0xe1] sm:$0xff]
      %v3921 = vld [vmem:[#allocation2 + $0xe9] sm:$0xff]
      %v3922 = vld [vmem:[#allocation2 + $0xf1] sm:$0xff]
      %v3923 = vld [vmem:[#allocation2 + $0xf9] sm:$0xff]
      %v3924 = vld [vmem:[#allocation2 + $0x101] sm:$0xff]
      %v3925 = vld [vmem:[#allocation2 + $0x109] sm:$0xff]
      %v3926 = vld [vmem:[#allocation2 + $0x111] sm:$0xff]
      %v3927 = vld [vmem:[#allocation2 + $0x119] sm:$0xff]
      %v3928 = vpack.c.bf16 %v3893, %v3892
      %v3929 = vpack.c.bf16 %v3895, %v3894
      %v3930 = vpack.c.bf16 %v3897, %v3896
      %v3931 = vpack.c.bf16 %v3899, %v3898
      %v3932 = vpack.c.bf16 %v3901, %v3900
      %v3933 = vpack.c.bf16 %v3903, %v3902
      %v3934 = vpack.c.bf16 %v3905, %v3904
      %v3935 = vpack.c.bf16 %v3907, %v3906
      %v3936 = vpack.c.bf16 %v3909, %v3908
      %v3937 = vpack.c.bf16 %v3911, %v3910
      %v3938 = vpack.c.bf16 %v3913, %v3912
      %v3939 = vpack.c.bf16 %v3915, %v3914
      %v3940 = vpack.c.bf16 %v3917, %v3916
      %v3941 = vpack.c.bf16 %v3919, %v3918
      %v3942 = vpack.c.bf16 %v3921, %v3920
      %v3943 = vpack.c.bf16 %v3923, %v3922
      %v3944 = vpack.c.bf16 %v3925, %v3924
      %v3945 = vpack.c.bf16 %v3927, %v3926
      %s3946 = scalar_lea.vmem %s5, 64
      %v3947 = vld [vmem:[%s3946] sm:$0xf]
      %v3948 = vld [vmem:[%s3946 + $0x4] sm:$0xf]
      %v3949 = vld [vmem:[%s3946 + $0x8] sm:$0xf]
      %v3950 = vld [vmem:[%s3946 + $0xc] sm:$0xf]
      %v3951 = vld [vmem:[%s3946 + $0x10] sm:$0xf]
      %v3952 = vld [vmem:[%s3946 + $0x14] sm:$0xf]
      %v3953 = vld [vmem:[%s3946 + $0x18] sm:$0xf]
      %v3954 = vld [vmem:[%s3946 + $0x1c] sm:$0xf]
      %v3955 = vld [vmem:[%s3946 + $0x20] sm:$0xf]
      %v3956 = vld [vmem:[%s3946 + $0x24] sm:$0xf]
      %v3957 = vld [vmem:[%s3946 + $0x28] sm:$0xf]
      %v3958 = vld [vmem:[%s3946 + $0x2c] sm:$0xf]
      %v3959 = vld [vmem:[%s3946 + $0x30] sm:$0xf]
      %v3960 = vld [vmem:[%s3946 + $0x34] sm:$0xf]
      %v3961 = vld [vmem:[%s3946 + $0x38] sm:$0xf]
      %v3962 = vld [vmem:[%s3946 + $0x3c] sm:$0xf]
      %v3979 = vunpack.c.l.b16 %v3947
      %v3980 = vunpack.c.l.b16 %v3948
      %v3981 = vunpack.c.l.b16 %v3949
      %v3982 = vunpack.c.l.b16 %v3950
      %v3983 = vunpack.c.l.b16 %v3951
      %v3984 = vunpack.c.l.b16 %v3952
      %v3985 = vunpack.c.l.b16 %v3953
      %v3986 = vunpack.c.l.b16 %v3954
      %v3987 = vunpack.c.l.b16 %v3955
      %v3988 = vunpack.c.l.b16 %v3956
      %v3989 = vunpack.c.l.b16 %v3957
      %v3990 = vunpack.c.l.b16 %v3958
      %v3991 = vunpack.c.l.b16 %v3959
      %v3992 = vunpack.c.l.b16 %v3960
      %v3993 = vunpack.c.l.b16 %v3961
      %v3994 = vunpack.c.l.b16 %v3962
      %v3995 = vpack.c.b16 %v3980, %v3979
      %v3996 = vpack.c.b16 %v3982, %v3981
      %v3997 = vpack.c.b16 %v3984, %v3983
      %v3998 = vpack.c.b16 %v3986, %v3985
      %v3999 = vpack.c.b16 %v3988, %v3987
      %v4000 = vpack.c.b16 %v3990, %v3989
      %v4001 = vpack.c.b16 %v3992, %v3991
      %v4002 = vpack.c.b16 %v3994, %v3993
      %4011 = vmatpush.bf16.msra.mxu0 %v4002
      %4012 = vmatpush.bf16.msra.mxu0 %v4001
      %4013 = vmatpush.bf16.msra.mxu0 %v4000
      %4014 = vmatpush.bf16.msra.mxu0 %v3999
      %4015 = vmatpush.bf16.msra.mxu0 %v3998
      %4016 = vmatpush.bf16.msra.mxu0 %v3997
      %4017 = vmatpush.bf16.msra.mxu0 %v3996
      %4018 = vmatpush.bf16.msra.mxu0 %v3995
      %4019 = vmatmul.bf16.gmra.mxu0 %v3928
      %v4020 = vpop.f32.mrf.mxu0
      %v4021 = vadd.f32 0.0, %v4020
      %v4022 = vpop.f32.mrf.mxu0
      %v4023 = vadd.f32 0.0, %v4022
      %4024 = vmatmul.bf16.gmra.mxu0 %v3929
      %v4025 = vpop.f32.mrf.mxu0
      %v4026 = vadd.f32 0.0, %v4025
      %v4027 = vpop.f32.mrf.mxu0
      %v4028 = vadd.f32 0.0, %v4027
      %4029 = vmatmul.bf16.gmra.mxu0 %v3930
      %v4030 = vpop.f32.mrf.mxu0
      %v4031 = vadd.f32 0.0, %v4030
      %v4032 = vpop.f32.mrf.mxu0
      %v4033 = vadd.f32 0.0, %v4032
      %4034 = vmatmul.bf16.gmra.mxu0 %v3931
      %v4035 = vpop.f32.mrf.mxu0
      %v4036 = vadd.f32 0.0, %v4035
      %v4037 = vpop.f32.mrf.mxu0
      %v4038 = vadd.f32 0.0, %v4037
      %4039 = vmatmul.bf16.gmra.mxu0 %v3932
      %v4040 = vpop.f32.mrf.mxu0
      %v4041 = vadd.f32 0.0, %v4040
      %v4042 = vpop.f32.mrf.mxu0
      %v4043 = vadd.f32 0.0, %v4042
      %4044 = vmatmul.bf16.gmra.mxu0 %v3933
      %v4045 = vpop.f32.mrf.mxu0
      %v4046 = vadd.f32 0.0, %v4045
      %v4047 = vpop.f32.mrf.mxu0
      %v4048 = vadd.f32 0.0, %v4047
      %4049 = vmatmul.bf16.gmra.mxu0 %v3934
      %v4050 = vpop.f32.mrf.mxu0
      %v4051 = vadd.f32 0.0, %v4050
      %v4052 = vpop.f32.mrf.mxu0
      %v4053 = vadd.f32 0.0, %v4052
      %4054 = vmatmul.bf16.gmra.mxu0 %v3935
      %v4055 = vpop.f32.mrf.mxu0
      %v4056 = vadd.f32 0.0, %v4055
      %v4057 = vpop.f32.mrf.mxu0
      %v4058 = vadd.f32 0.0, %v4057
      %4059 = vmatmul.bf16.gmra.mxu0 %v3936
      %v4060 = vpop.f32.mrf.mxu0
      %v4061 = vadd.f32 0.0, %v4060
      %v4062 = vpop.f32.mrf.mxu0
      %v4063 = vadd.f32 0.0, %v4062
      %4064 = vmatmul.bf16.gmra.mxu0 %v3937
      %v4065 = vpop.f32.mrf.mxu0
      %v4066 = vadd.f32 0.0, %v4065
      %v4067 = vpop.f32.mrf.mxu0
      %v4068 = vadd.f32 0.0, %v4067
      %4069 = vmatmul.bf16.gmra.mxu0 %v3938
      %v4070 = vpop.f32.mrf.mxu0
      %v4071 = vadd.f32 0.0, %v4070
      %v4072 = vpop.f32.mrf.mxu0
      %v4073 = vadd.f32 0.0, %v4072
      %4074 = vmatmul.bf16.gmra.mxu0 %v3939
      %v4075 = vpop.f32.mrf.mxu0
      %v4076 = vadd.f32 0.0, %v4075
      %v4077 = vpop.f32.mrf.mxu0
      %v4078 = vadd.f32 0.0, %v4077
      %4079 = vmatmul.bf16.gmra.mxu0 %v3940
      %v4080 = vpop.f32.mrf.mxu0
      %v4081 = vadd.f32 0.0, %v4080
      %v4082 = vpop.f32.mrf.mxu0
      %v4083 = vadd.f32 0.0, %v4082
      %4084 = vmatmul.bf16.gmra.mxu0 %v3941
      %v4085 = vpop.f32.mrf.mxu0
      %v4086 = vadd.f32 0.0, %v4085
      %v4087 = vpop.f32.mrf.mxu0
      %v4088 = vadd.f32 0.0, %v4087
      %4089 = vmatmul.bf16.gmra.mxu0 %v3942
      %v4090 = vpop.f32.mrf.mxu0
      %v4091 = vadd.f32 0.0, %v4090
      %v4092 = vpop.f32.mrf.mxu0
      %v4093 = vadd.f32 0.0, %v4092
      %4094 = vmatmul.bf16.gmra.mxu0 %v3943
      %v4095 = vpop.f32.mrf.mxu0
      %v4096 = vadd.f32 0.0, %v4095
      %v4097 = vpop.f32.mrf.mxu0
      %v4098 = vadd.f32 0.0, %v4097
      %4099 = vmatmul.bf16.gmra.mxu0 %v3944
      %v4100 = vpop.f32.mrf.mxu0
      %v4101 = vadd.f32 0.0, %v4100
      %v4102 = vpop.f32.mrf.mxu0
      %v4103 = vadd.f32 0.0, %v4102
      %4104 = vmatmul.bf16.gmra.mxu0 %v3945
      %v4105 = vpop.f32.mrf.mxu0
      %v4106 = vadd.f32 0.0, %v4105
      %v4107 = vpop.f32.mrf.mxu0
      %v4108 = vadd.f32 0.0, %v4107
      %4109 = vdwg.mxu0
      %v4110 = vld [vmem:[#allocation3] sm:$0xff]
      %v4111 = vld [vmem:[#allocation3 + $0x8] sm:$0xff]
      %v4112 = vld [vmem:[#allocation3 + $0x10] sm:$0xff]
      %v4113 = vld [vmem:[#allocation3 + $0x18] sm:$0xff]
      %v4114 = vld [vmem:[#allocation3 + $0x20] sm:$0xff]
      %v4115 = vld [vmem:[#allocation3 + $0x28] sm:$0xff]
      %v4116 = vld [vmem:[#allocation3 + $0x30] sm:$0xff]
      %v4117 = vld [vmem:[#allocation3 + $0x38] sm:$0xff]
      %v4118 = vld [vmem:[#allocation3 + $0x40] sm:$0xff]
      %v4119 = vld [vmem:[#allocation3 + $0x48] sm:$0xff]
      %v4120 = vld [vmem:[#allocation3 + $0x50] sm:$0xff]
      %v4121 = vld [vmem:[#allocation3 + $0x58] sm:$0xff]
      %v4122 = vld [vmem:[#allocation3 + $0x60] sm:$0xff]
      %v4123 = vld [vmem:[#allocation3 + $0x68] sm:$0xff]
      %v4124 = vld [vmem:[#allocation3 + $0x70] sm:$0xff]
      %v4125 = vld [vmem:[#allocation3 + $0x78] sm:$0xff]
      %v4126 = vld [vmem:[#allocation3 + $0x80] sm:$0xff]
      %v4127 = vld [vmem:[#allocation3 + $0x88] sm:$0xff]
      %v4128 = vld [vmem:[#allocation3 + $0x90] sm:$0xff]
      %v4129 = vld [vmem:[#allocation3 + $0x98] sm:$0xff]
      %v4130 = vld [vmem:[#allocation3 + $0xa0] sm:$0xff]
      %v4131 = vld [vmem:[#allocation3 + $0xa8] sm:$0xff]
      %v4132 = vld [vmem:[#allocation3 + $0xb0] sm:$0xff]
      %v4133 = vld [vmem:[#allocation3 + $0xb8] sm:$0xff]
      %v4134 = vld [vmem:[#allocation3 + $0xc0] sm:$0xff]
      %v4135 = vld [vmem:[#allocation3 + $0xc8] sm:$0xff]
      %v4136 = vld [vmem:[#allocation3 + $0xd0] sm:$0xff]
      %v4137 = vld [vmem:[#allocation3 + $0xd8] sm:$0xff]
      %v4138 = vld [vmem:[#allocation3 + $0xe0] sm:$0xff]
      %v4139 = vld [vmem:[#allocation3 + $0xe8] sm:$0xff]
      %v4140 = vld [vmem:[#allocation3 + $0xf0] sm:$0xff]
      %v4141 = vld [vmem:[#allocation3 + $0xf8] sm:$0xff]
      %v4142 = vld [vmem:[#allocation3 + $0x100] sm:$0xff]
      %v4143 = vld [vmem:[#allocation3 + $0x108] sm:$0xff]
      %v4144 = vld [vmem:[#allocation3 + $0x110] sm:$0xff]
      %v4145 = vld [vmem:[#allocation3 + $0x118] sm:$0xff]
      %v4146 = vadd.f32 %v4110, %v4021
      %v4147 = vadd.f32 %v4111, %v4023
      %v4148 = vadd.f32 %v4112, %v4026
      %v4149 = vadd.f32 %v4113, %v4028
      %v4150 = vadd.f32 %v4114, %v4031
      %v4151 = vadd.f32 %v4115, %v4033
      %v4152 = vadd.f32 %v4116, %v4036
      %v4153 = vadd.f32 %v4117, %v4038
      %v4154 = vadd.f32 %v4118, %v4041
      %v4155 = vadd.f32 %v4119, %v4043
      %v4156 = vadd.f32 %v4120, %v4046
      %v4157 = vadd.f32 %v4121, %v4048
      %v4158 = vadd.f32 %v4122, %v4051
      %v4159 = vadd.f32 %v4123, %v4053
      %v4160 = vadd.f32 %v4124, %v4056
      %v4161 = vadd.f32 %v4125, %v4058
      %v4162 = vadd.f32 %v4126, %v4061
      %v4163 = vadd.f32 %v4127, %v4063
      %v4164 = vadd.f32 %v4128, %v4066
      %v4165 = vadd.f32 %v4129, %v4068
      %v4166 = vadd.f32 %v4130, %v4071
      %v4167 = vadd.f32 %v4131, %v4073
      %v4168 = vadd.f32 %v4132, %v4076
      %v4169 = vadd.f32 %v4133, %v4078
      %v4170 = vadd.f32 %v4134, %v4081
      %v4171 = vadd.f32 %v4135, %v4083
      %v4172 = vadd.f32 %v4136, %v4086
      %v4173 = vadd.f32 %v4137, %v4088
      %v4174 = vadd.f32 %v4138, %v4091
      %v4175 = vadd.f32 %v4139, %v4093
      %v4176 = vadd.f32 %v4140, %v4096
      %v4177 = vadd.f32 %v4141, %v4098
      %v4178 = vadd.f32 %v4142, %v4101
      %v4179 = vadd.f32 %v4143, %v4103
      %v4180 = vadd.f32 %v4144, %v4106
      %v4181 = vadd.f32 %v4145, %v4108
      %4182 = vst [vmem:[#allocation3] sm:$0xff] %v4146
      %4183 = vst [vmem:[#allocation3 + $0x8] sm:$0xff] %v4147
      %4184 = vst [vmem:[#allocation3 + $0x10] sm:$0xff] %v4148
      %4185 = vst [vmem:[#allocation3 + $0x18] sm:$0xff] %v4149
      %4186 = vst [vmem:[#allocation3 + $0x20] sm:$0xff] %v4150
      %4187 = vst [vmem:[#allocation3 + $0x28] sm:$0xff] %v4151
      %4188 = vst [vmem:[#allocation3 + $0x30] sm:$0xff] %v4152
      %4189 = vst [vmem:[#allocation3 + $0x38] sm:$0xff] %v4153
      %4190 = vst [vmem:[#allocation3 + $0x40] sm:$0xff] %v4154
      %4191 = vst [vmem:[#allocation3 + $0x48] sm:$0xff] %v4155
      %4192 = vst [vmem:[#allocation3 + $0x50] sm:$0xff] %v4156
      %4193 = vst [vmem:[#allocation3 + $0x58] sm:$0xff] %v4157
      %4194 = vst [vmem:[#allocation3 + $0x60] sm:$0xff] %v4158
      %4195 = vst [vmem:[#allocation3 + $0x68] sm:$0xff] %v4159
      %4196 = vst [vmem:[#allocation3 + $0x70] sm:$0xff] %v4160
      %4197 = vst [vmem:[#allocation3 + $0x78] sm:$0xff] %v4161
      %4198 = vst [vmem:[#allocation3 + $0x80] sm:$0xff] %v4162
      %4199 = vst [vmem:[#allocation3 + $0x88] sm:$0xff] %v4163
      %4200 = vst [vmem:[#allocation3 + $0x90] sm:$0xff] %v4164
      %4201 = vst [vmem:[#allocation3 + $0x98] sm:$0xff] %v4165
      %4202 = vst [vmem:[#allocation3 + $0xa0] sm:$0xff] %v4166
      %4203 = vst [vmem:[#allocation3 + $0xa8] sm:$0xff] %v4167
      %4204 = vst [vmem:[#allocation3 + $0xb0] sm:$0xff] %v4168
      %4205 = vst [vmem:[#allocation3 + $0xb8] sm:$0xff] %v4169
      %4206 = vst [vmem:[#allocation3 + $0xc0] sm:$0xff] %v4170
      %4207 = vst [vmem:[#allocation3 + $0xc8] sm:$0xff] %v4171
      %4208 = vst [vmem:[#allocation3 + $0xd0] sm:$0xff] %v4172
      %4209 = vst [vmem:[#allocation3 + $0xd8] sm:$0xff] %v4173
      %4210 = vst [vmem:[#allocation3 + $0xe0] sm:$0xff] %v4174
      %4211 = vst [vmem:[#allocation3 + $0xe8] sm:$0xff] %v4175
      %4212 = vst [vmem:[#allocation3 + $0xf0] sm:$0xff] %v4176
      %4213 = vst [vmem:[#allocation3 + $0xf8] sm:$0xff] %v4177
      %4214 = vst [vmem:[#allocation3 + $0x100] sm:$0xff] %v4178
      %4215 = vst [vmem:[#allocation3 + $0x108] sm:$0xff] %v4179
      %4216 = vst [vmem:[#allocation3 + $0x110] sm:$0xff] %v4180
      %4217 = vst [vmem:[#allocation3 + $0x118] sm:$0xff] %v4181
      %v4218 = vld [vmem:[#allocation2 + $0x2] sm:$0xff]
      %v4219 = vld [vmem:[#allocation2 + $0xa] sm:$0xff]
      %v4220 = vld [vmem:[#allocation2 + $0x12] sm:$0xff]
      %v4221 = vld [vmem:[#allocation2 + $0x1a] sm:$0xff]
      %v4222 = vld [vmem:[#allocation2 + $0x22] sm:$0xff]
      %v4223 = vld [vmem:[#allocation2 + $0x2a] sm:$0xff]
      %v4224 = vld [vmem:[#allocation2 + $0x32] sm:$0xff]
      %v4225 = vld [vmem:[#allocation2 + $0x3a] sm:$0xff]
      %v4226 = vld [vmem:[#allocation2 + $0x42] sm:$0xff]
      %v4227 = vld [vmem:[#allocation2 + $0x4a] sm:$0xff]
      %v4228 = vld [vmem:[#allocation2 + $0x52] sm:$0xff]
      %v4229 = vld [vmem:[#allocation2 + $0x5a] sm:$0xff]
      %v4230 = vld [vmem:[#allocation2 + $0x62] sm:$0xff]
      %v4231 = vld [vmem:[#allocation2 + $0x6a] sm:$0xff]
      %v4232 = vld [vmem:[#allocation2 + $0x72] sm:$0xff]
      %v4233 = vld [vmem:[#allocation2 + $0x7a] sm:$0xff]
      %v4234 = vld [vmem:[#allocation2 + $0x82] sm:$0xff]
      %v4235 = vld [vmem:[#allocation2 + $0x8a] sm:$0xff]
      %v4236 = vld [vmem:[#allocation2 + $0x92] sm:$0xff]
      %v4237 = vld [vmem:[#allocation2 + $0x9a] sm:$0xff]
      %v4238 = vld [vmem:[#allocation2 + $0xa2] sm:$0xff]
      %v4239 = vld [vmem:[#allocation2 + $0xaa] sm:$0xff]
      %v4240 = vld [vmem:[#allocation2 + $0xb2] sm:$0xff]
      %v4241 = vld [vmem:[#allocation2 + $0xba] sm:$0xff]
      %v4242 = vld [vmem:[#allocation2 + $0xc2] sm:$0xff]
      %v4243 = vld [vmem:[#allocation2 + $0xca] sm:$0xff]
      %v4244 = vld [vmem:[#allocation2 + $0xd2] sm:$0xff]
      %v4245 = vld [vmem:[#allocation2 + $0xda] sm:$0xff]
      %v4246 = vld [vmem:[#allocation2 + $0xe2] sm:$0xff]
      %v4247 = vld [vmem:[#allocation2 + $0xea] sm:$0xff]
      %v4248 = vld [vmem:[#allocation2 + $0xf2] sm:$0xff]
      %v4249 = vld [vmem:[#allocation2 + $0xfa] sm:$0xff]
      %v4250 = vld [vmem:[#allocation2 + $0x102] sm:$0xff]
      %v4251 = vld [vmem:[#allocation2 + $0x10a] sm:$0xff]
      %v4252 = vld [vmem:[#allocation2 + $0x112] sm:$0xff]
      %v4253 = vld [vmem:[#allocation2 + $0x11a] sm:$0xff]
      %v4254 = vpack.c.bf16 %v4219, %v4218
      %v4255 = vpack.c.bf16 %v4221, %v4220
      %v4256 = vpack.c.bf16 %v4223, %v4222
      %v4257 = vpack.c.bf16 %v4225, %v4224
      %v4258 = vpack.c.bf16 %v4227, %v4226
      %v4259 = vpack.c.bf16 %v4229, %v4228
      %v4260 = vpack.c.bf16 %v4231, %v4230
      %v4261 = vpack.c.bf16 %v4233, %v4232
      %v4262 = vpack.c.bf16 %v4235, %v4234
      %v4263 = vpack.c.bf16 %v4237, %v4236
      %v4264 = vpack.c.bf16 %v4239, %v4238
      %v4265 = vpack.c.bf16 %v4241, %v4240
      %v4266 = vpack.c.bf16 %v4243, %v4242
      %v4267 = vpack.c.bf16 %v4245, %v4244
      %v4268 = vpack.c.bf16 %v4247, %v4246
      %v4269 = vpack.c.bf16 %v4249, %v4248
      %v4270 = vpack.c.bf16 %v4251, %v4250
      %v4271 = vpack.c.bf16 %v4253, %v4252
      %s4272 = scalar_lea.vmem %s5, 128
      %v4273 = vld [vmem:[%s4272] sm:$0xf]
      %v4274 = vld [vmem:[%s4272 + $0x4] sm:$0xf]
      %v4275 = vld [vmem:[%s4272 + $0x8] sm:$0xf]
      %v4276 = vld [vmem:[%s4272 + $0xc] sm:$0xf]
      %v4277 = vld [vmem:[%s4272 + $0x10] sm:$0xf]
      %v4278 = vld [vmem:[%s4272 + $0x14] sm:$0xf]
      %v4279 = vld [vmem:[%s4272 + $0x18] sm:$0xf]
      %v4280 = vld [vmem:[%s4272 + $0x1c] sm:$0xf]
      %v4281 = vld [vmem:[%s4272 + $0x20] sm:$0xf]
      %v4282 = vld [vmem:[%s4272 + $0x24] sm:$0xf]
      %v4283 = vld [vmem:[%s4272 + $0x28] sm:$0xf]
      %v4284 = vld [vmem:[%s4272 + $0x2c] sm:$0xf]
      %v4285 = vld [vmem:[%s4272 + $0x30] sm:$0xf]
      %v4286 = vld [vmem:[%s4272 + $0x34] sm:$0xf]
      %v4287 = vld [vmem:[%s4272 + $0x38] sm:$0xf]
      %v4288 = vld [vmem:[%s4272 + $0x3c] sm:$0xf]
      %v4305 = vunpack.c.l.b16 %v4273
      %v4306 = vunpack.c.l.b16 %v4274
      %v4307 = vunpack.c.l.b16 %v4275
      %v4308 = vunpack.c.l.b16 %v4276
      %v4309 = vunpack.c.l.b16 %v4277
      %v4310 = vunpack.c.l.b16 %v4278
      %v4311 = vunpack.c.l.b16 %v4279
      %v4312 = vunpack.c.l.b16 %v4280
      %v4313 = vunpack.c.l.b16 %v4281
      %v4314 = vunpack.c.l.b16 %v4282
      %v4315 = vunpack.c.l.b16 %v4283
      %v4316 = vunpack.c.l.b16 %v4284
      %v4317 = vunpack.c.l.b16 %v4285
      %v4318 = vunpack.c.l.b16 %v4286
      %v4319 = vunpack.c.l.b16 %v4287
      %v4320 = vunpack.c.l.b16 %v4288
      %v4321 = vpack.c.b16 %v4306, %v4305
      %v4322 = vpack.c.b16 %v4308, %v4307
      %v4323 = vpack.c.b16 %v4310, %v4309
      %v4324 = vpack.c.b16 %v4312, %v4311
      %v4325 = vpack.c.b16 %v4314, %v4313
      %v4326 = vpack.c.b16 %v4316, %v4315
      %v4327 = vpack.c.b16 %v4318, %v4317
      %v4328 = vpack.c.b16 %v4320, %v4319
      %4337 = vmatpush.bf16.msra.mxu0 %v4328
      %4338 = vmatpush.bf16.msra.mxu0 %v4327
      %4339 = vmatpush.bf16.msra.mxu0 %v4326
      %4340 = vmatpush.bf16.msra.mxu0 %v4325
      %4341 = vmatpush.bf16.msra.mxu0 %v4324
      %4342 = vmatpush.bf16.msra.mxu0 %v4323
      %4343 = vmatpush.bf16.msra.mxu0 %v4322
      %4344 = vmatpush.bf16.msra.mxu0 %v4321
      %4345 = vmatmul.bf16.gmra.mxu0 %v4254
      %v4346 = vpop.f32.mrf.mxu0
      %v4347 = vadd.f32 0.0, %v4346
      %v4348 = vpop.f32.mrf.mxu0
      %v4349 = vadd.f32 0.0, %v4348
      %4350 = vmatmul.bf16.gmra.mxu0 %v4255
      %v4351 = vpop.f32.mrf.mxu0
      %v4352 = vadd.f32 0.0, %v4351
      %v4353 = vpop.f32.mrf.mxu0
      %v4354 = vadd.f32 0.0, %v4353
      %4355 = vmatmul.bf16.gmra.mxu0 %v4256
      %v4356 = vpop.f32.mrf.mxu0
      %v4357 = vadd.f32 0.0, %v4356
      %v4358 = vpop.f32.mrf.mxu0
      %v4359 = vadd.f32 0.0, %v4358
      %4360 = vmatmul.bf16.gmra.mxu0 %v4257
      %v4361 = vpop.f32.mrf.mxu0
      %v4362 = vadd.f32 0.0, %v4361
      %v4363 = vpop.f32.mrf.mxu0
      %v4364 = vadd.f32 0.0, %v4363
      %4365 = vmatmul.bf16.gmra.mxu0 %v4258
      %v4366 = vpop.f32.mrf.mxu0
      %v4367 = vadd.f32 0.0, %v4366
      %v4368 = vpop.f32.mrf.mxu0
      %v4369 = vadd.f32 0.0, %v4368
      %4370 = vmatmul.bf16.gmra.mxu0 %v4259
      %v4371 = vpop.f32.mrf.mxu0
      %v4372 = vadd.f32 0.0, %v4371
      %v4373 = vpop.f32.mrf.mxu0
      %v4374 = vadd.f32 0.0, %v4373
      %4375 = vmatmul.bf16.gmra.mxu0 %v4260
      %v4376 = vpop.f32.mrf.mxu0
      %v4377 = vadd.f32 0.0, %v4376
      %v4378 = vpop.f32.mrf.mxu0
      %v4379 = vadd.f32 0.0, %v4378
      %4380 = vmatmul.bf16.gmra.mxu0 %v4261
      %v4381 = vpop.f32.mrf.mxu0
      %v4382 = vadd.f32 0.0, %v4381
      %v4383 = vpop.f32.mrf.mxu0
      %v4384 = vadd.f32 0.0, %v4383
      %4385 = vmatmul.bf16.gmra.mxu0 %v4262
      %v4386 = vpop.f32.mrf.mxu0
      %v4387 = vadd.f32 0.0, %v4386
      %v4388 = vpop.f32.mrf.mxu0
      %v4389 = vadd.f32 0.0, %v4388
      %4390 = vmatmul.bf16.gmra.mxu0 %v4263
      %v4391 = vpop.f32.mrf.mxu0
      %v4392 = vadd.f32 0.0, %v4391
      %v4393 = vpop.f32.mrf.mxu0
      %v4394 = vadd.f32 0.0, %v4393
      %4395 = vmatmul.bf16.gmra.mxu0 %v4264
      %v4396 = vpop.f32.mrf.mxu0
      %v4397 = vadd.f32 0.0, %v4396
      %v4398 = vpop.f32.mrf.mxu0
      %v4399 = vadd.f32 0.0, %v4398
      %4400 = vmatmul.bf16.gmra.mxu0 %v4265
      %v4401 = vpop.f32.mrf.mxu0
      %v4402 = vadd.f32 0.0, %v4401
      %v4403 = vpop.f32.mrf.mxu0
      %v4404 = vadd.f32 0.0, %v4403
      %4405 = vmatmul.bf16.gmra.mxu0 %v4266
      %v4406 = vpop.f32.mrf.mxu0
      %v4407 = vadd.f32 0.0, %v4406
      %v4408 = vpop.f32.mrf.mxu0
      %v4409 = vadd.f32 0.0, %v4408
      %4410 = vmatmul.bf16.gmra.mxu0 %v4267
      %v4411 = vpop.f32.mrf.mxu0
      %v4412 = vadd.f32 0.0, %v4411
      %v4413 = vpop.f32.mrf.mxu0
      %v4414 = vadd.f32 0.0, %v4413
      %4415 = vmatmul.bf16.gmra.mxu0 %v4268
      %v4416 = vpop.f32.mrf.mxu0
      %v4417 = vadd.f32 0.0, %v4416
      %v4418 = vpop.f32.mrf.mxu0
      %v4419 = vadd.f32 0.0, %v4418
      %4420 = vmatmul.bf16.gmra.mxu0 %v4269
      %v4421 = vpop.f32.mrf.mxu0
      %v4422 = vadd.f32 0.0, %v4421
      %v4423 = vpop.f32.mrf.mxu0
      %v4424 = vadd.f32 0.0, %v4423
      %4425 = vmatmul.bf16.gmra.mxu0 %v4270
      %v4426 = vpop.f32.mrf.mxu0
      %v4427 = vadd.f32 0.0, %v4426
      %v4428 = vpop.f32.mrf.mxu0
      %v4429 = vadd.f32 0.0, %v4428
      %4430 = vmatmul.bf16.gmra.mxu0 %v4271
      %v4431 = vpop.f32.mrf.mxu0
      %v4432 = vadd.f32 0.0, %v4431
      %v4433 = vpop.f32.mrf.mxu0
      %v4434 = vadd.f32 0.0, %v4433
      %4435 = vdwg.mxu0
      %v4436 = vld [vmem:[#allocation3] sm:$0xff]
      %v4437 = vld [vmem:[#allocation3 + $0x8] sm:$0xff]
      %v4438 = vld [vmem:[#allocation3 + $0x10] sm:$0xff]
      %v4439 = vld [vmem:[#allocation3 + $0x18] sm:$0xff]
      %v4440 = vld [vmem:[#allocation3 + $0x20] sm:$0xff]
      %v4441 = vld [vmem:[#allocation3 + $0x28] sm:$0xff]
      %v4442 = vld [vmem:[#allocation3 + $0x30] sm:$0xff]
      %v4443 = vld [vmem:[#allocation3 + $0x38] sm:$0xff]
      %v4444 = vld [vmem:[#allocation3 + $0x40] sm:$0xff]
      %v4445 = vld [vmem:[#allocation3 + $0x48] sm:$0xff]
      %v4446 = vld [vmem:[#allocation3 + $0x50] sm:$0xff]
      %v4447 = vld [vmem:[#allocation3 + $0x58] sm:$0xff]
      %v4448 = vld [vmem:[#allocation3 + $0x60] sm:$0xff]
      %v4449 = vld [vmem:[#allocation3 + $0x68] sm:$0xff]
      %v4450 = vld [vmem:[#allocation3 + $0x70] sm:$0xff]
      %v4451 = vld [vmem:[#allocation3 + $0x78] sm:$0xff]
      %v4452 = vld [vmem:[#allocation3 + $0x80] sm:$0xff]
      %v4453 = vld [vmem:[#allocation3 + $0x88] sm:$0xff]
      %v4454 = vld [vmem:[#allocation3 + $0x90] sm:$0xff]
      %v4455 = vld [vmem:[#allocation3 + $0x98] sm:$0xff]
      %v4456 = vld [vmem:[#allocation3 + $0xa0] sm:$0xff]
      %v4457 = vld [vmem:[#allocation3 + $0xa8] sm:$0xff]
      %v4458 = vld [vmem:[#allocation3 + $0xb0] sm:$0xff]
      %v4459 = vld [vmem:[#allocation3 + $0xb8] sm:$0xff]
      %v4460 = vld [vmem:[#allocation3 + $0xc0] sm:$0xff]
      %v4461 = vld [vmem:[#allocation3 + $0xc8] sm:$0xff]
      %v4462 = vld [vmem:[#allocation3 + $0xd0] sm:$0xff]
      %v4463 = vld [vmem:[#allocation3 + $0xd8] sm:$0xff]
      %v4464 = vld [vmem:[#allocation3 + $0xe0] sm:$0xff]
      %v4465 = vld [vmem:[#allocation3 + $0xe8] sm:$0xff]
      %v4466 = vld [vmem:[#allocation3 + $0xf0] sm:$0xff]
      %v4467 = vld [vmem:[#allocation3 + $0xf8] sm:$0xff]
      %v4468 = vld [vmem:[#allocation3 + $0x100] sm:$0xff]
      %v4469 = vld [vmem:[#allocation3 + $0x108] sm:$0xff]
      %v4470 = vld [vmem:[#allocation3 + $0x110] sm:$0xff]
      %v4471 = vld [vmem:[#allocation3 + $0x118] sm:$0xff]
      %v4472 = vadd.f32 %v4436, %v4347
      %v4473 = vadd.f32 %v4437, %v4349
      %v4474 = vadd.f32 %v4438, %v4352
      %v4475 = vadd.f32 %v4439, %v4354
      %v4476 = vadd.f32 %v4440, %v4357
      %v4477 = vadd.f32 %v4441, %v4359
      %v4478 = vadd.f32 %v4442, %v4362
      %v4479 = vadd.f32 %v4443, %v4364
      %v4480 = vadd.f32 %v4444, %v4367
      %v4481 = vadd.f32 %v4445, %v4369
      %v4482 = vadd.f32 %v4446, %v4372
      %v4483 = vadd.f32 %v4447, %v4374
      %v4484 = vadd.f32 %v4448, %v4377
      %v4485 = vadd.f32 %v4449, %v4379
      %v4486 = vadd.f32 %v4450, %v4382
      %v4487 = vadd.f32 %v4451, %v4384
      %v4488 = vadd.f32 %v4452, %v4387
      %v4489 = vadd.f32 %v4453, %v4389
      %v4490 = vadd.f32 %v4454, %v4392
      %v4491 = vadd.f32 %v4455, %v4394
      %v4492 = vadd.f32 %v4456, %v4397
      %v4493 = vadd.f32 %v4457, %v4399
      %v4494 = vadd.f32 %v4458, %v4402
      %v4495 = vadd.f32 %v4459, %v4404
      %v4496 = vadd.f32 %v4460, %v4407
      %v4497 = vadd.f32 %v4461, %v4409
      %v4498 = vadd.f32 %v4462, %v4412
      %v4499 = vadd.f32 %v4463, %v4414
      %v4500 = vadd.f32 %v4464, %v4417
      %v4501 = vadd.f32 %v4465, %v4419
      %v4502 = vadd.f32 %v4466, %v4422
      %v4503 = vadd.f32 %v4467, %v4424
      %v4504 = vadd.f32 %v4468, %v4427
      %v4505 = vadd.f32 %v4469, %v4429
      %v4506 = vadd.f32 %v4470, %v4432
      %v4507 = vadd.f32 %v4471, %v4434
      %4508 = vst [vmem:[#allocation3] sm:$0xff] %v4472
      %4509 = vst [vmem:[#allocation3 + $0x8] sm:$0xff] %v4473
      %4510 = vst [vmem:[#allocation3 + $0x10] sm:$0xff] %v4474
      %4511 = vst [vmem:[#allocation3 + $0x18] sm:$0xff] %v4475
      %4512 = vst [vmem:[#allocation3 + $0x20] sm:$0xff] %v4476
      %4513 = vst [vmem:[#allocation3 + $0x28] sm:$0xff] %v4477
      %4514 = vst [vmem:[#allocation3 + $0x30] sm:$0xff] %v4478
      %4515 = vst [vmem:[#allocation3 + $0x38] sm:$0xff] %v4479
      %4516 = vst [vmem:[#allocation3 + $0x40] sm:$0xff] %v4480
      %4517 = vst [vmem:[#allocation3 + $0x48] sm:$0xff] %v4481
      %4518 = vst [vmem:[#allocation3 + $0x50] sm:$0xff] %v4482
      %4519 = vst [vmem:[#allocation3 + $0x58] sm:$0xff] %v4483
      %4520 = vst [vmem:[#allocation3 + $0x60] sm:$0xff] %v4484
      %4521 = vst [vmem:[#allocation3 + $0x68] sm:$0xff] %v4485
      %4522 = vst [vmem:[#allocation3 + $0x70] sm:$0xff] %v4486
      %4523 = vst [vmem:[#allocation3 + $0x78] sm:$0xff] %v4487
      %4524 = vst [vmem:[#allocation3 + $0x80] sm:$0xff] %v4488
      %4525 = vst [vmem:[#allocation3 + $0x88] sm:$0xff] %v4489
      %4526 = vst [vmem:[#allocation3 + $0x90] sm:$0xff] %v4490
      %4527 = vst [vmem:[#allocation3 + $0x98] sm:$0xff] %v4491
      %4528 = vst [vmem:[#allocation3 + $0xa0] sm:$0xff] %v4492
      %4529 = vst [vmem:[#allocation3 + $0xa8] sm:$0xff] %v4493
      %4530 = vst [vmem:[#allocation3 + $0xb0] sm:$0xff] %v4494
      %4531 = vst [vmem:[#allocation3 + $0xb8] sm:$0xff] %v4495
      %4532 = vst [vmem:[#allocation3 + $0xc0] sm:$0xff] %v4496
      %4533 = vst [vmem:[#allocation3 + $0xc8] sm:$0xff] %v4497
      %4534 = vst [vmem:[#allocation3 + $0xd0] sm:$0xff] %v4498
      %4535 = vst [vmem:[#allocation3 + $0xd8] sm:$0xff] %v4499
      %4536 = vst [vmem:[#allocation3 + $0xe0] sm:$0xff] %v4500
      %4537 = vst [vmem:[#allocation3 + $0xe8] sm:$0xff] %v4501
      %4538 = vst [vmem:[#allocation3 + $0xf0] sm:$0xff] %v4502
      %4539 = vst [vmem:[#allocation3 + $0xf8] sm:$0xff] %v4503
      %4540 = vst [vmem:[#allocation3 + $0x100] sm:$0xff] %v4504
      %4541 = vst [vmem:[#allocation3 + $0x108] sm:$0xff] %v4505
      %4542 = vst [vmem:[#allocation3 + $0x110] sm:$0xff] %v4506
      %4543 = vst [vmem:[#allocation3 + $0x118] sm:$0xff] %v4507
      %v4544 = vld [vmem:[#allocation2 + $0x12] sm:$0xff]
      %v4545 = vld [vmem:[#allocation2 + $0x1a] sm:$0xff]
      %v4546 = vld [vmem:[#allocation2 + $0x22] sm:$0xff]
      %v4547 = vld [vmem:[#allocation2 + $0x2a] sm:$0xff]
      %v4548 = vld [vmem:[#allocation2 + $0x32] sm:$0xff]
      %v4549 = vld [vmem:[#allocation2 + $0x3a] sm:$0xff]
      %v4550 = vld [vmem:[#allocation2 + $0x42] sm:$0xff]
      %v4551 = vld [vmem:[#allocation2 + $0x4a] sm:$0xff]
      %v4552 = vld [vmem:[#allocation2 + $0x52] sm:$0xff]
      %v4553 = vld [vmem:[#allocation2 + $0x5a] sm:$0xff]
      %v4554 = vld [vmem:[#allocation2 + $0x62] sm:$0xff]
      %v4555 = vld [vmem:[#allocation2 + $0x6a] sm:$0xff]
      %v4556 = vld [vmem:[#allocation2 + $0x72] sm:$0xff]
      %v4557 = vld [vmem:[#allocation2 + $0x7a] sm:$0xff]
      %v4558 = vld [vmem:[#allocation2 + $0x82] sm:$0xff]
      %v4559 = vld [vmem:[#allocation2 + $0x8a] sm:$0xff]
      %v4560 = vld [vmem:[#allocation2 + $0x92] sm:$0xff]
      %v4561 = vld [vmem:[#allocation2 + $0x9a] sm:$0xff]
      %v4562 = vld [vmem:[#allocation2 + $0xa2] sm:$0xff]
      %v4563 = vld [vmem:[#allocation2 + $0xaa] sm:$0xff]
      %v4564 = vld [vmem:[#allocation2 + $0xb2] sm:$0xff]
      %v4565 = vld [vmem:[#allocation2 + $0xba] sm:$0xff]
      %v4566 = vld [vmem:[#allocation2 + $0xc2] sm:$0xff]
      %v4567 = vld [vmem:[#allocation2 + $0xca] sm:$0xff]
      %v4568 = vld [vmem:[#allocation2 + $0xd2] sm:$0xff]
      %v4569 = vld [vmem:[#allocation2 + $0xda] sm:$0xff]
      %v4570 = vld [vmem:[#allocation2 + $0xe2] sm:$0xff]
      %v4571 = vld [vmem:[#allocation2 + $0xea] sm:$0xff]
      %v4572 = vld [vmem:[#allocation2 + $0xf2] sm:$0xff]
      %v4573 = vld [vmem:[#allocation2 + $0xfa] sm:$0xff]
      %v4574 = vld [vmem:[#allocation2 + $0x102] sm:$0xff]
      %v4575 = vld [vmem:[#allocation2 + $0x10a] sm:$0xff]
      %v4576 = vld [vmem:[#allocation2 + $0x112] sm:$0xff]
      %v4577 = vld [vmem:[#allocation2 + $0x11a] sm:$0xff]
      %v4578 = vld [vmem:[#allocation2 + $0x122] sm:$0xff]
      %v4579 = vld [vmem:[#allocation2 + $0x12a] sm:$0xff]
      %v4580 = vpack.c.bf16 %v4545, %v4544
      %v4581 = vpack.c.bf16 %v4547, %v4546
      %v4582 = vpack.c.bf16 %v4549, %v4548
      %v4583 = vpack.c.bf16 %v4551, %v4550
      %v4584 = vpack.c.bf16 %v4553, %v4552
      %v4585 = vpack.c.bf16 %v4555, %v4554
      %v4586 = vpack.c.bf16 %v4557, %v4556
      %v4587 = vpack.c.bf16 %v4559, %v4558
      %v4588 = vpack.c.bf16 %v4561, %v4560
      %v4589 = vpack.c.bf16 %v4563, %v4562
      %v4590 = vpack.c.bf16 %v4565, %v4564
      %v4591 = vpack.c.bf16 %v4567, %v4566
      %v4592 = vpack.c.bf16 %v4569, %v4568
      %v4593 = vpack.c.bf16 %v4571, %v4570
      %v4594 = vpack.c.bf16 %v4573, %v4572
      %v4595 = vpack.c.bf16 %v4575, %v4574
      %v4596 = vpack.c.bf16 %v4577, %v4576
      %v4597 = vpack.c.bf16 %v4579, %v4578
      %s4598 = scalar_lea.vmem %s5, 192
      %v4599 = vld [vmem:[%s4598] sm:$0xf]
      %v4600 = vld [vmem:[%s4598 + $0x4] sm:$0xf]
      %v4601 = vld [vmem:[%s4598 + $0x8] sm:$0xf]
      %v4602 = vld [vmem:[%s4598 + $0xc] sm:$0xf]
      %v4603 = vld [vmem:[%s4598 + $0x10] sm:$0xf]
      %v4604 = vld [vmem:[%s4598 + $0x14] sm:$0xf]
      %v4605 = vld [vmem:[%s4598 + $0x18] sm:$0xf]
      %v4606 = vld [vmem:[%s4598 + $0x1c] sm:$0xf]
      %v4607 = vld [vmem:[%s4598 + $0x20] sm:$0xf]
      %v4608 = vld [vmem:[%s4598 + $0x24] sm:$0xf]
      %v4609 = vld [vmem:[%s4598 + $0x28] sm:$0xf]
      %v4610 = vld [vmem:[%s4598 + $0x2c] sm:$0xf]
      %v4611 = vld [vmem:[%s4598 + $0x30] sm:$0xf]
      %v4612 = vld [vmem:[%s4598 + $0x34] sm:$0xf]
      %v4613 = vld [vmem:[%s4598 + $0x38] sm:$0xf]
      %v4614 = vld [vmem:[%s4598 + $0x3c] sm:$0xf]
      %v4631 = vunpack.c.l.b16 %v4599
      %v4632 = vunpack.c.l.b16 %v4600
      %v4633 = vunpack.c.l.b16 %v4601
      %v4634 = vunpack.c.l.b16 %v4602
      %v4635 = vunpack.c.l.b16 %v4603
      %v4636 = vunpack.c.l.b16 %v4604
      %v4637 = vunpack.c.l.b16 %v4605
      %v4638 = vunpack.c.l.b16 %v4606
      %v4639 = vunpack.c.l.b16 %v4607
      %v4640 = vunpack.c.l.b16 %v4608
      %v4641 = vunpack.c.l.b16 %v4609
      %v4642 = vunpack.c.l.b16 %v4610
      %v4643 = vunpack.c.l.b16 %v4611
      %v4644 = vunpack.c.l.b16 %v4612
      %v4645 = vunpack.c.l.b16 %v4613
      %v4646 = vunpack.c.l.b16 %v4614
      %v4647 = vpack.c.b16 %v4632, %v4631
      %v4648 = vpack.c.b16 %v4634, %v4633
      %v4649 = vpack.c.b16 %v4636, %v4635
      %v4650 = vpack.c.b16 %v4638, %v4637
      %v4651 = vpack.c.b16 %v4640, %v4639
      %v4652 = vpack.c.b16 %v4642, %v4641
      %v4653 = vpack.c.b16 %v4644, %v4643
      %v4654 = vpack.c.b16 %v4646, %v4645
      %4663 = vmatpush.bf16.msra.mxu0 %v4654
      %4664 = vmatpush.bf16.msra.mxu0 %v4653
      %4665 = vmatpush.bf16.msra.mxu0 %v4652
      %4666 = vmatpush.bf16.msra.mxu0 %v4651
      %4667 = vmatpush.bf16.msra.mxu0 %v4650
      %4668 = vmatpush.bf16.msra.mxu0 %v4649
      %4669 = vmatpush.bf16.msra.mxu0 %v4648
      %4670 = vmatpush.bf16.msra.mxu0 %v4647
      %4671 = vmatmul.bf16.gmra.mxu0 %v4580
      %v4672 = vpop.f32.mrf.mxu0
      %v4673 = vadd.f32 0.0, %v4672
      %v4674 = vpop.f32.mrf.mxu0
      %v4675 = vadd.f32 0.0, %v4674
      %4676 = vmatmul.bf16.gmra.mxu0 %v4581
      %v4677 = vpop.f32.mrf.mxu0
      %v4678 = vadd.f32 0.0, %v4677
      %v4679 = vpop.f32.mrf.mxu0
      %v4680 = vadd.f32 0.0, %v4679
      %4681 = vmatmul.bf16.gmra.mxu0 %v4582
      %v4682 = vpop.f32.mrf.mxu0
      %v4683 = vadd.f32 0.0, %v4682
      %v4684 = vpop.f32.mrf.mxu0
      %v4685 = vadd.f32 0.0, %v4684
      %4686 = vmatmul.bf16.gmra.mxu0 %v4583
      %v4687 = vpop.f32.mrf.mxu0
      %v4688 = vadd.f32 0.0, %v4687
      %v4689 = vpop.f32.mrf.mxu0
      %v4690 = vadd.f32 0.0, %v4689
      %4691 = vmatmul.bf16.gmra.mxu0 %v4584
      %v4692 = vpop.f32.mrf.mxu0
      %v4693 = vadd.f32 0.0, %v4692
      %v4694 = vpop.f32.mrf.mxu0
      %v4695 = vadd.f32 0.0, %v4694
      %4696 = vmatmul.bf16.gmra.mxu0 %v4585
      %v4697 = vpop.f32.mrf.mxu0
      %v4698 = vadd.f32 0.0, %v4697
      %v4699 = vpop.f32.mrf.mxu0
      %v4700 = vadd.f32 0.0, %v4699
      %4701 = vmatmul.bf16.gmra.mxu0 %v4586
      %v4702 = vpop.f32.mrf.mxu0
      %v4703 = vadd.f32 0.0, %v4702
      %v4704 = vpop.f32.mrf.mxu0
      %v4705 = vadd.f32 0.0, %v4704
      %4706 = vmatmul.bf16.gmra.mxu0 %v4587
      %v4707 = vpop.f32.mrf.mxu0
      %v4708 = vadd.f32 0.0, %v4707
      %v4709 = vpop.f32.mrf.mxu0
      %v4710 = vadd.f32 0.0, %v4709
      %4711 = vmatmul.bf16.gmra.mxu0 %v4588
      %v4712 = vpop.f32.mrf.mxu0
      %v4713 = vadd.f32 0.0, %v4712
      %v4714 = vpop.f32.mrf.mxu0
      %v4715 = vadd.f32 0.0, %v4714
      %4716 = vmatmul.bf16.gmra.mxu0 %v4589
      %v4717 = vpop.f32.mrf.mxu0
      %v4718 = vadd.f32 0.0, %v4717
      %v4719 = vpop.f32.mrf.mxu0
      %v4720 = vadd.f32 0.0, %v4719
      %4721 = vmatmul.bf16.gmra.mxu0 %v4590
      %v4722 = vpop.f32.mrf.mxu0
      %v4723 = vadd.f32 0.0, %v4722
      %v4724 = vpop.f32.mrf.mxu0
      %v4725 = vadd.f32 0.0, %v4724
      %4726 = vmatmul.bf16.gmra.mxu0 %v4591
      %v4727 = vpop.f32.mrf.mxu0
      %v4728 = vadd.f32 0.0, %v4727
      %v4729 = vpop.f32.mrf.mxu0
      %v4730 = vadd.f32 0.0, %v4729
      %4731 = vmatmul.bf16.gmra.mxu0 %v4592
      %v4732 = vpop.f32.mrf.mxu0
      %v4733 = vadd.f32 0.0, %v4732
      %v4734 = vpop.f32.mrf.mxu0
      %v4735 = vadd.f32 0.0, %v4734
      %4736 = vmatmul.bf16.gmra.mxu0 %v4593
      %v4737 = vpop.f32.mrf.mxu0
      %v4738 = vadd.f32 0.0, %v4737
      %v4739 = vpop.f32.mrf.mxu0
      %v4740 = vadd.f32 0.0, %v4739
      %4741 = vmatmul.bf16.gmra.mxu0 %v4594
      %v4742 = vpop.f32.mrf.mxu0
      %v4743 = vadd.f32 0.0, %v4742
      %v4744 = vpop.f32.mrf.mxu0
      %v4745 = vadd.f32 0.0, %v4744
      %4746 = vmatmul.bf16.gmra.mxu0 %v4595
      %v4747 = vpop.f32.mrf.mxu0
      %v4748 = vadd.f32 0.0, %v4747
      %v4749 = vpop.f32.mrf.mxu0
      %v4750 = vadd.f32 0.0, %v4749
      %4751 = vmatmul.bf16.gmra.mxu0 %v4596
      %v4752 = vpop.f32.mrf.mxu0
      %v4753 = vadd.f32 0.0, %v4752
      %v4754 = vpop.f32.mrf.mxu0
      %v4755 = vadd.f32 0.0, %v4754
      %4756 = vmatmul.bf16.gmra.mxu0 %v4597
      %v4757 = vpop.f32.mrf.mxu0
      %v4758 = vadd.f32 0.0, %v4757
      %v4759 = vpop.f32.mrf.mxu0
      %v4760 = vadd.f32 0.0, %v4759
      %4761 = vdwg.mxu0
      %v4762 = vld [vmem:[#allocation3] sm:$0xff]
      %v4763 = vld [vmem:[#allocation3 + $0x8] sm:$0xff]
      %v4764 = vld [vmem:[#allocation3 + $0x10] sm:$0xff]
      %v4765 = vld [vmem:[#allocation3 + $0x18] sm:$0xff]
      %v4766 = vld [vmem:[#allocation3 + $0x20] sm:$0xff]
      %v4767 = vld [vmem:[#allocation3 + $0x28] sm:$0xff]
      %v4768 = vld [vmem:[#allocation3 + $0x30] sm:$0xff]
      %v4769 = vld [vmem:[#allocation3 + $0x38] sm:$0xff]
      %v4770 = vld [vmem:[#allocation3 + $0x40] sm:$0xff]
      %v4771 = vld [vmem:[#allocation3 + $0x48] sm:$0xff]
      %v4772 = vld [vmem:[#allocation3 + $0x50] sm:$0xff]
      %v4773 = vld [vmem:[#allocation3 + $0x58] sm:$0xff]
      %v4774 = vld [vmem:[#allocation3 + $0x60] sm:$0xff]
      %v4775 = vld [vmem:[#allocation3 + $0x68] sm:$0xff]
      %v4776 = vld [vmem:[#allocation3 + $0x70] sm:$0xff]
      %v4777 = vld [vmem:[#allocation3 + $0x78] sm:$0xff]
      %v4778 = vld [vmem:[#allocation3 + $0x80] sm:$0xff]
      %v4779 = vld [vmem:[#allocation3 + $0x88] sm:$0xff]
      %v4780 = vld [vmem:[#allocation3 + $0x90] sm:$0xff]
      %v4781 = vld [vmem:[#allocation3 + $0x98] sm:$0xff]
      %v4782 = vld [vmem:[#allocation3 + $0xa0] sm:$0xff]
      %v4783 = vld [vmem:[#allocation3 + $0xa8] sm:$0xff]
      %v4784 = vld [vmem:[#allocation3 + $0xb0] sm:$0xff]
      %v4785 = vld [vmem:[#allocation3 + $0xb8] sm:$0xff]
      %v4786 = vld [vmem:[#allocation3 + $0xc0] sm:$0xff]
      %v4787 = vld [vmem:[#allocation3 + $0xc8] sm:$0xff]
      %v4788 = vld [vmem:[#allocation3 + $0xd0] sm:$0xff]
      %v4789 = vld [vmem:[#allocation3 + $0xd8] sm:$0xff]
      %v4790 = vld [vmem:[#allocation3 + $0xe0] sm:$0xff]
      %v4791 = vld [vmem:[#allocation3 + $0xe8] sm:$0xff]
      %v4792 = vld [vmem:[#allocation3 + $0xf0] sm:$0xff]
      %v4793 = vld [vmem:[#allocation3 + $0xf8] sm:$0xff]
      %v4794 = vld [vmem:[#allocation3 + $0x100] sm:$0xff]
      %v4795 = vld [vmem:[#allocation3 + $0x108] sm:$0xff]
      %v4796 = vld [vmem:[#allocation3 + $0x110] sm:$0xff]
      %v4797 = vld [vmem:[#allocation3 + $0x118] sm:$0xff]
      %v4798 = vadd.f32 %v4762, %v4673
      %v4799 = vadd.f32 %v4763, %v4675
      %v4800 = vadd.f32 %v4764, %v4678
      %v4801 = vadd.f32 %v4765, %v4680
      %v4802 = vadd.f32 %v4766, %v4683
      %v4803 = vadd.f32 %v4767, %v4685
      %v4804 = vadd.f32 %v4768, %v4688
      %v4805 = vadd.f32 %v4769, %v4690
      %v4806 = vadd.f32 %v4770, %v4693
      %v4807 = vadd.f32 %v4771, %v4695
      %v4808 = vadd.f32 %v4772, %v4698
      %v4809 = vadd.f32 %v4773, %v4700
      %v4810 = vadd.f32 %v4774, %v4703
      %v4811 = vadd.f32 %v4775, %v4705
      %v4812 = vadd.f32 %v4776, %v4708
      %v4813 = vadd.f32 %v4777, %v4710
      %v4814 = vadd.f32 %v4778, %v4713
      %v4815 = vadd.f32 %v4779, %v4715
      %v4816 = vadd.f32 %v4780, %v4718
      %v4817 = vadd.f32 %v4781, %v4720
      %v4818 = vadd.f32 %v4782, %v4723
      %v4819 = vadd.f32 %v4783, %v4725
      %v4820 = vadd.f32 %v4784, %v4728
      %v4821 = vadd.f32 %v4785, %v4730
      %v4822 = vadd.f32 %v4786, %v4733
      %v4823 = vadd.f32 %v4787, %v4735
      %v4824 = vadd.f32 %v4788, %v4738
      %v4825 = vadd.f32 %v4789, %v4740
      %v4826 = vadd.f32 %v4790, %v4743
      %v4827 = vadd.f32 %v4791, %v4745
      %v4828 = vadd.f32 %v4792, %v4748
      %v4829 = vadd.f32 %v4793, %v4750
      %v4830 = vadd.f32 %v4794, %v4753
      %v4831 = vadd.f32 %v4795, %v4755
      %v4832 = vadd.f32 %v4796, %v4758
      %v4833 = vadd.f32 %v4797, %v4760
      %4834 = vst [vmem:[#allocation3] sm:$0xff] %v4798
      %4835 = vst [vmem:[#allocation3 + $0x8] sm:$0xff] %v4799
      %4836 = vst [vmem:[#allocation3 + $0x10] sm:$0xff] %v4800
      %4837 = vst [vmem:[#allocation3 + $0x18] sm:$0xff] %v4801
      %4838 = vst [vmem:[#allocation3 + $0x20] sm:$0xff] %v4802
      %4839 = vst [vmem:[#allocation3 + $0x28] sm:$0xff] %v4803
      %4840 = vst [vmem:[#allocation3 + $0x30] sm:$0xff] %v4804
      %4841 = vst [vmem:[#allocation3 + $0x38] sm:$0xff] %v4805
      %4842 = vst [vmem:[#allocation3 + $0x40] sm:$0xff] %v4806
      %4843 = vst [vmem:[#allocation3 + $0x48] sm:$0xff] %v4807
      %4844 = vst [vmem:[#allocation3 + $0x50] sm:$0xff] %v4808
      %4845 = vst [vmem:[#allocation3 + $0x58] sm:$0xff] %v4809
      %4846 = vst [vmem:[#allocation3 + $0x60] sm:$0xff] %v4810
      %4847 = vst [vmem:[#allocation3 + $0x68] sm:$0xff] %v4811
      %4848 = vst [vmem:[#allocation3 + $0x70] sm:$0xff] %v4812
      %4849 = vst [vmem:[#allocation3 + $0x78] sm:$0xff] %v4813
      %4850 = vst [vmem:[#allocation3 + $0x80] sm:$0xff] %v4814
      %4851 = vst [vmem:[#allocation3 + $0x88] sm:$0xff] %v4815
      %4852 = vst [vmem:[#allocation3 + $0x90] sm:$0xff] %v4816
      %4853 = vst [vmem:[#allocation3 + $0x98] sm:$0xff] %v4817
      %4854 = vst [vmem:[#allocation3 + $0xa0] sm:$0xff] %v4818
      %4855 = vst [vmem:[#allocation3 + $0xa8] sm:$0xff] %v4819
      %4856 = vst [vmem:[#allocation3 + $0xb0] sm:$0xff] %v4820
      %4857 = vst [vmem:[#allocation3 + $0xb8] sm:$0xff] %v4821
      %4858 = vst [vmem:[#allocation3 + $0xc0] sm:$0xff] %v4822
      %4859 = vst [vmem:[#allocation3 + $0xc8] sm:$0xff] %v4823
      %4860 = vst [vmem:[#allocation3 + $0xd0] sm:$0xff] %v4824
      %4861 = vst [vmem:[#allocation3 + $0xd8] sm:$0xff] %v4825
      %4862 = vst [vmem:[#allocation3 + $0xe0] sm:$0xff] %v4826
      %4863 = vst [vmem:[#allocation3 + $0xe8] sm:$0xff] %v4827
      %4864 = vst [vmem:[#allocation3 + $0xf0] sm:$0xff] %v4828
      %4865 = vst [vmem:[#allocation3 + $0xf8] sm:$0xff] %v4829
      %4866 = vst [vmem:[#allocation3 + $0x100] sm:$0xff] %v4830
      %4867 = vst [vmem:[#allocation3 + $0x108] sm:$0xff] %v4831
      %4868 = vst [vmem:[#allocation3 + $0x110] sm:$0xff] %v4832
      %4869 = vst [vmem:[#allocation3 + $0x118] sm:$0xff] %v4833
      %v4870 = vld [vmem:[#allocation2 + $0x13] sm:$0xff]
      %v4871 = vld [vmem:[#allocation2 + $0x1b] sm:$0xff]
      %v4872 = vld [vmem:[#allocation2 + $0x23] sm:$0xff]
      %v4873 = vld [vmem:[#allocation2 + $0x2b] sm:$0xff]
      %v4874 = vld [vmem:[#allocation2 + $0x33] sm:$0xff]
      %v4875 = vld [vmem:[#allocation2 + $0x3b] sm:$0xff]
      %v4876 = vld [vmem:[#allocation2 + $0x43] sm:$0xff]
      %v4877 = vld [vmem:[#allocation2 + $0x4b] sm:$0xff]
      %v4878 = vld [vmem:[#allocation2 + $0x53] sm:$0xff]
      %v4879 = vld [vmem:[#allocation2 + $0x5b] sm:$0xff]
      %v4880 = vld [vmem:[#allocation2 + $0x63] sm:$0xff]
      %v4881 = vld [vmem:[#allocation2 + $0x6b] sm:$0xff]
      %v4882 = vld [vmem:[#allocation2 + $0x73] sm:$0xff]
      %v4883 = vld [vmem:[#allocation2 + $0x7b] sm:$0xff]
      %v4884 = vld [vmem:[#allocation2 + $0x83] sm:$0xff]
      %v4885 = vld [vmem:[#allocation2 + $0x8b] sm:$0xff]
      %v4886 = vld [vmem:[#allocation2 + $0x93] sm:$0xff]
      %v4887 = vld [vmem:[#allocation2 + $0x9b] sm:$0xff]
      %v4888 = vld [vmem:[#allocation2 + $0xa3] sm:$0xff]
      %v4889 = vld [vmem:[#allocation2 + $0xab] sm:$0xff]
      %v4890 = vld [vmem:[#allocation2 + $0xb3] sm:$0xff]
      %v4891 = vld [vmem:[#allocation2 + $0xbb] sm:$0xff]
      %v4892 = vld [vmem:[#allocation2 + $0xc3] sm:$0xff]
      %v4893 = vld [vmem:[#allocation2 + $0xcb] sm:$0xff]
      %v4894 = vld [vmem:[#allocation2 + $0xd3] sm:$0xff]
      %v4895 = vld [vmem:[#allocation2 + $0xdb] sm:$0xff]
      %v4896 = vld [vmem:[#allocation2 + $0xe3] sm:$0xff]
      %v4897 = vld [vmem:[#allocation2 + $0xeb] sm:$0xff]
      %v4898 = vld [vmem:[#allocation2 + $0xf3] sm:$0xff]
      %v4899 = vld [vmem:[#allocation2 + $0xfb] sm:$0xff]
      %v4900 = vld [vmem:[#allocation2 + $0x103] sm:$0xff]
      %v4901 = vld [vmem:[#allocation2 + $0x10b] sm:$0xff]
      %v4902 = vld [vmem:[#allocation2 + $0x113] sm:$0xff]
      %v4903 = vld [vmem:[#allocation2 + $0x11b] sm:$0xff]
      %v4904 = vld [vmem:[#allocation2 + $0x123] sm:$0xff]
      %v4905 = vld [vmem:[#allocation2 + $0x12b] sm:$0xff]
      %v4906 = vpack.c.bf16 %v4871, %v4870
      %v4907 = vpack.c.bf16 %v4873, %v4872
      %v4908 = vpack.c.bf16 %v4875, %v4874
      %v4909 = vpack.c.bf16 %v4877, %v4876
      %v4910 = vpack.c.bf16 %v4879, %v4878
      %v4911 = vpack.c.bf16 %v4881, %v4880
      %v4912 = vpack.c.bf16 %v4883, %v4882
      %v4913 = vpack.c.bf16 %v4885, %v4884
      %v4914 = vpack.c.bf16 %v4887, %v4886
      %v4915 = vpack.c.bf16 %v4889, %v4888
      %v4916 = vpack.c.bf16 %v4891, %v4890
      %v4917 = vpack.c.bf16 %v4893, %v4892
      %v4918 = vpack.c.bf16 %v4895, %v4894
      %v4919 = vpack.c.bf16 %v4897, %v4896
      %v4920 = vpack.c.bf16 %v4899, %v4898
      %v4921 = vpack.c.bf16 %v4901, %v4900
      %v4922 = vpack.c.bf16 %v4903, %v4902
      %v4923 = vpack.c.bf16 %v4905, %v4904
      %s4924 = scalar_lea.vmem %s5, 256
      %v4925 = vld [vmem:[%s4924] sm:$0xf]
      %v4926 = vld [vmem:[%s4924 + $0x4] sm:$0xf]
      %v4927 = vld [vmem:[%s4924 + $0x8] sm:$0xf]
      %v4928 = vld [vmem:[%s4924 + $0xc] sm:$0xf]
      %v4929 = vld [vmem:[%s4924 + $0x10] sm:$0xf]
      %v4930 = vld [vmem:[%s4924 + $0x14] sm:$0xf]
      %v4931 = vld [vmem:[%s4924 + $0x18] sm:$0xf]
      %v4932 = vld [vmem:[%s4924 + $0x1c] sm:$0xf]
      %v4933 = vld [vmem:[%s4924 + $0x20] sm:$0xf]
      %v4934 = vld [vmem:[%s4924 + $0x24] sm:$0xf]
      %v4935 = vld [vmem:[%s4924 + $0x28] sm:$0xf]
      %v4936 = vld [vmem:[%s4924 + $0x2c] sm:$0xf]
      %v4937 = vld [vmem:[%s4924 + $0x30] sm:$0xf]
      %v4938 = vld [vmem:[%s4924 + $0x34] sm:$0xf]
      %v4939 = vld [vmem:[%s4924 + $0x38] sm:$0xf]
      %v4940 = vld [vmem:[%s4924 + $0x3c] sm:$0xf]
      %v4957 = vunpack.c.l.b16 %v4925
      %v4958 = vunpack.c.l.b16 %v4926
      %v4959 = vunpack.c.l.b16 %v4927
      %v4960 = vunpack.c.l.b16 %v4928
      %v4961 = vunpack.c.l.b16 %v4929
      %v4962 = vunpack.c.l.b16 %v4930
      %v4963 = vunpack.c.l.b16 %v4931
      %v4964 = vunpack.c.l.b16 %v4932
      %v4965 = vunpack.c.l.b16 %v4933
      %v4966 = vunpack.c.l.b16 %v4934
      %v4967 = vunpack.c.l.b16 %v4935
      %v4968 = vunpack.c.l.b16 %v4936
      %v4969 = vunpack.c.l.b16 %v4937
      %v4970 = vunpack.c.l.b16 %v4938
      %v4971 = vunpack.c.l.b16 %v4939
      %v4972 = vunpack.c.l.b16 %v4940
      %v4973 = vpack.c.b16 %v4958, %v4957
      %v4974 = vpack.c.b16 %v4960, %v4959
      %v4975 = vpack.c.b16 %v4962, %v4961
      %v4976 = vpack.c.b16 %v4964, %v4963
      %v4977 = vpack.c.b16 %v4966, %v4965
      %v4978 = vpack.c.b16 %v4968, %v4967
      %v4979 = vpack.c.b16 %v4970, %v4969
      %v4980 = vpack.c.b16 %v4972, %v4971
      %4989 = vmatpush.bf16.msra.mxu0 %v4980
      %4990 = vmatpush.bf16.msra.mxu0 %v4979
      %4991 = vmatpush.bf16.msra.mxu0 %v4978
      %4992 = vmatpush.bf16.msra.mxu0 %v4977
      %4993 = vmatpush.bf16.msra.mxu0 %v4976
      %4994 = vmatpush.bf16.msra.mxu0 %v4975
      %4995 = vmatpush.bf16.msra.mxu0 %v4974
      %4996 = vmatpush.bf16.msra.mxu0 %v4973
      %4997 = vmatmul.bf16.gmra.mxu0 %v4906
      %v4998 = vpop.f32.mrf.mxu0
      %v4999 = vadd.f32 0.0, %v4998
      %v5000 = vpop.f32.mrf.mxu0
      %v5001 = vadd.f32 0.0, %v5000
      %5002 = vmatmul.bf16.gmra.mxu0 %v4907
      %v5003 = vpop.f32.mrf.mxu0
      %v5004 = vadd.f32 0.0, %v5003
      %v5005 = vpop.f32.mrf.mxu0
      %v5006 = vadd.f32 0.0, %v5005
      %5007 = vmatmul.bf16.gmra.mxu0 %v4908
      %v5008 = vpop.f32.mrf.mxu0
      %v5009 = vadd.f32 0.0, %v5008
      %v5010 = vpop.f32.mrf.mxu0
      %v5011 = vadd.f32 0.0, %v5010
      %5012 = vmatmul.bf16.gmra.mxu0 %v4909
      %v5013 = vpop.f32.mrf.mxu0
      %v5014 = vadd.f32 0.0, %v5013
      %v5015 = vpop.f32.mrf.mxu0
      %v5016 = vadd.f32 0.0, %v5015
      %5017 = vmatmul.bf16.gmra.mxu0 %v4910
      %v5018 = vpop.f32.mrf.mxu0
      %v5019 = vadd.f32 0.0, %v5018
      %v5020 = vpop.f32.mrf.mxu0
      %v5021 = vadd.f32 0.0, %v5020
      %5022 = vmatmul.bf16.gmra.mxu0 %v4911
      %v5023 = vpop.f32.mrf.mxu0
      %v5024 = vadd.f32 0.0, %v5023
      %v5025 = vpop.f32.mrf.mxu0
      %v5026 = vadd.f32 0.0, %v5025
      %5027 = vmatmul.bf16.gmra.mxu0 %v4912
      %v5028 = vpop.f32.mrf.mxu0
      %v5029 = vadd.f32 0.0, %v5028
      %v5030 = vpop.f32.mrf.mxu0
      %v5031 = vadd.f32 0.0, %v5030
      %5032 = vmatmul.bf16.gmra.mxu0 %v4913
      %v5033 = vpop.f32.mrf.mxu0
      %v5034 = vadd.f32 0.0, %v5033
      %v5035 = vpop.f32.mrf.mxu0
      %v5036 = vadd.f32 0.0, %v5035
      %5037 = vmatmul.bf16.gmra.mxu0 %v4914
      %v5038 = vpop.f32.mrf.mxu0
      %v5039 = vadd.f32 0.0, %v5038
      %v5040 = vpop.f32.mrf.mxu0
      %v5041 = vadd.f32 0.0, %v5040
      %5042 = vmatmul.bf16.gmra.mxu0 %v4915
      %v5043 = vpop.f32.mrf.mxu0
      %v5044 = vadd.f32 0.0, %v5043
      %v5045 = vpop.f32.mrf.mxu0
      %v5046 = vadd.f32 0.0, %v5045
      %5047 = vmatmul.bf16.gmra.mxu0 %v4916
      %v5048 = vpop.f32.mrf.mxu0
      %v5049 = vadd.f32 0.0, %v5048
      %v5050 = vpop.f32.mrf.mxu0
      %v5051 = vadd.f32 0.0, %v5050
      %5052 = vmatmul.bf16.gmra.mxu0 %v4917
      %v5053 = vpop.f32.mrf.mxu0
      %v5054 = vadd.f32 0.0, %v5053
      %v5055 = vpop.f32.mrf.mxu0
      %v5056 = vadd.f32 0.0, %v5055
      %5057 = vmatmul.bf16.gmra.mxu0 %v4918
      %v5058 = vpop.f32.mrf.mxu0
      %v5059 = vadd.f32 0.0, %v5058
      %v5060 = vpop.f32.mrf.mxu0
      %v5061 = vadd.f32 0.0, %v5060
      %5062 = vmatmul.bf16.gmra.mxu0 %v4919
      %v5063 = vpop.f32.mrf.mxu0
      %v5064 = vadd.f32 0.0, %v5063
      %v5065 = vpop.f32.mrf.mxu0
      %v5066 = vadd.f32 0.0, %v5065
      %5067 = vmatmul.bf16.gmra.mxu0 %v4920
      %v5068 = vpop.f32.mrf.mxu0
      %v5069 = vadd.f32 0.0, %v5068
      %v5070 = vpop.f32.mrf.mxu0
      %v5071 = vadd.f32 0.0, %v5070
      %5072 = vmatmul.bf16.gmra.mxu0 %v4921
      %v5073 = vpop.f32.mrf.mxu0
      %v5074 = vadd.f32 0.0, %v5073
      %v5075 = vpop.f32.mrf.mxu0
      %v5076 = vadd.f32 0.0, %v5075
      %5077 = vmatmul.bf16.gmra.mxu0 %v4922
      %v5078 = vpop.f32.mrf.mxu0
      %v5079 = vadd.f32 0.0, %v5078
      %v5080 = vpop.f32.mrf.mxu0
      %v5081 = vadd.f32 0.0, %v5080
      %5082 = vmatmul.bf16.gmra.mxu0 %v4923
      %v5083 = vpop.f32.mrf.mxu0
      %v5084 = vadd.f32 0.0, %v5083
      %v5085 = vpop.f32.mrf.mxu0
      %v5086 = vadd.f32 0.0, %v5085
      %5087 = vdwg.mxu0
      %v5088 = vld [vmem:[#allocation3] sm:$0xff]
      %v5089 = vld [vmem:[#allocation3 + $0x8] sm:$0xff]
      %v5090 = vld [vmem:[#allocation3 + $0x10] sm:$0xff]
      %v5091 = vld [vmem:[#allocation3 + $0x18] sm:$0xff]
      %v5092 = vld [vmem:[#allocation3 + $0x20] sm:$0xff]
      %v5093 = vld [vmem:[#allocation3 + $0x28] sm:$0xff]
      %v5094 = vld [vmem:[#allocation3 + $0x30] sm:$0xff]
      %v5095 = vld [vmem:[#allocation3 + $0x38] sm:$0xff]
      %v5096 = vld [vmem:[#allocation3 + $0x40] sm:$0xff]
      %v5097 = vld [vmem:[#allocation3 + $0x48] sm:$0xff]
      %v5098 = vld [vmem:[#allocation3 + $0x50] sm:$0xff]
      %v5099 = vld [vmem:[#allocation3 + $0x58] sm:$0xff]
      %v5100 = vld [vmem:[#allocation3 + $0x60] sm:$0xff]
      %v5101 = vld [vmem:[#allocation3 + $0x68] sm:$0xff]
      %v5102 = vld [vmem:[#allocation3 + $0x70] sm:$0xff]
      %v5103 = vld [vmem:[#allocation3 + $0x78] sm:$0xff]
      %v5104 = vld [vmem:[#allocation3 + $0x80] sm:$0xff]
      %v5105 = vld [vmem:[#allocation3 + $0x88] sm:$0xff]
      %v5106 = vld [vmem:[#allocation3 + $0x90] sm:$0xff]
      %v5107 = vld [vmem:[#allocation3 + $0x98] sm:$0xff]
      %v5108 = vld [vmem:[#allocation3 + $0xa0] sm:$0xff]
      %v5109 = vld [vmem:[#allocation3 + $0xa8] sm:$0xff]
      %v5110 = vld [vmem:[#allocation3 + $0xb0] sm:$0xff]
      %v5111 = vld [vmem:[#allocation3 + $0xb8] sm:$0xff]
      %v5112 = vld [vmem:[#allocation3 + $0xc0] sm:$0xff]
      %v5113 = vld [vmem:[#allocation3 + $0xc8] sm:$0xff]
      %v5114 = vld [vmem:[#allocation3 + $0xd0] sm:$0xff]
      %v5115 = vld [vmem:[#allocation3 + $0xd8] sm:$0xff]
      %v5116 = vld [vmem:[#allocation3 + $0xe0] sm:$0xff]
      %v5117 = vld [vmem:[#allocation3 + $0xe8] sm:$0xff]
      %v5118 = vld [vmem:[#allocation3 + $0xf0] sm:$0xff]
      %v5119 = vld [vmem:[#allocation3 + $0xf8] sm:$0xff]
      %v5120 = vld [vmem:[#allocation3 + $0x100] sm:$0xff]
      %v5121 = vld [vmem:[#allocation3 + $0x108] sm:$0xff]
      %v5122 = vld [vmem:[#allocation3 + $0x110] sm:$0xff]
      %v5123 = vld [vmem:[#allocation3 + $0x118] sm:$0xff]
      %v5124 = vadd.f32 %v5088, %v4999
      %v5125 = vadd.f32 %v5089, %v5001
      %v5126 = vadd.f32 %v5090, %v5004
      %v5127 = vadd.f32 %v5091, %v5006
      %v5128 = vadd.f32 %v5092, %v5009
      %v5129 = vadd.f32 %v5093, %v5011
      %v5130 = vadd.f32 %v5094, %v5014
      %v5131 = vadd.f32 %v5095, %v5016
      %v5132 = vadd.f32 %v5096, %v5019
      %v5133 = vadd.f32 %v5097, %v5021
      %v5134 = vadd.f32 %v5098, %v5024
      %v5135 = vadd.f32 %v5099, %v5026
      %v5136 = vadd.f32 %v5100, %v5029
      %v5137 = vadd.f32 %v5101, %v5031
      %v5138 = vadd.f32 %v5102, %v5034
      %v5139 = vadd.f32 %v5103, %v5036
      %v5140 = vadd.f32 %v5104, %v5039
      %v5141 = vadd.f32 %v5105, %v5041
      %v5142 = vadd.f32 %v5106, %v5044
      %v5143 = vadd.f32 %v5107, %v5046
      %v5144 = vadd.f32 %v5108, %v5049
      %v5145 = vadd.f32 %v5109, %v5051
      %v5146 = vadd.f32 %v5110, %v5054
      %v5147 = vadd.f32 %v5111, %v5056
      %v5148 = vadd.f32 %v5112, %v5059
      %v5149 = vadd.f32 %v5113, %v5061
      %v5150 = vadd.f32 %v5114, %v5064
      %v5151 = vadd.f32 %v5115, %v5066
      %v5152 = vadd.f32 %v5116, %v5069
      %v5153 = vadd.f32 %v5117, %v5071
      %v5154 = vadd.f32 %v5118, %v5074
      %v5155 = vadd.f32 %v5119, %v5076
      %v5156 = vadd.f32 %v5120, %v5079
      %v5157 = vadd.f32 %v5121, %v5081
      %v5158 = vadd.f32 %v5122, %v5084
      %v5159 = vadd.f32 %v5123, %v5086
      %5160 = vst [vmem:[#allocation3] sm:$0xff] %v5124
      %5161 = vst [vmem:[#allocation3 + $0x8] sm:$0xff] %v5125
      %5162 = vst [vmem:[#allocation3 + $0x10] sm:$0xff] %v5126
      %5163 = vst [vmem:[#allocation3 + $0x18] sm:$0xff] %v5127
      %5164 = vst [vmem:[#allocation3 + $0x20] sm:$0xff] %v5128
      %5165 = vst [vmem:[#allocation3 + $0x28] sm:$0xff] %v5129
      %5166 = vst [vmem:[#allocation3 + $0x30] sm:$0xff] %v5130
      %5167 = vst [vmem:[#allocation3 + $0x38] sm:$0xff] %v5131
      %5168 = vst [vmem:[#allocation3 + $0x40] sm:$0xff] %v5132
      %5169 = vst [vmem:[#allocation3 + $0x48] sm:$0xff] %v5133
      %5170 = vst [vmem:[#allocation3 + $0x50] sm:$0xff] %v5134
      %5171 = vst [vmem:[#allocation3 + $0x58] sm:$0xff] %v5135
      %5172 = vst [vmem:[#allocation3 + $0x60] sm:$0xff] %v5136
      %5173 = vst [vmem:[#allocation3 + $0x68] sm:$0xff] %v5137
      %5174 = vst [vmem:[#allocation3 + $0x70] sm:$0xff] %v5138
      %5175 = vst [vmem:[#allocation3 + $0x78] sm:$0xff] %v5139
      %5176 = vst [vmem:[#allocation3 + $0x80] sm:$0xff] %v5140
      %5177 = vst [vmem:[#allocation3 + $0x88] sm:$0xff] %v5141
      %5178 = vst [vmem:[#allocation3 + $0x90] sm:$0xff] %v5142
      %5179 = vst [vmem:[#allocation3 + $0x98] sm:$0xff] %v5143
      %5180 = vst [vmem:[#allocation3 + $0xa0] sm:$0xff] %v5144
      %5181 = vst [vmem:[#allocation3 + $0xa8] sm:$0xff] %v5145
      %5182 = vst [vmem:[#allocation3 + $0xb0] sm:$0xff] %v5146
      %5183 = vst [vmem:[#allocation3 + $0xb8] sm:$0xff] %v5147
      %5184 = vst [vmem:[#allocation3 + $0xc0] sm:$0xff] %v5148
      %5185 = vst [vmem:[#allocation3 + $0xc8] sm:$0xff] %v5149
      %5186 = vst [vmem:[#allocation3 + $0xd0] sm:$0xff] %v5150
      %5187 = vst [vmem:[#allocation3 + $0xd8] sm:$0xff] %v5151
      %5188 = vst [vmem:[#allocation3 + $0xe0] sm:$0xff] %v5152
      %5189 = vst [vmem:[#allocation3 + $0xe8] sm:$0xff] %v5153
      %5190 = vst [vmem:[#allocation3 + $0xf0] sm:$0xff] %v5154
      %5191 = vst [vmem:[#allocation3 + $0xf8] sm:$0xff] %v5155
      %5192 = vst [vmem:[#allocation3 + $0x100] sm:$0xff] %v5156
      %5193 = vst [vmem:[#allocation3 + $0x108] sm:$0xff] %v5157
      %5194 = vst [vmem:[#allocation3 + $0x110] sm:$0xff] %v5158
      %5195 = vst [vmem:[#allocation3 + $0x118] sm:$0xff] %v5159
      %v5196 = vld [vmem:[#allocation2 + $0x14] sm:$0xff]
      %v5197 = vld [vmem:[#allocation2 + $0x1c] sm:$0xff]
      %v5198 = vld [vmem:[#allocation2 + $0x24] sm:$0xff]
      %v5199 = vld [vmem:[#allocation2 + $0x2c] sm:$0xff]
      %v5200 = vld [vmem:[#allocation2 + $0x34] sm:$0xff]
      %v5201 = vld [vmem:[#allocation2 + $0x3c] sm:$0xff]
      %v5202 = vld [vmem:[#allocation2 + $0x44] sm:$0xff]
      %v5203 = vld [vmem:[#allocation2 + $0x4c] sm:$0xff]
      %v5204 = vld [vmem:[#allocation2 + $0x54] sm:$0xff]
      %v5205 = vld [vmem:[#allocation2 + $0x5c] sm:$0xff]
      %v5206 = vld [vmem:[#allocation2 + $0x64] sm:$0xff]
      %v5207 = vld [vmem:[#allocation2 + $0x6c] sm:$0xff]
      %v5208 = vld [vmem:[#allocation2 + $0x74] sm:$0xff]
      %v5209 = vld [vmem:[#allocation2 + $0x7c] sm:$0xff]
      %v5210 = vld [vmem:[#allocation2 + $0x84] sm:$0xff]
      %v5211 = vld [vmem:[#allocation2 + $0x8c] sm:$0xff]
      %v5212 = vld [vmem:[#allocation2 + $0x94] sm:$0xff]
      %v5213 = vld [vmem:[#allocation2 + $0x9c] sm:$0xff]
      %v5214 = vld [vmem:[#allocation2 + $0xa4] sm:$0xff]
      %v5215 = vld [vmem:[#allocation2 + $0xac] sm:$0xff]
      %v5216 = vld [vmem:[#allocation2 + $0xb4] sm:$0xff]
      %v5217 = vld [vmem:[#allocation2 + $0xbc] sm:$0xff]
      %v5218 = vld [vmem:[#allocation2 + $0xc4] sm:$0xff]
      %v5219 = vld [vmem:[#allocation2 + $0xcc] sm:$0xff]
      %v5220 = vld [vmem:[#allocation2 + $0xd4] sm:$0xff]
      %v5221 = vld [vmem:[#allocation2 + $0xdc] sm:$0xff]
      %v5222 = vld [vmem:[#allocation2 + $0xe4] sm:$0xff]
      %v5223 = vld [vmem:[#allocation2 + $0xec] sm:$0xff]
      %v5224 = vld [vmem:[#allocation2 + $0xf4] sm:$0xff]
      %v5225 = vld [vmem:[#allocation2 + $0xfc] sm:$0xff]
      %v5226 = vld [vmem:[#allocation2 + $0x104] sm:$0xff]
      %v5227 = vld [vmem:[#allocation2 + $0x10c] sm:$0xff]
      %v5228 = vld [vmem:[#allocation2 + $0x114] sm:$0xff]
      %v5229 = vld [vmem:[#allocation2 + $0x11c] sm:$0xff]
      %v5230 = vld [vmem:[#allocation2 + $0x124] sm:$0xff]
      %v5231 = vld [vmem:[#allocation2 + $0x12c] sm:$0xff]
      %v5232 = vpack.c.bf16 %v5197, %v5196
      %v5233 = vpack.c.bf16 %v5199, %v5198
      %v5234 = vpack.c.bf16 %v5201, %v5200
      %v5235 = vpack.c.bf16 %v5203, %v5202
      %v5236 = vpack.c.bf16 %v5205, %v5204
      %v5237 = vpack.c.bf16 %v5207, %v5206
      %v5238 = vpack.c.bf16 %v5209, %v5208
      %v5239 = vpack.c.bf16 %v5211, %v5210
      %v5240 = vpack.c.bf16 %v5213, %v5212
      %v5241 = vpack.c.bf16 %v5215, %v5214
      %v5242 = vpack.c.bf16 %v5217, %v5216
      %v5243 = vpack.c.bf16 %v5219, %v5218
      %v5244 = vpack.c.bf16 %v5221, %v5220
      %v5245 = vpack.c.bf16 %v5223, %v5222
      %v5246 = vpack.c.bf16 %v5225, %v5224
      %v5247 = vpack.c.bf16 %v5227, %v5226
      %v5248 = vpack.c.bf16 %v5229, %v5228
      %v5249 = vpack.c.bf16 %v5231, %v5230
      %s5250 = scalar_lea.vmem %s5, 320
      %v5251 = vld [vmem:[%s5250] sm:$0xf]
      %v5252 = vld [vmem:[%s5250 + $0x4] sm:$0xf]
      %v5253 = vld [vmem:[%s5250 + $0x8] sm:$0xf]
      %v5254 = vld [vmem:[%s5250 + $0xc] sm:$0xf]
      %v5255 = vld [vmem:[%s5250 + $0x10] sm:$0xf]
      %v5256 = vld [vmem:[%s5250 + $0x14] sm:$0xf]
      %v5257 = vld [vmem:[%s5250 + $0x18] sm:$0xf]
      %v5258 = vld [vmem:[%s5250 + $0x1c] sm:$0xf]
      %v5259 = vld [vmem:[%s5250 + $0x20] sm:$0xf]
      %v5260 = vld [vmem:[%s5250 + $0x24] sm:$0xf]
      %v5261 = vld [vmem:[%s5250 + $0x28] sm:$0xf]
      %v5262 = vld [vmem:[%s5250 + $0x2c] sm:$0xf]
      %v5263 = vld [vmem:[%s5250 + $0x30] sm:$0xf]
      %v5264 = vld [vmem:[%s5250 + $0x34] sm:$0xf]
      %v5265 = vld [vmem:[%s5250 + $0x38] sm:$0xf]
      %v5266 = vld [vmem:[%s5250 + $0x3c] sm:$0xf]
      %v5283 = vunpack.c.l.b16 %v5251
      %v5284 = vunpack.c.l.b16 %v5252
      %v5285 = vunpack.c.l.b16 %v5253
      %v5286 = vunpack.c.l.b16 %v5254
      %v5287 = vunpack.c.l.b16 %v5255
      %v5288 = vunpack.c.l.b16 %v5256
      %v5289 = vunpack.c.l.b16 %v5257
      %v5290 = vunpack.c.l.b16 %v5258
      %v5291 = vunpack.c.l.b16 %v5259
      %v5292 = vunpack.c.l.b16 %v5260
      %v5293 = vunpack.c.l.b16 %v5261
      %v5294 = vunpack.c.l.b16 %v5262
      %v5295 = vunpack.c.l.b16 %v5263
      %v5296 = vunpack.c.l.b16 %v5264
      %v5297 = vunpack.c.l.b16 %v5265
      %v5298 = vunpack.c.l.b16 %v5266
      %v5299 = vpack.c.b16 %v5284, %v5283
      %v5300 = vpack.c.b16 %v5286, %v5285
      %v5301 = vpack.c.b16 %v5288, %v5287
      %v5302 = vpack.c.b16 %v5290, %v5289
      %v5303 = vpack.c.b16 %v5292, %v5291
      %v5304 = vpack.c.b16 %v5294, %v5293
      %v5305 = vpack.c.b16 %v5296, %v5295
      %v5306 = vpack.c.b16 %v5298, %v5297
      %5315 = vmatpush.bf16.msra.mxu0 %v5306
      %5316 = vmatpush.bf16.msra.mxu0 %v5305
      %5317 = vmatpush.bf16.msra.mxu0 %v5304
      %5318 = vmatpush.bf16.msra.mxu0 %v5303
      %5319 = vmatpush.bf16.msra.mxu0 %v5302
      %5320 = vmatpush.bf16.msra.mxu0 %v5301
      %5321 = vmatpush.bf16.msra.mxu0 %v5300
      %5322 = vmatpush.bf16.msra.mxu0 %v5299
      %5323 = vmatmul.bf16.gmra.mxu0 %v5232
      %v5324 = vpop.f32.mrf.mxu0
      %v5325 = vadd.f32 0.0, %v5324
      %v5326 = vpop.f32.mrf.mxu0
      %v5327 = vadd.f32 0.0, %v5326
      %5328 = vmatmul.bf16.gmra.mxu0 %v5233
      %v5329 = vpop.f32.mrf.mxu0
      %v5330 = vadd.f32 0.0, %v5329
      %v5331 = vpop.f32.mrf.mxu0
      %v5332 = vadd.f32 0.0, %v5331
      %5333 = vmatmul.bf16.gmra.mxu0 %v5234
      %v5334 = vpop.f32.mrf.mxu0
      %v5335 = vadd.f32 0.0, %v5334
      %v5336 = vpop.f32.mrf.mxu0
      %v5337 = vadd.f32 0.0, %v5336
      %5338 = vmatmul.bf16.gmra.mxu0 %v5235
      %v5339 = vpop.f32.mrf.mxu0
      %v5340 = vadd.f32 0.0, %v5339
      %v5341 = vpop.f32.mrf.mxu0
      %v5342 = vadd.f32 0.0, %v5341
      %5343 = vmatmul.bf16.gmra.mxu0 %v5236
      %v5344 = vpop.f32.mrf.mxu0
      %v5345 = vadd.f32 0.0, %v5344
      %v5346 = vpop.f32.mrf.mxu0
      %v5347 = vadd.f32 0.0, %v5346
      %5348 = vmatmul.bf16.gmra.mxu0 %v5237
      %v5349 = vpop.f32.mrf.mxu0
      %v5350 = vadd.f32 0.0, %v5349
      %v5351 = vpop.f32.mrf.mxu0
      %v5352 = vadd.f32 0.0, %v5351
      %5353 = vmatmul.bf16.gmra.mxu0 %v5238
      %v5354 = vpop.f32.mrf.mxu0
      %v5355 = vadd.f32 0.0, %v5354
      %v5356 = vpop.f32.mrf.mxu0
      %v5357 = vadd.f32 0.0, %v5356
      %5358 = vmatmul.bf16.gmra.mxu0 %v5239
      %v5359 = vpop.f32.mrf.mxu0
      %v5360 = vadd.f32 0.0, %v5359
      %v5361 = vpop.f32.mrf.mxu0
      %v5362 = vadd.f32 0.0, %v5361
      %5363 = vmatmul.bf16.gmra.mxu0 %v5240
      %v5364 = vpop.f32.mrf.mxu0
      %v5365 = vadd.f32 0.0, %v5364
      %v5366 = vpop.f32.mrf.mxu0
      %v5367 = vadd.f32 0.0, %v5366
      %5368 = vmatmul.bf16.gmra.mxu0 %v5241
      %v5369 = vpop.f32.mrf.mxu0
      %v5370 = vadd.f32 0.0, %v5369
      %v5371 = vpop.f32.mrf.mxu0
      %v5372 = vadd.f32 0.0, %v5371
      %5373 = vmatmul.bf16.gmra.mxu0 %v5242
      %v5374 = vpop.f32.mrf.mxu0
      %v5375 = vadd.f32 0.0, %v5374
      %v5376 = vpop.f32.mrf.mxu0
      %v5377 = vadd.f32 0.0, %v5376
      %5378 = vmatmul.bf16.gmra.mxu0 %v5243
      %v5379 = vpop.f32.mrf.mxu0
      %v5380 = vadd.f32 0.0, %v5379
      %v5381 = vpop.f32.mrf.mxu0
      %v5382 = vadd.f32 0.0, %v5381
      %5383 = vmatmul.bf16.gmra.mxu0 %v5244
      %v5384 = vpop.f32.mrf.mxu0
      %v5385 = vadd.f32 0.0, %v5384
      %v5386 = vpop.f32.mrf.mxu0
      %v5387 = vadd.f32 0.0, %v5386
      %5388 = vmatmul.bf16.gmra.mxu0 %v5245
      %v5389 = vpop.f32.mrf.mxu0
      %v5390 = vadd.f32 0.0, %v5389
      %v5391 = vpop.f32.mrf.mxu0
      %v5392 = vadd.f32 0.0, %v5391
      %5393 = vmatmul.bf16.gmra.mxu0 %v5246
      %v5394 = vpop.f32.mrf.mxu0
      %v5395 = vadd.f32 0.0, %v5394
      %v5396 = vpop.f32.mrf.mxu0
      %v5397 = vadd.f32 0.0, %v5396
      %5398 = vmatmul.bf16.gmra.mxu0 %v5247
      %v5399 = vpop.f32.mrf.mxu0
      %v5400 = vadd.f32 0.0, %v5399
      %v5401 = vpop.f32.mrf.mxu0
      %v5402 = vadd.f32 0.0, %v5401
      %5403 = vmatmul.bf16.gmra.mxu0 %v5248
      %v5404 = vpop.f32.mrf.mxu0
      %v5405 = vadd.f32 0.0, %v5404
      %v5406 = vpop.f32.mrf.mxu0
      %v5407 = vadd.f32 0.0, %v5406
      %5408 = vmatmul.bf16.gmra.mxu0 %v5249
      %v5409 = vpop.f32.mrf.mxu0
      %v5410 = vadd.f32 0.0, %v5409
      %v5411 = vpop.f32.mrf.mxu0
      %v5412 = vadd.f32 0.0, %v5411
      %5413 = vdwg.mxu0
      %v5414 = vld [vmem:[#allocation3] sm:$0xff]
      %v5415 = vld [vmem:[#allocation3 + $0x8] sm:$0xff]
      %v5416 = vld [vmem:[#allocation3 + $0x10] sm:$0xff]
      %v5417 = vld [vmem:[#allocation3 + $0x18] sm:$0xff]
      %v5418 = vld [vmem:[#allocation3 + $0x20] sm:$0xff]
      %v5419 = vld [vmem:[#allocation3 + $0x28] sm:$0xff]
      %v5420 = vld [vmem:[#allocation3 + $0x30] sm:$0xff]
      %v5421 = vld [vmem:[#allocation3 + $0x38] sm:$0xff]
      %v5422 = vld [vmem:[#allocation3 + $0x40] sm:$0xff]
      %v5423 = vld [vmem:[#allocation3 + $0x48] sm:$0xff]
      %v5424 = vld [vmem:[#allocation3 + $0x50] sm:$0xff]
      %v5425 = vld [vmem:[#allocation3 + $0x58] sm:$0xff]
      %v5426 = vld [vmem:[#allocation3 + $0x60] sm:$0xff]
      %v5427 = vld [vmem:[#allocation3 + $0x68] sm:$0xff]
      %v5428 = vld [vmem:[#allocation3 + $0x70] sm:$0xff]
      %v5429 = vld [vmem:[#allocation3 + $0x78] sm:$0xff]
      %v5430 = vld [vmem:[#allocation3 + $0x80] sm:$0xff]
      %v5431 = vld [vmem:[#allocation3 + $0x88] sm:$0xff]
      %v5432 = vld [vmem:[#allocation3 + $0x90] sm:$0xff]
      %v5433 = vld [vmem:[#allocation3 + $0x98] sm:$0xff]
      %v5434 = vld [vmem:[#allocation3 + $0xa0] sm:$0xff]
      %v5435 = vld [vmem:[#allocation3 + $0xa8] sm:$0xff]
      %v5436 = vld [vmem:[#allocation3 + $0xb0] sm:$0xff]
      %v5437 = vld [vmem:[#allocation3 + $0xb8] sm:$0xff]
      %v5438 = vld [vmem:[#allocation3 + $0xc0] sm:$0xff]
      %v5439 = vld [vmem:[#allocation3 + $0xc8] sm:$0xff]
      %v5440 = vld [vmem:[#allocation3 + $0xd0] sm:$0xff]
      %v5441 = vld [vmem:[#allocation3 + $0xd8] sm:$0xff]
      %v5442 = vld [vmem:[#allocation3 + $0xe0] sm:$0xff]
      %v5443 = vld [vmem:[#allocation3 + $0xe8] sm:$0xff]
      %v5444 = vld [vmem:[#allocation3 + $0xf0] sm:$0xff]
      %v5445 = vld [vmem:[#allocation3 + $0xf8] sm:$0xff]
      %v5446 = vld [vmem:[#allocation3 + $0x100] sm:$0xff]
      %v5447 = vld [vmem:[#allocation3 + $0x108] sm:$0xff]
      %v5448 = vld [vmem:[#allocation3 + $0x110] sm:$0xff]
      %v5449 = vld [vmem:[#allocation3 + $0x118] sm:$0xff]
      %v5450 = vadd.f32 %v5414, %v5325
      %v5451 = vadd.f32 %v5415, %v5327
      %v5452 = vadd.f32 %v5416, %v5330
      %v5453 = vadd.f32 %v5417, %v5332
      %v5454 = vadd.f32 %v5418, %v5335
      %v5455 = vadd.f32 %v5419, %v5337
      %v5456 = vadd.f32 %v5420, %v5340
      %v5457 = vadd.f32 %v5421, %v5342
      %v5458 = vadd.f32 %v5422, %v5345
      %v5459 = vadd.f32 %v5423, %v5347
      %v5460 = vadd.f32 %v5424, %v5350
      %v5461 = vadd.f32 %v5425, %v5352
      %v5462 = vadd.f32 %v5426, %v5355
      %v5463 = vadd.f32 %v5427, %v5357
      %v5464 = vadd.f32 %v5428, %v5360
      %v5465 = vadd.f32 %v5429, %v5362
      %v5466 = vadd.f32 %v5430, %v5365
      %v5467 = vadd.f32 %v5431, %v5367
      %v5468 = vadd.f32 %v5432, %v5370
      %v5469 = vadd.f32 %v5433, %v5372
      %v5470 = vadd.f32 %v5434, %v5375
      %v5471 = vadd.f32 %v5435, %v5377
      %v5472 = vadd.f32 %v5436, %v5380
      %v5473 = vadd.f32 %v5437, %v5382
      %v5474 = vadd.f32 %v5438, %v5385
      %v5475 = vadd.f32 %v5439, %v5387
      %v5476 = vadd.f32 %v5440, %v5390
      %v5477 = vadd.f32 %v5441, %v5392
      %v5478 = vadd.f32 %v5442, %v5395
      %v5479 = vadd.f32 %v5443, %v5397
      %v5480 = vadd.f32 %v5444, %v5400
      %v5481 = vadd.f32 %v5445, %v5402
      %v5482 = vadd.f32 %v5446, %v5405
      %v5483 = vadd.f32 %v5447, %v5407
      %v5484 = vadd.f32 %v5448, %v5410
      %v5485 = vadd.f32 %v5449, %v5412
      %5486 = vst [vmem:[#allocation3] sm:$0xff] %v5450
      %5487 = vst [vmem:[#allocation3 + $0x8] sm:$0xff] %v5451
      %5488 = vst [vmem:[#allocation3 + $0x10] sm:$0xff] %v5452
      %5489 = vst [vmem:[#allocation3 + $0x18] sm:$0xff] %v5453
      %5490 = vst [vmem:[#allocation3 + $0x20] sm:$0xff] %v5454
      %5491 = vst [vmem:[#allocation3 + $0x28] sm:$0xff] %v5455
      %5492 = vst [vmem:[#allocation3 + $0x30] sm:$0xff] %v5456
      %5493 = vst [vmem:[#allocation3 + $0x38] sm:$0xff] %v5457
      %5494 = vst [vmem:[#allocation3 + $0x40] sm:$0xff] %v5458
      %5495 = vst [vmem:[#allocation3 + $0x48] sm:$0xff] %v5459
      %5496 = vst [vmem:[#allocation3 + $0x50] sm:$0xff] %v5460
      %5497 = vst [vmem:[#allocation3 + $0x58] sm:$0xff] %v5461
      %5498 = vst [vmem:[#allocation3 + $0x60] sm:$0xff] %v5462
      %5499 = vst [vmem:[#allocation3 + $0x68] sm:$0xff] %v5463
      %5500 = vst [vmem:[#allocation3 + $0x70] sm:$0xff] %v5464
      %5501 = vst [vmem:[#allocation3 + $0x78] sm:$0xff] %v5465
      %5502 = vst [vmem:[#allocation3 + $0x80] sm:$0xff] %v5466
      %5503 = vst [vmem:[#allocation3 + $0x88] sm:$0xff] %v5467
      %5504 = vst [vmem:[#allocation3 + $0x90] sm:$0xff] %v5468
      %5505 = vst [vmem:[#allocation3 + $0x98] sm:$0xff] %v5469
      %5506 = vst [vmem:[#allocation3 + $0xa0] sm:$0xff] %v5470
      %5507 = vst [vmem:[#allocation3 + $0xa8] sm:$0xff] %v5471
      %5508 = vst [vmem:[#allocation3 + $0xb0] sm:$0xff] %v5472
      %5509 = vst [vmem:[#allocation3 + $0xb8] sm:$0xff] %v5473
      %5510 = vst [vmem:[#allocation3 + $0xc0] sm:$0xff] %v5474
      %5511 = vst [vmem:[#allocation3 + $0xc8] sm:$0xff] %v5475
      %5512 = vst [vmem:[#allocation3 + $0xd0] sm:$0xff] %v5476
      %5513 = vst [vmem:[#allocation3 + $0xd8] sm:$0xff] %v5477
      %5514 = vst [vmem:[#allocation3 + $0xe0] sm:$0xff] %v5478
      %5515 = vst [vmem:[#allocation3 + $0xe8] sm:$0xff] %v5479
      %5516 = vst [vmem:[#allocation3 + $0xf0] sm:$0xff] %v5480
      %5517 = vst [vmem:[#allocation3 + $0xf8] sm:$0xff] %v5481
      %5518 = vst [vmem:[#allocation3 + $0x100] sm:$0xff] %v5482
      %5519 = vst [vmem:[#allocation3 + $0x108] sm:$0xff] %v5483
      %5520 = vst [vmem:[#allocation3 + $0x110] sm:$0xff] %v5484
      %5521 = vst [vmem:[#allocation3 + $0x118] sm:$0xff] %v5485
      %v5522 = vld [vmem:[#allocation2 + $0x24] sm:$0xff]
      %v5523 = vld [vmem:[#allocation2 + $0x2c] sm:$0xff]
      %v5524 = vld [vmem:[#allocation2 + $0x34] sm:$0xff]
      %v5525 = vld [vmem:[#allocation2 + $0x3c] sm:$0xff]
      %v5526 = vld [vmem:[#allocation2 + $0x44] sm:$0xff]
      %v5527 = vld [vmem:[#allocation2 + $0x4c] sm:$0xff]
      %v5528 = vld [vmem:[#allocation2 + $0x54] sm:$0xff]
      %v5529 = vld [vmem:[#allocation2 + $0x5c] sm:$0xff]
      %v5530 = vld [vmem:[#allocation2 + $0x64] sm:$0xff]
      %v5531 = vld [vmem:[#allocation2 + $0x6c] sm:$0xff]
      %v5532 = vld [vmem:[#allocation2 + $0x74] sm:$0xff]
      %v5533 = vld [vmem:[#allocation2 + $0x7c] sm:$0xff]
      %v5534 = vld [vmem:[#allocation2 + $0x84] sm:$0xff]
      %v5535 = vld [vmem:[#allocation2 + $0x8c] sm:$0xff]
      %v5536 = vld [vmem:[#allocation2 + $0x94] sm:$0xff]
      %v5537 = vld [vmem:[#allocation2 + $0x9c] sm:$0xff]
      %v5538 = vld [vmem:[#allocation2 + $0xa4] sm:$0xff]
      %v5539 = vld [vmem:[#allocation2 + $0xac] sm:$0xff]
      %v5540 = vld [vmem:[#allocation2 + $0xb4] sm:$0xff]
      %v5541 = vld [vmem:[#allocation2 + $0xbc] sm:$0xff]
      %v5542 = vld [vmem:[#allocation2 + $0xc4] sm:$0xff]
      %v5543 = vld [vmem:[#allocation2 + $0xcc] sm:$0xff]
      %v5544 = vld [vmem:[#allocation2 + $0xd4] sm:$0xff]
      %v5545 = vld [vmem:[#allocation2 + $0xdc] sm:$0xff]
      %v5546 = vld [vmem:[#allocation2 + $0xe4] sm:$0xff]
      %v5547 = vld [vmem:[#allocation2 + $0xec] sm:$0xff]
      %v5548 = vld [vmem:[#allocation2 + $0xf4] sm:$0xff]
      %v5549 = vld [vmem:[#allocation2 + $0xfc] sm:$0xff]
      %v5550 = vld [vmem:[#allocation2 + $0x104] sm:$0xff]
      %v5551 = vld [vmem:[#allocation2 + $0x10c] sm:$0xff]
      %v5552 = vld [vmem:[#allocation2 + $0x114] sm:$0xff]
      %v5553 = vld [vmem:[#allocation2 + $0x11c] sm:$0xff]
      %v5554 = vld [vmem:[#allocation2 + $0x124] sm:$0xff]
      %v5555 = vld [vmem:[#allocation2 + $0x12c] sm:$0xff]
      %v5556 = vld [vmem:[#allocation2 + $0x134] sm:$0xff]
      %v5557 = vld [vmem:[#allocation2 + $0x13c] sm:$0xff]
      %v5558 = vpack.c.bf16 %v5523, %v5522
      %v5559 = vpack.c.bf16 %v5525, %v5524
      %v5560 = vpack.c.bf16 %v5527, %v5526
      %v5561 = vpack.c.bf16 %v5529, %v5528
      %v5562 = vpack.c.bf16 %v5531, %v5530
      %v5563 = vpack.c.bf16 %v5533, %v5532
      %v5564 = vpack.c.bf16 %v5535, %v5534
      %v5565 = vpack.c.bf16 %v5537, %v5536
      %v5566 = vpack.c.bf16 %v5539, %v5538
      %v5567 = vpack.c.bf16 %v5541, %v5540
      %v5568 = vpack.c.bf16 %v5543, %v5542
      %v5569 = vpack.c.bf16 %v5545, %v5544
      %v5570 = vpack.c.bf16 %v5547, %v5546
      %v5571 = vpack.c.bf16 %v5549, %v5548
      %v5572 = vpack.c.bf16 %v5551, %v5550
      %v5573 = vpack.c.bf16 %v5553, %v5552
      %v5574 = vpack.c.bf16 %v5555, %v5554
      %v5575 = vpack.c.bf16 %v5557, %v5556
      %s5576 = scalar_lea.vmem %s5, 384
      %v5577 = vld [vmem:[%s5576] sm:$0xf]
      %v5578 = vld [vmem:[%s5576 + $0x4] sm:$0xf]
      %v5579 = vld [vmem:[%s5576 + $0x8] sm:$0xf]
      %v5580 = vld [vmem:[%s5576 + $0xc] sm:$0xf]
      %v5581 = vld [vmem:[%s5576 + $0x10] sm:$0xf]
      %v5582 = vld [vmem:[%s5576 + $0x14] sm:$0xf]
      %v5583 = vld [vmem:[%s5576 + $0x18] sm:$0xf]
      %v5584 = vld [vmem:[%s5576 + $0x1c] sm:$0xf]
      %v5585 = vld [vmem:[%s5576 + $0x20] sm:$0xf]
      %v5586 = vld [vmem:[%s5576 + $0x24] sm:$0xf]
      %v5587 = vld [vmem:[%s5576 + $0x28] sm:$0xf]
      %v5588 = vld [vmem:[%s5576 + $0x2c] sm:$0xf]
      %v5589 = vld [vmem:[%s5576 + $0x30] sm:$0xf]
      %v5590 = vld [vmem:[%s5576 + $0x34] sm:$0xf]
      %v5591 = vld [vmem:[%s5576 + $0x38] sm:$0xf]
      %v5592 = vld [vmem:[%s5576 + $0x3c] sm:$0xf]
      %v5609 = vunpack.c.l.b16 %v5577
      %v5610 = vunpack.c.l.b16 %v5578
      %v5611 = vunpack.c.l.b16 %v5579
      %v5612 = vunpack.c.l.b16 %v5580
      %v5613 = vunpack.c.l.b16 %v5581
      %v5614 = vunpack.c.l.b16 %v5582
      %v5615 = vunpack.c.l.b16 %v5583
      %v5616 = vunpack.c.l.b16 %v5584
      %v5617 = vunpack.c.l.b16 %v5585
      %v5618 = vunpack.c.l.b16 %v5586
      %v5619 = vunpack.c.l.b16 %v5587
      %v5620 = vunpack.c.l.b16 %v5588
      %v5621 = vunpack.c.l.b16 %v5589
      %v5622 = vunpack.c.l.b16 %v5590
      %v5623 = vunpack.c.l.b16 %v5591
      %v5624 = vunpack.c.l.b16 %v5592
      %v5625 = vpack.c.b16 %v5610, %v5609
      %v5626 = vpack.c.b16 %v5612, %v5611
      %v5627 = vpack.c.b16 %v5614, %v5613
      %v5628 = vpack.c.b16 %v5616, %v5615
      %v5629 = vpack.c.b16 %v5618, %v5617
      %v5630 = vpack.c.b16 %v5620, %v5619
      %v5631 = vpack.c.b16 %v5622, %v5621
      %v5632 = vpack.c.b16 %v5624, %v5623
      %5641 = vmatpush.bf16.msra.mxu0 %v5632
      %5642 = vmatpush.bf16.msra.mxu0 %v5631
      %5643 = vmatpush.bf16.msra.mxu0 %v5630
      %5644 = vmatpush.bf16.msra.mxu0 %v5629
      %5645 = vmatpush.bf16.msra.mxu0 %v5628
      %5646 = vmatpush.bf16.msra.mxu0 %v5627
      %5647 = vmatpush.bf16.msra.mxu0 %v5626
      %5648 = vmatpush.bf16.msra.mxu0 %v5625
      %5649 = vmatmul.bf16.gmra.mxu0 %v5558
      %v5650 = vpop.f32.mrf.mxu0
      %v5651 = vadd.f32 0.0, %v5650
      %v5652 = vpop.f32.mrf.mxu0
      %v5653 = vadd.f32 0.0, %v5652
      %5654 = vmatmul.bf16.gmra.mxu0 %v5559
      %v5655 = vpop.f32.mrf.mxu0
      %v5656 = vadd.f32 0.0, %v5655
      %v5657 = vpop.f32.mrf.mxu0
      %v5658 = vadd.f32 0.0, %v5657
      %5659 = vmatmul.bf16.gmra.mxu0 %v5560
      %v5660 = vpop.f32.mrf.mxu0
      %v5661 = vadd.f32 0.0, %v5660
      %v5662 = vpop.f32.mrf.mxu0
      %v5663 = vadd.f32 0.0, %v5662
      %5664 = vmatmul.bf16.gmra.mxu0 %v5561
      %v5665 = vpop.f32.mrf.mxu0
      %v5666 = vadd.f32 0.0, %v5665
      %v5667 = vpop.f32.mrf.mxu0
      %v5668 = vadd.f32 0.0, %v5667
      %5669 = vmatmul.bf16.gmra.mxu0 %v5562
      %v5670 = vpop.f32.mrf.mxu0
      %v5671 = vadd.f32 0.0, %v5670
      %v5672 = vpop.f32.mrf.mxu0
      %v5673 = vadd.f32 0.0, %v5672
      %5674 = vmatmul.bf16.gmra.mxu0 %v5563
      %v5675 = vpop.f32.mrf.mxu0
      %v5676 = vadd.f32 0.0, %v5675
      %v5677 = vpop.f32.mrf.mxu0
      %v5678 = vadd.f32 0.0, %v5677
      %5679 = vmatmul.bf16.gmra.mxu0 %v5564
      %v5680 = vpop.f32.mrf.mxu0
      %v5681 = vadd.f32 0.0, %v5680
      %v5682 = vpop.f32.mrf.mxu0
      %v5683 = vadd.f32 0.0, %v5682
      %5684 = vmatmul.bf16.gmra.mxu0 %v5565
      %v5685 = vpop.f32.mrf.mxu0
      %v5686 = vadd.f32 0.0, %v5685
      %v5687 = vpop.f32.mrf.mxu0
      %v5688 = vadd.f32 0.0, %v5687
      %5689 = vmatmul.bf16.gmra.mxu0 %v5566
      %v5690 = vpop.f32.mrf.mxu0
      %v5691 = vadd.f32 0.0, %v5690
      %v5692 = vpop.f32.mrf.mxu0
      %v5693 = vadd.f32 0.0, %v5692
      %5694 = vmatmul.bf16.gmra.mxu0 %v5567
      %v5695 = vpop.f32.mrf.mxu0
      %v5696 = vadd.f32 0.0, %v5695
      %v5697 = vpop.f32.mrf.mxu0
      %v5698 = vadd.f32 0.0, %v5697
      %5699 = vmatmul.bf16.gmra.mxu0 %v5568
      %v5700 = vpop.f32.mrf.mxu0
      %v5701 = vadd.f32 0.0, %v5700
      %v5702 = vpop.f32.mrf.mxu0
      %v5703 = vadd.f32 0.0, %v5702
      %5704 = vmatmul.bf16.gmra.mxu0 %v5569
      %v5705 = vpop.f32.mrf.mxu0
      %v5706 = vadd.f32 0.0, %v5705
      %v5707 = vpop.f32.mrf.mxu0
      %v5708 = vadd.f32 0.0, %v5707
      %5709 = vmatmul.bf16.gmra.mxu0 %v5570
      %v5710 = vpop.f32.mrf.mxu0
      %v5711 = vadd.f32 0.0, %v5710
      %v5712 = vpop.f32.mrf.mxu0
      %v5713 = vadd.f32 0.0, %v5712
      %5714 = vmatmul.bf16.gmra.mxu0 %v5571
      %v5715 = vpop.f32.mrf.mxu0
      %v5716 = vadd.f32 0.0, %v5715
      %v5717 = vpop.f32.mrf.mxu0
      %v5718 = vadd.f32 0.0, %v5717
      %5719 = vmatmul.bf16.gmra.mxu0 %v5572
      %v5720 = vpop.f32.mrf.mxu0
      %v5721 = vadd.f32 0.0, %v5720
      %v5722 = vpop.f32.mrf.mxu0
      %v5723 = vadd.f32 0.0, %v5722
      %5724 = vmatmul.bf16.gmra.mxu0 %v5573
      %v5725 = vpop.f32.mrf.mxu0
      %v5726 = vadd.f32 0.0, %v5725
      %v5727 = vpop.f32.mrf.mxu0
      %v5728 = vadd.f32 0.0, %v5727
      %5729 = vmatmul.bf16.gmra.mxu0 %v5574
      %v5730 = vpop.f32.mrf.mxu0
      %v5731 = vadd.f32 0.0, %v5730
      %v5732 = vpop.f32.mrf.mxu0
      %v5733 = vadd.f32 0.0, %v5732
      %5734 = vmatmul.bf16.gmra.mxu0 %v5575
      %v5735 = vpop.f32.mrf.mxu0
      %v5736 = vadd.f32 0.0, %v5735
      %v5737 = vpop.f32.mrf.mxu0
      %v5738 = vadd.f32 0.0, %v5737
      %5739 = vdwg.mxu0
      %v5740 = vld [vmem:[#allocation3] sm:$0xff]
      %v5741 = vld [vmem:[#allocation3 + $0x8] sm:$0xff]
      %v5742 = vld [vmem:[#allocation3 + $0x10] sm:$0xff]
      %v5743 = vld [vmem:[#allocation3 + $0x18] sm:$0xff]
      %v5744 = vld [vmem:[#allocation3 + $0x20] sm:$0xff]
      %v5745 = vld [vmem:[#allocation3 + $0x28] sm:$0xff]
      %v5746 = vld [vmem:[#allocation3 + $0x30] sm:$0xff]
      %v5747 = vld [vmem:[#allocation3 + $0x38] sm:$0xff]
      %v5748 = vld [vmem:[#allocation3 + $0x40] sm:$0xff]
      %v5749 = vld [vmem:[#allocation3 + $0x48] sm:$0xff]
      %v5750 = vld [vmem:[#allocation3 + $0x50] sm:$0xff]
      %v5751 = vld [vmem:[#allocation3 + $0x58] sm:$0xff]
      %v5752 = vld [vmem:[#allocation3 + $0x60] sm:$0xff]
      %v5753 = vld [vmem:[#allocation3 + $0x68] sm:$0xff]
      %v5754 = vld [vmem:[#allocation3 + $0x70] sm:$0xff]
      %v5755 = vld [vmem:[#allocation3 + $0x78] sm:$0xff]
      %v5756 = vld [vmem:[#allocation3 + $0x80] sm:$0xff]
      %v5757 = vld [vmem:[#allocation3 + $0x88] sm:$0xff]
      %v5758 = vld [vmem:[#allocation3 + $0x90] sm:$0xff]
      %v5759 = vld [vmem:[#allocation3 + $0x98] sm:$0xff]
      %v5760 = vld [vmem:[#allocation3 + $0xa0] sm:$0xff]
      %v5761 = vld [vmem:[#allocation3 + $0xa8] sm:$0xff]
      %v5762 = vld [vmem:[#allocation3 + $0xb0] sm:$0xff]
      %v5763 = vld [vmem:[#allocation3 + $0xb8] sm:$0xff]
      %v5764 = vld [vmem:[#allocation3 + $0xc0] sm:$0xff]
      %v5765 = vld [vmem:[#allocation3 + $0xc8] sm:$0xff]
      %v5766 = vld [vmem:[#allocation3 + $0xd0] sm:$0xff]
      %v5767 = vld [vmem:[#allocation3 + $0xd8] sm:$0xff]
      %v5768 = vld [vmem:[#allocation3 + $0xe0] sm:$0xff]
      %v5769 = vld [vmem:[#allocation3 + $0xe8] sm:$0xff]
      %v5770 = vld [vmem:[#allocation3 + $0xf0] sm:$0xff]
      %v5771 = vld [vmem:[#allocation3 + $0xf8] sm:$0xff]
      %v5772 = vld [vmem:[#allocation3 + $0x100] sm:$0xff]
      %v5773 = vld [vmem:[#allocation3 + $0x108] sm:$0xff]
      %v5774 = vld [vmem:[#allocation3 + $0x110] sm:$0xff]
      %v5775 = vld [vmem:[#allocation3 + $0x118] sm:$0xff]
      %v5776 = vadd.f32 %v5740, %v5651
      %v5777 = vadd.f32 %v5741, %v5653
      %v5778 = vadd.f32 %v5742, %v5656
      %v5779 = vadd.f32 %v5743, %v5658
      %v5780 = vadd.f32 %v5744, %v5661
      %v5781 = vadd.f32 %v5745, %v5663
      %v5782 = vadd.f32 %v5746, %v5666
      %v5783 = vadd.f32 %v5747, %v5668
      %v5784 = vadd.f32 %v5748, %v5671
      %v5785 = vadd.f32 %v5749, %v5673
      %v5786 = vadd.f32 %v5750, %v5676
      %v5787 = vadd.f32 %v5751, %v5678
      %v5788 = vadd.f32 %v5752, %v5681
      %v5789 = vadd.f32 %v5753, %v5683
      %v5790 = vadd.f32 %v5754, %v5686
      %v5791 = vadd.f32 %v5755, %v5688
      %v5792 = vadd.f32 %v5756, %v5691
      %v5793 = vadd.f32 %v5757, %v5693
      %v5794 = vadd.f32 %v5758, %v5696
      %v5795 = vadd.f32 %v5759, %v5698
      %v5796 = vadd.f32 %v5760, %v5701
      %v5797 = vadd.f32 %v5761, %v5703
      %v5798 = vadd.f32 %v5762, %v5706
      %v5799 = vadd.f32 %v5763, %v5708
      %v5800 = vadd.f32 %v5764, %v5711
      %v5801 = vadd.f32 %v5765, %v5713
      %v5802 = vadd.f32 %v5766, %v5716
      %v5803 = vadd.f32 %v5767, %v5718
      %v5804 = vadd.f32 %v5768, %v5721
      %v5805 = vadd.f32 %v5769, %v5723
      %v5806 = vadd.f32 %v5770, %v5726
      %v5807 = vadd.f32 %v5771, %v5728
      %v5808 = vadd.f32 %v5772, %v5731
      %v5809 = vadd.f32 %v5773, %v5733
      %v5810 = vadd.f32 %v5774, %v5736
      %v5811 = vadd.f32 %v5775, %v5738
      %5812 = vst [vmem:[#allocation3] sm:$0xff] %v5776
      %5813 = vst [vmem:[#allocation3 + $0x8] sm:$0xff] %v5777
      %5814 = vst [vmem:[#allocation3 + $0x10] sm:$0xff] %v5778
      %5815 = vst [vmem:[#allocation3 + $0x18] sm:$0xff] %v5779
      %5816 = vst [vmem:[#allocation3 + $0x20] sm:$0xff] %v5780
      %5817 = vst [vmem:[#allocation3 + $0x28] sm:$0xff] %v5781
      %5818 = vst [vmem:[#allocation3 + $0x30] sm:$0xff] %v5782
      %5819 = vst [vmem:[#allocation3 + $0x38] sm:$0xff] %v5783
      %5820 = vst [vmem:[#allocation3 + $0x40] sm:$0xff] %v5784
      %5821 = vst [vmem:[#allocation3 + $0x48] sm:$0xff] %v5785
      %5822 = vst [vmem:[#allocation3 + $0x50] sm:$0xff] %v5786
      %5823 = vst [vmem:[#allocation3 + $0x58] sm:$0xff] %v5787
      %5824 = vst [vmem:[#allocation3 + $0x60] sm:$0xff] %v5788
      %5825 = vst [vmem:[#allocation3 + $0x68] sm:$0xff] %v5789
      %5826 = vst [vmem:[#allocation3 + $0x70] sm:$0xff] %v5790
      %5827 = vst [vmem:[#allocation3 + $0x78] sm:$0xff] %v5791
      %5828 = vst [vmem:[#allocation3 + $0x80] sm:$0xff] %v5792
      %5829 = vst [vmem:[#allocation3 + $0x88] sm:$0xff] %v5793
      %5830 = vst [vmem:[#allocation3 + $0x90] sm:$0xff] %v5794
      %5831 = vst [vmem:[#allocation3 + $0x98] sm:$0xff] %v5795
      %5832 = vst [vmem:[#allocation3 + $0xa0] sm:$0xff] %v5796
      %5833 = vst [vmem:[#allocation3 + $0xa8] sm:$0xff] %v5797
      %5834 = vst [vmem:[#allocation3 + $0xb0] sm:$0xff] %v5798
      %5835 = vst [vmem:[#allocation3 + $0xb8] sm:$0xff] %v5799
      %5836 = vst [vmem:[#allocation3 + $0xc0] sm:$0xff] %v5800
      %5837 = vst [vmem:[#allocation3 + $0xc8] sm:$0xff] %v5801
      %5838 = vst [vmem:[#allocation3 + $0xd0] sm:$0xff] %v5802
      %5839 = vst [vmem:[#allocation3 + $0xd8] sm:$0xff] %v5803
      %5840 = vst [vmem:[#allocation3 + $0xe0] sm:$0xff] %v5804
      %5841 = vst [vmem:[#allocation3 + $0xe8] sm:$0xff] %v5805
      %5842 = vst [vmem:[#allocation3 + $0xf0] sm:$0xff] %v5806
      %5843 = vst [vmem:[#allocation3 + $0xf8] sm:$0xff] %v5807
      %5844 = vst [vmem:[#allocation3 + $0x100] sm:$0xff] %v5808
      %5845 = vst [vmem:[#allocation3 + $0x108] sm:$0xff] %v5809
      %5846 = vst [vmem:[#allocation3 + $0x110] sm:$0xff] %v5810
      %5847 = vst [vmem:[#allocation3 + $0x118] sm:$0xff] %v5811
      %v5848 = vld [vmem:[#allocation2 + $0x25] sm:$0xff]
      %v5849 = vld [vmem:[#allocation2 + $0x2d] sm:$0xff]
      %v5850 = vld [vmem:[#allocation2 + $0x35] sm:$0xff]
      %v5851 = vld [vmem:[#allocation2 + $0x3d] sm:$0xff]
      %v5852 = vld [vmem:[#allocation2 + $0x45] sm:$0xff]
      %v5853 = vld [vmem:[#allocation2 + $0x4d] sm:$0xff]
      %v5854 = vld [vmem:[#allocation2 + $0x55] sm:$0xff]
      %v5855 = vld [vmem:[#allocation2 + $0x5d] sm:$0xff]
      %v5856 = vld [vmem:[#allocation2 + $0x65] sm:$0xff]
      %v5857 = vld [vmem:[#allocation2 + $0x6d] sm:$0xff]
      %v5858 = vld [vmem:[#allocation2 + $0x75] sm:$0xff]
      %v5859 = vld [vmem:[#allocation2 + $0x7d] sm:$0xff]
      %v5860 = vld [vmem:[#allocation2 + $0x85] sm:$0xff]
      %v5861 = vld [vmem:[#allocation2 + $0x8d] sm:$0xff]
      %v5862 = vld [vmem:[#allocation2 + $0x95] sm:$0xff]
      %v5863 = vld [vmem:[#allocation2 + $0x9d] sm:$0xff]
      %v5864 = vld [vmem:[#allocation2 + $0xa5] sm:$0xff]
      %v5865 = vld [vmem:[#allocation2 + $0xad] sm:$0xff]
      %v5866 = vld [vmem:[#allocation2 + $0xb5] sm:$0xff]
      %v5867 = vld [vmem:[#allocation2 + $0xbd] sm:$0xff]
      %v5868 = vld [vmem:[#allocation2 + $0xc5] sm:$0xff]
      %v5869 = vld [vmem:[#allocation2 + $0xcd] sm:$0xff]
      %v5870 = vld [vmem:[#allocation2 + $0xd5] sm:$0xff]
      %v5871 = vld [vmem:[#allocation2 + $0xdd] sm:$0xff]
      %v5872 = vld [vmem:[#allocation2 + $0xe5] sm:$0xff]
      %v5873 = vld [vmem:[#allocation2 + $0xed] sm:$0xff]
      %v5874 = vld [vmem:[#allocation2 + $0xf5] sm:$0xff]
      %v5875 = vld [vmem:[#allocation2 + $0xfd] sm:$0xff]
      %v5876 = vld [vmem:[#allocation2 + $0x105] sm:$0xff]
      %v5877 = vld [vmem:[#allocation2 + $0x10d] sm:$0xff]
      %v5878 = vld [vmem:[#allocation2 + $0x115] sm:$0xff]
      %v5879 = vld [vmem:[#allocation2 + $0x11d] sm:$0xff]
      %v5880 = vld [vmem:[#allocation2 + $0x125] sm:$0xff]
      %v5881 = vld [vmem:[#allocation2 + $0x12d] sm:$0xff]
      %v5882 = vld [vmem:[#allocation2 + $0x135] sm:$0xff]
      %v5883 = vld [vmem:[#allocation2 + $0x13d] sm:$0xff]
      %v5884 = vpack.c.bf16 %v5849, %v5848
      %v5885 = vpack.c.bf16 %v5851, %v5850
      %v5886 = vpack.c.bf16 %v5853, %v5852
      %v5887 = vpack.c.bf16 %v5855, %v5854
      %v5888 = vpack.c.bf16 %v5857, %v5856
      %v5889 = vpack.c.bf16 %v5859, %v5858
      %v5890 = vpack.c.bf16 %v5861, %v5860
      %v5891 = vpack.c.bf16 %v5863, %v5862
      %v5892 = vpack.c.bf16 %v5865, %v5864
      %v5893 = vpack.c.bf16 %v5867, %v5866
      %v5894 = vpack.c.bf16 %v5869, %v5868
      %v5895 = vpack.c.bf16 %v5871, %v5870
      %v5896 = vpack.c.bf16 %v5873, %v5872
      %v5897 = vpack.c.bf16 %v5875, %v5874
      %v5898 = vpack.c.bf16 %v5877, %v5876
      %v5899 = vpack.c.bf16 %v5879, %v5878
      %v5900 = vpack.c.bf16 %v5881, %v5880
      %v5901 = vpack.c.bf16 %v5883, %v5882
      %s5902 = scalar_lea.vmem %s5, 448
      %v5903 = vld [vmem:[%s5902] sm:$0xf]
      %v5904 = vld [vmem:[%s5902 + $0x4] sm:$0xf]
      %v5905 = vld [vmem:[%s5902 + $0x8] sm:$0xf]
      %v5906 = vld [vmem:[%s5902 + $0xc] sm:$0xf]
      %v5907 = vld [vmem:[%s5902 + $0x10] sm:$0xf]
      %v5908 = vld [vmem:[%s5902 + $0x14] sm:$0xf]
      %v5909 = vld [vmem:[%s5902 + $0x18] sm:$0xf]
      %v5910 = vld [vmem:[%s5902 + $0x1c] sm:$0xf]
      %v5911 = vld [vmem:[%s5902 + $0x20] sm:$0xf]
      %v5912 = vld [vmem:[%s5902 + $0x24] sm:$0xf]
      %v5913 = vld [vmem:[%s5902 + $0x28] sm:$0xf]
      %v5914 = vld [vmem:[%s5902 + $0x2c] sm:$0xf]
      %v5915 = vld [vmem:[%s5902 + $0x30] sm:$0xf]
      %v5916 = vld [vmem:[%s5902 + $0x34] sm:$0xf]
      %v5917 = vld [vmem:[%s5902 + $0x38] sm:$0xf]
      %v5918 = vld [vmem:[%s5902 + $0x3c] sm:$0xf]
      %v5935 = vunpack.c.l.b16 %v5903
      %v5936 = vunpack.c.l.b16 %v5904
      %v5937 = vunpack.c.l.b16 %v5905
      %v5938 = vunpack.c.l.b16 %v5906
      %v5939 = vunpack.c.l.b16 %v5907
      %v5940 = vunpack.c.l.b16 %v5908
      %v5941 = vunpack.c.l.b16 %v5909
      %v5942 = vunpack.c.l.b16 %v5910
      %v5943 = vunpack.c.l.b16 %v5911
      %v5944 = vunpack.c.l.b16 %v5912
      %v5945 = vunpack.c.l.b16 %v5913
      %v5946 = vunpack.c.l.b16 %v5914
      %v5947 = vunpack.c.l.b16 %v5915
      %v5948 = vunpack.c.l.b16 %v5916
      %v5949 = vunpack.c.l.b16 %v5917
      %v5950 = vunpack.c.l.b16 %v5918
      %v5951 = vpack.c.b16 %v5936, %v5935
      %v5952 = vpack.c.b16 %v5938, %v5937
      %v5953 = vpack.c.b16 %v5940, %v5939
      %v5954 = vpack.c.b16 %v5942, %v5941
      %v5955 = vpack.c.b16 %v5944, %v5943
      %v5956 = vpack.c.b16 %v5946, %v5945
      %v5957 = vpack.c.b16 %v5948, %v5947
      %v5958 = vpack.c.b16 %v5950, %v5949
      %5967 = vmatpush.bf16.msra.mxu0 %v5958
      %5968 = vmatpush.bf16.msra.mxu0 %v5957
      %5969 = vmatpush.bf16.msra.mxu0 %v5956
      %5970 = vmatpush.bf16.msra.mxu0 %v5955
      %5971 = vmatpush.bf16.msra.mxu0 %v5954
      %5972 = vmatpush.bf16.msra.mxu0 %v5953
      %5973 = vmatpush.bf16.msra.mxu0 %v5952
      %5974 = vmatpush.bf16.msra.mxu0 %v5951
      %5975 = vmatmul.bf16.gmra.mxu0 %v5884
      %v5976 = vpop.f32.mrf.mxu0
      %v5977 = vadd.f32 0.0, %v5976
      %v5978 = vpop.f32.mrf.mxu0
      %v5979 = vadd.f32 0.0, %v5978
      %5980 = vmatmul.bf16.gmra.mxu0 %v5885
      %v5981 = vpop.f32.mrf.mxu0
      %v5982 = vadd.f32 0.0, %v5981
      %v5983 = vpop.f32.mrf.mxu0
      %v5984 = vadd.f32 0.0, %v5983
      %5985 = vmatmul.bf16.gmra.mxu0 %v5886
      %v5986 = vpop.f32.mrf.mxu0
      %v5987 = vadd.f32 0.0, %v5986
      %v5988 = vpop.f32.mrf.mxu0
      %v5989 = vadd.f32 0.0, %v5988
      %5990 = vmatmul.bf16.gmra.mxu0 %v5887
      %v5991 = vpop.f32.mrf.mxu0
      %v5992 = vadd.f32 0.0, %v5991
      %v5993 = vpop.f32.mrf.mxu0
      %v5994 = vadd.f32 0.0, %v5993
      %5995 = vmatmul.bf16.gmra.mxu0 %v5888
      %v5996 = vpop.f32.mrf.mxu0
      %v5997 = vadd.f32 0.0, %v5996
      %v5998 = vpop.f32.mrf.mxu0
      %v5999 = vadd.f32 0.0, %v5998
      %6000 = vmatmul.bf16.gmra.mxu0 %v5889
      %v6001 = vpop.f32.mrf.mxu0
      %v6002 = vadd.f32 0.0, %v6001
      %v6003 = vpop.f32.mrf.mxu0
      %v6004 = vadd.f32 0.0, %v6003
      %6005 = vmatmul.bf16.gmra.mxu0 %v5890
      %v6006 = vpop.f32.mrf.mxu0
      %v6007 = vadd.f32 0.0, %v6006
      %v6008 = vpop.f32.mrf.mxu0
      %v6009 = vadd.f32 0.0, %v6008
      %6010 = vmatmul.bf16.gmra.mxu0 %v5891
      %v6011 = vpop.f32.mrf.mxu0
      %v6012 = vadd.f32 0.0, %v6011
      %v6013 = vpop.f32.mrf.mxu0
      %v6014 = vadd.f32 0.0, %v6013
      %6015 = vmatmul.bf16.gmra.mxu0 %v5892
      %v6016 = vpop.f32.mrf.mxu0
      %v6017 = vadd.f32 0.0, %v6016
      %v6018 = vpop.f32.mrf.mxu0
      %v6019 = vadd.f32 0.0, %v6018
      %6020 = vmatmul.bf16.gmra.mxu0 %v5893
      %v6021 = vpop.f32.mrf.mxu0
      %v6022 = vadd.f32 0.0, %v6021
      %v6023 = vpop.f32.mrf.mxu0
      %v6024 = vadd.f32 0.0, %v6023
      %6025 = vmatmul.bf16.gmra.mxu0 %v5894
      %v6026 = vpop.f32.mrf.mxu0
      %v6027 = vadd.f32 0.0, %v6026
      %v6028 = vpop.f32.mrf.mxu0
      %v6029 = vadd.f32 0.0, %v6028
      %6030 = vmatmul.bf16.gmra.mxu0 %v5895
      %v6031 = vpop.f32.mrf.mxu0
      %v6032 = vadd.f32 0.0, %v6031
      %v6033 = vpop.f32.mrf.mxu0
      %v6034 = vadd.f32 0.0, %v6033
      %6035 = vmatmul.bf16.gmra.mxu0 %v5896
      %v6036 = vpop.f32.mrf.mxu0
      %v6037 = vadd.f32 0.0, %v6036
      %v6038 = vpop.f32.mrf.mxu0
      %v6039 = vadd.f32 0.0, %v6038
      %6040 = vmatmul.bf16.gmra.mxu0 %v5897
      %v6041 = vpop.f32.mrf.mxu0
      %v6042 = vadd.f32 0.0, %v6041
      %v6043 = vpop.f32.mrf.mxu0
      %v6044 = vadd.f32 0.0, %v6043
      %6045 = vmatmul.bf16.gmra.mxu0 %v5898
      %v6046 = vpop.f32.mrf.mxu0
      %v6047 = vadd.f32 0.0, %v6046
      %v6048 = vpop.f32.mrf.mxu0
      %v6049 = vadd.f32 0.0, %v6048
      %6050 = vmatmul.bf16.gmra.mxu0 %v5899
      %v6051 = vpop.f32.mrf.mxu0
      %v6052 = vadd.f32 0.0, %v6051
      %v6053 = vpop.f32.mrf.mxu0
      %v6054 = vadd.f32 0.0, %v6053
      %6055 = vmatmul.bf16.gmra.mxu0 %v5900
      %v6056 = vpop.f32.mrf.mxu0
      %v6057 = vadd.f32 0.0, %v6056
      %v6058 = vpop.f32.mrf.mxu0
      %v6059 = vadd.f32 0.0, %v6058
      %6060 = vmatmul.bf16.gmra.mxu0 %v5901
      %v6061 = vpop.f32.mrf.mxu0
      %v6062 = vadd.f32 0.0, %v6061
      %v6063 = vpop.f32.mrf.mxu0
      %v6064 = vadd.f32 0.0, %v6063
      %6065 = vdwg.mxu0
      %v6066 = vld [vmem:[#allocation3] sm:$0xff]
      %v6067 = vld [vmem:[#allocation3 + $0x8] sm:$0xff]
      %v6068 = vld [vmem:[#allocation3 + $0x10] sm:$0xff]
      %v6069 = vld [vmem:[#allocation3 + $0x18] sm:$0xff]
      %v6070 = vld [vmem:[#allocation3 + $0x20] sm:$0xff]
      %v6071 = vld [vmem:[#allocation3 + $0x28] sm:$0xff]
      %v6072 = vld [vmem:[#allocation3 + $0x30] sm:$0xff]
      %v6073 = vld [vmem:[#allocation3 + $0x38] sm:$0xff]
      %v6074 = vld [vmem:[#allocation3 + $0x40] sm:$0xff]
      %v6075 = vld [vmem:[#allocation3 + $0x48] sm:$0xff]
      %v6076 = vld [vmem:[#allocation3 + $0x50] sm:$0xff]
      %v6077 = vld [vmem:[#allocation3 + $0x58] sm:$0xff]
      %v6078 = vld [vmem:[#allocation3 + $0x60] sm:$0xff]
      %v6079 = vld [vmem:[#allocation3 + $0x68] sm:$0xff]
      %v6080 = vld [vmem:[#allocation3 + $0x70] sm:$0xff]
      %v6081 = vld [vmem:[#allocation3 + $0x78] sm:$0xff]
      %v6082 = vld [vmem:[#allocation3 + $0x80] sm:$0xff]
      %v6083 = vld [vmem:[#allocation3 + $0x88] sm:$0xff]
      %v6084 = vld [vmem:[#allocation3 + $0x90] sm:$0xff]
      %v6085 = vld [vmem:[#allocation3 + $0x98] sm:$0xff]
      %v6086 = vld [vmem:[#allocation3 + $0xa0] sm:$0xff]
      %v6087 = vld [vmem:[#allocation3 + $0xa8] sm:$0xff]
      %v6088 = vld [vmem:[#allocation3 + $0xb0] sm:$0xff]
      %v6089 = vld [vmem:[#allocation3 + $0xb8] sm:$0xff]
      %v6090 = vld [vmem:[#allocation3 + $0xc0] sm:$0xff]
      %v6091 = vld [vmem:[#allocation3 + $0xc8] sm:$0xff]
      %v6092 = vld [vmem:[#allocation3 + $0xd0] sm:$0xff]
      %v6093 = vld [vmem:[#allocation3 + $0xd8] sm:$0xff]
      %v6094 = vld [vmem:[#allocation3 + $0xe0] sm:$0xff]
      %v6095 = vld [vmem:[#allocation3 + $0xe8] sm:$0xff]
      %v6096 = vld [vmem:[#allocation3 + $0xf0] sm:$0xff]
      %v6097 = vld [vmem:[#allocation3 + $0xf8] sm:$0xff]
      %v6098 = vld [vmem:[#allocation3 + $0x100] sm:$0xff]
      %v6099 = vld [vmem:[#allocation3 + $0x108] sm:$0xff]
      %v6100 = vld [vmem:[#allocation3 + $0x110] sm:$0xff]
      %v6101 = vld [vmem:[#allocation3 + $0x118] sm:$0xff]
      %v6102 = vadd.f32 %v6066, %v5977
      %v6103 = vadd.f32 %v6067, %v5979
      %v6104 = vadd.f32 %v6068, %v5982
      %v6105 = vadd.f32 %v6069, %v5984
      %v6106 = vadd.f32 %v6070, %v5987
      %v6107 = vadd.f32 %v6071, %v5989
      %v6108 = vadd.f32 %v6072, %v5992
      %v6109 = vadd.f32 %v6073, %v5994
      %v6110 = vadd.f32 %v6074, %v5997
      %v6111 = vadd.f32 %v6075, %v5999
      %v6112 = vadd.f32 %v6076, %v6002
      %v6113 = vadd.f32 %v6077, %v6004
      %v6114 = vadd.f32 %v6078, %v6007
      %v6115 = vadd.f32 %v6079, %v6009
      %v6116 = vadd.f32 %v6080, %v6012
      %v6117 = vadd.f32 %v6081, %v6014
      %v6118 = vadd.f32 %v6082, %v6017
      %v6119 = vadd.f32 %v6083, %v6019
      %v6120 = vadd.f32 %v6084, %v6022
      %v6121 = vadd.f32 %v6085, %v6024
      %v6122 = vadd.f32 %v6086, %v6027
      %v6123 = vadd.f32 %v6087, %v6029
      %v6124 = vadd.f32 %v6088, %v6032
      %v6125 = vadd.f32 %v6089, %v6034
      %v6126 = vadd.f32 %v6090, %v6037
      %v6127 = vadd.f32 %v6091, %v6039
      %v6128 = vadd.f32 %v6092, %v6042
      %v6129 = vadd.f32 %v6093, %v6044
      %v6130 = vadd.f32 %v6094, %v6047
      %v6131 = vadd.f32 %v6095, %v6049
      %v6132 = vadd.f32 %v6096, %v6052
      %v6133 = vadd.f32 %v6097, %v6054
      %v6134 = vadd.f32 %v6098, %v6057
      %v6135 = vadd.f32 %v6099, %v6059
      %v6136 = vadd.f32 %v6100, %v6062
      %v6137 = vadd.f32 %v6101, %v6064
      %6138 = vst [vmem:[#allocation3] sm:$0xff] %v6102
      %6139 = vst [vmem:[#allocation3 + $0x8] sm:$0xff] %v6103
      %6140 = vst [vmem:[#allocation3 + $0x10] sm:$0xff] %v6104
      %6141 = vst [vmem:[#allocation3 + $0x18] sm:$0xff] %v6105
      %6142 = vst [vmem:[#allocation3 + $0x20] sm:$0xff] %v6106
      %6143 = vst [vmem:[#allocation3 + $0x28] sm:$0xff] %v6107
      %6144 = vst [vmem:[#allocation3 + $0x30] sm:$0xff] %v6108
      %6145 = vst [vmem:[#allocation3 + $0x38] sm:$0xff] %v6109
      %6146 = vst [vmem:[#allocation3 + $0x40] sm:$0xff] %v6110
      %6147 = vst [vmem:[#allocation3 + $0x48] sm:$0xff] %v6111
      %6148 = vst [vmem:[#allocation3 + $0x50] sm:$0xff] %v6112
      %6149 = vst [vmem:[#allocation3 + $0x58] sm:$0xff] %v6113
      %6150 = vst [vmem:[#allocation3 + $0x60] sm:$0xff] %v6114
      %6151 = vst [vmem:[#allocation3 + $0x68] sm:$0xff] %v6115
      %6152 = vst [vmem:[#allocation3 + $0x70] sm:$0xff] %v6116
      %6153 = vst [vmem:[#allocation3 + $0x78] sm:$0xff] %v6117
      %6154 = vst [vmem:[#allocation3 + $0x80] sm:$0xff] %v6118
      %6155 = vst [vmem:[#allocation3 + $0x88] sm:$0xff] %v6119
      %6156 = vst [vmem:[#allocation3 + $0x90] sm:$0xff] %v6120
      %6157 = vst [vmem:[#allocation3 + $0x98] sm:$0xff] %v6121
      %6158 = vst [vmem:[#allocation3 + $0xa0] sm:$0xff] %v6122
      %6159 = vst [vmem:[#allocation3 + $0xa8] sm:$0xff] %v6123
      %6160 = vst [vmem:[#allocation3 + $0xb0] sm:$0xff] %v6124
      %6161 = vst [vmem:[#allocation3 + $0xb8] sm:$0xff] %v6125
      %6162 = vst [vmem:[#allocation3 + $0xc0] sm:$0xff] %v6126
      %6163 = vst [vmem:[#allocation3 + $0xc8] sm:$0xff] %v6127
      %6164 = vst [vmem:[#allocation3 + $0xd0] sm:$0xff] %v6128
      %6165 = vst [vmem:[#allocation3 + $0xd8] sm:$0xff] %v6129
      %6166 = vst [vmem:[#allocation3 + $0xe0] sm:$0xff] %v6130
      %6167 = vst [vmem:[#allocation3 + $0xe8] sm:$0xff] %v6131
      %6168 = vst [vmem:[#allocation3 + $0xf0] sm:$0xff] %v6132
      %6169 = vst [vmem:[#allocation3 + $0xf8] sm:$0xff] %v6133
      %6170 = vst [vmem:[#allocation3 + $0x100] sm:$0xff] %v6134
      %6171 = vst [vmem:[#allocation3 + $0x108] sm:$0xff] %v6135
      %6172 = vst [vmem:[#allocation3 + $0x110] sm:$0xff] %v6136
      %6173 = vst [vmem:[#allocation3 + $0x118] sm:$0xff] %v6137
      %v6174 = vld [vmem:[#allocation2 + $0x26] sm:$0xff]
      %v6175 = vld [vmem:[#allocation2 + $0x2e] sm:$0xff]
      %v6176 = vld [vmem:[#allocation2 + $0x36] sm:$0xff]
      %v6177 = vld [vmem:[#allocation2 + $0x3e] sm:$0xff]
      %v6178 = vld [vmem:[#allocation2 + $0x46] sm:$0xff]
      %v6179 = vld [vmem:[#allocation2 + $0x4e] sm:$0xff]
      %v6180 = vld [vmem:[#allocation2 + $0x56] sm:$0xff]
      %v6181 = vld [vmem:[#allocation2 + $0x5e] sm:$0xff]
      %v6182 = vld [vmem:[#allocation2 + $0x66] sm:$0xff]
      %v6183 = vld [vmem:[#allocation2 + $0x6e] sm:$0xff]
      %v6184 = vld [vmem:[#allocation2 + $0x76] sm:$0xff]
      %v6185 = vld [vmem:[#allocation2 + $0x7e] sm:$0xff]
      %v6186 = vld [vmem:[#allocation2 + $0x86] sm:$0xff]
      %v6187 = vld [vmem:[#allocation2 + $0x8e] sm:$0xff]
      %v6188 = vld [vmem:[#allocation2 + $0x96] sm:$0xff]
      %v6189 = vld [vmem:[#allocation2 + $0x9e] sm:$0xff]
      %v6190 = vld [vmem:[#allocation2 + $0xa6] sm:$0xff]
      %v6191 = vld [vmem:[#allocation2 + $0xae] sm:$0xff]
      %v6192 = vld [vmem:[#allocation2 + $0xb6] sm:$0xff]
      %v6193 = vld [vmem:[#allocation2 + $0xbe] sm:$0xff]
      %v6194 = vld [vmem:[#allocation2 + $0xc6] sm:$0xff]
      %v6195 = vld [vmem:[#allocation2 + $0xce] sm:$0xff]
      %v6196 = vld [vmem:[#allocation2 + $0xd6] sm:$0xff]
      %v6197 = vld [vmem:[#allocation2 + $0xde] sm:$0xff]
      %v6198 = vld [vmem:[#allocation2 + $0xe6] sm:$0xff]
      %v6199 = vld [vmem:[#allocation2 + $0xee] sm:$0xff]
      %v6200 = vld [vmem:[#allocation2 + $0xf6] sm:$0xff]
      %v6201 = vld [vmem:[#allocation2 + $0xfe] sm:$0xff]
      %v6202 = vld [vmem:[#allocation2 + $0x106] sm:$0xff]
      %v6203 = vld [vmem:[#allocation2 + $0x10e] sm:$0xff]
      %v6204 = vld [vmem:[#allocation2 + $0x116] sm:$0xff]
      %v6205 = vld [vmem:[#allocation2 + $0x11e] sm:$0xff]
      %v6206 = vld [vmem:[#allocation2 + $0x126] sm:$0xff]
      %v6207 = vld [vmem:[#allocation2 + $0x12e] sm:$0xff]
      %v6208 = vld [vmem:[#allocation2 + $0x136] sm:$0xff]
      %v6209 = vld [vmem:[#allocation2 + $0x13e] sm:$0xff]
      %v6210 = vpack.c.bf16 %v6175, %v6174
      %v6211 = vpack.c.bf16 %v6177, %v6176
      %v6212 = vpack.c.bf16 %v6179, %v6178
      %v6213 = vpack.c.bf16 %v6181, %v6180
      %v6214 = vpack.c.bf16 %v6183, %v6182
      %v6215 = vpack.c.bf16 %v6185, %v6184
      %v6216 = vpack.c.bf16 %v6187, %v6186
      %v6217 = vpack.c.bf16 %v6189, %v6188
      %v6218 = vpack.c.bf16 %v6191, %v6190
      %v6219 = vpack.c.bf16 %v6193, %v6192
      %v6220 = vpack.c.bf16 %v6195, %v6194
      %v6221 = vpack.c.bf16 %v6197, %v6196
      %v6222 = vpack.c.bf16 %v6199, %v6198
      %v6223 = vpack.c.bf16 %v6201, %v6200
      %v6224 = vpack.c.bf16 %v6203, %v6202
      %v6225 = vpack.c.bf16 %v6205, %v6204
      %v6226 = vpack.c.bf16 %v6207, %v6206
      %v6227 = vpack.c.bf16 %v6209, %v6208
      %s6228 = scalar_lea.vmem %s5, 512
      %v6229 = vld [vmem:[%s6228] sm:$0xf]
      %v6230 = vld [vmem:[%s6228 + $0x4] sm:$0xf]
      %v6231 = vld [vmem:[%s6228 + $0x8] sm:$0xf]
      %v6232 = vld [vmem:[%s6228 + $0xc] sm:$0xf]
      %v6233 = vld [vmem:[%s6228 + $0x10] sm:$0xf]
      %v6234 = vld [vmem:[%s6228 + $0x14] sm:$0xf]
      %v6235 = vld [vmem:[%s6228 + $0x18] sm:$0xf]
      %v6236 = vld [vmem:[%s6228 + $0x1c] sm:$0xf]
      %v6237 = vld [vmem:[%s6228 + $0x20] sm:$0xf]
      %v6238 = vld [vmem:[%s6228 + $0x24] sm:$0xf]
      %v6239 = vld [vmem:[%s6228 + $0x28] sm:$0xf]
      %v6240 = vld [vmem:[%s6228 + $0x2c] sm:$0xf]
      %v6241 = vld [vmem:[%s6228 + $0x30] sm:$0xf]
      %v6242 = vld [vmem:[%s6228 + $0x34] sm:$0xf]
      %v6243 = vld [vmem:[%s6228 + $0x38] sm:$0xf]
      %v6244 = vld [vmem:[%s6228 + $0x3c] sm:$0xf]
      %v6261 = vunpack.c.l.b16 %v6229
      %v6262 = vunpack.c.l.b16 %v6230
      %v6263 = vunpack.c.l.b16 %v6231
      %v6264 = vunpack.c.l.b16 %v6232
      %v6265 = vunpack.c.l.b16 %v6233
      %v6266 = vunpack.c.l.b16 %v6234
      %v6267 = vunpack.c.l.b16 %v6235
      %v6268 = vunpack.c.l.b16 %v6236
      %v6269 = vunpack.c.l.b16 %v6237
      %v6270 = vunpack.c.l.b16 %v6238
      %v6271 = vunpack.c.l.b16 %v6239
      %v6272 = vunpack.c.l.b16 %v6240
      %v6273 = vunpack.c.l.b16 %v6241
      %v6274 = vunpack.c.l.b16 %v6242
      %v6275 = vunpack.c.l.b16 %v6243
      %v6276 = vunpack.c.l.b16 %v6244
      %v6277 = vpack.c.b16 %v6262, %v6261
      %v6278 = vpack.c.b16 %v6264, %v6263
      %v6279 = vpack.c.b16 %v6266, %v6265
      %v6280 = vpack.c.b16 %v6268, %v6267
      %v6281 = vpack.c.b16 %v6270, %v6269
      %v6282 = vpack.c.b16 %v6272, %v6271
      %v6283 = vpack.c.b16 %v6274, %v6273
      %v6284 = vpack.c.b16 %v6276, %v6275
      %6293 = vmatpush.bf16.msra.mxu0 %v6284
      %6294 = vmatpush.bf16.msra.mxu0 %v6283
      %6295 = vmatpush.bf16.msra.mxu0 %v6282
      %6296 = vmatpush.bf16.msra.mxu0 %v6281
      %6297 = vmatpush.bf16.msra.mxu0 %v6280
      %6298 = vmatpush.bf16.msra.mxu0 %v6279
      %6299 = vmatpush.bf16.msra.mxu0 %v6278
      %6300 = vmatpush.bf16.msra.mxu0 %v6277
      %6301 = vmatmul.bf16.gmra.mxu0 %v6210
      %v6302 = vpop.f32.mrf.mxu0
      %v6303 = vadd.f32 0.0, %v6302
      %v6304 = vpop.f32.mrf.mxu0
      %v6305 = vadd.f32 0.0, %v6304
      %6306 = vmatmul.bf16.gmra.mxu0 %v6211
      %v6307 = vpop.f32.mrf.mxu0
      %v6308 = vadd.f32 0.0, %v6307
      %v6309 = vpop.f32.mrf.mxu0
      %v6310 = vadd.f32 0.0, %v6309
      %6311 = vmatmul.bf16.gmra.mxu0 %v6212
      %v6312 = vpop.f32.mrf.mxu0
      %v6313 = vadd.f32 0.0, %v6312
      %v6314 = vpop.f32.mrf.mxu0
      %v6315 = vadd.f32 0.0, %v6314
      %6316 = vmatmul.bf16.gmra.mxu0 %v6213
      %v6317 = vpop.f32.mrf.mxu0
      %v6318 = vadd.f32 0.0, %v6317
      %v6319 = vpop.f32.mrf.mxu0
      %v6320 = vadd.f32 0.0, %v6319
      %6321 = vmatmul.bf16.gmra.mxu0 %v6214
      %v6322 = vpop.f32.mrf.mxu0
      %v6323 = vadd.f32 0.0, %v6322
      %v6324 = vpop.f32.mrf.mxu0
      %v6325 = vadd.f32 0.0, %v6324
      %6326 = vmatmul.bf16.gmra.mxu0 %v6215
      %v6327 = vpop.f32.mrf.mxu0
      %v6328 = vadd.f32 0.0, %v6327
      %v6329 = vpop.f32.mrf.mxu0
      %v6330 = vadd.f32 0.0, %v6329
      %6331 = vmatmul.bf16.gmra.mxu0 %v6216
      %v6332 = vpop.f32.mrf.mxu0
      %v6333 = vadd.f32 0.0, %v6332
      %v6334 = vpop.f32.mrf.mxu0
      %v6335 = vadd.f32 0.0, %v6334
      %6336 = vmatmul.bf16.gmra.mxu0 %v6217
      %v6337 = vpop.f32.mrf.mxu0
      %v6338 = vadd.f32 0.0, %v6337
      %v6339 = vpop.f32.mrf.mxu0
      %v6340 = vadd.f32 0.0, %v6339
      %6341 = vmatmul.bf16.gmra.mxu0 %v6218
      %v6342 = vpop.f32.mrf.mxu0
      %v6343 = vadd.f32 0.0, %v6342
      %v6344 = vpop.f32.mrf.mxu0
      %v6345 = vadd.f32 0.0, %v6344
      %6346 = vmatmul.bf16.gmra.mxu0 %v6219
      %v6347 = vpop.f32.mrf.mxu0
      %v6348 = vadd.f32 0.0, %v6347
      %v6349 = vpop.f32.mrf.mxu0
      %v6350 = vadd.f32 0.0, %v6349
      %6351 = vmatmul.bf16.gmra.mxu0 %v6220
      %v6352 = vpop.f32.mrf.mxu0
      %v6353 = vadd.f32 0.0, %v6352
      %v6354 = vpop.f32.mrf.mxu0
      %v6355 = vadd.f32 0.0, %v6354
      %6356 = vmatmul.bf16.gmra.mxu0 %v6221
      %v6357 = vpop.f32.mrf.mxu0
      %v6358 = vadd.f32 0.0, %v6357
      %v6359 = vpop.f32.mrf.mxu0
      %v6360 = vadd.f32 0.0, %v6359
      %6361 = vmatmul.bf16.gmra.mxu0 %v6222
      %v6362 = vpop.f32.mrf.mxu0
      %v6363 = vadd.f32 0.0, %v6362
      %v6364 = vpop.f32.mrf.mxu0
      %v6365 = vadd.f32 0.0, %v6364
      %6366 = vmatmul.bf16.gmra.mxu0 %v6223
      %v6367 = vpop.f32.mrf.mxu0
      %v6368 = vadd.f32 0.0, %v6367
      %v6369 = vpop.f32.mrf.mxu0
      %v6370 = vadd.f32 0.0, %v6369
      %6371 = vmatmul.bf16.gmra.mxu0 %v6224
      %v6372 = vpop.f32.mrf.mxu0
      %v6373 = vadd.f32 0.0, %v6372
      %v6374 = vpop.f32.mrf.mxu0
      %v6375 = vadd.f32 0.0, %v6374
      %6376 = vmatmul.bf16.gmra.mxu0 %v6225
      %v6377 = vpop.f32.mrf.mxu0
      %v6378 = vadd.f32 0.0, %v6377
      %v6379 = vpop.f32.mrf.mxu0
      %v6380 = vadd.f32 0.0, %v6379
      %6381 = vmatmul.bf16.gmra.mxu0 %v6226
      %v6382 = vpop.f32.mrf.mxu0
      %v6383 = vadd.f32 0.0, %v6382
      %v6384 = vpop.f32.mrf.mxu0
      %v6385 = vadd.f32 0.0, %v6384
      %6386 = vmatmul.bf16.gmra.mxu0 %v6227
      %v6387 = vpop.f32.mrf.mxu0
      %v6388 = vadd.f32 0.0, %v6387
      %v6389 = vpop.f32.mrf.mxu0
      %v6390 = vadd.f32 0.0, %v6389
      %6391 = vdwg.mxu0
      %v6392 = vld [vmem:[#allocation3] sm:$0xff]
      %v6393 = vld [vmem:[#allocation3 + $0x8] sm:$0xff]
      %v6394 = vld [vmem:[#allocation3 + $0x10] sm:$0xff]
      %v6395 = vld [vmem:[#allocation3 + $0x18] sm:$0xff]
      %v6396 = vld [vmem:[#allocation3 + $0x20] sm:$0xff]
      %v6397 = vld [vmem:[#allocation3 + $0x28] sm:$0xff]
      %v6398 = vld [vmem:[#allocation3 + $0x30] sm:$0xff]
      %v6399 = vld [vmem:[#allocation3 + $0x38] sm:$0xff]
      %v6400 = vld [vmem:[#allocation3 + $0x40] sm:$0xff]
      %v6401 = vld [vmem:[#allocation3 + $0x48] sm:$0xff]
      %v6402 = vld [vmem:[#allocation3 + $0x50] sm:$0xff]
      %v6403 = vld [vmem:[#allocation3 + $0x58] sm:$0xff]
      %v6404 = vld [vmem:[#allocation3 + $0x60] sm:$0xff]
      %v6405 = vld [vmem:[#allocation3 + $0x68] sm:$0xff]
      %v6406 = vld [vmem:[#allocation3 + $0x70] sm:$0xff]
      %v6407 = vld [vmem:[#allocation3 + $0x78] sm:$0xff]
      %v6408 = vld [vmem:[#allocation3 + $0x80] sm:$0xff]
      %v6409 = vld [vmem:[#allocation3 + $0x88] sm:$0xff]
      %v6410 = vld [vmem:[#allocation3 + $0x90] sm:$0xff]
      %v6411 = vld [vmem:[#allocation3 + $0x98] sm:$0xff]
      %v6412 = vld [vmem:[#allocation3 + $0xa0] sm:$0xff]
      %v6413 = vld [vmem:[#allocation3 + $0xa8] sm:$0xff]
      %v6414 = vld [vmem:[#allocation3 + $0xb0] sm:$0xff]
      %v6415 = vld [vmem:[#allocation3 + $0xb8] sm:$0xff]
      %v6416 = vld [vmem:[#allocation3 + $0xc0] sm:$0xff]
      %v6417 = vld [vmem:[#allocation3 + $0xc8] sm:$0xff]
      %v6418 = vld [vmem:[#allocation3 + $0xd0] sm:$0xff]
      %v6419 = vld [vmem:[#allocation3 + $0xd8] sm:$0xff]
      %v6420 = vld [vmem:[#allocation3 + $0xe0] sm:$0xff]
      %v6421 = vld [vmem:[#allocation3 + $0xe8] sm:$0xff]
      %v6422 = vld [vmem:[#allocation3 + $0xf0] sm:$0xff]
      %v6423 = vld [vmem:[#allocation3 + $0xf8] sm:$0xff]
      %v6424 = vld [vmem:[#allocation3 + $0x100] sm:$0xff]
      %v6425 = vld [vmem:[#allocation3 + $0x108] sm:$0xff]
      %v6426 = vld [vmem:[#allocation3 + $0x110] sm:$0xff]
      %v6427 = vld [vmem:[#allocation3 + $0x118] sm:$0xff]
      %v6428 = vadd.f32 %v6392, %v6303
      %v6429 = vadd.f32 %v6393, %v6305
      %v6430 = vadd.f32 %v6394, %v6308
      %v6431 = vadd.f32 %v6395, %v6310
      %v6432 = vadd.f32 %v6396, %v6313
      %v6433 = vadd.f32 %v6397, %v6315
      %v6434 = vadd.f32 %v6398, %v6318
      %v6435 = vadd.f32 %v6399, %v6320
      %v6436 = vadd.f32 %v6400, %v6323
      %v6437 = vadd.f32 %v6401, %v6325
      %v6438 = vadd.f32 %v6402, %v6328
      %v6439 = vadd.f32 %v6403, %v6330
      %v6440 = vadd.f32 %v6404, %v6333
      %v6441 = vadd.f32 %v6405, %v6335
      %v6442 = vadd.f32 %v6406, %v6338
      %v6443 = vadd.f32 %v6407, %v6340
      %v6444 = vadd.f32 %v6408, %v6343
      %v6445 = vadd.f32 %v6409, %v6345
      %v6446 = vadd.f32 %v6410, %v6348
      %v6447 = vadd.f32 %v6411, %v6350
      %v6448 = vadd.f32 %v6412, %v6353
      %v6449 = vadd.f32 %v6413, %v6355
      %v6450 = vadd.f32 %v6414, %v6358
      %v6451 = vadd.f32 %v6415, %v6360
      %v6452 = vadd.f32 %v6416, %v6363
      %v6453 = vadd.f32 %v6417, %v6365
      %v6454 = vadd.f32 %v6418, %v6368
      %v6455 = vadd.f32 %v6419, %v6370
      %v6456 = vadd.f32 %v6420, %v6373
      %v6457 = vadd.f32 %v6421, %v6375
      %v6458 = vadd.f32 %v6422, %v6378
      %v6459 = vadd.f32 %v6423, %v6380
      %v6460 = vadd.f32 %v6424, %v6383
      %v6461 = vadd.f32 %v6425, %v6385
      %v6462 = vadd.f32 %v6426, %v6388
      %v6463 = vadd.f32 %v6427, %v6390
      %6464 = vst [vmem:[#allocation3] sm:$0xff] %v6428
      %6465 = vst [vmem:[#allocation3 + $0x8] sm:$0xff] %v6429
      %6466 = vst [vmem:[#allocation3 + $0x10] sm:$0xff] %v6430
      %6467 = vst [vmem:[#allocation3 + $0x18] sm:$0xff] %v6431
      %6468 = vst [vmem:[#allocation3 + $0x20] sm:$0xff] %v6432
      %6469 = vst [vmem:[#allocation3 + $0x28] sm:$0xff] %v6433
      %6470 = vst [vmem:[#allocation3 + $0x30] sm:$0xff] %v6434
      %6471 = vst [vmem:[#allocation3 + $0x38] sm:$0xff] %v6435
      %6472 = vst [vmem:[#allocation3 + $0x40] sm:$0xff] %v6436
      %6473 = vst [vmem:[#allocation3 + $0x48] sm:$0xff] %v6437
      %6474 = vst [vmem:[#allocation3 + $0x50] sm:$0xff] %v6438
      %6475 = vst [vmem:[#allocation3 + $0x58] sm:$0xff] %v6439
      %6476 = vst [vmem:[#allocation3 + $0x60] sm:$0xff] %v6440
      %6477 = vst [vmem:[#allocation3 + $0x68] sm:$0xff] %v6441
      %6478 = vst [vmem:[#allocation3 + $0x70] sm:$0xff] %v6442
      %6479 = vst [vmem:[#allocation3 + $0x78] sm:$0xff] %v6443
      %6480 = vst [vmem:[#allocation3 + $0x80] sm:$0xff] %v6444
      %6481 = vst [vmem:[#allocation3 + $0x88] sm:$0xff] %v6445
      %6482 = vst [vmem:[#allocation3 + $0x90] sm:$0xff] %v6446
      %6483 = vst [vmem:[#allocation3 + $0x98] sm:$0xff] %v6447
      %6484 = vst [vmem:[#allocation3 + $0xa0] sm:$0xff] %v6448
      %6485 = vst [vmem:[#allocation3 + $0xa8] sm:$0xff] %v6449
      %6486 = vst [vmem:[#allocation3 + $0xb0] sm:$0xff] %v6450
      %6487 = vst [vmem:[#allocation3 + $0xb8] sm:$0xff] %v6451
      %6488 = vst [vmem:[#allocation3 + $0xc0] sm:$0xff] %v6452
      %6489 = vst [vmem:[#allocation3 + $0xc8] sm:$0xff] %v6453
      %6490 = vst [vmem:[#allocation3 + $0xd0] sm:$0xff] %v6454
      %6491 = vst [vmem:[#allocation3 + $0xd8] sm:$0xff] %v6455
      %6492 = vst [vmem:[#allocation3 + $0xe0] sm:$0xff] %v6456
      %6493 = vst [vmem:[#allocation3 + $0xe8] sm:$0xff] %v6457
      %6494 = vst [vmem:[#allocation3 + $0xf0] sm:$0xff] %v6458
      %6495 = vst [vmem:[#allocation3 + $0xf8] sm:$0xff] %v6459
      %6496 = vst [vmem:[#allocation3 + $0x100] sm:$0xff] %v6460
      %6497 = vst [vmem:[#allocation3 + $0x108] sm:$0xff] %v6461
      %6498 = vst [vmem:[#allocation3 + $0x110] sm:$0xff] %v6462
      %6499 = vst [vmem:[#allocation3 + $0x118] sm:$0xff] %v6463
      %v6500 = vld [vmem:[#allocation3] sm:$0xff]
      %v6501 = vld [vmem:[#allocation3 + $0x8] sm:$0xff]
      %v6502 = vld [vmem:[#allocation3 + $0x10] sm:$0xff]
      %v6503 = vld [vmem:[#allocation3 + $0x18] sm:$0xff]
      %v6504 = vld [vmem:[#allocation3 + $0x20] sm:$0xff]
      %v6505 = vld [vmem:[#allocation3 + $0x28] sm:$0xff]
      %v6506 = vld [vmem:[#allocation3 + $0x30] sm:$0xff]
      %v6507 = vld [vmem:[#allocation3 + $0x38] sm:$0xff]
      %v6508 = vld [vmem:[#allocation3 + $0x40] sm:$0xff]
      %v6509 = vld [vmem:[#allocation3 + $0x48] sm:$0xff]
      %v6510 = vld [vmem:[#allocation3 + $0x50] sm:$0xff]
      %v6511 = vld [vmem:[#allocation3 + $0x58] sm:$0xff]
      %v6512 = vld [vmem:[#allocation3 + $0x60] sm:$0xff]
      %v6513 = vld [vmem:[#allocation3 + $0x68] sm:$0xff]
      %v6514 = vld [vmem:[#allocation3 + $0x70] sm:$0xff]
      %v6515 = vld [vmem:[#allocation3 + $0x78] sm:$0xff]
      %v6516 = vld [vmem:[#allocation3 + $0x80] sm:$0xff]
      %v6517 = vld [vmem:[#allocation3 + $0x88] sm:$0xff]
      %v6518 = vld [vmem:[#allocation3 + $0x90] sm:$0xff]
      %v6519 = vld [vmem:[#allocation3 + $0x98] sm:$0xff]
      %v6520 = vld [vmem:[#allocation3 + $0xa0] sm:$0xff]
      %v6521 = vld [vmem:[#allocation3 + $0xa8] sm:$0xff]
      %v6522 = vld [vmem:[#allocation3 + $0xb0] sm:$0xff]
      %v6523 = vld [vmem:[#allocation3 + $0xb8] sm:$0xff]
      %v6524 = vld [vmem:[#allocation3 + $0xc0] sm:$0xff]
      %v6525 = vld [vmem:[#allocation3 + $0xc8] sm:$0xff]
      %v6526 = vld [vmem:[#allocation3 + $0xd0] sm:$0xff]
      %v6527 = vld [vmem:[#allocation3 + $0xd8] sm:$0xff]
      %v6528 = vld [vmem:[#allocation3 + $0xe0] sm:$0xff]
      %v6529 = vld [vmem:[#allocation3 + $0xe8] sm:$0xff]
      %v6530 = vld [vmem:[#allocation3 + $0xf0] sm:$0xff]
      %v6531 = vld [vmem:[#allocation3 + $0xf8] sm:$0xff]
      %v6532 = vld [vmem:[#allocation3 + $0x100] sm:$0xff]
      %v6533 = vld [vmem:[#allocation3 + $0x108] sm:$0xff]
      %v6534 = vld [vmem:[#allocation3 + $0x110] sm:$0xff]
      %v6535 = vld [vmem:[#allocation3 + $0x118] sm:$0xff]
      %v6536 = vld [vmem:[%s6] sm:$0x1]
      %v6538 = vperm.slane %v6536, 0
      %v6540 = vmul.f32 %v6500, %v6538
      %v6541 = vmul.f32 %v6501, %v6538
      %v6542 = vmul.f32 %v6502, %v6538
      %v6543 = vmul.f32 %v6503, %v6538
      %v6544 = vmul.f32 %v6504, %v6538
      %v6545 = vmul.f32 %v6505, %v6538
      %v6546 = vmul.f32 %v6506, %v6538
      %v6547 = vmul.f32 %v6507, %v6538
      %v6548 = vmul.f32 %v6508, %v6538
      %v6549 = vmul.f32 %v6509, %v6538
      %v6550 = vmul.f32 %v6510, %v6538
      %v6551 = vmul.f32 %v6511, %v6538
      %v6552 = vmul.f32 %v6512, %v6538
      %v6553 = vmul.f32 %v6513, %v6538
      %v6554 = vmul.f32 %v6514, %v6538
      %v6555 = vmul.f32 %v6515, %v6538
      %v6556 = vmul.f32 %v6516, %v6538
      %v6557 = vmul.f32 %v6517, %v6538
      %v6558 = vmul.f32 %v6518, %v6538
      %v6559 = vmul.f32 %v6519, %v6538
      %v6560 = vmul.f32 %v6520, %v6538
      %v6561 = vmul.f32 %v6521, %v6538
      %v6562 = vmul.f32 %v6522, %v6538
      %v6563 = vmul.f32 %v6523, %v6538
      %v6564 = vmul.f32 %v6524, %v6538
      %v6565 = vmul.f32 %v6525, %v6538
      %v6566 = vmul.f32 %v6526, %v6538
      %v6567 = vmul.f32 %v6527, %v6538
      %v6568 = vmul.f32 %v6528, %v6538
      %v6569 = vmul.f32 %v6529, %v6538
      %v6570 = vmul.f32 %v6530, %v6538
      %v6571 = vmul.f32 %v6531, %v6538
      %v6572 = vmul.f32 %v6532, %v6538
      %v6573 = vmul.f32 %v6533, %v6538
      %v6574 = vmul.f32 %v6534, %v6538
      %v6575 = vmul.f32 %v6535, %v6538
      %v6576 = vld [vmem:[%s7] sm:$0x1]
      %v6578 = vperm.slane %v6576, 0
      %v6580 = vadd.f32 %v6540, %v6578
      %v6581 = vadd.f32 %v6541, %v6578
      %v6582 = vadd.f32 %v6542, %v6578
      %v6583 = vadd.f32 %v6543, %v6578
      %v6584 = vadd.f32 %v6544, %v6578
      %v6585 = vadd.f32 %v6545, %v6578
      %v6586 = vadd.f32 %v6546, %v6578
      %v6587 = vadd.f32 %v6547, %v6578
      %v6588 = vadd.f32 %v6548, %v6578
      %v6589 = vadd.f32 %v6549, %v6578
      %v6590 = vadd.f32 %v6550, %v6578
      %v6591 = vadd.f32 %v6551, %v6578
      %v6592 = vadd.f32 %v6552, %v6578
      %v6593 = vadd.f32 %v6553, %v6578
      %v6594 = vadd.f32 %v6554, %v6578
      %v6595 = vadd.f32 %v6555, %v6578
      %v6596 = vadd.f32 %v6556, %v6578
      %v6597 = vadd.f32 %v6557, %v6578
      %v6598 = vadd.f32 %v6558, %v6578
      %v6599 = vadd.f32 %v6559, %v6578
      %v6600 = vadd.f32 %v6560, %v6578
      %v6601 = vadd.f32 %v6561, %v6578
      %v6602 = vadd.f32 %v6562, %v6578
      %v6603 = vadd.f32 %v6563, %v6578
      %v6604 = vadd.f32 %v6564, %v6578
      %v6605 = vadd.f32 %v6565, %v6578
      %v6606 = vadd.f32 %v6566, %v6578
      %v6607 = vadd.f32 %v6567, %v6578
      %v6608 = vadd.f32 %v6568, %v6578
      %v6609 = vadd.f32 %v6569, %v6578
      %v6610 = vadd.f32 %v6570, %v6578
      %v6611 = vadd.f32 %v6571, %v6578
      %v6612 = vadd.f32 %v6572, %v6578
      %v6613 = vadd.f32 %v6573, %v6578
      %v6614 = vadd.f32 %v6574, %v6578
      %v6615 = vadd.f32 %v6575, %v6578
      %v6616 = vmax.f32 %v6580, 0.0
      %v6617 = vmax.f32 %v6581, 0.0
      %v6618 = vmax.f32 %v6582, 0.0
      %v6619 = vmax.f32 %v6583, 0.0
      %v6620 = vmax.f32 %v6584, 0.0
      %v6621 = vmax.f32 %v6585, 0.0
      %v6622 = vmax.f32 %v6586, 0.0
      %v6623 = vmax.f32 %v6587, 0.0
      %v6624 = vmax.f32 %v6588, 0.0
      %v6625 = vmax.f32 %v6589, 0.0
      %v6626 = vmax.f32 %v6590, 0.0
      %v6627 = vmax.f32 %v6591, 0.0
      %v6628 = vmax.f32 %v6592, 0.0
      %v6629 = vmax.f32 %v6593, 0.0
      %v6630 = vmax.f32 %v6594, 0.0
      %v6631 = vmax.f32 %v6595, 0.0
      %v6632 = vmax.f32 %v6596, 0.0
      %v6633 = vmax.f32 %v6597, 0.0
      %v6634 = vmax.f32 %v6598, 0.0
      %v6635 = vmax.f32 %v6599, 0.0
      %v6636 = vmax.f32 %v6600, 0.0
      %v6637 = vmax.f32 %v6601, 0.0
      %v6638 = vmax.f32 %v6602, 0.0
      %v6639 = vmax.f32 %v6603, 0.0
      %v6640 = vmax.f32 %v6604, 0.0
      %v6641 = vmax.f32 %v6605, 0.0
      %v6642 = vmax.f32 %v6606, 0.0
      %v6643 = vmax.f32 %v6607, 0.0
      %v6644 = vmax.f32 %v6608, 0.0
      %v6645 = vmax.f32 %v6609, 0.0
      %v6646 = vmax.f32 %v6610, 0.0
      %v6647 = vmax.f32 %v6611, 0.0
      %v6648 = vmax.f32 %v6612, 0.0
      %v6649 = vmax.f32 %v6613, 0.0
      %v6650 = vmax.f32 %v6614, 0.0
      %v6651 = vmax.f32 %v6615, 0.0
      %6652 = vst [vmem:[%s340] sm:$0xff] %v6616
      %6653 = vst [vmem:[%s340 + $0x8] sm:$0xff] %v6617
      %6654 = vst [vmem:[%s340 + $0x10] sm:$0xff] %v6618
      %6655 = vst [vmem:[%s340 + $0x18] sm:$0xff] %v6619
      %6656 = vst [vmem:[%s340 + $0x20] sm:$0xff] %v6620
      %6657 = vst [vmem:[%s340 + $0x28] sm:$0xff] %v6621
      %6658 = vst [vmem:[%s340 + $0x30] sm:$0xff] %v6622
      %6659 = vst [vmem:[%s340 + $0x38] sm:$0xff] %v6623
      %6660 = vst [vmem:[%s340 + $0x40] sm:$0xff] %v6624
      %6661 = vst [vmem:[%s340 + $0x48] sm:$0xff] %v6625
      %6662 = vst [vmem:[%s340 + $0x50] sm:$0xff] %v6626
      %6663 = vst [vmem:[%s340 + $0x58] sm:$0xff] %v6627
      %6664 = vst [vmem:[%s340 + $0x60] sm:$0xff] %v6628
      %6665 = vst [vmem:[%s340 + $0x68] sm:$0xff] %v6629
      %6666 = vst [vmem:[%s340 + $0x70] sm:$0xff] %v6630
      %6667 = vst [vmem:[%s340 + $0x78] sm:$0xff] %v6631
      %6668 = vst [vmem:[%s340 + $0x80] sm:$0xff] %v6632
      %6669 = vst [vmem:[%s340 + $0x88] sm:$0xff] %v6633
      %6670 = vst [vmem:[%s340 + $0x90] sm:$0xff] %v6634
      %6671 = vst [vmem:[%s340 + $0x98] sm:$0xff] %v6635
      %6672 = vst [vmem:[%s340 + $0xa0] sm:$0xff] %v6636
      %6673 = vst [vmem:[%s340 + $0xa8] sm:$0xff] %v6637
      %6674 = vst [vmem:[%s340 + $0xb0] sm:$0xff] %v6638
      %6675 = vst [vmem:[%s340 + $0xb8] sm:$0xff] %v6639
      %6676 = vst [vmem:[%s340 + $0xc0] sm:$0xff] %v6640
      %6677 = vst [vmem:[%s340 + $0xc8] sm:$0xff] %v6641
      %6678 = vst [vmem:[%s340 + $0xd0] sm:$0xff] %v6642
      %6679 = vst [vmem:[%s340 + $0xd8] sm:$0xff] %v6643
      %6680 = vst [vmem:[%s340 + $0xe0] sm:$0xff] %v6644
      %6681 = vst [vmem:[%s340 + $0xe8] sm:$0xff] %v6645
      %6682 = vst [vmem:[%s340 + $0xf0] sm:$0xff] %v6646
      %6683 = vst [vmem:[%s340 + $0xf8] sm:$0xff] %v6647
      %6684 = vst [vmem:[%s340 + $0x100] sm:$0xff] %v6648
      %6685 = vst [vmem:[%s340 + $0x108] sm:$0xff] %v6649
      %6686 = vst [vmem:[%s340 + $0x110] sm:$0xff] %v6650
      %6687 = vst [vmem:[%s340 + $0x118] sm:$0xff] %v6651
      %v6688 = vld [vmem:[%s340] ss:$2 sm:$0xff]
      %s6689 = scalar_lea.vmem %s340, 1
      %v6690 = vld [vmem:[%s6689] ss:$2 sm:$0xff]
      %s6691 = scalar_lea.vmem %s340, 18
      %v6692 = vld [vmem:[%s6691] ss:$2 sm:$0xff]
      %s6693 = scalar_lea.vmem %s340, 19
      %v6694 = vld [vmem:[%s6693] ss:$2 sm:$0xff]
      %v6695 = vmax.f32 %v6688, %v6690
      %v6696 = vmax.f32 %v6692, %v6694
      %v6697 = vmax.f32 %v6695, %v6696
      %6698 = vst [vmem:[%s345] sm:$0xff] %v6697
      %s6699 = scalar_lea.vmem %s340, 36
      %v6700 = vld [vmem:[%s6699] ss:$2 sm:$0xff]
      %s6701 = scalar_lea.vmem %s340, 37
      %v6702 = vld [vmem:[%s6701] ss:$2 sm:$0xff]
      %s6703 = scalar_lea.vmem %s340, 54
      %v6704 = vld [vmem:[%s6703] ss:$2 sm:$0xff]
      %s6705 = scalar_lea.vmem %s340, 55
      %v6706 = vld [vmem:[%s6705] ss:$2 sm:$0xff]
      %v6707 = vmax.f32 %v6700, %v6702
      %v6708 = vmax.f32 %v6704, %v6706
      %v6709 = vmax.f32 %v6707, %v6708
      %6710 = vst [vmem:[%s345 + $0x8] sm:$0xff] %v6709
      %s6711 = scalar_lea.vmem %s340, 72
      %v6712 = vld [vmem:[%s6711] ss:$2 sm:$0xff]
      %s6713 = scalar_lea.vmem %s340, 73
      %v6714 = vld [vmem:[%s6713] ss:$2 sm:$0xff]
      %s6715 = scalar_lea.vmem %s340, 90
      %v6716 = vld [vmem:[%s6715] ss:$2 sm:$0xff]
      %s6717 = scalar_lea.vmem %s340, 91
      %v6718 = vld [vmem:[%s6717] ss:$2 sm:$0xff]
      %v6719 = vmax.f32 %v6712, %v6714
      %v6720 = vmax.f32 %v6716, %v6718
      %v6721 = vmax.f32 %v6719, %v6720
      %6722 = vst [vmem:[%s345 + $0x10] sm:$0xff] %v6721
      %s6723 = scalar_lea.vmem %s340, 108
      %v6724 = vld [vmem:[%s6723] ss:$2 sm:$0xff]
      %s6725 = scalar_lea.vmem %s340, 109
      %v6726 = vld [vmem:[%s6725] ss:$2 sm:$0xff]
      %s6727 = scalar_lea.vmem %s340, 126
      %v6728 = vld [vmem:[%s6727] ss:$2 sm:$0xff]
      %s6729 = scalar_lea.vmem %s340, 127
      %v6730 = vld [vmem:[%s6729] ss:$2 sm:$0xff]
      %v6731 = vmax.f32 %v6724, %v6726
      %v6732 = vmax.f32 %v6728, %v6730
      %v6733 = vmax.f32 %v6731, %v6732
      %6734 = vst [vmem:[%s345 + $0x18] sm:$0xff] %v6733
      %s6735 = scalar_lea.vmem %s340, 144
      %v6736 = vld [vmem:[%s6735] ss:$2 sm:$0xff]
      %s6737 = scalar_lea.vmem %s340, 145
      %v6738 = vld [vmem:[%s6737] ss:$2 sm:$0xff]
      %s6739 = scalar_lea.vmem %s340, 162
      %v6740 = vld [vmem:[%s6739] ss:$2 sm:$0xff]
      %s6741 = scalar_lea.vmem %s340, 163
      %v6742 = vld [vmem:[%s6741] ss:$2 sm:$0xff]
      %v6743 = vmax.f32 %v6736, %v6738
      %v6744 = vmax.f32 %v6740, %v6742
      %v6745 = vmax.f32 %v6743, %v6744
      %6746 = vst [vmem:[%s345 + $0x20] sm:$0xff] %v6745
      %s6747 = scalar_lea.vmem %s340, 180
      %v6748 = vld [vmem:[%s6747] ss:$2 sm:$0xff]
      %s6749 = scalar_lea.vmem %s340, 181
      %v6750 = vld [vmem:[%s6749] ss:$2 sm:$0xff]
      %s6751 = scalar_lea.vmem %s340, 198
      %v6752 = vld [vmem:[%s6751] ss:$2 sm:$0xff]
      %s6753 = scalar_lea.vmem %s340, 199
      %v6754 = vld [vmem:[%s6753] ss:$2 sm:$0xff]
      %v6755 = vmax.f32 %v6748, %v6750
      %v6756 = vmax.f32 %v6752, %v6754
      %v6757 = vmax.f32 %v6755, %v6756
      %6758 = vst [vmem:[%s345 + $0x28] sm:$0xff] %v6757
      %s6759 = scalar_lea.vmem %s340, 216
      %v6760 = vld [vmem:[%s6759] ss:$2 sm:$0xff]
      %s6761 = scalar_lea.vmem %s340, 217
      %v6762 = vld [vmem:[%s6761] ss:$2 sm:$0xff]
      %s6763 = scalar_lea.vmem %s340, 234
      %v6764 = vld [vmem:[%s6763] ss:$2 sm:$0xff]
      %s6765 = scalar_lea.vmem %s340, 235
      %v6766 = vld [vmem:[%s6765] ss:$2 sm:$0xff]
      %v6767 = vmax.f32 %v6760, %v6762
      %v6768 = vmax.f32 %v6764, %v6766
      %v6769 = vmax.f32 %v6767, %v6768
      %6770 = vst [vmem:[%s345 + $0x30] sm:$0xff] %v6769
      %s6771 = scalar_lea.vmem %s340, 252
      %v6772 = vld [vmem:[%s6771] ss:$2 sm:$0xff]
      %s6773 = scalar_lea.vmem %s340, 253
      %v6774 = vld [vmem:[%s6773] ss:$2 sm:$0xff]
      %s6775 = scalar_lea.vmem %s340, 270
      %v6776 = vld [vmem:[%s6775] ss:$2 sm:$0xff]
      %s6777 = scalar_lea.vmem %s340, 271
      %v6778 = vld [vmem:[%s6777] ss:$2 sm:$0xff]
      %v6779 = vmax.f32 %v6772, %v6774
      %v6780 = vmax.f32 %v6776, %v6778
      %v6781 = vmax.f32 %v6779, %v6780
      %6782 = vst [vmem:[%s345 + $0x38] sm:$0xff] %v6781
      %p6783 = scmp.lt.s32.totalorder %s21, 1
      %s6784 = scalar_select %p6783, %s21, 1
      %s6785 = smul.addr %s6784, 36
      %s6786 = smul.addr %s6785, 8
      %s6787 = scalar_lea.vmem %s8, %s6786
      %p6788 = scmp.lt.s32.totalorder %s21, 1
      %s6789 = scalar_select %p6788, %s21, 1
      %s6790 = smul.addr %s6789, 8
      %s6791 = smul.addr %s6790, 8
      %s6792 = scalar_lea.vmem %s9, %s6791
      // Predicated region
      $region53: #{downsample_forward.1} parent=51 // pred_check
        %p6793 = pneg %p212
      $region54: #{downsample_forward.1} parent=51 // pred_check_branch
        %6795 = sbr.rel (%p6793) target = $region56
      $region55: #{downsample_forward.1} parent=51 // pred_region
        _
      $region56: #{downsample_forward.1} parent=51 // pred_fallthru
        _
      // Predicated region
      $region57: #{downsample_forward.1} parent=51 // pred_check
        %p6796 = pneg %p238
      $region58: #{downsample_forward.1} parent=51 // pred_check_branch
        %6798 = sbr.rel (%p6796) target = $region60
      $region59: #{downsample_forward.1} parent=51 // pred_region
        _
      $region60: #{downsample_forward.1} parent=51 // pred_fallthru
        _
    $region52: #{downsample_forward.1} parent=5 // pred_fallthru
      _
    %p6799 = scmp.le.s32.totalorder 2, %s16
    // Predicated region
    $region61: #{downsample_forward.1} parent=5 // pred_check
      %p6800 = pneg %p6799
    $region62: #{downsample_forward.1} parent=5 // pred_check_branch
      %6802 = sbr.rel (%p6800) target = $region64
    $region63: #{downsample_forward.1} parent=5 // pred_region
      %s6803 = ssub.s32 %s16, 2
      // Predicated region
      $region65: #{downsample_forward.1} parent=63 // pred_check
        %p6804 = pneg %p218
      $region66: #{downsample_forward.1} parent=63 // pred_check_branch
        %6806 = sbr.rel (%p6804) target = $region68
      $region67: #{downsample_forward.1} parent=63 // pred_region
        %p6807 = scmp.lt.s32.totalorder %s22, 1
        %s6808 = scalar_select %p6807, %s22, 1
        %s6809 = smul.addr %s6808, 36
        %s6810 = smul.addr %s6809, 8
        %s6811 = scalar_lea.vmem %s8, %s6810
      $region68: #{downsample_forward.1} parent=63 // pred_fallthru
        _
      // Predicated region
      $region69: #{downsample_forward.1} parent=63 // pred_check
        %p6812 = pneg %p244
      $region70: #{downsample_forward.1} parent=63 // pred_check_branch
        %6814 = sbr.rel (%p6812) target = $region72
      $region71: #{downsample_forward.1} parent=63 // pred_region
        %p6815 = scmp.lt.s32.totalorder %s22, 1
        %s6816 = scalar_select %p6815, %s22, 1
        %s6817 = smul.addr %s6816, 8
        %s6818 = smul.addr %s6817, 8
        %s6819 = scalar_lea.vmem %s9, %s6818
      $region72: #{downsample_forward.1} parent=63 // pred_fallthru
        _
    $region64: #{downsample_forward.1} parent=5 // pred_fallthru
      _
  $region6: #{downsample_forward.1} parent=0 // loop_footer
    %s20 = sadd.s32 1, %s16
  $region7: #{downsample_forward.1} parent=0 // loop_footer_branch
    %15 = sbr.rel target = $region3
  $region8: #{downsample_forward.1} parent=0 // loop_exit
    _

</llo_original>
